<compile_context>
chip_gen: v6e
topology: v6e:2x2x1
jax: 0.10.0
libtpu: 0.0.40
codegen_flags: <defaults>
</compile_context>

<pallas_src>
import jax
import jax.numpy as jnp
from jax import lax
from jax.experimental import pallas as pl
from jax.experimental.pallas import tpu as pltpu

INPUT_SIZE = 34
HIDDEN = 64
SUBLANE = 8


# ----------------------------- fused Pallas kernel ------------------------- #

def _fused_frame_lstm_kernel(
    x_ref, len_ref,
    wih0_ref, whhf0_ref, whhb0_ref, b0_ref,
    wih1f_ref, wih1b_ref, whhf1_ref, whhb1_ref, b1_ref,
    fcwf_ref, fcwb_ref, fcb_ref,
    out_ref,
    gx_scr, h0f_scr, h0b_scr, h1f_scr, h1b_scr,
):
    """Whole FrameLSTM forward, time-major, VMEM-resident.

    x_ref:    (T*B, Din)   flattened time-major inputs
    len_ref:  (B, 1) int32 valid lengths
    wih0:     (Din, 8H)    layer-0 input weights, [fwd 4H | bwd 4H], gate order (i,f,o,g)
    whhf0/whhb0: (H, 4H)   layer-0 recurrent weights (per direction)
    b0:       (1, 8H)      layer-0 combined biases
    wih1f/wih1b: (H, 8H)   layer-1 input weights: rows acting on layer-0 fwd / bwd halves
    whhf1/whhb1: (H, 4H)   layer-1 recurrent weights
    b1:       (1, 8H)
    fcwf/fcwb:(1,1,H)      FC weight halves, fcb: (1,1)
    out_ref:  (T, B)       fc(out).squeeze(-1), time-major
    """
    T, B = out_ref.shape
    H = whhf0_ref.shape[0]
    H2, H3, H4 = 2 * H, 3 * H, 4 * H
    lens = len_ref[...]                                   # (B, 1) int32

    def cell(gx, h, c, whh):
        # gate column order (i, f, o, g): one fused sigmoid + one tanh per cell
        g = gx + jnp.dot(h, whh, preferred_element_type=jnp.float32)
        s = jax.nn.sigmoid(g[:, :H3])                     # [i | f | o]
        gg = jnp.tanh(g[:, H3:])                          # g gate
        c_new = s[:, H:H2] * c + s[:, :H] * gg
        h_new = s[:, H2:H3] * jnp.tanh(c_new)
        return h_new, c_new

    def bidir(whhf, whhb, write_fwd, write_bwd):
        def step(i, carry):
            hf, cf, hb, cb = carry
            tf = i
            tb = T - 1 - i
            rf = pl.multiple_of(tf * B, B)
            rb = pl.multiple_of(tb * B, B)
            gxf = gx_scr[pl.ds(rf, B), :H4]               # fwd pre-gates at tf
            gxb = gx_scr[pl.ds(rb, B), H4:]               # bwd pre-gates at tb
            hf_n, cf_n = cell(gxf, hf, cf, whhf)
            hb_n, cb_n = cell(gxb, hb, cb, whhb)
            vf = tf < lens                                # (B,1) broadcast over H
            vb = tb < lens
            write_fwd(tf, rf, jnp.where(vf, hf_n, 0.0))
            write_bwd(tb, rb, jnp.where(vb, hb_n, 0.0))
            return (jnp.where(vf, hf_n, hf), jnp.where(vf, cf_n, cf),
                    jnp.where(vb, hb_n, hb), jnp.where(vb, cb_n, cb))

        z = jnp.zeros((B, H), jnp.float32)
        lax.fori_loop(0, T, step, (z, z, z, z), unroll=True)

    # ---- layer 0: input projection hoisted to one MXU matmul ----
    gx_scr[...] = (jnp.dot(x_ref[...], wih0_ref[...],
                           preferred_element_type=jnp.float32) + b0_ref[...])

    def w0f(t, r, v):
        h0f_scr[pl.ds(r, B), :] = v

    def w0b(t, r, v):
        h0b_scr[pl.ds(r, B), :] = v

    bidir(whhf0_ref[...], whhb0_ref[...], w0f, w0b)

    # ---- layer 1: input projection from VMEM-resident layer-0 outputs ----
    # TODO(synk): nn.LSTM inter-layer dropout(0.3) is training-only & stochastic;
    # eval semantics (identity) are implemented here.
    gx_scr[...] = (jnp.dot(h0f_scr[...], wih1f_ref[...],
                           preferred_element_type=jnp.float32)
                   + jnp.dot(h0b_scr[...], wih1b_ref[...],
                             preferred_element_type=jnp.float32)
                   + b1_ref[...])

    def w1f(t, r, v):
        h1f_scr[t] = v

    def w1b(t, r, v):
        h1b_scr[t] = v

    bidir(whhf1_ref[...], whhb1_ref[...], w1f, w1b)

    # ---- FC head fused as epilogue: lane-reduction over the two hidden halves ----
    out_ref[...] = (jnp.sum(h1f_scr[...] * fcwf_ref[...], axis=-1)
                    + jnp.sum(h1b_scr[...] * fcwb_ref[...], axis=-1)
                    + fcb_ref[...])


# ----------------------------- host wrapper --------------------------------- #

def _full_specs(args):
    return [pl.BlockSpec(a.shape, lambda i, nd=a.ndim: (0,) * nd) for a in args]


def frame_lstm_forward(packed, x, lengths):
    """x: (B, T, input_size) float32; lengths: python ints. Returns (B, max(lengths))."""
    B0, T, Din = x.shape
    lengths = [int(l) for l in lengths]
    max_len = max(lengths)
    H = packed["whhf0"].shape[0]

    # pad batch to a multiple of 8 sublanes; padded rows get length 0 (fully masked)
    B = -(-B0 // SUBLANE) * SUBLANE
    x = x.astype(jnp.float32)
    if B != B0:
        x = jnp.concatenate([x, jnp.zeros((B - B0, T, Din), jnp.float32)], axis=0)
    lens = (jnp.zeros((B,), jnp.int32)
            .at[:B0].set(jnp.asarray(lengths, jnp.int32)).reshape(B, 1))
    x_tm = jnp.transpose(x, (1, 0, 2)).reshape(T * B, Din)   # time-major, flat

    args = (x_tm, lens,
            packed["wih0"], packed["whhf0"], packed["whhb0"], packed["b0"],
            packed["wih1f"], packed["wih1b"], packed["whhf1"], packed["whhb1"],
            packed["b1"],
            packed["fcwf"], packed["fcwb"], packed["fcb"])

    out_tb = pl.pallas_call(
        _fused_frame_lstm_kernel,
        grid=(1,),
        in_specs=_full_specs(args),
        out_specs=pl.BlockSpec((T, B), lambda i: (0, 0)),
        out_shape=jax.ShapeDtypeStruct((T, B), jnp.float32),
        scratch_shapes=[
            pltpu.VMEM((T * B, 8 * H), jnp.float32),   # pre-computed input gates
            pltpu.VMEM((T * B, H), jnp.float32),       # layer-0 fwd outputs
            pltpu.VMEM((T * B, H), jnp.float32),       # layer-0 bwd outputs
            pltpu.VMEM((T, B, H), jnp.float32),        # layer-1 fwd outputs
            pltpu.VMEM((T, B, H), jnp.float32),        # layer-1 bwd outputs
        ],
        compiler_params=pltpu.CompilerParams(dimension_semantics=("arbitrary",)),
    )(*args)

    return jnp.transpose(out_tb)[:B0, :max_len]


# ----------------------------- parameters ----------------------------------- #

def init_params(key, input_size=INPUT_SIZE, hidden=HIDDEN):
    """Raw PyTorch-layout params, U(-1/sqrt(H), 1/sqrt(H)), gate order (i, f, g, o)."""
    k = 1.0 / float(hidden) ** 0.5
    raw = {}
    layer_in = [input_size, 2 * hidden]
    for layer in range(2):
        for dirn in ("fwd", "bwd"):
            key, k1, k2, k3, k4 = jax.random.split(key, 5)
            din = layer_in[layer]
            raw[(layer, dirn)] = dict(
                w_ih=jax.random.uniform(k1, (4 * hidden, din), jnp.float32, -k, k),
                w_hh=jax.random.uniform(k2, (4 * hidden, hidden), jnp.float32, -k, k),
                b_ih=jax.random.uniform(k3, (4 * hidden,), jnp.float32, -k, k),
                b_hh=jax.random.uniform(k4, (4 * hidden,), jnp.float32, -k, k),
            )
    key, k1, k2 = jax.random.split(key, 3)
    kf = 1.0 / float(2 * hidden) ** 0.5
    raw["fc"] = dict(
        w=jax.random.uniform(k1, (1, 2 * hidden), jnp.float32, -kf, kf),
        b=jax.random.uniform(k2, (1,), jnp.float32, -kf, kf),
    )
    return raw


def _permute_gates_rows(w, hidden):
    # torch gate-row order (i, f, g, o) -> kernel order (i, f, o, g)
    return jnp.concatenate(
        [w[:hidden], w[hidden:2 * hidden], w[3 * hidden:4 * hidden],
         w[2 * hidden:3 * hidden]], axis=0)


def pack_params(raw, hidden=HIDDEN):
    """Pack raw torch-layout params into the kernel layout (gate permutation applied once)."""
    H = hidden

    def dir_pack(layer, dirn):
        p = raw[(layer, dirn)]
        wih = _permute_gates_rows(p["w_ih"], H).T                       # (Din, 4H)
        whh = _permute_gates_rows(p["w_hh"], H).T                       # (H, 4H)
        b = _permute_gates_rows((p["b_ih"] + p["b_hh"]).reshape(4 * H, 1),
                                H).reshape(1, 4 * H)
        return wih, whh, b

    wih0f, whhf0, b0f = dir_pack(0, "fwd")
    wih0b, whhb0, b0b = dir_pack(0, "bwd")
    wih1_fdir, whhf1, b1f = dir_pack(1, "fwd")                          # (2H, 4H)
    wih1_bdir, whhb1, b1b = dir_pack(1, "bwd")

    wih1 = jnp.concatenate([wih1_fdir, wih1_bdir], axis=1)              # (2H, 8H)
    fcw = raw["fc"]["w"]                                                # (1, 2H)
    return dict(
        wih0=jnp.concatenate([wih0f, wih0b], axis=1),                   # (Din, 8H)
        whhf0=whhf0, whhb0=whhb0,
        b0=jnp.concatenate([b0f, b0b], axis=1),                         # (1, 8H)
        wih1f=wih1[:H, :],                                              # rows for h0 fwd half
        wih1b=wih1[H:, :],                                              # rows for h0 bwd half
        whhf1=whhf1, whhb1=whhb1,
        b1=jnp.concatenate([b1f, b1b], axis=1),
        fcwf=fcw[:, :H].reshape(1, 1, H),
        fcwb=fcw[:, H:].reshape(1, 1, H),
        fcb=raw["fc"]["b"].reshape(1, 1),
    )


# ----------------------------- pure-JAX reference --------------------------- #

def _ref_dir(x_tm, lens_col, w_ih, w_hh, b_ih, b_hh, reverse, hidden):
    T, B, _ = x_tm.shape
    H = hidden
    wih_t, whh_t = w_ih.T, w_hh.T
    b = (b_ih + b_hh).reshape(1, 4 * H)
    ts = jnp.arange(T)[::-1] if reverse else jnp.arange(T)

    def step(carry, t):
        h, c = carry
        g = x_tm[t] @ wih_t + h @ whh_t + b
        i = jax.nn.sigmoid(g[:, :H])
        f = jax.nn.sigmoid(g[:, H:2 * H])
        gg = jnp.tanh(g[:, 2 * H:3 * H])
        o = jax.nn.sigmoid(g[:, 3 * H:4 * H])
        c_new = f * c + i * gg
        h_new = o * jnp.tanh(c_new)
        valid = t < lens_col
        out = jnp.where(valid, h_new, 0.0)
        return (jnp.where(valid, h_new, h), jnp.where(valid, c_new, c)), out

    z = jnp.zeros((B, H), jnp.float32)
    (_, _), outs = lax.scan(step, (z, z), ts)
    return outs[::-1] if reverse else outs


def reference_forward(raw, x, lengths, hidden=HIDDEN):
    B, T, _ = x.shape
    lengths = [int(l) for l in lengths]
    max_len = max(lengths)
    lens_col = jnp.asarray(lengths, jnp.int32).reshape(B, 1)
    h = jnp.transpose(x, (1, 0, 2)).astype(jnp.float32)
    for layer in range(2):
        pf, pb = raw[(layer, "fwd")], raw[(layer, "bwd")]
        fwd = _ref_dir(h, lens_col, pf["w_ih"], pf["w_hh"], pf["b_ih"], pf["b_hh"],
                       False, hidden)
        bwd = _ref_dir(h, lens_col, pb["w_ih"], pb["w_hh"], pb["b_ih"], pb["b_hh"],
                       True, hidden)
        h = jnp.concatenate([fwd, bwd], axis=-1)
    out = jnp.transpose(h, (1, 0, 2))[:, :max_len, :]
    y = out.reshape(B * max_len, -1) @ raw["fc"]["w"].T + raw["fc"]["b"]
    return y.reshape(B, max_len)


# ----------------------------- main ----------------------------------------- #

if __name__ == "__main__":
    key = jax.random.PRNGKey(0)
    pkey, xkey = jax.random.split(key)
    raw = init_params(pkey)
    packed = pack_params(raw)

    B, T = 3, 8
    x = jax.random.normal(xkey, (B, T, INPUT_SIZE), jnp.float32)
    lengths = [8, 5, 3]

    y = frame_lstm_forward(packed, x, lengths)
    y = jax.block_until_ready(y)

    y_ref = reference_forward(raw, x, lengths)
    assert y.shape == (B, max(lengths)), y.shape
    if not bool(jnp.allclose(y, y_ref, atol=1e-4, rtol=1e-4)):
        raise AssertionError("Pallas output does not match JAX reference")

    print("KERNEL_OK")
</pallas_src>

<mosaic_0001>
module attributes {stable_mosaic.version = 11 : i64} {
  func.func @_fused_frame_lstm_kernel(%arg0: i32, %arg1: memref<64x34xf32, #tpu.memory_space<vmem>>, %arg2: memref<8x1xi32, #tpu.memory_space<vmem>>, %arg3: memref<34x512xf32, #tpu.memory_space<vmem>>, %arg4: memref<64x256xf32, #tpu.memory_space<vmem>>, %arg5: memref<64x256xf32, #tpu.memory_space<vmem>>, %arg6: memref<1x512xf32, #tpu.memory_space<vmem>>, %arg7: memref<64x512xf32, #tpu.memory_space<vmem>>, %arg8: memref<64x512xf32, #tpu.memory_space<vmem>>, %arg9: memref<64x256xf32, #tpu.memory_space<vmem>>, %arg10: memref<64x256xf32, #tpu.memory_space<vmem>>, %arg11: memref<1x512xf32, #tpu.memory_space<vmem>>, %arg12: memref<1x1x64xf32, #tpu.memory_space<vmem>>, %arg13: memref<1x1x64xf32, #tpu.memory_space<vmem>>, %arg14: memref<1x1xf32, #tpu.memory_space<vmem>>, %arg15: memref<8x8xf32, #tpu.memory_space<vmem>>, %arg16: memref<64x512xf32, #tpu.memory_space<vmem>>, %arg17: memref<64x64xf32, #tpu.memory_space<vmem>>, %arg18: memref<64x64xf32, #tpu.memory_space<vmem>>, %arg19: memref<8x8x64xf32, #tpu.memory_space<vmem>>, %arg20: memref<8x8x64xf32, #tpu.memory_space<vmem>>) attributes {dimension_semantics = [#tpu.dimension_semantics<arbitrary>], iteration_bounds = array<i64: 1>, scalar_prefetch = 0 : i64, scratch_operands = 5 : i64, tpu.core_type = #tpu.core_type<tc>, window_params = [{pipeline_mode = #tpu.pipeline_mode<synchronous>, transform_indices = @transform_0, window_bounds = array<i64: 64, 34>}, {pipeline_mode = #tpu.pipeline_mode<synchronous>, transform_indices = @transform_1, window_bounds = array<i64: 8, 1>}, {pipeline_mode = #tpu.pipeline_mode<synchronous>, transform_indices = @transform_2, window_bounds = array<i64: 34, 512>}, {pipeline_mode = #tpu.pipeline_mode<synchronous>, transform_indices = @transform_3, window_bounds = array<i64: 64, 256>}, {pipeline_mode = #tpu.pipeline_mode<synchronous>, transform_indices = @transform_4, window_bounds = array<i64: 64, 256>}, {pipeline_mode = #tpu.pipeline_mode<synchronous>, transform_indices = @transform_5, window_bounds = array<i64: 1, 512>}, {pipeline_mode = #tpu.pipeline_mode<synchronous>, transform_indices = @transform_6, window_bounds = array<i64: 64, 512>}, {pipeline_mode = #tpu.pipeline_mode<synchronous>, transform_indices = @transform_7, window_bounds = array<i64: 64, 512>}, {pipeline_mode = #tpu.pipeline_mode<synchronous>, transform_indices = @transform_8, window_bounds = array<i64: 64, 256>}, {pipeline_mode = #tpu.pipeline_mode<synchronous>, transform_indices = @transform_9, window_bounds = array<i64: 64, 256>}, {pipeline_mode = #tpu.pipeline_mode<synchronous>, transform_indices = @transform_10, window_bounds = array<i64: 1, 512>}, {pipeline_mode = #tpu.pipeline_mode<synchronous>, transform_indices = @transform_11, window_bounds = array<i64: 1, 1, 64>}, {pipeline_mode = #tpu.pipeline_mode<synchronous>, transform_indices = @transform_12, window_bounds = array<i64: 1, 1, 64>}, {pipeline_mode = #tpu.pipeline_mode<synchronous>, transform_indices = @transform_13, window_bounds = array<i64: 1, 1>}, {pipeline_mode = #tpu.pipeline_mode<synchronous>, transform_indices = @transform_14, window_bounds = array<i64: 8, 8>}]} {
    %c0 = arith.constant 0 : index
    %c0_0 = arith.constant 0 : index
    %0 = vector.load %arg2[%c0, %c0_0] : memref<8x1xi32, #tpu.memory_space<vmem>>, vector<8x1xi32>
    %c0_1 = arith.constant 0 : index
    %c0_2 = arith.constant 0 : index
    %1 = vector.load %arg1[%c0_1, %c0_2] : memref<64x34xf32, #tpu.memory_space<vmem>>, vector<64x34xf32>
    %c0_3 = arith.constant 0 : index
    %c0_4 = arith.constant 0 : index
    %2 = vector.load %arg3[%c0_3, %c0_4] : memref<34x512xf32, #tpu.memory_space<vmem>>, vector<34x512xf32>
    %cst = arith.constant dense<0.000000e+00> : vector<64x512xf32>
    %3 = tpu.matmul %1, %2, %cst {dimension_numbers = #tpu.dot_dimension_numbers<[1], [0], [0], [1], [0, 0, 1, 1], [], []>} : vector<64x34xf32>, vector<34x512xf32>, vector<64x512xf32> -> vector<64x512xf32>
    %c0_5 = arith.constant 0 : index
    %c0_6 = arith.constant 0 : index
    %4 = vector.load %arg6[%c0_5, %c0_6] : memref<1x512xf32, #tpu.memory_space<vmem>>, vector<1x512xf32>
    %5 = vector.broadcast %4 : vector<1x512xf32> to vector<64x512xf32>
    %6 = arith.addf %3, %5 : vector<64x512xf32>
    %c0_7 = arith.constant 0 : index
    %c0_8 = arith.constant 0 : index
    %7 = vector.load %arg16[%c0_7, %c0_8] : memref<64x512xf32, #tpu.memory_space<vmem>>, vector<64x512xf32>
    tpu.vector_store %arg16[%c0_7, %c0_8], %6 {strides = array<i32>} : memref<64x512xf32, #tpu.memory_space<vmem>>, vector<64x512xf32>,
    %c0_9 = arith.constant 0 : index
    %c0_10 = arith.constant 0 : index
    %8 = vector.load %arg4[%c0_9, %c0_10] : memref<64x256xf32, #tpu.memory_space<vmem>>, vector<64x256xf32>
    %c0_11 = arith.constant 0 : index
    %c0_12 = arith.constant 0 : index
    %9 = vector.load %arg5[%c0_11, %c0_12] : memref<64x256xf32, #tpu.memory_space<vmem>>, vector<64x256xf32>
    %cst_13 = arith.constant 0.000000e+00 : f32
    %10 = vector.broadcast %cst_13 : f32 to vector<8x64xf32>
    %c0_i32 = arith.constant 0 : i32
    %c7_i32 = arith.constant 7 : i32
    %11 = arith.subi %c7_i32, %c0_i32 : i32
    %c8_i32 = arith.constant 8 : i32
    %12 = arith.muli %c0_i32, %c8_i32 : i32
    %13 = tpu.assume_multiple %12, 8 : i32
    %c8_i32_14 = arith.constant 8 : i32
    %14 = arith.muli %11, %c8_i32_14 : i32
    %15 = tpu.assume_multiple %14, 8 : i32
    %16 = arith.index_cast %13 : i32 to index
    %c0_15 = arith.constant 0 : index
    %17 = vector.load %arg16[%16, %c0_15] : memref<64x512xf32, #tpu.memory_space<vmem>>, vector<8x256xf32>
    %18 = arith.index_cast %15 : i32 to index
    %c256 = arith.constant 256 : index
    %19 = vector.load %arg16[%18, %c256] : memref<64x512xf32, #tpu.memory_space<vmem>>, vector<8x256xf32>
    %cst_16 = arith.constant dense<0.000000e+00> : vector<8x256xf32>
    %20 = tpu.matmul %10, %8, %cst_16 {dimension_numbers = #tpu.dot_dimension_numbers<[1], [0], [0], [1], [0, 0, 1, 1], [], []>} : vector<8x64xf32>, vector<64x256xf32>, vector<8x256xf32> -> vector<8x256xf32>
    %21 = arith.addf %17, %20 : vector<8x256xf32>
    %22 = vector.extract_strided_slice %21 {offsets = [0, 0], sizes = [8, 192], strides = [1, 1]} : vector<8x256xf32> to vector<8x192xf32>
    %23 = arith.negf %22 : vector<8x192xf32>
    %24 = math.exp %23 : vector<8x192xf32>
    %cst_17 = arith.constant 1.000000e+00 : f32
    %25 = vector.broadcast %cst_17 : f32 to vector<8x192xf32>
    %26 = arith.addf %25, %24 : vector<8x192xf32>
    %27 = arith.divf %25, %26 : vector<8x192xf32>
    %28 = vector.extract_strided_slice %21 {offsets = [0, 192], sizes = [8, 64], strides = [1, 1]} : vector<8x256xf32> to vector<8x64xf32>
    %29 = math.tanh %28 : vector<8x64xf32>
    %30 = vector.extract_strided_slice %27 {offsets = [0, 64], sizes = [8, 64], strides = [1, 1]} : vector<8x192xf32> to vector<8x64xf32>
    %31 = arith.mulf %30, %10 : vector<8x64xf32>
    %32 = vector.extract_strided_slice %27 {offsets = [0, 0], sizes = [8, 64], strides = [1, 1]} : vector<8x192xf32> to vector<8x64xf32>
    %33 = arith.mulf %32, %29 : vector<8x64xf32>
    %34 = arith.addf %31, %33 : vector<8x64xf32>
    %35 = vector.extract_strided_slice %27 {offsets = [0, 128], sizes = [8, 64], strides = [1, 1]} : vector<8x192xf32> to vector<8x64xf32>
    %36 = math.tanh %34 : vector<8x64xf32>
    %37 = arith.mulf %35, %36 : vector<8x64xf32>
    %cst_18 = arith.constant dense<0.000000e+00> : vector<8x256xf32>
    %38 = tpu.matmul %10, %9, %cst_18 {dimension_numbers = #tpu.dot_dimension_numbers<[1], [0], [0], [1], [0, 0, 1, 1], [], []>} : vector<8x64xf32>, vector<64x256xf32>, vector<8x256xf32> -> vector<8x256xf32>
    %39 = arith.addf %19, %38 : vector<8x256xf32>
    %40 = vector.extract_strided_slice %39 {offsets = [0, 0], sizes = [8, 192], strides = [1, 1]} : vector<8x256xf32> to vector<8x192xf32>
    %41 = arith.negf %40 : vector<8x192xf32>
    %42 = math.exp %41 : vector<8x192xf32>
    %cst_19 = arith.constant 1.000000e+00 : f32
    %43 = vector.broadcast %cst_19 : f32 to vector<8x192xf32>
    %44 = arith.addf %43, %42 : vector<8x192xf32>
    %45 = arith.divf %43, %44 : vector<8x192xf32>
    %46 = vector.extract_strided_slice %39 {offsets = [0, 192], sizes = [8, 64], strides = [1, 1]} : vector<8x256xf32> to vector<8x64xf32>
    %47 = math.tanh %46 : vector<8x64xf32>
    %48 = vector.extract_strided_slice %45 {offsets = [0, 64], sizes = [8, 64], strides = [1, 1]} : vector<8x192xf32> to vector<8x64xf32>
    %49 = arith.mulf %48, %10 : vector<8x64xf32>
    %50 = vector.extract_strided_slice %45 {offsets = [0, 0], sizes = [8, 64], strides = [1, 1]} : vector<8x192xf32> to vector<8x64xf32>
    %51 = arith.mulf %50, %47 : vector<8x64xf32>
    %52 = arith.addf %49, %51 : vector<8x64xf32>
    %53 = vector.extract_strided_slice %45 {offsets = [0, 128], sizes = [8, 64], strides = [1, 1]} : vector<8x192xf32> to vector<8x64xf32>
    %54 = math.tanh %52 : vector<8x64xf32>
    %55 = arith.mulf %53, %54 : vector<8x64xf32>
    %56 = vector.broadcast %c0_i32 : i32 to vector<8x1xi32>
    %57 = arith.cmpi slt, %56, %0 : vector<8x1xi32>
    %58 = vector.broadcast %11 : i32 to vector<8x1xi32>
    %59 = arith.cmpi slt, %58, %0 : vector<8x1xi32>
    %cst_20 = arith.constant 0.000000e+00 : f32
    %60 = vector.shape_cast %57 : vector<8x1xi1> to vector<8x1xi1>
    %61 = vector.broadcast %60 : vector<8x1xi1> to vector<8x64xi1>
    %62 = vector.broadcast %cst_20 : f32 to vector<8x64xf32>
    %63 = arith.select %61, %37, %62 : vector<8x64xi1>, vector<8x64xf32>
    %64 = arith.index_cast %13 : i32 to index
    %c0_21 = arith.constant 0 : index
    %65 = vector.load %arg17[%64, %c0_21] : memref<64x64xf32, #tpu.memory_space<vmem>>, vector<8x64xf32>
    tpu.vector_store %arg17[%64, %c0_21], %63 {strides = array<i32>} : memref<64x64xf32, #tpu.memory_space<vmem>>, vector<8x64xf32>,
    %cst_22 = arith.constant 0.000000e+00 : f32
    %66 = vector.shape_cast %59 : vector<8x1xi1> to vector<8x1xi1>
    %67 = vector.broadcast %66 : vector<8x1xi1> to vector<8x64xi1>
    %68 = vector.broadcast %cst_22 : f32 to vector<8x64xf32>
    %69 = arith.select %67, %55, %68 : vector<8x64xi1>, vector<8x64xf32>
    %70 = arith.index_cast %15 : i32 to index
    %c0_23 = arith.constant 0 : index
    %71 = vector.load %arg18[%70, %c0_23] : memref<64x64xf32, #tpu.memory_space<vmem>>, vector<8x64xf32>
    tpu.vector_store %arg18[%70, %c0_23], %69 {strides = array<i32>} : memref<64x64xf32, #tpu.memory_space<vmem>>, vector<8x64xf32>,
    %72 = vector.shape_cast %57 : vector<8x1xi1> to vector<8x1xi1>
    %73 = vector.broadcast %72 : vector<8x1xi1> to vector<8x64xi1>
    %74 = arith.select %73, %37, %10 : vector<8x64xi1>, vector<8x64xf32>
    %75 = vector.shape_cast %57 : vector<8x1xi1> to vector<8x1xi1>
    %76 = vector.broadcast %75 : vector<8x1xi1> to vector<8x64xi1>
    %77 = arith.select %76, %34, %10 : vector<8x64xi1>, vector<8x64xf32>
    %78 = vector.shape_cast %59 : vector<8x1xi1> to vector<8x1xi1>
    %79 = vector.broadcast %78 : vector<8x1xi1> to vector<8x64xi1>
    %80 = arith.select %79, %55, %10 : vector<8x64xi1>, vector<8x64xf32>
    %81 = vector.shape_cast %59 : vector<8x1xi1> to vector<8x1xi1>
    %82 = vector.broadcast %81 : vector<8x1xi1> to vector<8x64xi1>
    %83 = arith.select %82, %52, %10 : vector<8x64xi1>, vector<8x64xf32>
    %c1_i32 = arith.constant 1 : i32
    %c7_i32_24 = arith.constant 7 : i32
    %84 = arith.subi %c7_i32_24, %c1_i32 : i32
    %c8_i32_25 = arith.constant 8 : i32
    %85 = arith.muli %c1_i32, %c8_i32_25 : i32
    %86 = tpu.assume_multiple %85, 8 : i32
    %c8_i32_26 = arith.constant 8 : i32
    %87 = arith.muli %84, %c8_i32_26 : i32
    %88 = tpu.assume_multiple %87, 8 : i32
    %89 = arith.index_cast %86 : i32 to index
    %c0_27 = arith.constant 0 : index
    %90 = vector.load %arg16[%89, %c0_27] : memref<64x512xf32, #tpu.memory_space<vmem>>, vector<8x256xf32>
    %91 = arith.index_cast %88 : i32 to index
    %c256_28 = arith.constant 256 : index
    %92 = vector.load %arg16[%91, %c256_28] : memref<64x512xf32, #tpu.memory_space<vmem>>, vector<8x256xf32>
    %cst_29 = arith.constant dense<0.000000e+00> : vector<8x256xf32>
    %93 = tpu.matmul %74, %8, %cst_29 {dimension_numbers = #tpu.dot_dimension_numbers<[1], [0], [0], [1], [0, 0, 1, 1], [], []>} : vector<8x64xf32>, vector<64x256xf32>, vector<8x256xf32> -> vector<8x256xf32>
    %94 = arith.addf %90, %93 : vector<8x256xf32>
    %95 = vector.extract_strided_slice %94 {offsets = [0, 0], sizes = [8, 192], strides = [1, 1]} : vector<8x256xf32> to vector<8x192xf32>
    %96 = arith.negf %95 : vector<8x192xf32>
    %97 = math.exp %96 : vector<8x192xf32>
    %cst_30 = arith.constant 1.000000e+00 : f32
    %98 = vector.broadcast %cst_30 : f32 to vector<8x192xf32>
    %99 = arith.addf %98, %97 : vector<8x192xf32>
    %100 = arith.divf %98, %99 : vector<8x192xf32>
    %101 = vector.extract_strided_slice %94 {offsets = [0, 192], sizes = [8, 64], strides = [1, 1]} : vector<8x256xf32> to vector<8x64xf32>
    %102 = math.tanh %101 : vector<8x64xf32>
    %103 = vector.extract_strided_slice %100 {offsets = [0, 64], sizes = [8, 64], strides = [1, 1]} : vector<8x192xf32> to vector<8x64xf32>
    %104 = arith.mulf %103, %77 : vector<8x64xf32>
    %105 = vector.extract_strided_slice %100 {offsets = [0, 0], sizes = [8, 64], strides = [1, 1]} : vector<8x192xf32> to vector<8x64xf32>
    %106 = arith.mulf %105, %102 : vector<8x64xf32>
    %107 = arith.addf %104, %106 : vector<8x64xf32>
    %108 = vector.extract_strided_slice %100 {offsets = [0, 128], sizes = [8, 64], strides = [1, 1]} : vector<8x192xf32> to vector<8x64xf32>
    %109 = math.tanh %107 : vector<8x64xf32>
    %110 = arith.mulf %108, %109 : vector<8x64xf32>
    %cst_31 = arith.constant dense<0.000000e+00> : vector<8x256xf32>
    %111 = tpu.matmul %80, %9, %cst_31 {dimension_numbers = #tpu.dot_dimension_numbers<[1], [0], [0], [1], [0, 0, 1, 1], [], []>} : vector<8x64xf32>, vector<64x256xf32>, vector<8x256xf32> -> vector<8x256xf32>
    %112 = arith.addf %92, %111 : vector<8x256xf32>
    %113 = vector.extract_strided_slice %112 {offsets = [0, 0], sizes = [8, 192], strides = [1, 1]} : vector<8x256xf32> to vector<8x192xf32>
    %114 = arith.negf %113 : vector<8x192xf32>
    %115 = math.exp %114 : vector<8x192xf32>
    %cst_32 = arith.constant 1.000000e+00 : f32
    %116 = vector.broadcast %cst_32 : f32 to vector<8x192xf32>
    %117 = arith.addf %116, %115 : vector<8x192xf32>
    %118 = arith.divf %116, %117 : vector<8x192xf32>
    %119 = vector.extract_strided_slice %112 {offsets = [0, 192], sizes = [8, 64], strides = [1, 1]} : vector<8x256xf32> to vector<8x64xf32>
    %120 = math.tanh %119 : vector<8x64xf32>
    %121 = vector.extract_strided_slice %118 {offsets = [0, 64], sizes = [8, 64], strides = [1, 1]} : vector<8x192xf32> to vector<8x64xf32>
    %122 = arith.mulf %121, %83 : vector<8x64xf32>
    %123 = vector.extract_strided_slice %118 {offsets = [0, 0], sizes = [8, 64], strides = [1, 1]} : vector<8x192xf32> to vector<8x64xf32>
    %124 = arith.mulf %123, %120 : vector<8x64xf32>
    %125 = arith.addf %122, %124 : vector<8x64xf32>
    %126 = vector.extract_strided_slice %118 {offsets = [0, 128], sizes = [8, 64], strides = [1, 1]} : vector<8x192xf32> to vector<8x64xf32>
    %127 = math.tanh %125 : vector<8x64xf32>
    %128 = arith.mulf %126, %127 : vector<8x64xf32>
    %129 = vector.broadcast %c1_i32 : i32 to vector<8x1xi32>
    %130 = arith.cmpi slt, %129, %0 : vector<8x1xi32>
    %131 = vector.broadcast %84 : i32 to vector<8x1xi32>
    %132 = arith.cmpi slt, %131, %0 : vector<8x1xi32>
    %cst_33 = arith.constant 0.000000e+00 : f32
    %133 = vector.shape_cast %130 : vector<8x1xi1> to vector<8x1xi1>
    %134 = vector.broadcast %133 : vector<8x1xi1> to vector<8x64xi1>
    %135 = vector.broadcast %cst_33 : f32 to vector<8x64xf32>
    %136 = arith.select %134, %110, %135 : vector<8x64xi1>, vector<8x64xf32>
    %137 = arith.index_cast %86 : i32 to index
    %c0_34 = arith.constant 0 : index
    %138 = vector.load %arg17[%137, %c0_34] : memref<64x64xf32, #tpu.memory_space<vmem>>, vector<8x64xf32>
    tpu.vector_store %arg17[%137, %c0_34], %136 {strides = array<i32>} : memref<64x64xf32, #tpu.memory_space<vmem>>, vector<8x64xf32>,
    %cst_35 = arith.constant 0.000000e+00 : f32
    %139 = vector.shape_cast %132 : vector<8x1xi1> to vector<8x1xi1>
    %140 = vector.broadcast %139 : vector<8x1xi1> to vector<8x64xi1>
    %141 = vector.broadcast %cst_35 : f32 to vector<8x64xf32>
    %142 = arith.select %140, %128, %141 : vector<8x64xi1>, vector<8x64xf32>
    %143 = arith.index_cast %88 : i32 to index
    %c0_36 = arith.constant 0 : index
    %144 = vector.load %arg18[%143, %c0_36] : memref<64x64xf32, #tpu.memory_space<vmem>>, vector<8x64xf32>
    tpu.vector_store %arg18[%143, %c0_36], %142 {strides = array<i32>} : memref<64x64xf32, #tpu.memory_space<vmem>>, vector<8x64xf32>,
    %145 = vector.shape_cast %130 : vector<8x1xi1> to vector<8x1xi1>
    %146 = vector.broadcast %145 : vector<8x1xi1> to vector<8x64xi1>
    %147 = arith.select %146, %110, %74 : vector<8x64xi1>, vector<8x64xf32>
    %148 = vector.shape_cast %130 : vector<8x1xi1> to vector<8x1xi1>
    %149 = vector.broadcast %148 : vector<8x1xi1> to vector<8x64xi1>
    %150 = arith.select %149, %107, %77 : vector<8x64xi1>, vector<8x64xf32>
    %151 = vector.shape_cast %132 : vector<8x1xi1> to vector<8x1xi1>
    %152 = vector.broadcast %151 : vector<8x1xi1> to vector<8x64xi1>
    %153 = arith.select %152, %128, %80 : vector<8x64xi1>, vector<8x64xf32>
    %154 = vector.shape_cast %132 : vector<8x1xi1> to vector<8x1xi1>
    %155 = vector.broadcast %154 : vector<8x1xi1> to vector<8x64xi1>
    %156 = arith.select %155, %125, %83 : vector<8x64xi1>, vector<8x64xf32>
    %c2_i32 = arith.constant 2 : i32
    %c7_i32_37 = arith.constant 7 : i32
    %157 = arith.subi %c7_i32_37, %c2_i32 : i32
    %c8_i32_38 = arith.constant 8 : i32
    %158 = arith.muli %c2_i32, %c8_i32_38 : i32
    %159 = tpu.assume_multiple %158, 8 : i32
    %c8_i32_39 = arith.constant 8 : i32
    %160 = arith.muli %157, %c8_i32_39 : i32
    %161 = tpu.assume_multiple %160, 8 : i32
    %162 = arith.index_cast %159 : i32 to index
    %c0_40 = arith.constant 0 : index
    %163 = vector.load %arg16[%162, %c0_40] : memref<64x512xf32, #tpu.memory_space<vmem>>, vector<8x256xf32>
    %164 = arith.index_cast %161 : i32 to index
    %c256_41 = arith.constant 256 : index
    %165 = vector.load %arg16[%164, %c256_41] : memref<64x512xf32, #tpu.memory_space<vmem>>, vector<8x256xf32>
    %cst_42 = arith.constant dense<0.000000e+00> : vector<8x256xf32>
    %166 = tpu.matmul %147, %8, %cst_42 {dimension_numbers = #tpu.dot_dimension_numbers<[1], [0], [0], [1], [0, 0, 1, 1], [], []>} : vector<8x64xf32>, vector<64x256xf32>, vector<8x256xf32> -> vector<8x256xf32>
    %167 = arith.addf %163, %166 : vector<8x256xf32>
    %168 = vector.extract_strided_slice %167 {offsets = [0, 0], sizes = [8, 192], strides = [1, 1]} : vector<8x256xf32> to vector<8x192xf32>
    %169 = arith.negf %168 : vector<8x192xf32>
    %170 = math.exp %169 : vector<8x192xf32>
    %cst_43 = arith.constant 1.000000e+00 : f32
    %171 = vector.broadcast %cst_43 : f32 to vector<8x192xf32>
    %172 = arith.addf %171, %170 : vector<8x192xf32>
    %173 = arith.divf %171, %172 : vector<8x192xf32>
    %174 = vector.extract_strided_slice %167 {offsets = [0, 192], sizes = [8, 64], strides = [1, 1]} : vector<8x256xf32> to vector<8x64xf32>
    %175 = math.tanh %174 : vector<8x64xf32>
    %176 = vector.extract_strided_slice %173 {offsets = [0, 64], sizes = [8, 64], strides = [1, 1]} : vector<8x192xf32> to vector<8x64xf32>
    %177 = arith.mulf %176, %150 : vector<8x64xf32>
    %178 = vector.extract_strided_slice %173 {offsets = [0, 0], sizes = [8, 64], strides = [1, 1]} : vector<8x192xf32> to vector<8x64xf32>
    %179 = arith.mulf %178, %175 : vector<8x64xf32>
    %180 = arith.addf %177, %179 : vector<8x64xf32>
    %181 = vector.extract_strided_slice %173 {offsets = [0, 128], sizes = [8, 64], strides = [1, 1]} : vector<8x192xf32> to vector<8x64xf32>
    %182 = math.tanh %180 : vector<8x64xf32>
    %183 = arith.mulf %181, %182 : vector<8x64xf32>
    %cst_44 = arith.constant dense<0.000000e+00> : vector<8x256xf32>
    %184 = tpu.matmul %153, %9, %cst_44 {dimension_numbers = #tpu.dot_dimension_numbers<[1], [0], [0], [1], [0, 0, 1, 1], [], []>} : vector<8x64xf32>, vector<64x256xf32>, vector<8x256xf32> -> vector<8x256xf32>
    %185 = arith.addf %165, %184 : vector<8x256xf32>
    %186 = vector.extract_strided_slice %185 {offsets = [0, 0], sizes = [8, 192], strides = [1, 1]} : vector<8x256xf32> to vector<8x192xf32>
    %187 = arith.negf %186 : vector<8x192xf32>
    %188 = math.exp %187 : vector<8x192xf32>
    %cst_45 = arith.constant 1.000000e+00 : f32
    %189 = vector.broadcast %cst_45 : f32 to vector<8x192xf32>
    %190 = arith.addf %189, %188 : vector<8x192xf32>
    %191 = arith.divf %189, %190 : vector<8x192xf32>
    %192 = vector.extract_strided_slice %185 {offsets = [0, 192], sizes = [8, 64], strides = [1, 1]} : vector<8x256xf32> to vector<8x64xf32>
    %193 = math.tanh %192 : vector<8x64xf32>
    %194 = vector.extract_strided_slice %191 {offsets = [0, 64], sizes = [8, 64], strides = [1, 1]} : vector<8x192xf32> to vector<8x64xf32>
    %195 = arith.mulf %194, %156 : vector<8x64xf32>
    %196 = vector.extract_strided_slice %191 {offsets = [0, 0], sizes = [8, 64], strides = [1, 1]} : vector<8x192xf32> to vector<8x64xf32>
    %197 = arith.mulf %196, %193 : vector<8x64xf32>
    %198 = arith.addf %195, %197 : vector<8x64xf32>
    %199 = vector.extract_strided_slice %191 {offsets = [0, 128], sizes = [8, 64], strides = [1, 1]} : vector<8x192xf32> to vector<8x64xf32>
    %200 = math.tanh %198 : vector<8x64xf32>
    %201 = arith.mulf %199, %200 : vector<8x64xf32>
    %202 = vector.broadcast %c2_i32 : i32 to vector<8x1xi32>
    %203 = arith.cmpi slt, %202, %0 : vector<8x1xi32>
    %204 = vector.broadcast %157 : i32 to vector<8x1xi32>
    %205 = arith.cmpi slt, %204, %0 : vector<8x1xi32>
    %cst_46 = arith.constant 0.000000e+00 : f32
    %206 = vector.shape_cast %203 : vector<8x1xi1> to vector<8x1xi1>
    %207 = vector.broadcast %206 : vector<8x1xi1> to vector<8x64xi1>
    %208 = vector.broadcast %cst_46 : f32 to vector<8x64xf32>
    %209 = arith.select %207, %183, %208 : vector<8x64xi1>, vector<8x64xf32>
    %210 = arith.index_cast %159 : i32 to index
    %c0_47 = arith.constant 0 : index
    %211 = vector.load %arg17[%210, %c0_47] : memref<64x64xf32, #tpu.memory_space<vmem>>, vector<8x64xf32>
    tpu.vector_store %arg17[%210, %c0_47], %209 {strides = array<i32>} : memref<64x64xf32, #tpu.memory_space<vmem>>, vector<8x64xf32>,
    %cst_48 = arith.constant 0.000000e+00 : f32
    %212 = vector.shape_cast %205 : vector<8x1xi1> to vector<8x1xi1>
    %213 = vector.broadcast %212 : vector<8x1xi1> to vector<8x64xi1>
    %214 = vector.broadcast %cst_48 : f32 to vector<8x64xf32>
    %215 = arith.select %213, %201, %214 : vector<8x64xi1>, vector<8x64xf32>
    %216 = arith.index_cast %161 : i32 to index
    %c0_49 = arith.constant 0 : index
    %217 = vector.load %arg18[%216, %c0_49] : memref<64x64xf32, #tpu.memory_space<vmem>>, vector<8x64xf32>
    tpu.vector_store %arg18[%216, %c0_49], %215 {strides = array<i32>} : memref<64x64xf32, #tpu.memory_space<vmem>>, vector<8x64xf32>,
    %218 = vector.shape_cast %203 : vector<8x1xi1> to vector<8x1xi1>
    %219 = vector.broadcast %218 : vector<8x1xi1> to vector<8x64xi1>
    %220 = arith.select %219, %183, %147 : vector<8x64xi1>, vector<8x64xf32>
    %221 = vector.shape_cast %203 : vector<8x1xi1> to vector<8x1xi1>
    %222 = vector.broadcast %221 : vector<8x1xi1> to vector<8x64xi1>
    %223 = arith.select %222, %180, %150 : vector<8x64xi1>, vector<8x64xf32>
    %224 = vector.shape_cast %205 : vector<8x1xi1> to vector<8x1xi1>
    %225 = vector.broadcast %224 : vector<8x1xi1> to vector<8x64xi1>
    %226 = arith.select %225, %201, %153 : vector<8x64xi1>, vector<8x64xf32>
    %227 = vector.shape_cast %205 : vector<8x1xi1> to vector<8x1xi1>
    %228 = vector.broadcast %227 : vector<8x1xi1> to vector<8x64xi1>
    %229 = arith.select %228, %198, %156 : vector<8x64xi1>, vector<8x64xf32>
    %c3_i32 = arith.constant 3 : i32
    %c7_i32_50 = arith.constant 7 : i32
    %230 = arith.subi %c7_i32_50, %c3_i32 : i32
    %c8_i32_51 = arith.constant 8 : i32
    %231 = arith.muli %c3_i32, %c8_i32_51 : i32
    %232 = tpu.assume_multiple %231, 8 : i32
    %c8_i32_52 = arith.constant 8 : i32
    %233 = arith.muli %230, %c8_i32_52 : i32
    %234 = tpu.assume_multiple %233, 8 : i32
    %235 = arith.index_cast %232 : i32 to index
    %c0_53 = arith.constant 0 : index
    %236 = vector.load %arg16[%235, %c0_53] : memref<64x512xf32, #tpu.memory_space<vmem>>, vector<8x256xf32>
    %237 = arith.index_cast %234 : i32 to index
    %c256_54 = arith.constant 256 : index
    %238 = vector.load %arg16[%237, %c256_54] : memref<64x512xf32, #tpu.memory_space<vmem>>, vector<8x256xf32>
    %cst_55 = arith.constant dense<0.000000e+00> : vector<8x256xf32>
    %239 = tpu.matmul %220, %8, %cst_55 {dimension_numbers = #tpu.dot_dimension_numbers<[1], [0], [0], [1], [0, 0, 1, 1], [], []>} : vector<8x64xf32>, vector<64x256xf32>, vector<8x256xf32> -> vector<8x256xf32>
    %240 = arith.addf %236, %239 : vector<8x256xf32>
    %241 = vector.extract_strided_slice %240 {offsets = [0, 0], sizes = [8, 192], strides = [1, 1]} : vector<8x256xf32> to vector<8x192xf32>
    %242 = arith.negf %241 : vector<8x192xf32>
    %243 = math.exp %242 : vector<8x192xf32>
    %cst_56 = arith.constant 1.000000e+00 : f32
    %244 = vector.broadcast %cst_56 : f32 to vector<8x192xf32>
    %245 = arith.addf %244, %243 : vector<8x192xf32>
    %246 = arith.divf %244, %245 : vector<8x192xf32>
    %247 = vector.extract_strided_slice %240 {offsets = [0, 192], sizes = [8, 64], strides = [1, 1]} : vector<8x256xf32> to vector<8x64xf32>
    %248 = math.tanh %247 : vector<8x64xf32>
    %249 = vector.extract_strided_slice %246 {offsets = [0, 64], sizes = [8, 64], strides = [1, 1]} : vector<8x192xf32> to vector<8x64xf32>
    %250 = arith.mulf %249, %223 : vector<8x64xf32>
    %251 = vector.extract_strided_slice %246 {offsets = [0, 0], sizes = [8, 64], strides = [1, 1]} : vector<8x192xf32> to vector<8x64xf32>
    %252 = arith.mulf %251, %248 : vector<8x64xf32>
    %253 = arith.addf %250, %252 : vector<8x64xf32>
    %254 = vector.extract_strided_slice %246 {offsets = [0, 128], sizes = [8, 64], strides = [1, 1]} : vector<8x192xf32> to vector<8x64xf32>
    %255 = math.tanh %253 : vector<8x64xf32>
    %256 = arith.mulf %254, %255 : vector<8x64xf32>
    %cst_57 = arith.constant dense<0.000000e+00> : vector<8x256xf32>
    %257 = tpu.matmul %226, %9, %cst_57 {dimension_numbers = #tpu.dot_dimension_numbers<[1], [0], [0], [1], [0, 0, 1, 1], [], []>} : vector<8x64xf32>, vector<64x256xf32>, vector<8x256xf32> -> vector<8x256xf32>
    %258 = arith.addf %238, %257 : vector<8x256xf32>
    %259 = vector.extract_strided_slice %258 {offsets = [0, 0], sizes = [8, 192], strides = [1, 1]} : vector<8x256xf32> to vector<8x192xf32>
    %260 = arith.negf %259 : vector<8x192xf32>
    %261 = math.exp %260 : vector<8x192xf32>
    %cst_58 = arith.constant 1.000000e+00 : f32
    %262 = vector.broadcast %cst_58 : f32 to vector<8x192xf32>
    %263 = arith.addf %262, %261 : vector<8x192xf32>
    %264 = arith.divf %262, %263 : vector<8x192xf32>
    %265 = vector.extract_strided_slice %258 {offsets = [0, 192], sizes = [8, 64], strides = [1, 1]} : vector<8x256xf32> to vector<8x64xf32>
    %266 = math.tanh %265 : vector<8x64xf32>
    %267 = vector.extract_strided_slice %264 {offsets = [0, 64], sizes = [8, 64], strides = [1, 1]} : vector<8x192xf32> to vector<8x64xf32>
    %268 = arith.mulf %267, %229 : vector<8x64xf32>
    %269 = vector.extract_strided_slice %264 {offsets = [0, 0], sizes = [8, 64], strides = [1, 1]} : vector<8x192xf32> to vector<8x64xf32>
    %270 = arith.mulf %269, %266 : vector<8x64xf32>
    %271 = arith.addf %268, %270 : vector<8x64xf32>
    %272 = vector.extract_strided_slice %264 {offsets = [0, 128], sizes = [8, 64], strides = [1, 1]} : vector<8x192xf32> to vector<8x64xf32>
    %273 = math.tanh %271 : vector<8x64xf32>
    %274 = arith.mulf %272, %273 : vector<8x64xf32>
    %275 = vector.broadcast %c3_i32 : i32 to vector<8x1xi32>
    %276 = arith.cmpi slt, %275, %0 : vector<8x1xi32>
    %277 = vector.broadcast %230 : i32 to vector<8x1xi32>
    %278 = arith.cmpi slt, %277, %0 : vector<8x1xi32>
    %cst_59 = arith.constant 0.000000e+00 : f32
    %279 = vector.shape_cast %276 : vector<8x1xi1> to vector<8x1xi1>
    %280 = vector.broadcast %279 : vector<8x1xi1> to vector<8x64xi1>
    %281 = vector.broadcast %cst_59 : f32 to vector<8x64xf32>
    %282 = arith.select %280, %256, %281 : vector<8x64xi1>, vector<8x64xf32>
    %283 = arith.index_cast %232 : i32 to index
    %c0_60 = arith.constant 0 : index
    %284 = vector.load %arg17[%283, %c0_60] : memref<64x64xf32, #tpu.memory_space<vmem>>, vector<8x64xf32>
    tpu.vector_store %arg17[%283, %c0_60], %282 {strides = array<i32>} : memref<64x64xf32, #tpu.memory_space<vmem>>, vector<8x64xf32>,
    %cst_61 = arith.constant 0.000000e+00 : f32
    %285 = vector.shape_cast %278 : vector<8x1xi1> to vector<8x1xi1>
    %286 = vector.broadcast %285 : vector<8x1xi1> to vector<8x64xi1>
    %287 = vector.broadcast %cst_61 : f32 to vector<8x64xf32>
    %288 = arith.select %286, %274, %287 : vector<8x64xi1>, vector<8x64xf32>
    %289 = arith.index_cast %234 : i32 to index
    %c0_62 = arith.constant 0 : index
    %290 = vector.load %arg18[%289, %c0_62] : memref<64x64xf32, #tpu.memory_space<vmem>>, vector<8x64xf32>
    tpu.vector_store %arg18[%289, %c0_62], %288 {strides = array<i32>} : memref<64x64xf32, #tpu.memory_space<vmem>>, vector<8x64xf32>,
    %291 = vector.shape_cast %276 : vector<8x1xi1> to vector<8x1xi1>
    %292 = vector.broadcast %291 : vector<8x1xi1> to vector<8x64xi1>
    %293 = arith.select %292, %256, %220 : vector<8x64xi1>, vector<8x64xf32>
    %294 = vector.shape_cast %276 : vector<8x1xi1> to vector<8x1xi1>
    %295 = vector.broadcast %294 : vector<8x1xi1> to vector<8x64xi1>
    %296 = arith.select %295, %253, %223 : vector<8x64xi1>, vector<8x64xf32>
    %297 = vector.shape_cast %278 : vector<8x1xi1> to vector<8x1xi1>
    %298 = vector.broadcast %297 : vector<8x1xi1> to vector<8x64xi1>
    %299 = arith.select %298, %274, %226 : vector<8x64xi1>, vector<8x64xf32>
    %300 = vector.shape_cast %278 : vector<8x1xi1> to vector<8x1xi1>
    %301 = vector.broadcast %300 : vector<8x1xi1> to vector<8x64xi1>
    %302 = arith.select %301, %271, %229 : vector<8x64xi1>, vector<8x64xf32>
    %c4_i32 = arith.constant 4 : i32
    %c7_i32_63 = arith.constant 7 : i32
    %303 = arith.subi %c7_i32_63, %c4_i32 : i32
    %c8_i32_64 = arith.constant 8 : i32
    %304 = arith.muli %c4_i32, %c8_i32_64 : i32
    %305 = tpu.assume_multiple %304, 8 : i32
    %c8_i32_65 = arith.constant 8 : i32
    %306 = arith.muli %303, %c8_i32_65 : i32
    %307 = tpu.assume_multiple %306, 8 : i32
    %308 = arith.index_cast %305 : i32 to index
    %c0_66 = arith.constant 0 : index
    %309 = vector.load %arg16[%308, %c0_66] : memref<64x512xf32, #tpu.memory_space<vmem>>, vector<8x256xf32>
    %310 = arith.index_cast %307 : i32 to index
    %c256_67 = arith.constant 256 : index
    %311 = vector.load %arg16[%310, %c256_67] : memref<64x512xf32, #tpu.memory_space<vmem>>, vector<8x256xf32>
    %cst_68 = arith.constant dense<0.000000e+00> : vector<8x256xf32>
    %312 = tpu.matmul %293, %8, %cst_68 {dimension_numbers = #tpu.dot_dimension_numbers<[1], [0], [0], [1], [0, 0, 1, 1], [], []>} : vector<8x64xf32>, vector<64x256xf32>, vector<8x256xf32> -> vector<8x256xf32>
    %313 = arith.addf %309, %312 : vector<8x256xf32>
    %314 = vector.extract_strided_slice %313 {offsets = [0, 0], sizes = [8, 192], strides = [1, 1]} : vector<8x256xf32> to vector<8x192xf32>
    %315 = arith.negf %314 : vector<8x192xf32>
    %316 = math.exp %315 : vector<8x192xf32>
    %cst_69 = arith.constant 1.000000e+00 : f32
    %317 = vector.broadcast %cst_69 : f32 to vector<8x192xf32>
    %318 = arith.addf %317, %316 : vector<8x192xf32>
    %319 = arith.divf %317, %318 : vector<8x192xf32>
    %320 = vector.extract_strided_slice %313 {offsets = [0, 192], sizes = [8, 64], strides = [1, 1]} : vector<8x256xf32> to vector<8x64xf32>
    %321 = math.tanh %320 : vector<8x64xf32>
    %322 = vector.extract_strided_slice %319 {offsets = [0, 64], sizes = [8, 64], strides = [1, 1]} : vector<8x192xf32> to vector<8x64xf32>
    %323 = arith.mulf %322, %296 : vector<8x64xf32>
    %324 = vector.extract_strided_slice %319 {offsets = [0, 0], sizes = [8, 64], strides = [1, 1]} : vector<8x192xf32> to vector<8x64xf32>
    %325 = arith.mulf %324, %321 : vector<8x64xf32>
    %326 = arith.addf %323, %325 : vector<8x64xf32>
    %327 = vector.extract_strided_slice %319 {offsets = [0, 128], sizes = [8, 64], strides = [1, 1]} : vector<8x192xf32> to vector<8x64xf32>
    %328 = math.tanh %326 : vector<8x64xf32>
    %329 = arith.mulf %327, %328 : vector<8x64xf32>
    %cst_70 = arith.constant dense<0.000000e+00> : vector<8x256xf32>
    %330 = tpu.matmul %299, %9, %cst_70 {dimension_numbers = #tpu.dot_dimension_numbers<[1], [0], [0], [1], [0, 0, 1, 1], [], []>} : vector<8x64xf32>, vector<64x256xf32>, vector<8x256xf32> -> vector<8x256xf32>
    %331 = arith.addf %311, %330 : vector<8x256xf32>
    %332 = vector.extract_strided_slice %331 {offsets = [0, 0], sizes = [8, 192], strides = [1, 1]} : vector<8x256xf32> to vector<8x192xf32>
    %333 = arith.negf %332 : vector<8x192xf32>
    %334 = math.exp %333 : vector<8x192xf32>
    %cst_71 = arith.constant 1.000000e+00 : f32
    %335 = vector.broadcast %cst_71 : f32 to vector<8x192xf32>
    %336 = arith.addf %335, %334 : vector<8x192xf32>
    %337 = arith.divf %335, %336 : vector<8x192xf32>
    %338 = vector.extract_strided_slice %331 {offsets = [0, 192], sizes = [8, 64], strides = [1, 1]} : vector<8x256xf32> to vector<8x64xf32>
    %339 = math.tanh %338 : vector<8x64xf32>
    %340 = vector.extract_strided_slice %337 {offsets = [0, 64], sizes = [8, 64], strides = [1, 1]} : vector<8x192xf32> to vector<8x64xf32>
    %341 = arith.mulf %340, %302 : vector<8x64xf32>
    %342 = vector.extract_strided_slice %337 {offsets = [0, 0], sizes = [8, 64], strides = [1, 1]} : vector<8x192xf32> to vector<8x64xf32>
    %343 = arith.mulf %342, %339 : vector<8x64xf32>
    %344 = arith.addf %341, %343 : vector<8x64xf32>
    %345 = vector.extract_strided_slice %337 {offsets = [0, 128], sizes = [8, 64], strides = [1, 1]} : vector<8x192xf32> to vector<8x64xf32>
    %346 = math.tanh %344 : vector<8x64xf32>
    %347 = arith.mulf %345, %346 : vector<8x64xf32>
    %348 = vector.broadcast %c4_i32 : i32 to vector<8x1xi32>
    %349 = arith.cmpi slt, %348, %0 : vector<8x1xi32>
    %350 = vector.broadcast %303 : i32 to vector<8x1xi32>
    %351 = arith.cmpi slt, %350, %0 : vector<8x1xi32>
    %cst_72 = arith.constant 0.000000e+00 : f32
    %352 = vector.shape_cast %349 : vector<8x1xi1> to vector<8x1xi1>
    %353 = vector.broadcast %352 : vector<8x1xi1> to vector<8x64xi1>
    %354 = vector.broadcast %cst_72 : f32 to vector<8x64xf32>
    %355 = arith.select %353, %329, %354 : vector<8x64xi1>, vector<8x64xf32>
    %356 = arith.index_cast %305 : i32 to index
    %c0_73 = arith.constant 0 : index
    %357 = vector.load %arg17[%356, %c0_73] : memref<64x64xf32, #tpu.memory_space<vmem>>, vector<8x64xf32>
    tpu.vector_store %arg17[%356, %c0_73], %355 {strides = array<i32>} : memref<64x64xf32, #tpu.memory_space<vmem>>, vector<8x64xf32>,
    %cst_74 = arith.constant 0.000000e+00 : f32
    %358 = vector.shape_cast %351 : vector<8x1xi1> to vector<8x1xi1>
    %359 = vector.broadcast %358 : vector<8x1xi1> to vector<8x64xi1>
    %360 = vector.broadcast %cst_74 : f32 to vector<8x64xf32>
    %361 = arith.select %359, %347, %360 : vector<8x64xi1>, vector<8x64xf32>
    %362 = arith.index_cast %307 : i32 to index
    %c0_75 = arith.constant 0 : index
    %363 = vector.load %arg18[%362, %c0_75] : memref<64x64xf32, #tpu.memory_space<vmem>>, vector<8x64xf32>
    tpu.vector_store %arg18[%362, %c0_75], %361 {strides = array<i32>} : memref<64x64xf32, #tpu.memory_space<vmem>>, vector<8x64xf32>,
    %364 = vector.shape_cast %349 : vector<8x1xi1> to vector<8x1xi1>
    %365 = vector.broadcast %364 : vector<8x1xi1> to vector<8x64xi1>
    %366 = arith.select %365, %329, %293 : vector<8x64xi1>, vector<8x64xf32>
    %367 = vector.shape_cast %349 : vector<8x1xi1> to vector<8x1xi1>
    %368 = vector.broadcast %367 : vector<8x1xi1> to vector<8x64xi1>
    %369 = arith.select %368, %326, %296 : vector<8x64xi1>, vector<8x64xf32>
    %370 = vector.shape_cast %351 : vector<8x1xi1> to vector<8x1xi1>
    %371 = vector.broadcast %370 : vector<8x1xi1> to vector<8x64xi1>
    %372 = arith.select %371, %347, %299 : vector<8x64xi1>, vector<8x64xf32>
    %373 = vector.shape_cast %351 : vector<8x1xi1> to vector<8x1xi1>
    %374 = vector.broadcast %373 : vector<8x1xi1> to vector<8x64xi1>
    %375 = arith.select %374, %344, %302 : vector<8x64xi1>, vector<8x64xf32>
    %c5_i32 = arith.constant 5 : i32
    %c7_i32_76 = arith.constant 7 : i32
    %376 = arith.subi %c7_i32_76, %c5_i32 : i32
    %c8_i32_77 = arith.constant 8 : i32
    %377 = arith.muli %c5_i32, %c8_i32_77 : i32
    %378 = tpu.assume_multiple %377, 8 : i32
    %c8_i32_78 = arith.constant 8 : i32
    %379 = arith.muli %376, %c8_i32_78 : i32
    %380 = tpu.assume_multiple %379, 8 : i32
    %381 = arith.index_cast %378 : i32 to index
    %c0_79 = arith.constant 0 : index
    %382 = vector.load %arg16[%381, %c0_79] : memref<64x512xf32, #tpu.memory_space<vmem>>, vector<8x256xf32>
    %383 = arith.index_cast %380 : i32 to index
    %c256_80 = arith.constant 256 : index
    %384 = vector.load %arg16[%383, %c256_80] : memref<64x512xf32, #tpu.memory_space<vmem>>, vector<8x256xf32>
    %cst_81 = arith.constant dense<0.000000e+00> : vector<8x256xf32>
    %385 = tpu.matmul %366, %8, %cst_81 {dimension_numbers = #tpu.dot_dimension_numbers<[1], [0], [0], [1], [0, 0, 1, 1], [], []>} : vector<8x64xf32>, vector<64x256xf32>, vector<8x256xf32> -> vector<8x256xf32>
    %386 = arith.addf %382, %385 : vector<8x256xf32>
    %387 = vector.extract_strided_slice %386 {offsets = [0, 0], sizes = [8, 192], strides = [1, 1]} : vector<8x256xf32> to vector<8x192xf32>
    %388 = arith.negf %387 : vector<8x192xf32>
    %389 = math.exp %388 : vector<8x192xf32>
    %cst_82 = arith.constant 1.000000e+00 : f32
    %390 = vector.broadcast %cst_82 : f32 to vector<8x192xf32>
    %391 = arith.addf %390, %389 : vector<8x192xf32>
    %392 = arith.divf %390, %391 : vector<8x192xf32>
    %393 = vector.extract_strided_slice %386 {offsets = [0, 192], sizes = [8, 64], strides = [1, 1]} : vector<8x256xf32> to vector<8x64xf32>
    %394 = math.tanh %393 : vector<8x64xf32>
    %395 = vector.extract_strided_slice %392 {offsets = [0, 64], sizes = [8, 64], strides = [1, 1]} : vector<8x192xf32> to vector<8x64xf32>
    %396 = arith.mulf %395, %369 : vector<8x64xf32>
    %397 = vector.extract_strided_slice %392 {offsets = [0, 0], sizes = [8, 64], strides = [1, 1]} : vector<8x192xf32> to vector<8x64xf32>
    %398 = arith.mulf %397, %394 : vector<8x64xf32>
    %399 = arith.addf %396, %398 : vector<8x64xf32>
    %400 = vector.extract_strided_slice %392 {offsets = [0, 128], sizes = [8, 64], strides = [1, 1]} : vector<8x192xf32> to vector<8x64xf32>
    %401 = math.tanh %399 : vector<8x64xf32>
    %402 = arith.mulf %400, %401 : vector<8x64xf32>
    %cst_83 = arith.constant dense<0.000000e+00> : vector<8x256xf32>
    %403 = tpu.matmul %372, %9, %cst_83 {dimension_numbers = #tpu.dot_dimension_numbers<[1], [0], [0], [1], [0, 0, 1, 1], [], []>} : vector<8x64xf32>, vector<64x256xf32>, vector<8x256xf32> -> vector<8x256xf32>
    %404 = arith.addf %384, %403 : vector<8x256xf32>
    %405 = vector.extract_strided_slice %404 {offsets = [0, 0], sizes = [8, 192], strides = [1, 1]} : vector<8x256xf32> to vector<8x192xf32>
    %406 = arith.negf %405 : vector<8x192xf32>
    %407 = math.exp %406 : vector<8x192xf32>
    %cst_84 = arith.constant 1.000000e+00 : f32
    %408 = vector.broadcast %cst_84 : f32 to vector<8x192xf32>
    %409 = arith.addf %408, %407 : vector<8x192xf32>
    %410 = arith.divf %408, %409 : vector<8x192xf32>
    %411 = vector.extract_strided_slice %404 {offsets = [0, 192], sizes = [8, 64], strides = [1, 1]} : vector<8x256xf32> to vector<8x64xf32>
    %412 = math.tanh %411 : vector<8x64xf32>
    %413 = vector.extract_strided_slice %410 {offsets = [0, 64], sizes = [8, 64], strides = [1, 1]} : vector<8x192xf32> to vector<8x64xf32>
    %414 = arith.mulf %413, %375 : vector<8x64xf32>
    %415 = vector.extract_strided_slice %410 {offsets = [0, 0], sizes = [8, 64], strides = [1, 1]} : vector<8x192xf32> to vector<8x64xf32>
    %416 = arith.mulf %415, %412 : vector<8x64xf32>
    %417 = arith.addf %414, %416 : vector<8x64xf32>
    %418 = vector.extract_strided_slice %410 {offsets = [0, 128], sizes = [8, 64], strides = [1, 1]} : vector<8x192xf32> to vector<8x64xf32>
    %419 = math.tanh %417 : vector<8x64xf32>
    %420 = arith.mulf %418, %419 : vector<8x64xf32>
    %421 = vector.broadcast %c5_i32 : i32 to vector<8x1xi32>
    %422 = arith.cmpi slt, %421, %0 : vector<8x1xi32>
    %423 = vector.broadcast %376 : i32 to vector<8x1xi32>
    %424 = arith.cmpi slt, %423, %0 : vector<8x1xi32>
    %cst_85 = arith.constant 0.000000e+00 : f32
    %425 = vector.shape_cast %422 : vector<8x1xi1> to vector<8x1xi1>
    %426 = vector.broadcast %425 : vector<8x1xi1> to vector<8x64xi1>
    %427 = vector.broadcast %cst_85 : f32 to vector<8x64xf32>
    %428 = arith.select %426, %402, %427 : vector<8x64xi1>, vector<8x64xf32>
    %429 = arith.index_cast %378 : i32 to index
    %c0_86 = arith.constant 0 : index
    %430 = vector.load %arg17[%429, %c0_86] : memref<64x64xf32, #tpu.memory_space<vmem>>, vector<8x64xf32>
    tpu.vector_store %arg17[%429, %c0_86], %428 {strides = array<i32>} : memref<64x64xf32, #tpu.memory_space<vmem>>, vector<8x64xf32>,
    %cst_87 = arith.constant 0.000000e+00 : f32
    %431 = vector.shape_cast %424 : vector<8x1xi1> to vector<8x1xi1>
    %432 = vector.broadcast %431 : vector<8x1xi1> to vector<8x64xi1>
    %433 = vector.broadcast %cst_87 : f32 to vector<8x64xf32>
    %434 = arith.select %432, %420, %433 : vector<8x64xi1>, vector<8x64xf32>
    %435 = arith.index_cast %380 : i32 to index
    %c0_88 = arith.constant 0 : index
    %436 = vector.load %arg18[%435, %c0_88] : memref<64x64xf32, #tpu.memory_space<vmem>>, vector<8x64xf32>
    tpu.vector_store %arg18[%435, %c0_88], %434 {strides = array<i32>} : memref<64x64xf32, #tpu.memory_space<vmem>>, vector<8x64xf32>,
    %437 = vector.shape_cast %422 : vector<8x1xi1> to vector<8x1xi1>
    %438 = vector.broadcast %437 : vector<8x1xi1> to vector<8x64xi1>
    %439 = arith.select %438, %402, %366 : vector<8x64xi1>, vector<8x64xf32>
    %440 = vector.shape_cast %422 : vector<8x1xi1> to vector<8x1xi1>
    %441 = vector.broadcast %440 : vector<8x1xi1> to vector<8x64xi1>
    %442 = arith.select %441, %399, %369 : vector<8x64xi1>, vector<8x64xf32>
    %443 = vector.shape_cast %424 : vector<8x1xi1> to vector<8x1xi1>
    %444 = vector.broadcast %443 : vector<8x1xi1> to vector<8x64xi1>
    %445 = arith.select %444, %420, %372 : vector<8x64xi1>, vector<8x64xf32>
    %446 = vector.shape_cast %424 : vector<8x1xi1> to vector<8x1xi1>
    %447 = vector.broadcast %446 : vector<8x1xi1> to vector<8x64xi1>
    %448 = arith.select %447, %417, %375 : vector<8x64xi1>, vector<8x64xf32>
    %c6_i32 = arith.constant 6 : i32
    %c7_i32_89 = arith.constant 7 : i32
    %449 = arith.subi %c7_i32_89, %c6_i32 : i32
    %c8_i32_90 = arith.constant 8 : i32
    %450 = arith.muli %c6_i32, %c8_i32_90 : i32
    %451 = tpu.assume_multiple %450, 8 : i32
    %c8_i32_91 = arith.constant 8 : i32
    %452 = arith.muli %449, %c8_i32_91 : i32
    %453 = tpu.assume_multiple %452, 8 : i32
    %454 = arith.index_cast %451 : i32 to index
    %c0_92 = arith.constant 0 : index
    %455 = vector.load %arg16[%454, %c0_92] : memref<64x512xf32, #tpu.memory_space<vmem>>, vector<8x256xf32>
    %456 = arith.index_cast %453 : i32 to index
    %c256_93 = arith.constant 256 : index
    %457 = vector.load %arg16[%456, %c256_93] : memref<64x512xf32, #tpu.memory_space<vmem>>, vector<8x256xf32>
    %cst_94 = arith.constant dense<0.000000e+00> : vector<8x256xf32>
    %458 = tpu.matmul %439, %8, %cst_94 {dimension_numbers = #tpu.dot_dimension_numbers<[1], [0], [0], [1], [0, 0, 1, 1], [], []>} : vector<8x64xf32>, vector<64x256xf32>, vector<8x256xf32> -> vector<8x256xf32>
    %459 = arith.addf %455, %458 : vector<8x256xf32>
    %460 = vector.extract_strided_slice %459 {offsets = [0, 0], sizes = [8, 192], strides = [1, 1]} : vector<8x256xf32> to vector<8x192xf32>
    %461 = arith.negf %460 : vector<8x192xf32>
    %462 = math.exp %461 : vector<8x192xf32>
    %cst_95 = arith.constant 1.000000e+00 : f32
    %463 = vector.broadcast %cst_95 : f32 to vector<8x192xf32>
    %464 = arith.addf %463, %462 : vector<8x192xf32>
    %465 = arith.divf %463, %464 : vector<8x192xf32>
    %466 = vector.extract_strided_slice %459 {offsets = [0, 192], sizes = [8, 64], strides = [1, 1]} : vector<8x256xf32> to vector<8x64xf32>
    %467 = math.tanh %466 : vector<8x64xf32>
    %468 = vector.extract_strided_slice %465 {offsets = [0, 64], sizes = [8, 64], strides = [1, 1]} : vector<8x192xf32> to vector<8x64xf32>
    %469 = arith.mulf %468, %442 : vector<8x64xf32>
    %470 = vector.extract_strided_slice %465 {offsets = [0, 0], sizes = [8, 64], strides = [1, 1]} : vector<8x192xf32> to vector<8x64xf32>
    %471 = arith.mulf %470, %467 : vector<8x64xf32>
    %472 = arith.addf %469, %471 : vector<8x64xf32>
    %473 = vector.extract_strided_slice %465 {offsets = [0, 128], sizes = [8, 64], strides = [1, 1]} : vector<8x192xf32> to vector<8x64xf32>
    %474 = math.tanh %472 : vector<8x64xf32>
    %475 = arith.mulf %473, %474 : vector<8x64xf32>
    %cst_96 = arith.constant dense<0.000000e+00> : vector<8x256xf32>
    %476 = tpu.matmul %445, %9, %cst_96 {dimension_numbers = #tpu.dot_dimension_numbers<[1], [0], [0], [1], [0, 0, 1, 1], [], []>} : vector<8x64xf32>, vector<64x256xf32>, vector<8x256xf32> -> vector<8x256xf32>
    %477 = arith.addf %457, %476 : vector<8x256xf32>
    %478 = vector.extract_strided_slice %477 {offsets = [0, 0], sizes = [8, 192], strides = [1, 1]} : vector<8x256xf32> to vector<8x192xf32>
    %479 = arith.negf %478 : vector<8x192xf32>
    %480 = math.exp %479 : vector<8x192xf32>
    %cst_97 = arith.constant 1.000000e+00 : f32
    %481 = vector.broadcast %cst_97 : f32 to vector<8x192xf32>
    %482 = arith.addf %481, %480 : vector<8x192xf32>
    %483 = arith.divf %481, %482 : vector<8x192xf32>
    %484 = vector.extract_strided_slice %477 {offsets = [0, 192], sizes = [8, 64], strides = [1, 1]} : vector<8x256xf32> to vector<8x64xf32>
    %485 = math.tanh %484 : vector<8x64xf32>
    %486 = vector.extract_strided_slice %483 {offsets = [0, 64], sizes = [8, 64], strides = [1, 1]} : vector<8x192xf32> to vector<8x64xf32>
    %487 = arith.mulf %486, %448 : vector<8x64xf32>
    %488 = vector.extract_strided_slice %483 {offsets = [0, 0], sizes = [8, 64], strides = [1, 1]} : vector<8x192xf32> to vector<8x64xf32>
    %489 = arith.mulf %488, %485 : vector<8x64xf32>
    %490 = arith.addf %487, %489 : vector<8x64xf32>
    %491 = vector.extract_strided_slice %483 {offsets = [0, 128], sizes = [8, 64], strides = [1, 1]} : vector<8x192xf32> to vector<8x64xf32>
    %492 = math.tanh %490 : vector<8x64xf32>
    %493 = arith.mulf %491, %492 : vector<8x64xf32>
    %494 = vector.broadcast %c6_i32 : i32 to vector<8x1xi32>
    %495 = arith.cmpi slt, %494, %0 : vector<8x1xi32>
    %496 = vector.broadcast %449 : i32 to vector<8x1xi32>
    %497 = arith.cmpi slt, %496, %0 : vector<8x1xi32>
    %cst_98 = arith.constant 0.000000e+00 : f32
    %498 = vector.shape_cast %495 : vector<8x1xi1> to vector<8x1xi1>
    %499 = vector.broadcast %498 : vector<8x1xi1> to vector<8x64xi1>
    %500 = vector.broadcast %cst_98 : f32 to vector<8x64xf32>
    %501 = arith.select %499, %475, %500 : vector<8x64xi1>, vector<8x64xf32>
    %502 = arith.index_cast %451 : i32 to index
    %c0_99 = arith.constant 0 : index
    %503 = vector.load %arg17[%502, %c0_99] : memref<64x64xf32, #tpu.memory_space<vmem>>, vector<8x64xf32>
    tpu.vector_store %arg17[%502, %c0_99], %501 {strides = array<i32>} : memref<64x64xf32, #tpu.memory_space<vmem>>, vector<8x64xf32>,
    %cst_100 = arith.constant 0.000000e+00 : f32
    %504 = vector.shape_cast %497 : vector<8x1xi1> to vector<8x1xi1>
    %505 = vector.broadcast %504 : vector<8x1xi1> to vector<8x64xi1>
    %506 = vector.broadcast %cst_100 : f32 to vector<8x64xf32>
    %507 = arith.select %505, %493, %506 : vector<8x64xi1>, vector<8x64xf32>
    %508 = arith.index_cast %453 : i32 to index
    %c0_101 = arith.constant 0 : index
    %509 = vector.load %arg18[%508, %c0_101] : memref<64x64xf32, #tpu.memory_space<vmem>>, vector<8x64xf32>
    tpu.vector_store %arg18[%508, %c0_101], %507 {strides = array<i32>} : memref<64x64xf32, #tpu.memory_space<vmem>>, vector<8x64xf32>,
    %510 = vector.shape_cast %495 : vector<8x1xi1> to vector<8x1xi1>
    %511 = vector.broadcast %510 : vector<8x1xi1> to vector<8x64xi1>
    %512 = arith.select %511, %475, %439 : vector<8x64xi1>, vector<8x64xf32>
    %513 = vector.shape_cast %495 : vector<8x1xi1> to vector<8x1xi1>
    %514 = vector.broadcast %513 : vector<8x1xi1> to vector<8x64xi1>
    %515 = arith.select %514, %472, %442 : vector<8x64xi1>, vector<8x64xf32>
    %516 = vector.shape_cast %497 : vector<8x1xi1> to vector<8x1xi1>
    %517 = vector.broadcast %516 : vector<8x1xi1> to vector<8x64xi1>
    %518 = arith.select %517, %493, %445 : vector<8x64xi1>, vector<8x64xf32>
    %519 = vector.shape_cast %497 : vector<8x1xi1> to vector<8x1xi1>
    %520 = vector.broadcast %519 : vector<8x1xi1> to vector<8x64xi1>
    %521 = arith.select %520, %490, %448 : vector<8x64xi1>, vector<8x64xf32>
    %c7_i32_102 = arith.constant 7 : i32
    %c7_i32_103 = arith.constant 7 : i32
    %522 = arith.subi %c7_i32_103, %c7_i32_102 : i32
    %c8_i32_104 = arith.constant 8 : i32
    %523 = arith.muli %c7_i32_102, %c8_i32_104 : i32
    %524 = tpu.assume_multiple %523, 8 : i32
    %c8_i32_105 = arith.constant 8 : i32
    %525 = arith.muli %522, %c8_i32_105 : i32
    %526 = tpu.assume_multiple %525, 8 : i32
    %527 = arith.index_cast %524 : i32 to index
    %c0_106 = arith.constant 0 : index
    %528 = vector.load %arg16[%527, %c0_106] : memref<64x512xf32, #tpu.memory_space<vmem>>, vector<8x256xf32>
    %529 = arith.index_cast %526 : i32 to index
    %c256_107 = arith.constant 256 : index
    %530 = vector.load %arg16[%529, %c256_107] : memref<64x512xf32, #tpu.memory_space<vmem>>, vector<8x256xf32>
    %cst_108 = arith.constant dense<0.000000e+00> : vector<8x256xf32>
    %531 = tpu.matmul %512, %8, %cst_108 {dimension_numbers = #tpu.dot_dimension_numbers<[1], [0], [0], [1], [0, 0, 1, 1], [], []>} : vector<8x64xf32>, vector<64x256xf32>, vector<8x256xf32> -> vector<8x256xf32>
    %532 = arith.addf %528, %531 : vector<8x256xf32>
    %533 = vector.extract_strided_slice %532 {offsets = [0, 0], sizes = [8, 192], strides = [1, 1]} : vector<8x256xf32> to vector<8x192xf32>
    %534 = arith.negf %533 : vector<8x192xf32>
    %535 = math.exp %534 : vector<8x192xf32>
    %cst_109 = arith.constant 1.000000e+00 : f32
    %536 = vector.broadcast %cst_109 : f32 to vector<8x192xf32>
    %537 = arith.addf %536, %535 : vector<8x192xf32>
    %538 = arith.divf %536, %537 : vector<8x192xf32>
    %539 = vector.extract_strided_slice %532 {offsets = [0, 192], sizes = [8, 64], strides = [1, 1]} : vector<8x256xf32> to vector<8x64xf32>
    %540 = math.tanh %539 : vector<8x64xf32>
    %541 = vector.extract_strided_slice %538 {offsets = [0, 64], sizes = [8, 64], strides = [1, 1]} : vector<8x192xf32> to vector<8x64xf32>
    %542 = arith.mulf %541, %515 : vector<8x64xf32>
    %543 = vector.extract_strided_slice %538 {offsets = [0, 0], sizes = [8, 64], strides = [1, 1]} : vector<8x192xf32> to vector<8x64xf32>
    %544 = arith.mulf %543, %540 : vector<8x64xf32>
    %545 = arith.addf %542, %544 : vector<8x64xf32>
    %546 = vector.extract_strided_slice %538 {offsets = [0, 128], sizes = [8, 64], strides = [1, 1]} : vector<8x192xf32> to vector<8x64xf32>
    %547 = math.tanh %545 : vector<8x64xf32>
    %548 = arith.mulf %546, %547 : vector<8x64xf32>
    %cst_110 = arith.constant dense<0.000000e+00> : vector<8x256xf32>
    %549 = tpu.matmul %518, %9, %cst_110 {dimension_numbers = #tpu.dot_dimension_numbers<[1], [0], [0], [1], [0, 0, 1, 1], [], []>} : vector<8x64xf32>, vector<64x256xf32>, vector<8x256xf32> -> vector<8x256xf32>
    %550 = arith.addf %530, %549 : vector<8x256xf32>
    %551 = vector.extract_strided_slice %550 {offsets = [0, 0], sizes = [8, 192], strides = [1, 1]} : vector<8x256xf32> to vector<8x192xf32>
    %552 = arith.negf %551 : vector<8x192xf32>
    %553 = math.exp %552 : vector<8x192xf32>
    %cst_111 = arith.constant 1.000000e+00 : f32
    %554 = vector.broadcast %cst_111 : f32 to vector<8x192xf32>
    %555 = arith.addf %554, %553 : vector<8x192xf32>
    %556 = arith.divf %554, %555 : vector<8x192xf32>
    %557 = vector.extract_strided_slice %550 {offsets = [0, 192], sizes = [8, 64], strides = [1, 1]} : vector<8x256xf32> to vector<8x64xf32>
    %558 = math.tanh %557 : vector<8x64xf32>
    %559 = vector.extract_strided_slice %556 {offsets = [0, 64], sizes = [8, 64], strides = [1, 1]} : vector<8x192xf32> to vector<8x64xf32>
    %560 = arith.mulf %559, %521 : vector<8x64xf32>
    %561 = vector.extract_strided_slice %556 {offsets = [0, 0], sizes = [8, 64], strides = [1, 1]} : vector<8x192xf32> to vector<8x64xf32>
    %562 = arith.mulf %561, %558 : vector<8x64xf32>
    %563 = arith.addf %560, %562 : vector<8x64xf32>
    %564 = vector.extract_strided_slice %556 {offsets = [0, 128], sizes = [8, 64], strides = [1, 1]} : vector<8x192xf32> to vector<8x64xf32>
    %565 = math.tanh %563 : vector<8x64xf32>
    %566 = arith.mulf %564, %565 : vector<8x64xf32>
    %567 = vector.broadcast %c7_i32_102 : i32 to vector<8x1xi32>
    %568 = arith.cmpi slt, %567, %0 : vector<8x1xi32>
    %569 = vector.broadcast %522 : i32 to vector<8x1xi32>
    %570 = arith.cmpi slt, %569, %0 : vector<8x1xi32>
    %cst_112 = arith.constant 0.000000e+00 : f32
    %571 = vector.shape_cast %568 : vector<8x1xi1> to vector<8x1xi1>
    %572 = vector.broadcast %571 : vector<8x1xi1> to vector<8x64xi1>
    %573 = vector.broadcast %cst_112 : f32 to vector<8x64xf32>
    %574 = arith.select %572, %548, %573 : vector<8x64xi1>, vector<8x64xf32>
    %575 = arith.index_cast %524 : i32 to index
    %c0_113 = arith.constant 0 : index
    %576 = vector.load %arg17[%575, %c0_113] : memref<64x64xf32, #tpu.memory_space<vmem>>, vector<8x64xf32>
    tpu.vector_store %arg17[%575, %c0_113], %574 {strides = array<i32>} : memref<64x64xf32, #tpu.memory_space<vmem>>, vector<8x64xf32>,
    %cst_114 = arith.constant 0.000000e+00 : f32
    %577 = vector.shape_cast %570 : vector<8x1xi1> to vector<8x1xi1>
    %578 = vector.broadcast %577 : vector<8x1xi1> to vector<8x64xi1>
    %579 = vector.broadcast %cst_114 : f32 to vector<8x64xf32>
    %580 = arith.select %578, %566, %579 : vector<8x64xi1>, vector<8x64xf32>
    %581 = arith.index_cast %526 : i32 to index
    %c0_115 = arith.constant 0 : index
    %582 = vector.load %arg18[%581, %c0_115] : memref<64x64xf32, #tpu.memory_space<vmem>>, vector<8x64xf32>
    tpu.vector_store %arg18[%581, %c0_115], %580 {strides = array<i32>} : memref<64x64xf32, #tpu.memory_space<vmem>>, vector<8x64xf32>,
    %583 = vector.shape_cast %568 : vector<8x1xi1> to vector<8x1xi1>
    %584 = vector.broadcast %583 : vector<8x1xi1> to vector<8x64xi1>
    %585 = arith.select %584, %548, %512 : vector<8x64xi1>, vector<8x64xf32>
    %586 = vector.shape_cast %568 : vector<8x1xi1> to vector<8x1xi1>
    %587 = vector.broadcast %586 : vector<8x1xi1> to vector<8x64xi1>
    %588 = arith.select %587, %545, %515 : vector<8x64xi1>, vector<8x64xf32>
    %589 = vector.shape_cast %570 : vector<8x1xi1> to vector<8x1xi1>
    %590 = vector.broadcast %589 : vector<8x1xi1> to vector<8x64xi1>
    %591 = arith.select %590, %566, %518 : vector<8x64xi1>, vector<8x64xf32>
    %592 = vector.shape_cast %570 : vector<8x1xi1> to vector<8x1xi1>
    %593 = vector.broadcast %592 : vector<8x1xi1> to vector<8x64xi1>
    %594 = arith.select %593, %563, %521 : vector<8x64xi1>, vector<8x64xf32>
    %c8_i32_116 = arith.constant 8 : i32
    %c0_117 = arith.constant 0 : index
    %c0_118 = arith.constant 0 : index
    %595 = vector.load %arg17[%c0_117, %c0_118] : memref<64x64xf32, #tpu.memory_space<vmem>>, vector<64x64xf32>
    %c0_119 = arith.constant 0 : index
    %c0_120 = arith.constant 0 : index
    %596 = vector.load %arg7[%c0_119, %c0_120] : memref<64x512xf32, #tpu.memory_space<vmem>>, vector<64x512xf32>
    %cst_121 = arith.constant dense<0.000000e+00> : vector<64x512xf32>
    %597 = tpu.matmul %595, %596, %cst_121 {dimension_numbers = #tpu.dot_dimension_numbers<[1], [0], [0], [1], [0, 0, 1, 1], [], []>} : vector<64x64xf32>, vector<64x512xf32>, vector<64x512xf32> -> vector<64x512xf32>
    %c0_122 = arith.constant 0 : index
    %c0_123 = arith.constant 0 : index
    %598 = vector.load %arg18[%c0_122, %c0_123] : memref<64x64xf32, #tpu.memory_space<vmem>>, vector<64x64xf32>
    %c0_124 = arith.constant 0 : index
    %c0_125 = arith.constant 0 : index
    %599 = vector.load %arg8[%c0_124, %c0_125] : memref<64x512xf32, #tpu.memory_space<vmem>>, vector<64x512xf32>
    %cst_126 = arith.constant dense<0.000000e+00> : vector<64x512xf32>
    %600 = tpu.matmul %598, %599, %cst_126 {dimension_numbers = #tpu.dot_dimension_numbers<[1], [0], [0], [1], [0, 0, 1, 1], [], []>} : vector<64x64xf32>, vector<64x512xf32>, vector<64x512xf32> -> vector<64x512xf32>
    %601 = arith.addf %597, %600 : vector<64x512xf32>
    %c0_127 = arith.constant 0 : index
    %c0_128 = arith.constant 0 : index
    %602 = vector.load %arg11[%c0_127, %c0_128] : memref<1x512xf32, #tpu.memory_space<vmem>>, vector<1x512xf32>
    %603 = vector.broadcast %602 : vector<1x512xf32> to vector<64x512xf32>
    %604 = arith.addf %601, %603 : vector<64x512xf32>
    %c0_129 = arith.constant 0 : index
    %c0_130 = arith.constant 0 : index
    %605 = vector.load %arg16[%c0_129, %c0_130] : memref<64x512xf32, #tpu.memory_space<vmem>>, vector<64x512xf32>
    tpu.vector_store %arg16[%c0_129, %c0_130], %604 {strides = array<i32>} : memref<64x512xf32, #tpu.memory_space<vmem>>, vector<64x512xf32>,
    %c0_131 = arith.constant 0 : index
    %c0_132 = arith.constant 0 : index
    %606 = vector.load %arg9[%c0_131, %c0_132] : memref<64x256xf32, #tpu.memory_space<vmem>>, vector<64x256xf32>
    %c0_133 = arith.constant 0 : index
    %c0_134 = arith.constant 0 : index
    %607 = vector.load %arg10[%c0_133, %c0_134] : memref<64x256xf32, #tpu.memory_space<vmem>>, vector<64x256xf32>
    %cst_135 = arith.constant 0.000000e+00 : f32
    %608 = vector.broadcast %cst_135 : f32 to vector<8x64xf32>
    %c0_i32_136 = arith.constant 0 : i32
    %c7_i32_137 = arith.constant 7 : i32
    %609 = arith.subi %c7_i32_137, %c0_i32_136 : i32
    %c8_i32_138 = arith.constant 8 : i32
    %610 = arith.muli %c0_i32_136, %c8_i32_138 : i32
    %611 = tpu.assume_multiple %610, 8 : i32
    %c8_i32_139 = arith.constant 8 : i32
    %612 = arith.muli %609, %c8_i32_139 : i32
    %613 = tpu.assume_multiple %612, 8 : i32
    %614 = arith.index_cast %611 : i32 to index
    %c0_140 = arith.constant 0 : index
    %615 = vector.load %arg16[%614, %c0_140] : memref<64x512xf32, #tpu.memory_space<vmem>>, vector<8x256xf32>
    %616 = arith.index_cast %613 : i32 to index
    %c256_141 = arith.constant 256 : index
    %617 = vector.load %arg16[%616, %c256_141] : memref<64x512xf32, #tpu.memory_space<vmem>>, vector<8x256xf32>
    %cst_142 = arith.constant dense<0.000000e+00> : vector<8x256xf32>
    %618 = tpu.matmul %608, %606, %cst_142 {dimension_numbers = #tpu.dot_dimension_numbers<[1], [0], [0], [1], [0, 0, 1, 1], [], []>} : vector<8x64xf32>, vector<64x256xf32>, vector<8x256xf32> -> vector<8x256xf32>
    %619 = arith.addf %615, %618 : vector<8x256xf32>
    %620 = vector.extract_strided_slice %619 {offsets = [0, 0], sizes = [8, 192], strides = [1, 1]} : vector<8x256xf32> to vector<8x192xf32>
    %621 = arith.negf %620 : vector<8x192xf32>
    %622 = math.exp %621 : vector<8x192xf32>
    %cst_143 = arith.constant 1.000000e+00 : f32
    %623 = vector.broadcast %cst_143 : f32 to vector<8x192xf32>
    %624 = arith.addf %623, %622 : vector<8x192xf32>
    %625 = arith.divf %623, %624 : vector<8x192xf32>
    %626 = vector.extract_strided_slice %619 {offsets = [0, 192], sizes = [8, 64], strides = [1, 1]} : vector<8x256xf32> to vector<8x64xf32>
    %627 = math.tanh %626 : vector<8x64xf32>
    %628 = vector.extract_strided_slice %625 {offsets = [0, 64], sizes = [8, 64], strides = [1, 1]} : vector<8x192xf32> to vector<8x64xf32>
    %629 = arith.mulf %628, %608 : vector<8x64xf32>
    %630 = vector.extract_strided_slice %625 {offsets = [0, 0], sizes = [8, 64], strides = [1, 1]} : vector<8x192xf32> to vector<8x64xf32>
    %631 = arith.mulf %630, %627 : vector<8x64xf32>
    %632 = arith.addf %629, %631 : vector<8x64xf32>
    %633 = vector.extract_strided_slice %625 {offsets = [0, 128], sizes = [8, 64], strides = [1, 1]} : vector<8x192xf32> to vector<8x64xf32>
    %634 = math.tanh %632 : vector<8x64xf32>
    %635 = arith.mulf %633, %634 : vector<8x64xf32>
    %cst_144 = arith.constant dense<0.000000e+00> : vector<8x256xf32>
    %636 = tpu.matmul %608, %607, %cst_144 {dimension_numbers = #tpu.dot_dimension_numbers<[1], [0], [0], [1], [0, 0, 1, 1], [], []>} : vector<8x64xf32>, vector<64x256xf32>, vector<8x256xf32> -> vector<8x256xf32>
    %637 = arith.addf %617, %636 : vector<8x256xf32>
    %638 = vector.extract_strided_slice %637 {offsets = [0, 0], sizes = [8, 192], strides = [1, 1]} : vector<8x256xf32> to vector<8x192xf32>
    %639 = arith.negf %638 : vector<8x192xf32>
    %640 = math.exp %639 : vector<8x192xf32>
    %cst_145 = arith.constant 1.000000e+00 : f32
    %641 = vector.broadcast %cst_145 : f32 to vector<8x192xf32>
    %642 = arith.addf %641, %640 : vector<8x192xf32>
    %643 = arith.divf %641, %642 : vector<8x192xf32>
    %644 = vector.extract_strided_slice %637 {offsets = [0, 192], sizes = [8, 64], strides = [1, 1]} : vector<8x256xf32> to vector<8x64xf32>
    %645 = math.tanh %644 : vector<8x64xf32>
    %646 = vector.extract_strided_slice %643 {offsets = [0, 64], sizes = [8, 64], strides = [1, 1]} : vector<8x192xf32> to vector<8x64xf32>
    %647 = arith.mulf %646, %608 : vector<8x64xf32>
    %648 = vector.extract_strided_slice %643 {offsets = [0, 0], sizes = [8, 64], strides = [1, 1]} : vector<8x192xf32> to vector<8x64xf32>
    %649 = arith.mulf %648, %645 : vector<8x64xf32>
    %650 = arith.addf %647, %649 : vector<8x64xf32>
    %651 = vector.extract_strided_slice %643 {offsets = [0, 128], sizes = [8, 64], strides = [1, 1]} : vector<8x192xf32> to vector<8x64xf32>
    %652 = math.tanh %650 : vector<8x64xf32>
    %653 = arith.mulf %651, %652 : vector<8x64xf32>
    %654 = vector.broadcast %c0_i32_136 : i32 to vector<8x1xi32>
    %655 = arith.cmpi slt, %654, %0 : vector<8x1xi32>
    %656 = vector.broadcast %609 : i32 to vector<8x1xi32>
    %657 = arith.cmpi slt, %656, %0 : vector<8x1xi32>
    %cst_146 = arith.constant 0.000000e+00 : f32
    %658 = vector.shape_cast %655 : vector<8x1xi1> to vector<8x1xi1>
    %659 = vector.broadcast %658 : vector<8x1xi1> to vector<8x64xi1>
    %660 = vector.broadcast %cst_146 : f32 to vector<8x64xf32>
    %661 = arith.select %659, %635, %660 : vector<8x64xi1>, vector<8x64xf32>
    %662 = arith.index_cast %c0_i32_136 : i32 to index
    %c0_147 = arith.constant 0 : index
    %c0_148 = arith.constant 0 : index
    %663 = vector.load %arg19[%662, %c0_147, %c0_148] : memref<8x8x64xf32, #tpu.memory_space<vmem>>, vector<1x8x64xf32>
    %664 = vector.shape_cast %663 : vector<1x8x64xf32> to vector<8x64xf32>
    %665 = vector.shape_cast %661 : vector<8x64xf32> to vector<1x8x64xf32>
    tpu.vector_store %arg19[%662, %c0_147, %c0_148], %665 {strides = array<i32>} : memref<8x8x64xf32, #tpu.memory_space<vmem>>, vector<1x8x64xf32>,
    %cst_149 = arith.constant 0.000000e+00 : f32
    %666 = vector.shape_cast %657 : vector<8x1xi1> to vector<8x1xi1>
    %667 = vector.broadcast %666 : vector<8x1xi1> to vector<8x64xi1>
    %668 = vector.broadcast %cst_149 : f32 to vector<8x64xf32>
    %669 = arith.select %667, %653, %668 : vector<8x64xi1>, vector<8x64xf32>
    %670 = arith.index_cast %609 : i32 to index
    %c0_150 = arith.constant 0 : index
    %c0_151 = arith.constant 0 : index
    %671 = vector.load %arg20[%670, %c0_150, %c0_151] : memref<8x8x64xf32, #tpu.memory_space<vmem>>, vector<1x8x64xf32>
    %672 = vector.shape_cast %671 : vector<1x8x64xf32> to vector<8x64xf32>
    %673 = vector.shape_cast %669 : vector<8x64xf32> to vector<1x8x64xf32>
    tpu.vector_store %arg20[%670, %c0_150, %c0_151], %673 {strides = array<i32>} : memref<8x8x64xf32, #tpu.memory_space<vmem>>, vector<1x8x64xf32>,
    %674 = vector.shape_cast %655 : vector<8x1xi1> to vector<8x1xi1>
    %675 = vector.broadcast %674 : vector<8x1xi1> to vector<8x64xi1>
    %676 = arith.select %675, %635, %608 : vector<8x64xi1>, vector<8x64xf32>
    %677 = vector.shape_cast %655 : vector<8x1xi1> to vector<8x1xi1>
    %678 = vector.broadcast %677 : vector<8x1xi1> to vector<8x64xi1>
    %679 = arith.select %678, %632, %608 : vector<8x64xi1>, vector<8x64xf32>
    %680 = vector.shape_cast %657 : vector<8x1xi1> to vector<8x1xi1>
    %681 = vector.broadcast %680 : vector<8x1xi1> to vector<8x64xi1>
    %682 = arith.select %681, %653, %608 : vector<8x64xi1>, vector<8x64xf32>
    %683 = vector.shape_cast %657 : vector<8x1xi1> to vector<8x1xi1>
    %684 = vector.broadcast %683 : vector<8x1xi1> to vector<8x64xi1>
    %685 = arith.select %684, %650, %608 : vector<8x64xi1>, vector<8x64xf32>
    %c1_i32_152 = arith.constant 1 : i32
    %c7_i32_153 = arith.constant 7 : i32
    %686 = arith.subi %c7_i32_153, %c1_i32_152 : i32
    %c8_i32_154 = arith.constant 8 : i32
    %687 = arith.muli %c1_i32_152, %c8_i32_154 : i32
    %688 = tpu.assume_multiple %687, 8 : i32
    %c8_i32_155 = arith.constant 8 : i32
    %689 = arith.muli %686, %c8_i32_155 : i32
    %690 = tpu.assume_multiple %689, 8 : i32
    %691 = arith.index_cast %688 : i32 to index
    %c0_156 = arith.constant 0 : index
    %692 = vector.load %arg16[%691, %c0_156] : memref<64x512xf32, #tpu.memory_space<vmem>>, vector<8x256xf32>
    %693 = arith.index_cast %690 : i32 to index
    %c256_157 = arith.constant 256 : index
    %694 = vector.load %arg16[%693, %c256_157] : memref<64x512xf32, #tpu.memory_space<vmem>>, vector<8x256xf32>
    %cst_158 = arith.constant dense<0.000000e+00> : vector<8x256xf32>
    %695 = tpu.matmul %676, %606, %cst_158 {dimension_numbers = #tpu.dot_dimension_numbers<[1], [0], [0], [1], [0, 0, 1, 1], [], []>} : vector<8x64xf32>, vector<64x256xf32>, vector<8x256xf32> -> vector<8x256xf32>
    %696 = arith.addf %692, %695 : vector<8x256xf32>
    %697 = vector.extract_strided_slice %696 {offsets = [0, 0], sizes = [8, 192], strides = [1, 1]} : vector<8x256xf32> to vector<8x192xf32>
    %698 = arith.negf %697 : vector<8x192xf32>
    %699 = math.exp %698 : vector<8x192xf32>
    %cst_159 = arith.constant 1.000000e+00 : f32
    %700 = vector.broadcast %cst_159 : f32 to vector<8x192xf32>
    %701 = arith.addf %700, %699 : vector<8x192xf32>
    %702 = arith.divf %700, %701 : vector<8x192xf32>
    %703 = vector.extract_strided_slice %696 {offsets = [0, 192], sizes = [8, 64], strides = [1, 1]} : vector<8x256xf32> to vector<8x64xf32>
    %704 = math.tanh %703 : vector<8x64xf32>
    %705 = vector.extract_strided_slice %702 {offsets = [0, 64], sizes = [8, 64], strides = [1, 1]} : vector<8x192xf32> to vector<8x64xf32>
    %706 = arith.mulf %705, %679 : vector<8x64xf32>
    %707 = vector.extract_strided_slice %702 {offsets = [0, 0], sizes = [8, 64], strides = [1, 1]} : vector<8x192xf32> to vector<8x64xf32>
    %708 = arith.mulf %707, %704 : vector<8x64xf32>
    %709 = arith.addf %706, %708 : vector<8x64xf32>
    %710 = vector.extract_strided_slice %702 {offsets = [0, 128], sizes = [8, 64], strides = [1, 1]} : vector<8x192xf32> to vector<8x64xf32>
    %711 = math.tanh %709 : vector<8x64xf32>
    %712 = arith.mulf %710, %711 : vector<8x64xf32>
    %cst_160 = arith.constant dense<0.000000e+00> : vector<8x256xf32>
    %713 = tpu.matmul %682, %607, %cst_160 {dimension_numbers = #tpu.dot_dimension_numbers<[1], [0], [0], [1], [0, 0, 1, 1], [], []>} : vector<8x64xf32>, vector<64x256xf32>, vector<8x256xf32> -> vector<8x256xf32>
    %714 = arith.addf %694, %713 : vector<8x256xf32>
    %715 = vector.extract_strided_slice %714 {offsets = [0, 0], sizes = [8, 192], strides = [1, 1]} : vector<8x256xf32> to vector<8x192xf32>
    %716 = arith.negf %715 : vector<8x192xf32>
    %717 = math.exp %716 : vector<8x192xf32>
    %cst_161 = arith.constant 1.000000e+00 : f32
    %718 = vector.broadcast %cst_161 : f32 to vector<8x192xf32>
    %719 = arith.addf %718, %717 : vector<8x192xf32>
    %720 = arith.divf %718, %719 : vector<8x192xf32>
    %721 = vector.extract_strided_slice %714 {offsets = [0, 192], sizes = [8, 64], strides = [1, 1]} : vector<8x256xf32> to vector<8x64xf32>
    %722 = math.tanh %721 : vector<8x64xf32>
    %723 = vector.extract_strided_slice %720 {offsets = [0, 64], sizes = [8, 64], strides = [1, 1]} : vector<8x192xf32> to vector<8x64xf32>
    %724 = arith.mulf %723, %685 : vector<8x64xf32>
    %725 = vector.extract_strided_slice %720 {offsets = [0, 0], sizes = [8, 64], strides = [1, 1]} : vector<8x192xf32> to vector<8x64xf32>
    %726 = arith.mulf %725, %722 : vector<8x64xf32>
    %727 = arith.addf %724, %726 : vector<8x64xf32>
    %728 = vector.extract_strided_slice %720 {offsets = [0, 128], sizes = [8, 64], strides = [1, 1]} : vector<8x192xf32> to vector<8x64xf32>
    %729 = math.tanh %727 : vector<8x64xf32>
    %730 = arith.mulf %728, %729 : vector<8x64xf32>
    %731 = vector.broadcast %c1_i32_152 : i32 to vector<8x1xi32>
    %732 = arith.cmpi slt, %731, %0 : vector<8x1xi32>
    %733 = vector.broadcast %686 : i32 to vector<8x1xi32>
    %734 = arith.cmpi slt, %733, %0 : vector<8x1xi32>
    %cst_162 = arith.constant 0.000000e+00 : f32
    %735 = vector.shape_cast %732 : vector<8x1xi1> to vector<8x1xi1>
    %736 = vector.broadcast %735 : vector<8x1xi1> to vector<8x64xi1>
    %737 = vector.broadcast %cst_162 : f32 to vector<8x64xf32>
    %738 = arith.select %736, %712, %737 : vector<8x64xi1>, vector<8x64xf32>
    %739 = arith.index_cast %c1_i32_152 : i32 to index
    %c0_163 = arith.constant 0 : index
    %c0_164 = arith.constant 0 : index
    %740 = vector.load %arg19[%739, %c0_163, %c0_164] : memref<8x8x64xf32, #tpu.memory_space<vmem>>, vector<1x8x64xf32>
    %741 = vector.shape_cast %740 : vector<1x8x64xf32> to vector<8x64xf32>
    %742 = vector.shape_cast %738 : vector<8x64xf32> to vector<1x8x64xf32>
    tpu.vector_store %arg19[%739, %c0_163, %c0_164], %742 {strides = array<i32>} : memref<8x8x64xf32, #tpu.memory_space<vmem>>, vector<1x8x64xf32>,
    %cst_165 = arith.constant 0.000000e+00 : f32
    %743 = vector.shape_cast %734 : vector<8x1xi1> to vector<8x1xi1>
    %744 = vector.broadcast %743 : vector<8x1xi1> to vector<8x64xi1>
    %745 = vector.broadcast %cst_165 : f32 to vector<8x64xf32>
    %746 = arith.select %744, %730, %745 : vector<8x64xi1>, vector<8x64xf32>
    %747 = arith.index_cast %686 : i32 to index
    %c0_166 = arith.constant 0 : index
    %c0_167 = arith.constant 0 : index
    %748 = vector.load %arg20[%747, %c0_166, %c0_167] : memref<8x8x64xf32, #tpu.memory_space<vmem>>, vector<1x8x64xf32>
    %749 = vector.shape_cast %748 : vector<1x8x64xf32> to vector<8x64xf32>
    %750 = vector.shape_cast %746 : vector<8x64xf32> to vector<1x8x64xf32>
    tpu.vector_store %arg20[%747, %c0_166, %c0_167], %750 {strides = array<i32>} : memref<8x8x64xf32, #tpu.memory_space<vmem>>, vector<1x8x64xf32>,
    %751 = vector.shape_cast %732 : vector<8x1xi1> to vector<8x1xi1>
    %752 = vector.broadcast %751 : vector<8x1xi1> to vector<8x64xi1>
    %753 = arith.select %752, %712, %676 : vector<8x64xi1>, vector<8x64xf32>
    %754 = vector.shape_cast %732 : vector<8x1xi1> to vector<8x1xi1>
    %755 = vector.broadcast %754 : vector<8x1xi1> to vector<8x64xi1>
    %756 = arith.select %755, %709, %679 : vector<8x64xi1>, vector<8x64xf32>
    %757 = vector.shape_cast %734 : vector<8x1xi1> to vector<8x1xi1>
    %758 = vector.broadcast %757 : vector<8x1xi1> to vector<8x64xi1>
    %759 = arith.select %758, %730, %682 : vector<8x64xi1>, vector<8x64xf32>
    %760 = vector.shape_cast %734 : vector<8x1xi1> to vector<8x1xi1>
    %761 = vector.broadcast %760 : vector<8x1xi1> to vector<8x64xi1>
    %762 = arith.select %761, %727, %685 : vector<8x64xi1>, vector<8x64xf32>
    %c2_i32_168 = arith.constant 2 : i32
    %c7_i32_169 = arith.constant 7 : i32
    %763 = arith.subi %c7_i32_169, %c2_i32_168 : i32
    %c8_i32_170 = arith.constant 8 : i32
    %764 = arith.muli %c2_i32_168, %c8_i32_170 : i32
    %765 = tpu.assume_multiple %764, 8 : i32
    %c8_i32_171 = arith.constant 8 : i32
    %766 = arith.muli %763, %c8_i32_171 : i32
    %767 = tpu.assume_multiple %766, 8 : i32
    %768 = arith.index_cast %765 : i32 to index
    %c0_172 = arith.constant 0 : index
    %769 = vector.load %arg16[%768, %c0_172] : memref<64x512xf32, #tpu.memory_space<vmem>>, vector<8x256xf32>
    %770 = arith.index_cast %767 : i32 to index
    %c256_173 = arith.constant 256 : index
    %771 = vector.load %arg16[%770, %c256_173] : memref<64x512xf32, #tpu.memory_space<vmem>>, vector<8x256xf32>
    %cst_174 = arith.constant dense<0.000000e+00> : vector<8x256xf32>
    %772 = tpu.matmul %753, %606, %cst_174 {dimension_numbers = #tpu.dot_dimension_numbers<[1], [0], [0], [1], [0, 0, 1, 1], [], []>} : vector<8x64xf32>, vector<64x256xf32>, vector<8x256xf32> -> vector<8x256xf32>
    %773 = arith.addf %769, %772 : vector<8x256xf32>
    %774 = vector.extract_strided_slice %773 {offsets = [0, 0], sizes = [8, 192], strides = [1, 1]} : vector<8x256xf32> to vector<8x192xf32>
    %775 = arith.negf %774 : vector<8x192xf32>
    %776 = math.exp %775 : vector<8x192xf32>
    %cst_175 = arith.constant 1.000000e+00 : f32
    %777 = vector.broadcast %cst_175 : f32 to vector<8x192xf32>
    %778 = arith.addf %777, %776 : vector<8x192xf32>
    %779 = arith.divf %777, %778 : vector<8x192xf32>
    %780 = vector.extract_strided_slice %773 {offsets = [0, 192], sizes = [8, 64], strides = [1, 1]} : vector<8x256xf32> to vector<8x64xf32>
    %781 = math.tanh %780 : vector<8x64xf32>
    %782 = vector.extract_strided_slice %779 {offsets = [0, 64], sizes = [8, 64], strides = [1, 1]} : vector<8x192xf32> to vector<8x64xf32>
    %783 = arith.mulf %782, %756 : vector<8x64xf32>
    %784 = vector.extract_strided_slice %779 {offsets = [0, 0], sizes = [8, 64], strides = [1, 1]} : vector<8x192xf32> to vector<8x64xf32>
    %785 = arith.mulf %784, %781 : vector<8x64xf32>
    %786 = arith.addf %783, %785 : vector<8x64xf32>
    %787 = vector.extract_strided_slice %779 {offsets = [0, 128], sizes = [8, 64], strides = [1, 1]} : vector<8x192xf32> to vector<8x64xf32>
    %788 = math.tanh %786 : vector<8x64xf32>
    %789 = arith.mulf %787, %788 : vector<8x64xf32>
    %cst_176 = arith.constant dense<0.000000e+00> : vector<8x256xf32>
    %790 = tpu.matmul %759, %607, %cst_176 {dimension_numbers = #tpu.dot_dimension_numbers<[1], [0], [0], [1], [0, 0, 1, 1], [], []>} : vector<8x64xf32>, vector<64x256xf32>, vector<8x256xf32> -> vector<8x256xf32>
    %791 = arith.addf %771, %790 : vector<8x256xf32>
    %792 = vector.extract_strided_slice %791 {offsets = [0, 0], sizes = [8, 192], strides = [1, 1]} : vector<8x256xf32> to vector<8x192xf32>
    %793 = arith.negf %792 : vector<8x192xf32>
    %794 = math.exp %793 : vector<8x192xf32>
    %cst_177 = arith.constant 1.000000e+00 : f32
    %795 = vector.broadcast %cst_177 : f32 to vector<8x192xf32>
    %796 = arith.addf %795, %794 : vector<8x192xf32>
    %797 = arith.divf %795, %796 : vector<8x192xf32>
    %798 = vector.extract_strided_slice %791 {offsets = [0, 192], sizes = [8, 64], strides = [1, 1]} : vector<8x256xf32> to vector<8x64xf32>
    %799 = math.tanh %798 : vector<8x64xf32>
    %800 = vector.extract_strided_slice %797 {offsets = [0, 64], sizes = [8, 64], strides = [1, 1]} : vector<8x192xf32> to vector<8x64xf32>
    %801 = arith.mulf %800, %762 : vector<8x64xf32>
    %802 = vector.extract_strided_slice %797 {offsets = [0, 0], sizes = [8, 64], strides = [1, 1]} : vector<8x192xf32> to vector<8x64xf32>
    %803 = arith.mulf %802, %799 : vector<8x64xf32>
    %804 = arith.addf %801, %803 : vector<8x64xf32>
    %805 = vector.extract_strided_slice %797 {offsets = [0, 128], sizes = [8, 64], strides = [1, 1]} : vector<8x192xf32> to vector<8x64xf32>
    %806 = math.tanh %804 : vector<8x64xf32>
    %807 = arith.mulf %805, %806 : vector<8x64xf32>
    %808 = vector.broadcast %c2_i32_168 : i32 to vector<8x1xi32>
    %809 = arith.cmpi slt, %808, %0 : vector<8x1xi32>
    %810 = vector.broadcast %763 : i32 to vector<8x1xi32>
    %811 = arith.cmpi slt, %810, %0 : vector<8x1xi32>
    %cst_178 = arith.constant 0.000000e+00 : f32
    %812 = vector.shape_cast %809 : vector<8x1xi1> to vector<8x1xi1>
    %813 = vector.broadcast %812 : vector<8x1xi1> to vector<8x64xi1>
    %814 = vector.broadcast %cst_178 : f32 to vector<8x64xf32>
    %815 = arith.select %813, %789, %814 : vector<8x64xi1>, vector<8x64xf32>
    %816 = arith.index_cast %c2_i32_168 : i32 to index
    %c0_179 = arith.constant 0 : index
    %c0_180 = arith.constant 0 : index
    %817 = vector.load %arg19[%816, %c0_179, %c0_180] : memref<8x8x64xf32, #tpu.memory_space<vmem>>, vector<1x8x64xf32>
    %818 = vector.shape_cast %817 : vector<1x8x64xf32> to vector<8x64xf32>
    %819 = vector.shape_cast %815 : vector<8x64xf32> to vector<1x8x64xf32>
    tpu.vector_store %arg19[%816, %c0_179, %c0_180], %819 {strides = array<i32>} : memref<8x8x64xf32, #tpu.memory_space<vmem>>, vector<1x8x64xf32>,
    %cst_181 = arith.constant 0.000000e+00 : f32
    %820 = vector.shape_cast %811 : vector<8x1xi1> to vector<8x1xi1>
    %821 = vector.broadcast %820 : vector<8x1xi1> to vector<8x64xi1>
    %822 = vector.broadcast %cst_181 : f32 to vector<8x64xf32>
    %823 = arith.select %821, %807, %822 : vector<8x64xi1>, vector<8x64xf32>
    %824 = arith.index_cast %763 : i32 to index
    %c0_182 = arith.constant 0 : index
    %c0_183 = arith.constant 0 : index
    %825 = vector.load %arg20[%824, %c0_182, %c0_183] : memref<8x8x64xf32, #tpu.memory_space<vmem>>, vector<1x8x64xf32>
    %826 = vector.shape_cast %825 : vector<1x8x64xf32> to vector<8x64xf32>
    %827 = vector.shape_cast %823 : vector<8x64xf32> to vector<1x8x64xf32>
    tpu.vector_store %arg20[%824, %c0_182, %c0_183], %827 {strides = array<i32>} : memref<8x8x64xf32, #tpu.memory_space<vmem>>, vector<1x8x64xf32>,
    %828 = vector.shape_cast %809 : vector<8x1xi1> to vector<8x1xi1>
    %829 = vector.broadcast %828 : vector<8x1xi1> to vector<8x64xi1>
    %830 = arith.select %829, %789, %753 : vector<8x64xi1>, vector<8x64xf32>
    %831 = vector.shape_cast %809 : vector<8x1xi1> to vector<8x1xi1>
    %832 = vector.broadcast %831 : vector<8x1xi1> to vector<8x64xi1>
    %833 = arith.select %832, %786, %756 : vector<8x64xi1>, vector<8x64xf32>
    %834 = vector.shape_cast %811 : vector<8x1xi1> to vector<8x1xi1>
    %835 = vector.broadcast %834 : vector<8x1xi1> to vector<8x64xi1>
    %836 = arith.select %835, %807, %759 : vector<8x64xi1>, vector<8x64xf32>
    %837 = vector.shape_cast %811 : vector<8x1xi1> to vector<8x1xi1>
    %838 = vector.broadcast %837 : vector<8x1xi1> to vector<8x64xi1>
    %839 = arith.select %838, %804, %762 : vector<8x64xi1>, vector<8x64xf32>
    %c3_i32_184 = arith.constant 3 : i32
    %c7_i32_185 = arith.constant 7 : i32
    %840 = arith.subi %c7_i32_185, %c3_i32_184 : i32
    %c8_i32_186 = arith.constant 8 : i32
    %841 = arith.muli %c3_i32_184, %c8_i32_186 : i32
    %842 = tpu.assume_multiple %841, 8 : i32
    %c8_i32_187 = arith.constant 8 : i32
    %843 = arith.muli %840, %c8_i32_187 : i32
    %844 = tpu.assume_multiple %843, 8 : i32
    %845 = arith.index_cast %842 : i32 to index
    %c0_188 = arith.constant 0 : index
    %846 = vector.load %arg16[%845, %c0_188] : memref<64x512xf32, #tpu.memory_space<vmem>>, vector<8x256xf32>
    %847 = arith.index_cast %844 : i32 to index
    %c256_189 = arith.constant 256 : index
    %848 = vector.load %arg16[%847, %c256_189] : memref<64x512xf32, #tpu.memory_space<vmem>>, vector<8x256xf32>
    %cst_190 = arith.constant dense<0.000000e+00> : vector<8x256xf32>
    %849 = tpu.matmul %830, %606, %cst_190 {dimension_numbers = #tpu.dot_dimension_numbers<[1], [0], [0], [1], [0, 0, 1, 1], [], []>} : vector<8x64xf32>, vector<64x256xf32>, vector<8x256xf32> -> vector<8x256xf32>
    %850 = arith.addf %846, %849 : vector<8x256xf32>
    %851 = vector.extract_strided_slice %850 {offsets = [0, 0], sizes = [8, 192], strides = [1, 1]} : vector<8x256xf32> to vector<8x192xf32>
    %852 = arith.negf %851 : vector<8x192xf32>
    %853 = math.exp %852 : vector<8x192xf32>
    %cst_191 = arith.constant 1.000000e+00 : f32
    %854 = vector.broadcast %cst_191 : f32 to vector<8x192xf32>
    %855 = arith.addf %854, %853 : vector<8x192xf32>
    %856 = arith.divf %854, %855 : vector<8x192xf32>
    %857 = vector.extract_strided_slice %850 {offsets = [0, 192], sizes = [8, 64], strides = [1, 1]} : vector<8x256xf32> to vector<8x64xf32>
    %858 = math.tanh %857 : vector<8x64xf32>
    %859 = vector.extract_strided_slice %856 {offsets = [0, 64], sizes = [8, 64], strides = [1, 1]} : vector<8x192xf32> to vector<8x64xf32>
    %860 = arith.mulf %859, %833 : vector<8x64xf32>
    %861 = vector.extract_strided_slice %856 {offsets = [0, 0], sizes = [8, 64], strides = [1, 1]} : vector<8x192xf32> to vector<8x64xf32>
    %862 = arith.mulf %861, %858 : vector<8x64xf32>
    %863 = arith.addf %860, %862 : vector<8x64xf32>
    %864 = vector.extract_strided_slice %856 {offsets = [0, 128], sizes = [8, 64], strides = [1, 1]} : vector<8x192xf32> to vector<8x64xf32>
    %865 = math.tanh %863 : vector<8x64xf32>
    %866 = arith.mulf %864, %865 : vector<8x64xf32>
    %cst_192 = arith.constant dense<0.000000e+00> : vector<8x256xf32>
    %867 = tpu.matmul %836, %607, %cst_192 {dimension_numbers = #tpu.dot_dimension_numbers<[1], [0], [0], [1], [0, 0, 1, 1], [], []>} : vector<8x64xf32>, vector<64x256xf32>, vector<8x256xf32> -> vector<8x256xf32>
    %868 = arith.addf %848, %867 : vector<8x256xf32>
    %869 = vector.extract_strided_slice %868 {offsets = [0, 0], sizes = [8, 192], strides = [1, 1]} : vector<8x256xf32> to vector<8x192xf32>
    %870 = arith.negf %869 : vector<8x192xf32>
    %871 = math.exp %870 : vector<8x192xf32>
    %cst_193 = arith.constant 1.000000e+00 : f32
    %872 = vector.broadcast %cst_193 : f32 to vector<8x192xf32>
    %873 = arith.addf %872, %871 : vector<8x192xf32>
    %874 = arith.divf %872, %873 : vector<8x192xf32>
    %875 = vector.extract_strided_slice %868 {offsets = [0, 192], sizes = [8, 64], strides = [1, 1]} : vector<8x256xf32> to vector<8x64xf32>
    %876 = math.tanh %875 : vector<8x64xf32>
    %877 = vector.extract_strided_slice %874 {offsets = [0, 64], sizes = [8, 64], strides = [1, 1]} : vector<8x192xf32> to vector<8x64xf32>
    %878 = arith.mulf %877, %839 : vector<8x64xf32>
    %879 = vector.extract_strided_slice %874 {offsets = [0, 0], sizes = [8, 64], strides = [1, 1]} : vector<8x192xf32> to vector<8x64xf32>
    %880 = arith.mulf %879, %876 : vector<8x64xf32>
    %881 = arith.addf %878, %880 : vector<8x64xf32>
    %882 = vector.extract_strided_slice %874 {offsets = [0, 128], sizes = [8, 64], strides = [1, 1]} : vector<8x192xf32> to vector<8x64xf32>
    %883 = math.tanh %881 : vector<8x64xf32>
    %884 = arith.mulf %882, %883 : vector<8x64xf32>
    %885 = vector.broadcast %c3_i32_184 : i32 to vector<8x1xi32>
    %886 = arith.cmpi slt, %885, %0 : vector<8x1xi32>
    %887 = vector.broadcast %840 : i32 to vector<8x1xi32>
    %888 = arith.cmpi slt, %887, %0 : vector<8x1xi32>
    %cst_194 = arith.constant 0.000000e+00 : f32
    %889 = vector.shape_cast %886 : vector<8x1xi1> to vector<8x1xi1>
    %890 = vector.broadcast %889 : vector<8x1xi1> to vector<8x64xi1>
    %891 = vector.broadcast %cst_194 : f32 to vector<8x64xf32>
    %892 = arith.select %890, %866, %891 : vector<8x64xi1>, vector<8x64xf32>
    %893 = arith.index_cast %c3_i32_184 : i32 to index
    %c0_195 = arith.constant 0 : index
    %c0_196 = arith.constant 0 : index
    %894 = vector.load %arg19[%893, %c0_195, %c0_196] : memref<8x8x64xf32, #tpu.memory_space<vmem>>, vector<1x8x64xf32>
    %895 = vector.shape_cast %894 : vector<1x8x64xf32> to vector<8x64xf32>
    %896 = vector.shape_cast %892 : vector<8x64xf32> to vector<1x8x64xf32>
    tpu.vector_store %arg19[%893, %c0_195, %c0_196], %896 {strides = array<i32>} : memref<8x8x64xf32, #tpu.memory_space<vmem>>, vector<1x8x64xf32>,
    %cst_197 = arith.constant 0.000000e+00 : f32
    %897 = vector.shape_cast %888 : vector<8x1xi1> to vector<8x1xi1>
    %898 = vector.broadcast %897 : vector<8x1xi1> to vector<8x64xi1>
    %899 = vector.broadcast %cst_197 : f32 to vector<8x64xf32>
    %900 = arith.select %898, %884, %899 : vector<8x64xi1>, vector<8x64xf32>
    %901 = arith.index_cast %840 : i32 to index
    %c0_198 = arith.constant 0 : index
    %c0_199 = arith.constant 0 : index
    %902 = vector.load %arg20[%901, %c0_198, %c0_199] : memref<8x8x64xf32, #tpu.memory_space<vmem>>, vector<1x8x64xf32>
    %903 = vector.shape_cast %902 : vector<1x8x64xf32> to vector<8x64xf32>
    %904 = vector.shape_cast %900 : vector<8x64xf32> to vector<1x8x64xf32>
    tpu.vector_store %arg20[%901, %c0_198, %c0_199], %904 {strides = array<i32>} : memref<8x8x64xf32, #tpu.memory_space<vmem>>, vector<1x8x64xf32>,
    %905 = vector.shape_cast %886 : vector<8x1xi1> to vector<8x1xi1>
    %906 = vector.broadcast %905 : vector<8x1xi1> to vector<8x64xi1>
    %907 = arith.select %906, %866, %830 : vector<8x64xi1>, vector<8x64xf32>
    %908 = vector.shape_cast %886 : vector<8x1xi1> to vector<8x1xi1>
    %909 = vector.broadcast %908 : vector<8x1xi1> to vector<8x64xi1>
    %910 = arith.select %909, %863, %833 : vector<8x64xi1>, vector<8x64xf32>
    %911 = vector.shape_cast %888 : vector<8x1xi1> to vector<8x1xi1>
    %912 = vector.broadcast %911 : vector<8x1xi1> to vector<8x64xi1>
    %913 = arith.select %912, %884, %836 : vector<8x64xi1>, vector<8x64xf32>
    %914 = vector.shape_cast %888 : vector<8x1xi1> to vector<8x1xi1>
    %915 = vector.broadcast %914 : vector<8x1xi1> to vector<8x64xi1>
    %916 = arith.select %915, %881, %839 : vector<8x64xi1>, vector<8x64xf32>
    %c4_i32_200 = arith.constant 4 : i32
    %c7_i32_201 = arith.constant 7 : i32
    %917 = arith.subi %c7_i32_201, %c4_i32_200 : i32
    %c8_i32_202 = arith.constant 8 : i32
    %918 = arith.muli %c4_i32_200, %c8_i32_202 : i32
    %919 = tpu.assume_multiple %918, 8 : i32
    %c8_i32_203 = arith.constant 8 : i32
    %920 = arith.muli %917, %c8_i32_203 : i32
    %921 = tpu.assume_multiple %920, 8 : i32
    %922 = arith.index_cast %919 : i32 to index
    %c0_204 = arith.constant 0 : index
    %923 = vector.load %arg16[%922, %c0_204] : memref<64x512xf32, #tpu.memory_space<vmem>>, vector<8x256xf32>
    %924 = arith.index_cast %921 : i32 to index
    %c256_205 = arith.constant 256 : index
    %925 = vector.load %arg16[%924, %c256_205] : memref<64x512xf32, #tpu.memory_space<vmem>>, vector<8x256xf32>
    %cst_206 = arith.constant dense<0.000000e+00> : vector<8x256xf32>
    %926 = tpu.matmul %907, %606, %cst_206 {dimension_numbers = #tpu.dot_dimension_numbers<[1], [0], [0], [1], [0, 0, 1, 1], [], []>} : vector<8x64xf32>, vector<64x256xf32>, vector<8x256xf32> -> vector<8x256xf32>
    %927 = arith.addf %923, %926 : vector<8x256xf32>
    %928 = vector.extract_strided_slice %927 {offsets = [0, 0], sizes = [8, 192], strides = [1, 1]} : vector<8x256xf32> to vector<8x192xf32>
    %929 = arith.negf %928 : vector<8x192xf32>
    %930 = math.exp %929 : vector<8x192xf32>
    %cst_207 = arith.constant 1.000000e+00 : f32
    %931 = vector.broadcast %cst_207 : f32 to vector<8x192xf32>
    %932 = arith.addf %931, %930 : vector<8x192xf32>
    %933 = arith.divf %931, %932 : vector<8x192xf32>
    %934 = vector.extract_strided_slice %927 {offsets = [0, 192], sizes = [8, 64], strides = [1, 1]} : vector<8x256xf32> to vector<8x64xf32>
    %935 = math.tanh %934 : vector<8x64xf32>
    %936 = vector.extract_strided_slice %933 {offsets = [0, 64], sizes = [8, 64], strides = [1, 1]} : vector<8x192xf32> to vector<8x64xf32>
    %937 = arith.mulf %936, %910 : vector<8x64xf32>
    %938 = vector.extract_strided_slice %933 {offsets = [0, 0], sizes = [8, 64], strides = [1, 1]} : vector<8x192xf32> to vector<8x64xf32>
    %939 = arith.mulf %938, %935 : vector<8x64xf32>
    %940 = arith.addf %937, %939 : vector<8x64xf32>
    %941 = vector.extract_strided_slice %933 {offsets = [0, 128], sizes = [8, 64], strides = [1, 1]} : vector<8x192xf32> to vector<8x64xf32>
    %942 = math.tanh %940 : vector<8x64xf32>
    %943 = arith.mulf %941, %942 : vector<8x64xf32>
    %cst_208 = arith.constant dense<0.000000e+00> : vector<8x256xf32>
    %944 = tpu.matmul %913, %607, %cst_208 {dimension_numbers = #tpu.dot_dimension_numbers<[1], [0], [0], [1], [0, 0, 1, 1], [], []>} : vector<8x64xf32>, vector<64x256xf32>, vector<8x256xf32> -> vector<8x256xf32>
    %945 = arith.addf %925, %944 : vector<8x256xf32>
    %946 = vector.extract_strided_slice %945 {offsets = [0, 0], sizes = [8, 192], strides = [1, 1]} : vector<8x256xf32> to vector<8x192xf32>
    %947 = arith.negf %946 : vector<8x192xf32>
    %948 = math.exp %947 : vector<8x192xf32>
    %cst_209 = arith.constant 1.000000e+00 : f32
    %949 = vector.broadcast %cst_209 : f32 to vector<8x192xf32>
    %950 = arith.addf %949, %948 : vector<8x192xf32>
    %951 = arith.divf %949, %950 : vector<8x192xf32>
    %952 = vector.extract_strided_slice %945 {offsets = [0, 192], sizes = [8, 64], strides = [1, 1]} : vector<8x256xf32> to vector<8x64xf32>
    %953 = math.tanh %952 : vector<8x64xf32>
    %954 = vector.extract_strided_slice %951 {offsets = [0, 64], sizes = [8, 64], strides = [1, 1]} : vector<8x192xf32> to vector<8x64xf32>
    %955 = arith.mulf %954, %916 : vector<8x64xf32>
    %956 = vector.extract_strided_slice %951 {offsets = [0, 0], sizes = [8, 64], strides = [1, 1]} : vector<8x192xf32> to vector<8x64xf32>
    %957 = arith.mulf %956, %953 : vector<8x64xf32>
    %958 = arith.addf %955, %957 : vector<8x64xf32>
    %959 = vector.extract_strided_slice %951 {offsets = [0, 128], sizes = [8, 64], strides = [1, 1]} : vector<8x192xf32> to vector<8x64xf32>
    %960 = math.tanh %958 : vector<8x64xf32>
    %961 = arith.mulf %959, %960 : vector<8x64xf32>
    %962 = vector.broadcast %c4_i32_200 : i32 to vector<8x1xi32>
    %963 = arith.cmpi slt, %962, %0 : vector<8x1xi32>
    %964 = vector.broadcast %917 : i32 to vector<8x1xi32>
    %965 = arith.cmpi slt, %964, %0 : vector<8x1xi32>
    %cst_210 = arith.constant 0.000000e+00 : f32
    %966 = vector.shape_cast %963 : vector<8x1xi1> to vector<8x1xi1>
    %967 = vector.broadcast %966 : vector<8x1xi1> to vector<8x64xi1>
    %968 = vector.broadcast %cst_210 : f32 to vector<8x64xf32>
    %969 = arith.select %967, %943, %968 : vector<8x64xi1>, vector<8x64xf32>
    %970 = arith.index_cast %c4_i32_200 : i32 to index
    %c0_211 = arith.constant 0 : index
    %c0_212 = arith.constant 0 : index
    %971 = vector.load %arg19[%970, %c0_211, %c0_212] : memref<8x8x64xf32, #tpu.memory_space<vmem>>, vector<1x8x64xf32>
    %972 = vector.shape_cast %971 : vector<1x8x64xf32> to vector<8x64xf32>
    %973 = vector.shape_cast %969 : vector<8x64xf32> to vector<1x8x64xf32>
    tpu.vector_store %arg19[%970, %c0_211, %c0_212], %973 {strides = array<i32>} : memref<8x8x64xf32, #tpu.memory_space<vmem>>, vector<1x8x64xf32>,
    %cst_213 = arith.constant 0.000000e+00 : f32
    %974 = vector.shape_cast %965 : vector<8x1xi1> to vector<8x1xi1>
    %975 = vector.broadcast %974 : vector<8x1xi1> to vector<8x64xi1>
    %976 = vector.broadcast %cst_213 : f32 to vector<8x64xf32>
    %977 = arith.select %975, %961, %976 : vector<8x64xi1>, vector<8x64xf32>
    %978 = arith.index_cast %917 : i32 to index
    %c0_214 = arith.constant 0 : index
    %c0_215 = arith.constant 0 : index
    %979 = vector.load %arg20[%978, %c0_214, %c0_215] : memref<8x8x64xf32, #tpu.memory_space<vmem>>, vector<1x8x64xf32>
    %980 = vector.shape_cast %979 : vector<1x8x64xf32> to vector<8x64xf32>
    %981 = vector.shape_cast %977 : vector<8x64xf32> to vector<1x8x64xf32>
    tpu.vector_store %arg20[%978, %c0_214, %c0_215], %981 {strides = array<i32>} : memref<8x8x64xf32, #tpu.memory_space<vmem>>, vector<1x8x64xf32>,
    %982 = vector.shape_cast %963 : vector<8x1xi1> to vector<8x1xi1>
    %983 = vector.broadcast %982 : vector<8x1xi1> to vector<8x64xi1>
    %984 = arith.select %983, %943, %907 : vector<8x64xi1>, vector<8x64xf32>
    %985 = vector.shape_cast %963 : vector<8x1xi1> to vector<8x1xi1>
    %986 = vector.broadcast %985 : vector<8x1xi1> to vector<8x64xi1>
    %987 = arith.select %986, %940, %910 : vector<8x64xi1>, vector<8x64xf32>
    %988 = vector.shape_cast %965 : vector<8x1xi1> to vector<8x1xi1>
    %989 = vector.broadcast %988 : vector<8x1xi1> to vector<8x64xi1>
    %990 = arith.select %989, %961, %913 : vector<8x64xi1>, vector<8x64xf32>
    %991 = vector.shape_cast %965 : vector<8x1xi1> to vector<8x1xi1>
    %992 = vector.broadcast %991 : vector<8x1xi1> to vector<8x64xi1>
    %993 = arith.select %992, %958, %916 : vector<8x64xi1>, vector<8x64xf32>
    %c5_i32_216 = arith.constant 5 : i32
    %c7_i32_217 = arith.constant 7 : i32
    %994 = arith.subi %c7_i32_217, %c5_i32_216 : i32
    %c8_i32_218 = arith.constant 8 : i32
    %995 = arith.muli %c5_i32_216, %c8_i32_218 : i32
    %996 = tpu.assume_multiple %995, 8 : i32
    %c8_i32_219 = arith.constant 8 : i32
    %997 = arith.muli %994, %c8_i32_219 : i32
    %998 = tpu.assume_multiple %997, 8 : i32
    %999 = arith.index_cast %996 : i32 to index
    %c0_220 = arith.constant 0 : index
    %1000 = vector.load %arg16[%999, %c0_220] : memref<64x512xf32, #tpu.memory_space<vmem>>, vector<8x256xf32>
    %1001 = arith.index_cast %998 : i32 to index
    %c256_221 = arith.constant 256 : index
    %1002 = vector.load %arg16[%1001, %c256_221] : memref<64x512xf32, #tpu.memory_space<vmem>>, vector<8x256xf32>
    %cst_222 = arith.constant dense<0.000000e+00> : vector<8x256xf32>
    %1003 = tpu.matmul %984, %606, %cst_222 {dimension_numbers = #tpu.dot_dimension_numbers<[1], [0], [0], [1], [0, 0, 1, 1], [], []>} : vector<8x64xf32>, vector<64x256xf32>, vector<8x256xf32> -> vector<8x256xf32>
    %1004 = arith.addf %1000, %1003 : vector<8x256xf32>
    %1005 = vector.extract_strided_slice %1004 {offsets = [0, 0], sizes = [8, 192], strides = [1, 1]} : vector<8x256xf32> to vector<8x192xf32>
    %1006 = arith.negf %1005 : vector<8x192xf32>
    %1007 = math.exp %1006 : vector<8x192xf32>
    %cst_223 = arith.constant 1.000000e+00 : f32
    %1008 = vector.broadcast %cst_223 : f32 to vector<8x192xf32>
    %1009 = arith.addf %1008, %1007 : vector<8x192xf32>
    %1010 = arith.divf %1008, %1009 : vector<8x192xf32>
    %1011 = vector.extract_strided_slice %1004 {offsets = [0, 192], sizes = [8, 64], strides = [1, 1]} : vector<8x256xf32> to vector<8x64xf32>
    %1012 = math.tanh %1011 : vector<8x64xf32>
    %1013 = vector.extract_strided_slice %1010 {offsets = [0, 64], sizes = [8, 64], strides = [1, 1]} : vector<8x192xf32> to vector<8x64xf32>
    %1014 = arith.mulf %1013, %987 : vector<8x64xf32>
    %1015 = vector.extract_strided_slice %1010 {offsets = [0, 0], sizes = [8, 64], strides = [1, 1]} : vector<8x192xf32> to vector<8x64xf32>
    %1016 = arith.mulf %1015, %1012 : vector<8x64xf32>
    %1017 = arith.addf %1014, %1016 : vector<8x64xf32>
    %1018 = vector.extract_strided_slice %1010 {offsets = [0, 128], sizes = [8, 64], strides = [1, 1]} : vector<8x192xf32> to vector<8x64xf32>
    %1019 = math.tanh %1017 : vector<8x64xf32>
    %1020 = arith.mulf %1018, %1019 : vector<8x64xf32>
    %cst_224 = arith.constant dense<0.000000e+00> : vector<8x256xf32>
    %1021 = tpu.matmul %990, %607, %cst_224 {dimension_numbers = #tpu.dot_dimension_numbers<[1], [0], [0], [1], [0, 0, 1, 1], [], []>} : vector<8x64xf32>, vector<64x256xf32>, vector<8x256xf32> -> vector<8x256xf32>
    %1022 = arith.addf %1002, %1021 : vector<8x256xf32>
    %1023 = vector.extract_strided_slice %1022 {offsets = [0, 0], sizes = [8, 192], strides = [1, 1]} : vector<8x256xf32> to vector<8x192xf32>
    %1024 = arith.negf %1023 : vector<8x192xf32>
    %1025 = math.exp %1024 : vector<8x192xf32>
    %cst_225 = arith.constant 1.000000e+00 : f32
    %1026 = vector.broadcast %cst_225 : f32 to vector<8x192xf32>
    %1027 = arith.addf %1026, %1025 : vector<8x192xf32>
    %1028 = arith.divf %1026, %1027 : vector<8x192xf32>
    %1029 = vector.extract_strided_slice %1022 {offsets = [0, 192], sizes = [8, 64], strides = [1, 1]} : vector<8x256xf32> to vector<8x64xf32>
    %1030 = math.tanh %1029 : vector<8x64xf32>
    %1031 = vector.extract_strided_slice %1028 {offsets = [0, 64], sizes = [8, 64], strides = [1, 1]} : vector<8x192xf32> to vector<8x64xf32>
    %1032 = arith.mulf %1031, %993 : vector<8x64xf32>
    %1033 = vector.extract_strided_slice %1028 {offsets = [0, 0], sizes = [8, 64], strides = [1, 1]} : vector<8x192xf32> to vector<8x64xf32>
    %1034 = arith.mulf %1033, %1030 : vector<8x64xf32>
    %1035 = arith.addf %1032, %1034 : vector<8x64xf32>
    %1036 = vector.extract_strided_slice %1028 {offsets = [0, 128], sizes = [8, 64], strides = [1, 1]} : vector<8x192xf32> to vector<8x64xf32>
    %1037 = math.tanh %1035 : vector<8x64xf32>
    %1038 = arith.mulf %1036, %1037 : vector<8x64xf32>
    %1039 = vector.broadcast %c5_i32_216 : i32 to vector<8x1xi32>
    %1040 = arith.cmpi slt, %1039, %0 : vector<8x1xi32>
    %1041 = vector.broadcast %994 : i32 to vector<8x1xi32>
    %1042 = arith.cmpi slt, %1041, %0 : vector<8x1xi32>
    %cst_226 = arith.constant 0.000000e+00 : f32
    %1043 = vector.shape_cast %1040 : vector<8x1xi1> to vector<8x1xi1>
    %1044 = vector.broadcast %1043 : vector<8x1xi1> to vector<8x64xi1>
    %1045 = vector.broadcast %cst_226 : f32 to vector<8x64xf32>
    %1046 = arith.select %1044, %1020, %1045 : vector<8x64xi1>, vector<8x64xf32>
    %1047 = arith.index_cast %c5_i32_216 : i32 to index
    %c0_227 = arith.constant 0 : index
    %c0_228 = arith.constant 0 : index
    %1048 = vector.load %arg19[%1047, %c0_227, %c0_228] : memref<8x8x64xf32, #tpu.memory_space<vmem>>, vector<1x8x64xf32>
    %1049 = vector.shape_cast %1048 : vector<1x8x64xf32> to vector<8x64xf32>
    %1050 = vector.shape_cast %1046 : vector<8x64xf32> to vector<1x8x64xf32>
    tpu.vector_store %arg19[%1047, %c0_227, %c0_228], %1050 {strides = array<i32>} : memref<8x8x64xf32, #tpu.memory_space<vmem>>, vector<1x8x64xf32>,
    %cst_229 = arith.constant 0.000000e+00 : f32
    %1051 = vector.shape_cast %1042 : vector<8x1xi1> to vector<8x1xi1>
    %1052 = vector.broadcast %1051 : vector<8x1xi1> to vector<8x64xi1>
    %1053 = vector.broadcast %cst_229 : f32 to vector<8x64xf32>
    %1054 = arith.select %1052, %1038, %1053 : vector<8x64xi1>, vector<8x64xf32>
    %1055 = arith.index_cast %994 : i32 to index
    %c0_230 = arith.constant 0 : index
    %c0_231 = arith.constant 0 : index
    %1056 = vector.load %arg20[%1055, %c0_230, %c0_231] : memref<8x8x64xf32, #tpu.memory_space<vmem>>, vector<1x8x64xf32>
    %1057 = vector.shape_cast %1056 : vector<1x8x64xf32> to vector<8x64xf32>
    %1058 = vector.shape_cast %1054 : vector<8x64xf32> to vector<1x8x64xf32>
    tpu.vector_store %arg20[%1055, %c0_230, %c0_231], %1058 {strides = array<i32>} : memref<8x8x64xf32, #tpu.memory_space<vmem>>, vector<1x8x64xf32>,
    %1059 = vector.shape_cast %1040 : vector<8x1xi1> to vector<8x1xi1>
    %1060 = vector.broadcast %1059 : vector<8x1xi1> to vector<8x64xi1>
    %1061 = arith.select %1060, %1020, %984 : vector<8x64xi1>, vector<8x64xf32>
    %1062 = vector.shape_cast %1040 : vector<8x1xi1> to vector<8x1xi1>
    %1063 = vector.broadcast %1062 : vector<8x1xi1> to vector<8x64xi1>
    %1064 = arith.select %1063, %1017, %987 : vector<8x64xi1>, vector<8x64xf32>
    %1065 = vector.shape_cast %1042 : vector<8x1xi1> to vector<8x1xi1>
    %1066 = vector.broadcast %1065 : vector<8x1xi1> to vector<8x64xi1>
    %1067 = arith.select %1066, %1038, %990 : vector<8x64xi1>, vector<8x64xf32>
    %1068 = vector.shape_cast %1042 : vector<8x1xi1> to vector<8x1xi1>
    %1069 = vector.broadcast %1068 : vector<8x1xi1> to vector<8x64xi1>
    %1070 = arith.select %1069, %1035, %993 : vector<8x64xi1>, vector<8x64xf32>
    %c6_i32_232 = arith.constant 6 : i32
    %c7_i32_233 = arith.constant 7 : i32
    %1071 = arith.subi %c7_i32_233, %c6_i32_232 : i32
    %c8_i32_234 = arith.constant 8 : i32
    %1072 = arith.muli %c6_i32_232, %c8_i32_234 : i32
    %1073 = tpu.assume_multiple %1072, 8 : i32
    %c8_i32_235 = arith.constant 8 : i32
    %1074 = arith.muli %1071, %c8_i32_235 : i32
    %1075 = tpu.assume_multiple %1074, 8 : i32
    %1076 = arith.index_cast %1073 : i32 to index
    %c0_236 = arith.constant 0 : index
    %1077 = vector.load %arg16[%1076, %c0_236] : memref<64x512xf32, #tpu.memory_space<vmem>>, vector<8x256xf32>
    %1078 = arith.index_cast %1075 : i32 to index
    %c256_237 = arith.constant 256 : index
    %1079 = vector.load %arg16[%1078, %c256_237] : memref<64x512xf32, #tpu.memory_space<vmem>>, vector<8x256xf32>
    %cst_238 = arith.constant dense<0.000000e+00> : vector<8x256xf32>
    %1080 = tpu.matmul %1061, %606, %cst_238 {dimension_numbers = #tpu.dot_dimension_numbers<[1], [0], [0], [1], [0, 0, 1, 1], [], []>} : vector<8x64xf32>, vector<64x256xf32>, vector<8x256xf32> -> vector<8x256xf32>
    %1081 = arith.addf %1077, %1080 : vector<8x256xf32>
    %1082 = vector.extract_strided_slice %1081 {offsets = [0, 0], sizes = [8, 192], strides = [1, 1]} : vector<8x256xf32> to vector<8x192xf32>
    %1083 = arith.negf %1082 : vector<8x192xf32>
    %1084 = math.exp %1083 : vector<8x192xf32>
    %cst_239 = arith.constant 1.000000e+00 : f32
    %1085 = vector.broadcast %cst_239 : f32 to vector<8x192xf32>
    %1086 = arith.addf %1085, %1084 : vector<8x192xf32>
    %1087 = arith.divf %1085, %1086 : vector<8x192xf32>
    %1088 = vector.extract_strided_slice %1081 {offsets = [0, 192], sizes = [8, 64], strides = [1, 1]} : vector<8x256xf32> to vector<8x64xf32>
    %1089 = math.tanh %1088 : vector<8x64xf32>
    %1090 = vector.extract_strided_slice %1087 {offsets = [0, 64], sizes = [8, 64], strides = [1, 1]} : vector<8x192xf32> to vector<8x64xf32>
    %1091 = arith.mulf %1090, %1064 : vector<8x64xf32>
    %1092 = vector.extract_strided_slice %1087 {offsets = [0, 0], sizes = [8, 64], strides = [1, 1]} : vector<8x192xf32> to vector<8x64xf32>
    %1093 = arith.mulf %1092, %1089 : vector<8x64xf32>
    %1094 = arith.addf %1091, %1093 : vector<8x64xf32>
    %1095 = vector.extract_strided_slice %1087 {offsets = [0, 128], sizes = [8, 64], strides = [1, 1]} : vector<8x192xf32> to vector<8x64xf32>
    %1096 = math.tanh %1094 : vector<8x64xf32>
    %1097 = arith.mulf %1095, %1096 : vector<8x64xf32>
    %cst_240 = arith.constant dense<0.000000e+00> : vector<8x256xf32>
    %1098 = tpu.matmul %1067, %607, %cst_240 {dimension_numbers = #tpu.dot_dimension_numbers<[1], [0], [0], [1], [0, 0, 1, 1], [], []>} : vector<8x64xf32>, vector<64x256xf32>, vector<8x256xf32> -> vector<8x256xf32>
    %1099 = arith.addf %1079, %1098 : vector<8x256xf32>
    %1100 = vector.extract_strided_slice %1099 {offsets = [0, 0], sizes = [8, 192], strides = [1, 1]} : vector<8x256xf32> to vector<8x192xf32>
    %1101 = arith.negf %1100 : vector<8x192xf32>
    %1102 = math.exp %1101 : vector<8x192xf32>
    %cst_241 = arith.constant 1.000000e+00 : f32
    %1103 = vector.broadcast %cst_241 : f32 to vector<8x192xf32>
    %1104 = arith.addf %1103, %1102 : vector<8x192xf32>
    %1105 = arith.divf %1103, %1104 : vector<8x192xf32>
    %1106 = vector.extract_strided_slice %1099 {offsets = [0, 192], sizes = [8, 64], strides = [1, 1]} : vector<8x256xf32> to vector<8x64xf32>
    %1107 = math.tanh %1106 : vector<8x64xf32>
    %1108 = vector.extract_strided_slice %1105 {offsets = [0, 64], sizes = [8, 64], strides = [1, 1]} : vector<8x192xf32> to vector<8x64xf32>
    %1109 = arith.mulf %1108, %1070 : vector<8x64xf32>
    %1110 = vector.extract_strided_slice %1105 {offsets = [0, 0], sizes = [8, 64], strides = [1, 1]} : vector<8x192xf32> to vector<8x64xf32>
    %1111 = arith.mulf %1110, %1107 : vector<8x64xf32>
    %1112 = arith.addf %1109, %1111 : vector<8x64xf32>
    %1113 = vector.extract_strided_slice %1105 {offsets = [0, 128], sizes = [8, 64], strides = [1, 1]} : vector<8x192xf32> to vector<8x64xf32>
    %1114 = math.tanh %1112 : vector<8x64xf32>
    %1115 = arith.mulf %1113, %1114 : vector<8x64xf32>
    %1116 = vector.broadcast %c6_i32_232 : i32 to vector<8x1xi32>
    %1117 = arith.cmpi slt, %1116, %0 : vector<8x1xi32>
    %1118 = vector.broadcast %1071 : i32 to vector<8x1xi32>
    %1119 = arith.cmpi slt, %1118, %0 : vector<8x1xi32>
    %cst_242 = arith.constant 0.000000e+00 : f32
    %1120 = vector.shape_cast %1117 : vector<8x1xi1> to vector<8x1xi1>
    %1121 = vector.broadcast %1120 : vector<8x1xi1> to vector<8x64xi1>
    %1122 = vector.broadcast %cst_242 : f32 to vector<8x64xf32>
    %1123 = arith.select %1121, %1097, %1122 : vector<8x64xi1>, vector<8x64xf32>
    %1124 = arith.index_cast %c6_i32_232 : i32 to index
    %c0_243 = arith.constant 0 : index
    %c0_244 = arith.constant 0 : index
    %1125 = vector.load %arg19[%1124, %c0_243, %c0_244] : memref<8x8x64xf32, #tpu.memory_space<vmem>>, vector<1x8x64xf32>
    %1126 = vector.shape_cast %1125 : vector<1x8x64xf32> to vector<8x64xf32>
    %1127 = vector.shape_cast %1123 : vector<8x64xf32> to vector<1x8x64xf32>
    tpu.vector_store %arg19[%1124, %c0_243, %c0_244], %1127 {strides = array<i32>} : memref<8x8x64xf32, #tpu.memory_space<vmem>>, vector<1x8x64xf32>,
    %cst_245 = arith.constant 0.000000e+00 : f32
    %1128 = vector.shape_cast %1119 : vector<8x1xi1> to vector<8x1xi1>
    %1129 = vector.broadcast %1128 : vector<8x1xi1> to vector<8x64xi1>
    %1130 = vector.broadcast %cst_245 : f32 to vector<8x64xf32>
    %1131 = arith.select %1129, %1115, %1130 : vector<8x64xi1>, vector<8x64xf32>
    %1132 = arith.index_cast %1071 : i32 to index
    %c0_246 = arith.constant 0 : index
    %c0_247 = arith.constant 0 : index
    %1133 = vector.load %arg20[%1132, %c0_246, %c0_247] : memref<8x8x64xf32, #tpu.memory_space<vmem>>, vector<1x8x64xf32>
    %1134 = vector.shape_cast %1133 : vector<1x8x64xf32> to vector<8x64xf32>
    %1135 = vector.shape_cast %1131 : vector<8x64xf32> to vector<1x8x64xf32>
    tpu.vector_store %arg20[%1132, %c0_246, %c0_247], %1135 {strides = array<i32>} : memref<8x8x64xf32, #tpu.memory_space<vmem>>, vector<1x8x64xf32>,
    %1136 = vector.shape_cast %1117 : vector<8x1xi1> to vector<8x1xi1>
    %1137 = vector.broadcast %1136 : vector<8x1xi1> to vector<8x64xi1>
    %1138 = arith.select %1137, %1097, %1061 : vector<8x64xi1>, vector<8x64xf32>
    %1139 = vector.shape_cast %1117 : vector<8x1xi1> to vector<8x1xi1>
    %1140 = vector.broadcast %1139 : vector<8x1xi1> to vector<8x64xi1>
    %1141 = arith.select %1140, %1094, %1064 : vector<8x64xi1>, vector<8x64xf32>
    %1142 = vector.shape_cast %1119 : vector<8x1xi1> to vector<8x1xi1>
    %1143 = vector.broadcast %1142 : vector<8x1xi1> to vector<8x64xi1>
    %1144 = arith.select %1143, %1115, %1067 : vector<8x64xi1>, vector<8x64xf32>
    %1145 = vector.shape_cast %1119 : vector<8x1xi1> to vector<8x1xi1>
    %1146 = vector.broadcast %1145 : vector<8x1xi1> to vector<8x64xi1>
    %1147 = arith.select %1146, %1112, %1070 : vector<8x64xi1>, vector<8x64xf32>
    %c7_i32_248 = arith.constant 7 : i32
    %c7_i32_249 = arith.constant 7 : i32
    %1148 = arith.subi %c7_i32_249, %c7_i32_248 : i32
    %c8_i32_250 = arith.constant 8 : i32
    %1149 = arith.muli %c7_i32_248, %c8_i32_250 : i32
    %1150 = tpu.assume_multiple %1149, 8 : i32
    %c8_i32_251 = arith.constant 8 : i32
    %1151 = arith.muli %1148, %c8_i32_251 : i32
    %1152 = tpu.assume_multiple %1151, 8 : i32
    %1153 = arith.index_cast %1150 : i32 to index
    %c0_252 = arith.constant 0 : index
    %1154 = vector.load %arg16[%1153, %c0_252] : memref<64x512xf32, #tpu.memory_space<vmem>>, vector<8x256xf32>
    %1155 = arith.index_cast %1152 : i32 to index
    %c256_253 = arith.constant 256 : index
    %1156 = vector.load %arg16[%1155, %c256_253] : memref<64x512xf32, #tpu.memory_space<vmem>>, vector<8x256xf32>
    %cst_254 = arith.constant dense<0.000000e+00> : vector<8x256xf32>
    %1157 = tpu.matmul %1138, %606, %cst_254 {dimension_numbers = #tpu.dot_dimension_numbers<[1], [0], [0], [1], [0, 0, 1, 1], [], []>} : vector<8x64xf32>, vector<64x256xf32>, vector<8x256xf32> -> vector<8x256xf32>
    %1158 = arith.addf %1154, %1157 : vector<8x256xf32>
    %1159 = vector.extract_strided_slice %1158 {offsets = [0, 0], sizes = [8, 192], strides = [1, 1]} : vector<8x256xf32> to vector<8x192xf32>
    %1160 = arith.negf %1159 : vector<8x192xf32>
    %1161 = math.exp %1160 : vector<8x192xf32>
    %cst_255 = arith.constant 1.000000e+00 : f32
    %1162 = vector.broadcast %cst_255 : f32 to vector<8x192xf32>
    %1163 = arith.addf %1162, %1161 : vector<8x192xf32>
    %1164 = arith.divf %1162, %1163 : vector<8x192xf32>
    %1165 = vector.extract_strided_slice %1158 {offsets = [0, 192], sizes = [8, 64], strides = [1, 1]} : vector<8x256xf32> to vector<8x64xf32>
    %1166 = math.tanh %1165 : vector<8x64xf32>
    %1167 = vector.extract_strided_slice %1164 {offsets = [0, 64], sizes = [8, 64], strides = [1, 1]} : vector<8x192xf32> to vector<8x64xf32>
    %1168 = arith.mulf %1167, %1141 : vector<8x64xf32>
    %1169 = vector.extract_strided_slice %1164 {offsets = [0, 0], sizes = [8, 64], strides = [1, 1]} : vector<8x192xf32> to vector<8x64xf32>
    %1170 = arith.mulf %1169, %1166 : vector<8x64xf32>
    %1171 = arith.addf %1168, %1170 : vector<8x64xf32>
    %1172 = vector.extract_strided_slice %1164 {offsets = [0, 128], sizes = [8, 64], strides = [1, 1]} : vector<8x192xf32> to vector<8x64xf32>
    %1173 = math.tanh %1171 : vector<8x64xf32>
    %1174 = arith.mulf %1172, %1173 : vector<8x64xf32>
    %cst_256 = arith.constant dense<0.000000e+00> : vector<8x256xf32>
    %1175 = tpu.matmul %1144, %607, %cst_256 {dimension_numbers = #tpu.dot_dimension_numbers<[1], [0], [0], [1], [0, 0, 1, 1], [], []>} : vector<8x64xf32>, vector<64x256xf32>, vector<8x256xf32> -> vector<8x256xf32>
    %1176 = arith.addf %1156, %1175 : vector<8x256xf32>
    %1177 = vector.extract_strided_slice %1176 {offsets = [0, 0], sizes = [8, 192], strides = [1, 1]} : vector<8x256xf32> to vector<8x192xf32>
    %1178 = arith.negf %1177 : vector<8x192xf32>
    %1179 = math.exp %1178 : vector<8x192xf32>
    %cst_257 = arith.constant 1.000000e+00 : f32
    %1180 = vector.broadcast %cst_257 : f32 to vector<8x192xf32>
    %1181 = arith.addf %1180, %1179 : vector<8x192xf32>
    %1182 = arith.divf %1180, %1181 : vector<8x192xf32>
    %1183 = vector.extract_strided_slice %1176 {offsets = [0, 192], sizes = [8, 64], strides = [1, 1]} : vector<8x256xf32> to vector<8x64xf32>
    %1184 = math.tanh %1183 : vector<8x64xf32>
    %1185 = vector.extract_strided_slice %1182 {offsets = [0, 64], sizes = [8, 64], strides = [1, 1]} : vector<8x192xf32> to vector<8x64xf32>
    %1186 = arith.mulf %1185, %1147 : vector<8x64xf32>
    %1187 = vector.extract_strided_slice %1182 {offsets = [0, 0], sizes = [8, 64], strides = [1, 1]} : vector<8x192xf32> to vector<8x64xf32>
    %1188 = arith.mulf %1187, %1184 : vector<8x64xf32>
    %1189 = arith.addf %1186, %1188 : vector<8x64xf32>
    %1190 = vector.extract_strided_slice %1182 {offsets = [0, 128], sizes = [8, 64], strides = [1, 1]} : vector<8x192xf32> to vector<8x64xf32>
    %1191 = math.tanh %1189 : vector<8x64xf32>
    %1192 = arith.mulf %1190, %1191 : vector<8x64xf32>
    %1193 = vector.broadcast %c7_i32_248 : i32 to vector<8x1xi32>
    %1194 = arith.cmpi slt, %1193, %0 : vector<8x1xi32>
    %1195 = vector.broadcast %1148 : i32 to vector<8x1xi32>
    %1196 = arith.cmpi slt, %1195, %0 : vector<8x1xi32>
    %cst_258 = arith.constant 0.000000e+00 : f32
    %1197 = vector.shape_cast %1194 : vector<8x1xi1> to vector<8x1xi1>
    %1198 = vector.broadcast %1197 : vector<8x1xi1> to vector<8x64xi1>
    %1199 = vector.broadcast %cst_258 : f32 to vector<8x64xf32>
    %1200 = arith.select %1198, %1174, %1199 : vector<8x64xi1>, vector<8x64xf32>
    %1201 = arith.index_cast %c7_i32_248 : i32 to index
    %c0_259 = arith.constant 0 : index
    %c0_260 = arith.constant 0 : index
    %1202 = vector.load %arg19[%1201, %c0_259, %c0_260] : memref<8x8x64xf32, #tpu.memory_space<vmem>>, vector<1x8x64xf32>
    %1203 = vector.shape_cast %1202 : vector<1x8x64xf32> to vector<8x64xf32>
    %1204 = vector.shape_cast %1200 : vector<8x64xf32> to vector<1x8x64xf32>
    tpu.vector_store %arg19[%1201, %c0_259, %c0_260], %1204 {strides = array<i32>} : memref<8x8x64xf32, #tpu.memory_space<vmem>>, vector<1x8x64xf32>,
    %cst_261 = arith.constant 0.000000e+00 : f32
    %1205 = vector.shape_cast %1196 : vector<8x1xi1> to vector<8x1xi1>
    %1206 = vector.broadcast %1205 : vector<8x1xi1> to vector<8x64xi1>
    %1207 = vector.broadcast %cst_261 : f32 to vector<8x64xf32>
    %1208 = arith.select %1206, %1192, %1207 : vector<8x64xi1>, vector<8x64xf32>
    %1209 = arith.index_cast %1148 : i32 to index
    %c0_262 = arith.constant 0 : index
    %c0_263 = arith.constant 0 : index
    %1210 = vector.load %arg20[%1209, %c0_262, %c0_263] : memref<8x8x64xf32, #tpu.memory_space<vmem>>, vector<1x8x64xf32>
    %1211 = vector.shape_cast %1210 : vector<1x8x64xf32> to vector<8x64xf32>
    %1212 = vector.shape_cast %1208 : vector<8x64xf32> to vector<1x8x64xf32>
    tpu.vector_store %arg20[%1209, %c0_262, %c0_263], %1212 {strides = array<i32>} : memref<8x8x64xf32, #tpu.memory_space<vmem>>, vector<1x8x64xf32>,
    %1213 = vector.shape_cast %1194 : vector<8x1xi1> to vector<8x1xi1>
    %1214 = vector.broadcast %1213 : vector<8x1xi1> to vector<8x64xi1>
    %1215 = arith.select %1214, %1174, %1138 : vector<8x64xi1>, vector<8x64xf32>
    %1216 = vector.shape_cast %1194 : vector<8x1xi1> to vector<8x1xi1>
    %1217 = vector.broadcast %1216 : vector<8x1xi1> to vector<8x64xi1>
    %1218 = arith.select %1217, %1171, %1141 : vector<8x64xi1>, vector<8x64xf32>
    %1219 = vector.shape_cast %1196 : vector<8x1xi1> to vector<8x1xi1>
    %1220 = vector.broadcast %1219 : vector<8x1xi1> to vector<8x64xi1>
    %1221 = arith.select %1220, %1192, %1144 : vector<8x64xi1>, vector<8x64xf32>
    %1222 = vector.shape_cast %1196 : vector<8x1xi1> to vector<8x1xi1>
    %1223 = vector.broadcast %1222 : vector<8x1xi1> to vector<8x64xi1>
    %1224 = arith.select %1223, %1189, %1147 : vector<8x64xi1>, vector<8x64xf32>
    %c8_i32_264 = arith.constant 8 : i32
    %c0_265 = arith.constant 0 : index
    %c0_266 = arith.constant 0 : index
    %c0_267 = arith.constant 0 : index
    %1225 = vector.load %arg19[%c0_265, %c0_266, %c0_267] : memref<8x8x64xf32, #tpu.memory_space<vmem>>, vector<8x8x64xf32>
    %c0_268 = arith.constant 0 : index
    %c0_269 = arith.constant 0 : index
    %c0_270 = arith.constant 0 : index
    %1226 = vector.load %arg12[%c0_268, %c0_269, %c0_270] : memref<1x1x64xf32, #tpu.memory_space<vmem>>, vector<1x1x64xf32>
    %1227 = vector.broadcast %1226 : vector<1x1x64xf32> to vector<8x8x64xf32>
    %1228 = arith.mulf %1225, %1227 : vector<8x8x64xf32>
    %cst_271 = arith.constant dense<0.000000e+00> : vector<8x8xf32>
    %1229 = vector.multi_reduction <add>, %1228, %cst_271 [2] : vector<8x8x64xf32> to vector<8x8xf32>
    %c0_272 = arith.constant 0 : index
    %c0_273 = arith.constant 0 : index
    %c0_274 = arith.constant 0 : index
    %1230 = vector.load %arg20[%c0_272, %c0_273, %c0_274] : memref<8x8x64xf32, #tpu.memory_space<vmem>>, vector<8x8x64xf32>
    %c0_275 = arith.constant 0 : index
    %c0_276 = arith.constant 0 : index
    %c0_277 = arith.constant 0 : index
    %1231 = vector.load %arg13[%c0_275, %c0_276, %c0_277] : memref<1x1x64xf32, #tpu.memory_space<vmem>>, vector<1x1x64xf32>
    %1232 = vector.broadcast %1231 : vector<1x1x64xf32> to vector<8x8x64xf32>
    %1233 = arith.mulf %1230, %1232 : vector<8x8x64xf32>
    %cst_278 = arith.constant dense<0.000000e+00> : vector<8x8xf32>
    %1234 = vector.multi_reduction <add>, %1233, %cst_278 [2] : vector<8x8x64xf32> to vector<8x8xf32>
    %1235 = arith.addf %1229, %1234 : vector<8x8xf32>
    %c0_279 = arith.constant 0 : index
    %c0_280 = arith.constant 0 : index
    %1236 = vector.load %arg14[%c0_279, %c0_280] : memref<1x1xf32, #tpu.memory_space<vmem>>, vector<1x1xf32>
    %1237 = vector.broadcast %1236 : vector<1x1xf32> to vector<8x8xf32>
    %1238 = arith.addf %1235, %1237 : vector<8x8xf32>
    %c0_281 = arith.constant 0 : index
    %c0_282 = arith.constant 0 : index
    %1239 = vector.load %arg15[%c0_281, %c0_282] : memref<8x8xf32, #tpu.memory_space<vmem>>, vector<8x8xf32>
    tpu.vector_store %arg15[%c0_281, %c0_282], %1238 {strides = array<i32>} : memref<8x8xf32, #tpu.memory_space<vmem>>, vector<8x8xf32>,
    return
  }
  func.func @transform_0(%arg0: i32) -> (i32, i32) {
    %c0_i32 = arith.constant 0 : i32
    %c0_i32_0 = arith.constant 0 : i32
    %c0_i32_1 = arith.constant 0 : i32
    return %c0_i32, %c0_i32_0 : i32, i32
  }
  func.func @transform_1(%arg0: i32) -> (i32, i32) {
    %c0_i32 = arith.constant 0 : i32
    %c0_i32_0 = arith.constant 0 : i32
    %c0_i32_1 = arith.constant 0 : i32
    return %c0_i32, %c0_i32_0 : i32, i32
  }
  func.func @transform_2(%arg0: i32) -> (i32, i32) {
    %c0_i32 = arith.constant 0 : i32
    %c0_i32_0 = arith.constant 0 : i32
    %c0_i32_1 = arith.constant 0 : i32
    return %c0_i32, %c0_i32_0 : i32, i32
  }
  func.func @transform_3(%arg0: i32) -> (i32, i32) {
    %c0_i32 = arith.constant 0 : i32
    %c0_i32_0 = arith.constant 0 : i32
    %c0_i32_1 = arith.constant 0 : i32
    return %c0_i32, %c0_i32_0 : i32, i32
  }
  func.func @transform_4(%arg0: i32) -> (i32, i32) {
    %c0_i32 = arith.constant 0 : i32
    %c0_i32_0 = arith.constant 0 : i32
    %c0_i32_1 = arith.constant 0 : i32
    return %c0_i32, %c0_i32_0 : i32, i32
  }
  func.func @transform_5(%arg0: i32) -> (i32, i32) {
    %c0_i32 = arith.constant 0 : i32
    %c0_i32_0 = arith.constant 0 : i32
    %c0_i32_1 = arith.constant 0 : i32
    return %c0_i32, %c0_i32_0 : i32, i32
  }
  func.func @transform_6(%arg0: i32) -> (i32, i32) {
    %c0_i32 = arith.constant 0 : i32
    %c0_i32_0 = arith.constant 0 : i32
    %c0_i32_1 = arith.constant 0 : i32
    return %c0_i32, %c0_i32_0 : i32, i32
  }
  func.func @transform_7(%arg0: i32) -> (i32, i32) {
    %c0_i32 = arith.constant 0 : i32
    %c0_i32_0 = arith.constant 0 : i32
    %c0_i32_1 = arith.constant 0 : i32
    return %c0_i32, %c0_i32_0 : i32, i32
  }
  func.func @transform_8(%arg0: i32) -> (i32, i32) {
    %c0_i32 = arith.constant 0 : i32
    %c0_i32_0 = arith.constant 0 : i32
    %c0_i32_1 = arith.constant 0 : i32
    return %c0_i32, %c0_i32_0 : i32, i32
  }
  func.func @transform_9(%arg0: i32) -> (i32, i32) {
    %c0_i32 = arith.constant 0 : i32
    %c0_i32_0 = arith.constant 0 : i32
    %c0_i32_1 = arith.constant 0 : i32
    return %c0_i32, %c0_i32_0 : i32, i32
  }
  func.func @transform_10(%arg0: i32) -> (i32, i32) {
    %c0_i32 = arith.constant 0 : i32
    %c0_i32_0 = arith.constant 0 : i32
    %c0_i32_1 = arith.constant 0 : i32
    return %c0_i32, %c0_i32_0 : i32, i32
  }
  func.func @transform_11(%arg0: i32) -> (i32, i32, i32) {
    %c0_i32 = arith.constant 0 : i32
    %c0_i32_0 = arith.constant 0 : i32
    %c0_i32_1 = arith.constant 0 : i32
    %c0_i32_2 = arith.constant 0 : i32
    return %c0_i32, %c0_i32_0, %c0_i32_1 : i32, i32, i32
  }
  func.func @transform_12(%arg0: i32) -> (i32, i32, i32) {
    %c0_i32 = arith.constant 0 : i32
    %c0_i32_0 = arith.constant 0 : i32
    %c0_i32_1 = arith.constant 0 : i32
    %c0_i32_2 = arith.constant 0 : i32
    return %c0_i32, %c0_i32_0, %c0_i32_1 : i32, i32, i32
  }
  func.func @transform_13(%arg0: i32) -> (i32, i32) {
    %c0_i32 = arith.constant 0 : i32
    %c0_i32_0 = arith.constant 0 : i32
    %c0_i32_1 = arith.constant 0 : i32
    return %c0_i32, %c0_i32_0 : i32, i32
  }
  func.func @transform_14(%arg0: i32) -> (i32, i32) {
    %c0_i32 = arith.constant 0 : i32
    %c0_i32_0 = arith.constant 0 : i32
    %c0_i32_1 = arith.constant 0 : i32
    return %c0_i32, %c0_i32_0 : i32, i32
  }
}

</mosaic_0001>

<llo_original>
// kernel: tpu_custom_call.1
$region0: #{tpu_custom_call.1}
  #allocation0 [shape = 'u32[]', space=smem, size = 0x4, offset = 0x4, fixed_abs, tag = 'smem constant byte address 0x4 - core index']
  #allocation1 [shape = 'u32[144,128]{1,0:T(1,128)}', space=vmem, size = 0x12000, scoped, tag = 'internal scratch']
  #allocation2 [shape = 'f32[64,512]{1,0:T(8,128)}', space=vmem, size = 0x20000, scoped, tag = 'scratch operand']
  #allocation3 [shape = 'f32[64,64]{1,0:T(8,128)}', space=vmem, size = 0x8000, scoped, tag = 'scratch operand']
  #allocation4 [shape = 'f32[64,64]{1,0:T(8,128)}', space=vmem, size = 0x8000, scoped, tag = 'scratch operand']
  #allocation5 [shape = 'f32[8,8,64]{2,1,0:T(8,128)}', space=vmem, size = 0x8000, scoped, tag = 'scratch operand']
  #allocation6 [shape = 'f32[8,8,64]{2,1,0:T(8,128)}', space=vmem, size = 0x8000, scoped, tag = 'scratch operand']
  #allocation7 [shape = 'f32[1,1]{1,0:T(1,128)S(1)}', space=vmem, size = 0x200, scoped, tag = 'scoped memory for tpu_custom_call.1']
  %s0 = inlined_call_operand.vmem [shape: f32[64,34], index: 0, kind: input, shape index: {}]
  %s1 = inlined_call_operand.vmem [shape: s32[8,1], index: 1, kind: input, shape index: {}]
  %s2 = inlined_call_operand.hbm [shape: f32[34,512], index: 2, kind: input, shape index: {}]
  %s3 = inlined_call_operand.hbm [shape: f32[64,256], index: 3, kind: input, shape index: {}]
  %s4 = inlined_call_operand.hbm [shape: f32[64,256], index: 4, kind: input, shape index: {}]
  %s5 = inlined_call_operand.hbm [shape: f32[1,512], index: 5, kind: input, shape index: {}]
  %s6 = inlined_call_operand.hbm [shape: f32[64,512], index: 6, kind: input, shape index: {}]
  %s7 = inlined_call_operand.hbm [shape: f32[64,512], index: 7, kind: input, shape index: {}]
  %s8 = inlined_call_operand.vmem [shape: f32[64,256], index: 8, kind: input, shape index: {}]
  %s9 = inlined_call_operand.hbm [shape: f32[64,256], index: 9, kind: input, shape index: {}]
  %s10 = inlined_call_operand.vmem [shape: f32[1,512], index: 10, kind: input, shape index: {}]
  %s11 = inlined_call_operand.vmem [shape: f32[1,1,64], index: 11, kind: input, shape index: {}]
  %s12 = inlined_call_operand.vmem [shape: f32[1,1,64], index: 12, kind: input, shape index: {}]
  %s13 = inlined_call_operand.<no memory space> [shape: f32[1,1], index: 13, kind: input, shape index: {}]
  %s14 = inlined_call_operand.hbm [shape: f32[8,8], index: 14, kind: output, shape index: {}]
  %s15 = sld [smem:[#allocation0]]
  $region94: #{tpu_custom_call.1} parent=0
    _
  %s17 = ssub.s32 1, %s15
  %s18 = scalar_select 0, %s17, %s15
  %v19 = vstv %s13
  %20 = vst [vmem:[#allocation7] sm:$0x1] %v19
  $region1: #{tpu_custom_call.1} parent=0
    #allocation8 [shape = 'u8[81920]{0}', space=vmem, size = 0x14000, scoped, tag = 'input window, operand 2, single buffered']
    #allocation9 [shape = 's32[1]{0}', space=sflag, size = 0x4, scoped, tag = 'scoped memory for tpu_custom_call.1']
    #allocation10 [shape = 's32[1]{0}', space=sflag, size = 0x4, scoped, tag = 'scoped memory for tpu_custom_call.1']
    #allocation11 [shape = 'u8[65536]{0}', space=vmem, size = 0x10000, scoped, tag = 'input window, operand 3, single buffered']
    #allocation12 [shape = 's32[1]{0}', space=sflag, size = 0x4, scoped, tag = 'scoped memory for tpu_custom_call.1']
    #allocation13 [shape = 'u8[65536]{0}', space=vmem, size = 0x10000, scoped, tag = 'input window, operand 4, single buffered']
    #allocation14 [shape = 'u8[2048]{0}', space=vmem, size = 0x800, scoped, tag = 'input window, operand 5, single buffered']
    #allocation15 [shape = 's32[1]{0}', space=sflag, size = 0x4, scoped, tag = 'scoped memory for tpu_custom_call.1']
    #allocation16 [shape = 'u8[131072]{0}', space=vmem, size = 0x20000, scoped, tag = 'input window, operand 6, single buffered']
    #allocation17 [shape = 'u8[131072]{0}', space=vmem, size = 0x20000, scoped, tag = 'input window, operand 7, single buffered']
    #allocation18 [shape = 's32[1]{0}', space=sflag, size = 0x4, scoped, tag = 'scoped memory for tpu_custom_call.1']
    #allocation19 [shape = 'u8[65536]{0}', space=vmem, size = 0x10000, scoped, tag = 'input window, operand 9, single buffered']
    #allocation20 [shape = 'u8[4096]{0}', space=vmem, size = 0x1000, scoped, tag = 'output window, operand 0, single buffered']
    %21 = vsyncpa [#allocation9], 0
    %22 = vsyncpa [#allocation12], 0
    %23 = vsyncpa [#allocation15], 0
    %24 = vsyncpa [#allocation18], 0
    %25 = vsyncpa [#allocation10], 0
    // Predicated region
    $region2: #{tpu_custom_call.1} parent=1 // pred_check
      _
    $region3: #{tpu_custom_call.1} parent=1 // pred_check_branch
      %27 = sbr.rel (0) target = $region5
    $region4: #{tpu_custom_call.1} parent=1 // pred_region
      _
    $region5: #{tpu_custom_call.1} parent=1 // pred_fallthru
      _
    // Predicated region
    $region6: #{tpu_custom_call.1} parent=1 // pred_check
      _
    $region7: #{tpu_custom_call.1} parent=1 // pred_check_branch
      %29 = sbr.rel (0) target = $region9
    $region8: #{tpu_custom_call.1} parent=1 // pred_region
      _
    $region9: #{tpu_custom_call.1} parent=1 // pred_fallthru
      _
    // Predicated region
    $region10: #{tpu_custom_call.1} parent=1 // pred_check
      _
    $region11: #{tpu_custom_call.1} parent=1 // pred_check_branch
      %31 = sbr.rel (0) target = $region13
    $region12: #{tpu_custom_call.1} parent=1 // pred_region
      %s33 = ssub.s32 2560, 2560
      %34 = vsyncadd [#allocation9], %s33
      %s35 = sshll.u32 [#allocation8], 4
      %s36 = int_to_ptr.vmem [resolvable:$true] %s35
      %41 = dma.hbm_to_vmem [thread:$0]  %s2, 2560, %s36, [#allocation9], 512, 512, 32
    $region13: #{tpu_custom_call.1} parent=1 // pred_fallthru
      _
    // Predicated region
    $region14: #{tpu_custom_call.1} parent=1 // pred_check
      _
    $region15: #{tpu_custom_call.1} parent=1 // pred_check_branch
      %43 = sbr.rel (0) target = $region17
    $region16: #{tpu_custom_call.1} parent=1 // pred_region
      %s45 = ssub.s32 2048, 2048
      %46 = vsyncadd [#allocation12], %s45
      %s47 = sshll.u32 [#allocation11], 4
      %s48 = int_to_ptr.vmem [resolvable:$true] %s47
      %53 = dma.hbm_to_vmem [thread:$0]  %s3, 2048, %s48, [#allocation12], 256, 256, 16
    $region17: #{tpu_custom_call.1} parent=1 // pred_fallthru
      _
    // Predicated region
    $region18: #{tpu_custom_call.1} parent=1 // pred_check
      _
    $region19: #{tpu_custom_call.1} parent=1 // pred_check_branch
      %55 = sbr.rel (0) target = $region21
    $region20: #{tpu_custom_call.1} parent=1 // pred_region
      %s57 = ssub.s32 2048, 2048
      %58 = vsyncadd [#allocation12], %s57
      %s59 = sshll.u32 [#allocation13], 4
      %s60 = int_to_ptr.vmem [resolvable:$true] %s59
      %65 = dma.hbm_to_vmem [thread:$0]  %s4, 2048, %s60, [#allocation12], 256, 256, 16
    $region21: #{tpu_custom_call.1} parent=1 // pred_fallthru
      _
    // Predicated region
    $region22: #{tpu_custom_call.1} parent=1 // pred_check
      _
    $region23: #{tpu_custom_call.1} parent=1 // pred_check_branch
      %67 = sbr.rel (0) target = $region25
    $region24: #{tpu_custom_call.1} parent=1 // pred_region
      %s69 = ssub.s32 64, 64
      %70 = vsyncadd [#allocation15], %s69
      %s72 = sshll.u32 [#allocation14], 4
      %s73 = int_to_ptr.vmem [resolvable:$true] %s72
      %75 = dma.hbm_to_vmem [thread:$0]  %s5, 64, %s73, [#allocation15]
    $region25: #{tpu_custom_call.1} parent=1 // pred_fallthru
      _
    // Predicated region
    $region26: #{tpu_custom_call.1} parent=1 // pred_check
      _
    $region27: #{tpu_custom_call.1} parent=1 // pred_check_branch
      %77 = sbr.rel (0) target = $region29
    $region28: #{tpu_custom_call.1} parent=1 // pred_region
      %s79 = ssub.s32 4096, 4096
      %80 = vsyncadd [#allocation15], %s79
      %s81 = sshll.u32 [#allocation16], 4
      %s82 = int_to_ptr.vmem [resolvable:$true] %s81
      %87 = dma.hbm_to_vmem [thread:$0]  %s6, 4096, %s82, [#allocation15], 512, 512, 32
    $region29: #{tpu_custom_call.1} parent=1 // pred_fallthru
      _
    // Predicated region
    $region30: #{tpu_custom_call.1} parent=1 // pred_check
      _
    $region31: #{tpu_custom_call.1} parent=1 // pred_check_branch
      %89 = sbr.rel (0) target = $region33
    $region32: #{tpu_custom_call.1} parent=1 // pred_region
      %s91 = ssub.s32 4096, 4096
      %92 = vsyncadd [#allocation18], %s91
      %s93 = sshll.u32 [#allocation17], 4
      %s94 = int_to_ptr.vmem [resolvable:$true] %s93
      %99 = dma.hbm_to_vmem [thread:$0]  %s7, 4096, %s94, [#allocation18], 512, 512, 32
    $region33: #{tpu_custom_call.1} parent=1 // pred_fallthru
      _
    // Predicated region
    $region34: #{tpu_custom_call.1} parent=1 // pred_check
      _
    $region35: #{tpu_custom_call.1} parent=1 // pred_check_branch
      %101 = sbr.rel (0) target = $region37
    $region36: #{tpu_custom_call.1} parent=1 // pred_region
      _
    $region37: #{tpu_custom_call.1} parent=1 // pred_fallthru
      _
    // Predicated region
    $region38: #{tpu_custom_call.1} parent=1 // pred_check
      _
    $region39: #{tpu_custom_call.1} parent=1 // pred_check_branch
      %103 = sbr.rel (0) target = $region41
    $region40: #{tpu_custom_call.1} parent=1 // pred_region
      %s105 = ssub.s32 2048, 2048
      %106 = vsyncadd [#allocation18], %s105
      %s107 = sshll.u32 [#allocation19], 4
      %s108 = int_to_ptr.vmem [resolvable:$true] %s107
      %113 = dma.hbm_to_vmem [thread:$0]  %s9, 2048, %s108, [#allocation18], 256, 256, 16
    $region41: #{tpu_custom_call.1} parent=1 // pred_fallthru
      _
    // Predicated region
    $region42: #{tpu_custom_call.1} parent=1 // pred_check
      _
    $region43: #{tpu_custom_call.1} parent=1 // pred_check_branch
      %115 = sbr.rel (0) target = $region45
    $region44: #{tpu_custom_call.1} parent=1 // pred_region
      _
    $region45: #{tpu_custom_call.1} parent=1 // pred_fallthru
      _
    // Predicated region
    $region46: #{tpu_custom_call.1} parent=1 // pred_check
      _
    $region47: #{tpu_custom_call.1} parent=1 // pred_check_branch
      %117 = sbr.rel (0) target = $region49
    $region48: #{tpu_custom_call.1} parent=1 // pred_region
      _
    $region49: #{tpu_custom_call.1} parent=1 // pred_fallthru
      _
    // Predicated region
    $region50: #{tpu_custom_call.1} parent=1 // pred_check
      _
    $region51: #{tpu_custom_call.1} parent=1 // pred_check_branch
      %119 = sbr.rel (0) target = $region53
    $region52: #{tpu_custom_call.1} parent=1 // pred_region
      _
    $region53: #{tpu_custom_call.1} parent=1 // pred_fallthru
      _
    // Predicated region
    $region54: #{tpu_custom_call.1} parent=1 // pred_check
      _
    $region55: #{tpu_custom_call.1} parent=1 // pred_check_branch
      %121 = sbr.rel (0) target = $region57
    $region56: #{tpu_custom_call.1} parent=1 // pred_region
      _
    $region57: #{tpu_custom_call.1} parent=1 // pred_fallthru
      _
    // Predicated region
    $region58: #{tpu_custom_call.1} parent=1 // pred_check
      _
    $region59: #{tpu_custom_call.1} parent=1 // pred_check_branch
      %123 = sbr.rel (0) target = $region61
    $region60: #{tpu_custom_call.1} parent=1 // pred_region
      %124 = dma.done [#allocation9], 2560
    $region61: #{tpu_custom_call.1} parent=1 // pred_fallthru
      _
    // Predicated region
    $region62: #{tpu_custom_call.1} parent=1 // pred_check
      _
    $region63: #{tpu_custom_call.1} parent=1 // pred_check_branch
      %126 = sbr.rel (0) target = $region65
    $region64: #{tpu_custom_call.1} parent=1 // pred_region
      %127 = dma.done [#allocation12], 2048
    $region65: #{tpu_custom_call.1} parent=1 // pred_fallthru
      _
    // Predicated region
    $region66: #{tpu_custom_call.1} parent=1 // pred_check
      _
    $region67: #{tpu_custom_call.1} parent=1 // pred_check_branch
      %129 = sbr.rel (0) target = $region69
    $region68: #{tpu_custom_call.1} parent=1 // pred_region
      %130 = dma.done [#allocation12], 2048
    $region69: #{tpu_custom_call.1} parent=1 // pred_fallthru
      _
    // Predicated region
    $region70: #{tpu_custom_call.1} parent=1 // pred_check
      _
    $region71: #{tpu_custom_call.1} parent=1 // pred_check_branch
      %132 = sbr.rel (0) target = $region73
    $region72: #{tpu_custom_call.1} parent=1 // pred_region
      %133 = dma.done [#allocation15], 64
    $region73: #{tpu_custom_call.1} parent=1 // pred_fallthru
      _
    // Predicated region
    $region74: #{tpu_custom_call.1} parent=1 // pred_check
      _
    $region75: #{tpu_custom_call.1} parent=1 // pred_check_branch
      %135 = sbr.rel (0) target = $region77
    $region76: #{tpu_custom_call.1} parent=1 // pred_region
      %136 = dma.done [#allocation15], 4096
    $region77: #{tpu_custom_call.1} parent=1 // pred_fallthru
      _
    // Predicated region
    $region78: #{tpu_custom_call.1} parent=1 // pred_check
      _
    $region79: #{tpu_custom_call.1} parent=1 // pred_check_branch
      %138 = sbr.rel (0) target = $region81
    $region80: #{tpu_custom_call.1} parent=1 // pred_region
      %139 = dma.done [#allocation18], 4096
    $region81: #{tpu_custom_call.1} parent=1 // pred_fallthru
      _
    // Predicated region
    $region82: #{tpu_custom_call.1} parent=1 // pred_check
      _
    $region83: #{tpu_custom_call.1} parent=1 // pred_check_branch
      %141 = sbr.rel (0) target = $region85
    $region84: #{tpu_custom_call.1} parent=1 // pred_region
      %142 = dma.done [#allocation18], 2048
    $region85: #{tpu_custom_call.1} parent=1 // pred_fallthru
      _
    %v143 = vld [vmem:[%s1] sm:$0xff]
    %v144 = vld [vmem:[%s0] sm:$0xff]
    %v145 = vld [vmem:[%s0 + $0x8] sm:$0xff]
    %v146 = vld [vmem:[%s0 + $0x10] sm:$0xff]
    %v147 = vld [vmem:[%s0 + $0x18] sm:$0xff]
    %v148 = vld [vmem:[%s0 + $0x20] sm:$0xff]
    %v149 = vld [vmem:[%s0 + $0x28] sm:$0xff]
    %v150 = vld [vmem:[%s0 + $0x30] sm:$0xff]
    %v151 = vld [vmem:[%s0 + $0x38] sm:$0xff]
    %v152 = vld [vmem:[#allocation8] sm:$0xff]
    %v153 = vld [vmem:[#allocation8 + $0x8] sm:$0xff]
    %v154 = vld [vmem:[#allocation8 + $0x10] sm:$0xff]
    %v155 = vld [vmem:[#allocation8 + $0x18] sm:$0xff]
    %v156 = vld [vmem:[#allocation8 + $0x20] sm:$0xff]
    %v157 = vld [vmem:[#allocation8 + $0x28] sm:$0xff]
    %v158 = vld [vmem:[#allocation8 + $0x30] sm:$0xff]
    %v159 = vld [vmem:[#allocation8 + $0x38] sm:$0xff]
    %v160 = vld [vmem:[#allocation8 + $0x40] sm:$0xff]
    %v161 = vld [vmem:[#allocation8 + $0x48] sm:$0xff]
    %v162 = vld [vmem:[#allocation8 + $0x50] sm:$0xff]
    %v163 = vld [vmem:[#allocation8 + $0x58] sm:$0xff]
    %v164 = vld [vmem:[#allocation8 + $0x60] sm:$0xff]
    %v165 = vld [vmem:[#allocation8 + $0x68] sm:$0xff]
    %v166 = vld [vmem:[#allocation8 + $0x70] sm:$0xff]
    %v167 = vld [vmem:[#allocation8 + $0x78] sm:$0xff]
    %v168 = vld [vmem:[#allocation8 + $0x80] sm:$0x3]
    %v169 = vld [vmem:[#allocation8 + $0x88] sm:$0x3]
    %v170 = vld [vmem:[#allocation8 + $0x90] sm:$0x3]
    %v171 = vld [vmem:[#allocation8 + $0x98] sm:$0x3]
    %v172 = vld [vmem:[#allocation14] sm:$0xf]
    %v174 = vlaneseq
    %v175 = vshrl.u32 %v174, 7
    %v176 = vsub.s32 0, %v175
    %v177 = vrot.slane %v172, %v176
    %v178 = vlaneseq
    %v179 = vshrl.u32 %v178, 7
    %v180 = vsub.s32 1, %v179
    %v181 = vrot.slane %v172, %v180
    %v182 = vlaneseq
    %v183 = vshrl.u32 %v182, 7
    %v184 = vsub.s32 2, %v183
    %v185 = vrot.slane %v172, %v184
    %v186 = vlaneseq
    %v187 = vshrl.u32 %v186, 7
    %v188 = vsub.s32 3, %v187
    %v189 = vrot.slane %v172, %v188
    %vm194 = vcmask 277504
    %v196 = vsel %vm194, %v144, 0
    %v199 = vsel %vm194, %v145, 0
    %v202 = vsel %vm194, %v146, 0
    %v205 = vsel %vm194, %v147, 0
    %v208 = vsel %vm194, %v148, 0
    %v211 = vsel %vm194, %v149, 0
    %v214 = vsel %vm194, %v150, 0
    %v217 = vsel %vm194, %v151, 0
    %vm219 = vcmask 1041408
    %v221 = vsel %vm219, %v168, 0
    %v224 = vsel %vm219, %v169, 0
    %v227 = vsel %vm219, %v170, 0
    %v230 = vsel %vm219, %v171, 0
    %232 = vmatprep.subr.mxu0 0.0
    %233 = vmatpush1.msra.mxu0 0.0
    %234 = vmatprep.subr.mxu0 0.0
    %235 = vmatpush1.msra.mxu0 0.0
    %236 = vmatprep.subr.mxu0 0.0
    %237 = vmatpush1.msra.mxu0 0.0
    %238 = vmatprep.subr.mxu0 0.0
    %239 = vmatpush1.msra.mxu0 0.0
    %240 = vmatprep.subr.mxu0 0.0
    %241 = vmatpush1.msra.mxu0 0.0
    %242 = vmatprep.subr.mxu0 0.0
    %243 = vmatpush1.msra.mxu0 0.0
    %244 = vmatprep.subr.mxu0 0.0
    %245 = vmatpush1.msra.mxu0 0.0
    %246 = vmatprep.subr.mxu0 0.0
    %247 = vmatpush1.msra.mxu0 0.0
    %248 = vmatprep.subr.mxu0 0.0
    %249 = vmatpush1.msra.mxu0 0.0
    %250 = vmatprep.subr.mxu0 0.0
    %251 = vmatpush1.msra.mxu0 0.0
    %252 = vmatprep.subr.mxu0 0.0
    %253 = vmatpush1.msra.mxu0 0.0
    %254 = vmatprep.subr.mxu0 %v224
    %255 = vmatpush1.msra.mxu0 %v221
    %256 = vmatprep.subr.mxu0 %v165
    %257 = vmatpush1.msra.mxu0 %v164
    %258 = vmatprep.subr.mxu0 %v161
    %259 = vmatpush1.msra.mxu0 %v160
    %260 = vmatprep.subr.mxu0 %v157
    %261 = vmatpush1.msra.mxu0 %v156
    %262 = vmatprep.subr.mxu0 %v153
    %263 = vmatpush1.msra.mxu0 %v152
    %264 = vmatprep.subr.mxu0 0.0
    %265 = vmatpush2.msra.mxu0 0.0
    %266 = vmatprep.subr.mxu0 0.0
    %267 = vmatpush2.msra.mxu0 0.0
    %268 = vmatprep.subr.mxu0 0.0
    %269 = vmatpush2.msra.mxu0 0.0
    %270 = vmatprep.subr.mxu0 0.0
    %271 = vmatpush2.msra.mxu0 0.0
    %272 = vmatprep.subr.mxu0 0.0
    %273 = vmatpush2.msra.mxu0 0.0
    %274 = vmatprep.subr.mxu0 0.0
    %275 = vmatpush2.msra.mxu0 0.0
    %276 = vmatprep.subr.mxu0 0.0
    %277 = vmatpush2.msra.mxu0 0.0
    %278 = vmatprep.subr.mxu0 0.0
    %279 = vmatpush2.msra.mxu0 0.0
    %280 = vmatprep.subr.mxu0 0.0
    %281 = vmatpush2.msra.mxu0 0.0
    %282 = vmatprep.subr.mxu0 0.0
    %283 = vmatpush2.msra.mxu0 0.0
    %284 = vmatprep.subr.mxu0 0.0
    %285 = vmatpush2.msra.mxu0 0.0
    %286 = vmatprep.subr.mxu0 0.0
    %287 = vmatpush2.msra.mxu0 0.0
    %288 = vmatprep.subr.mxu0 0.0
    %289 = vmatpush2.msra.mxu0 0.0
    %290 = vmatprep.subr.mxu0 0.0
    %291 = vmatpush2.msra.mxu0 0.0
    %292 = vmatprep.subr.mxu0 0.0
    %293 = vmatpush2.msra.mxu0 0.0
    %294 = vmatprep.subr.mxu0 0.0
    %295 = vmatpush2.msra.mxu0 0.0
    %296 = vmatprep.mubr.f32.mxu0 0.0
    %297 = vmatmul.mubr.f32.gmra.mxu0 %v196
    %v298 = vpop.f32.mrf.mxu0
    %v299 = vadd.f32 %v177, %v298
    %v300 = vpop.f32.mrf.mxu0
    %v301 = vadd.f32 %v181, %v300
    %302 = vmatprep.mubr.f32.mxu0 0.0
    %303 = vmatmul.mubr.f32.gmra.mxu0 %v199
    %v304 = vpop.f32.mrf.mxu0
    %v305 = vadd.f32 %v177, %v304
    %v306 = vpop.f32.mrf.mxu0
    %v307 = vadd.f32 %v181, %v306
    %308 = vmatprep.mubr.f32.mxu0 0.0
    %309 = vmatmul.mubr.f32.gmra.mxu0 %v202
    %v310 = vpop.f32.mrf.mxu0
    %v311 = vadd.f32 %v177, %v310
    %v312 = vpop.f32.mrf.mxu0
    %v313 = vadd.f32 %v181, %v312
    %314 = vmatprep.mubr.f32.mxu0 0.0
    %315 = vmatmul.mubr.f32.gmra.mxu0 %v205
    %v316 = vpop.f32.mrf.mxu0
    %v317 = vadd.f32 %v177, %v316
    %v318 = vpop.f32.mrf.mxu0
    %v319 = vadd.f32 %v181, %v318
    %320 = vmatprep.mubr.f32.mxu0 0.0
    %321 = vmatmul.mubr.f32.gmra.mxu0 %v208
    %v322 = vpop.f32.mrf.mxu0
    %v323 = vadd.f32 %v177, %v322
    %v324 = vpop.f32.mrf.mxu0
    %v325 = vadd.f32 %v181, %v324
    %326 = vmatprep.mubr.f32.mxu0 0.0
    %327 = vmatmul.mubr.f32.gmra.mxu0 %v211
    %v328 = vpop.f32.mrf.mxu0
    %v329 = vadd.f32 %v177, %v328
    %v330 = vpop.f32.mrf.mxu0
    %v331 = vadd.f32 %v181, %v330
    %332 = vmatprep.mubr.f32.mxu0 0.0
    %333 = vmatmul.mubr.f32.gmra.mxu0 %v214
    %v334 = vpop.f32.mrf.mxu0
    %v335 = vadd.f32 %v177, %v334
    %v336 = vpop.f32.mrf.mxu0
    %v337 = vadd.f32 %v181, %v336
    %338 = vmatprep.mubr.f32.mxu0 0.0
    %339 = vmatmul.mubr.f32.gmra.mxu0 %v217
    %v340 = vpop.f32.mrf.mxu0
    %v341 = vadd.f32 %v177, %v340
    %v342 = vpop.f32.mrf.mxu0
    %v343 = vadd.f32 %v181, %v342
    %344 = vdwg.mxu0
    %345 = vmatprep.subr.mxu0 0.0
    %346 = vmatpush1.msra.mxu0 0.0
    %347 = vmatprep.subr.mxu0 0.0
    %348 = vmatpush1.msra.mxu0 0.0
    %349 = vmatprep.subr.mxu0 0.0
    %350 = vmatpush1.msra.mxu0 0.0
    %351 = vmatprep.subr.mxu0 0.0
    %352 = vmatpush1.msra.mxu0 0.0
    %353 = vmatprep.subr.mxu0 0.0
    %354 = vmatpush1.msra.mxu0 0.0
    %355 = vmatprep.subr.mxu0 0.0
    %356 = vmatpush1.msra.mxu0 0.0
    %357 = vmatprep.subr.mxu0 0.0
    %358 = vmatpush1.msra.mxu0 0.0
    %359 = vmatprep.subr.mxu0 0.0
    %360 = vmatpush1.msra.mxu0 0.0
    %361 = vmatprep.subr.mxu0 0.0
    %362 = vmatpush1.msra.mxu0 0.0
    %363 = vmatprep.subr.mxu0 0.0
    %364 = vmatpush1.msra.mxu0 0.0
    %365 = vmatprep.subr.mxu0 0.0
    %366 = vmatpush1.msra.mxu0 0.0
    %367 = vmatprep.subr.mxu0 %v230
    %368 = vmatpush1.msra.mxu0 %v227
    %369 = vmatprep.subr.mxu0 %v167
    %370 = vmatpush1.msra.mxu0 %v166
    %371 = vmatprep.subr.mxu0 %v163
    %372 = vmatpush1.msra.mxu0 %v162
    %373 = vmatprep.subr.mxu0 %v159
    %374 = vmatpush1.msra.mxu0 %v158
    %375 = vmatprep.subr.mxu0 %v155
    %376 = vmatpush1.msra.mxu0 %v154
    %377 = vmatprep.subr.mxu0 0.0
    %378 = vmatpush2.msra.mxu0 0.0
    %379 = vmatprep.subr.mxu0 0.0
    %380 = vmatpush2.msra.mxu0 0.0
    %381 = vmatprep.subr.mxu0 0.0
    %382 = vmatpush2.msra.mxu0 0.0
    %383 = vmatprep.subr.mxu0 0.0
    %384 = vmatpush2.msra.mxu0 0.0
    %385 = vmatprep.subr.mxu0 0.0
    %386 = vmatpush2.msra.mxu0 0.0
    %387 = vmatprep.subr.mxu0 0.0
    %388 = vmatpush2.msra.mxu0 0.0
    %389 = vmatprep.subr.mxu0 0.0
    %390 = vmatpush2.msra.mxu0 0.0
    %391 = vmatprep.subr.mxu0 0.0
    %392 = vmatpush2.msra.mxu0 0.0
    %393 = vmatprep.subr.mxu0 0.0
    %394 = vmatpush2.msra.mxu0 0.0
    %395 = vmatprep.subr.mxu0 0.0
    %396 = vmatpush2.msra.mxu0 0.0
    %397 = vmatprep.subr.mxu0 0.0
    %398 = vmatpush2.msra.mxu0 0.0
    %399 = vmatprep.subr.mxu0 0.0
    %400 = vmatpush2.msra.mxu0 0.0
    %401 = vmatprep.subr.mxu0 0.0
    %402 = vmatpush2.msra.mxu0 0.0
    %403 = vmatprep.subr.mxu0 0.0
    %404 = vmatpush2.msra.mxu0 0.0
    %405 = vmatprep.subr.mxu0 0.0
    %406 = vmatpush2.msra.mxu0 0.0
    %407 = vmatprep.subr.mxu0 0.0
    %408 = vmatpush2.msra.mxu0 0.0
    %409 = vmatprep.mubr.f32.mxu0 0.0
    %410 = vmatmul.mubr.f32.gmra.mxu0 %v196
    %v411 = vpop.f32.mrf.mxu0
    %v412 = vadd.f32 %v185, %v411
    %v413 = vpop.f32.mrf.mxu0
    %v414 = vadd.f32 %v189, %v413
    %415 = vmatprep.mubr.f32.mxu0 0.0
    %416 = vmatmul.mubr.f32.gmra.mxu0 %v199
    %v417 = vpop.f32.mrf.mxu0
    %v418 = vadd.f32 %v185, %v417
    %v419 = vpop.f32.mrf.mxu0
    %v420 = vadd.f32 %v189, %v419
    %421 = vmatprep.mubr.f32.mxu0 0.0
    %422 = vmatmul.mubr.f32.gmra.mxu0 %v202
    %v423 = vpop.f32.mrf.mxu0
    %v424 = vadd.f32 %v185, %v423
    %v425 = vpop.f32.mrf.mxu0
    %v426 = vadd.f32 %v189, %v425
    %427 = vmatprep.mubr.f32.mxu0 0.0
    %428 = vmatmul.mubr.f32.gmra.mxu0 %v205
    %v429 = vpop.f32.mrf.mxu0
    %v430 = vadd.f32 %v185, %v429
    %v431 = vpop.f32.mrf.mxu0
    %v432 = vadd.f32 %v189, %v431
    %433 = vmatprep.mubr.f32.mxu0 0.0
    %434 = vmatmul.mubr.f32.gmra.mxu0 %v208
    %v435 = vpop.f32.mrf.mxu0
    %v436 = vadd.f32 %v185, %v435
    %v437 = vpop.f32.mrf.mxu0
    %v438 = vadd.f32 %v189, %v437
    %439 = vmatprep.mubr.f32.mxu0 0.0
    %440 = vmatmul.mubr.f32.gmra.mxu0 %v211
    %v441 = vpop.f32.mrf.mxu0
    %v442 = vadd.f32 %v185, %v441
    %v443 = vpop.f32.mrf.mxu0
    %v444 = vadd.f32 %v189, %v443
    %445 = vmatprep.mubr.f32.mxu0 0.0
    %446 = vmatmul.mubr.f32.gmra.mxu0 %v214
    %v447 = vpop.f32.mrf.mxu0
    %v448 = vadd.f32 %v185, %v447
    %v449 = vpop.f32.mrf.mxu0
    %v450 = vadd.f32 %v189, %v449
    %451 = vmatprep.mubr.f32.mxu0 0.0
    %452 = vmatmul.mubr.f32.gmra.mxu0 %v217
    %v453 = vpop.f32.mrf.mxu0
    %v454 = vadd.f32 %v185, %v453
    %v455 = vpop.f32.mrf.mxu0
    %v456 = vadd.f32 %v189, %v455
    %457 = vdwg.mxu0
    %458 = vst [vmem:[#allocation2] sm:$0xff] %v299
    %459 = vst [vmem:[#allocation2 + $0x8] sm:$0xff] %v301
    %460 = vst [vmem:[#allocation2 + $0x10] sm:$0xff] %v412
    %461 = vst [vmem:[#allocation2 + $0x18] sm:$0xff] %v414
    %462 = vst [vmem:[#allocation2 + $0x20] sm:$0xff] %v305
    %463 = vst [vmem:[#allocation2 + $0x28] sm:$0xff] %v307
    %464 = vst [vmem:[#allocation2 + $0x30] sm:$0xff] %v418
    %465 = vst [vmem:[#allocation2 + $0x38] sm:$0xff] %v420
    %466 = vst [vmem:[#allocation2 + $0x40] sm:$0xff] %v311
    %467 = vst [vmem:[#allocation2 + $0x48] sm:$0xff] %v313
    %468 = vst [vmem:[#allocation2 + $0x50] sm:$0xff] %v424
    %469 = vst [vmem:[#allocation2 + $0x58] sm:$0xff] %v426
    %470 = vst [vmem:[#allocation2 + $0x60] sm:$0xff] %v317
    %471 = vst [vmem:[#allocation2 + $0x68] sm:$0xff] %v319
    %472 = vst [vmem:[#allocation2 + $0x70] sm:$0xff] %v430
    %473 = vst [vmem:[#allocation2 + $0x78] sm:$0xff] %v432
    %474 = vst [vmem:[#allocation2 + $0x80] sm:$0xff] %v323
    %475 = vst [vmem:[#allocation2 + $0x88] sm:$0xff] %v325
    %476 = vst [vmem:[#allocation2 + $0x90] sm:$0xff] %v436
    %477 = vst [vmem:[#allocation2 + $0x98] sm:$0xff] %v438
    %478 = vst [vmem:[#allocation2 + $0xa0] sm:$0xff] %v329
    %479 = vst [vmem:[#allocation2 + $0xa8] sm:$0xff] %v331
    %480 = vst [vmem:[#allocation2 + $0xb0] sm:$0xff] %v442
    %481 = vst [vmem:[#allocation2 + $0xb8] sm:$0xff] %v444
    %482 = vst [vmem:[#allocation2 + $0xc0] sm:$0xff] %v335
    %483 = vst [vmem:[#allocation2 + $0xc8] sm:$0xff] %v337
    %484 = vst [vmem:[#allocation2 + $0xd0] sm:$0xff] %v448
    %485 = vst [vmem:[#allocation2 + $0xd8] sm:$0xff] %v450
    %486 = vst [vmem:[#allocation2 + $0xe0] sm:$0xff] %v341
    %487 = vst [vmem:[#allocation2 + $0xe8] sm:$0xff] %v343
    %488 = vst [vmem:[#allocation2 + $0xf0] sm:$0xff] %v454
    %489 = vst [vmem:[#allocation2 + $0xf8] sm:$0xff] %v456
    %v490 = vld [vmem:[#allocation11] sm:$0xff]
    %v491 = vld [vmem:[#allocation11 + $0x8] sm:$0xff]
    %v492 = vld [vmem:[#allocation11 + $0x10] sm:$0xff]
    %v493 = vld [vmem:[#allocation11 + $0x18] sm:$0xff]
    %v494 = vld [vmem:[#allocation11 + $0x20] sm:$0xff]
    %v495 = vld [vmem:[#allocation11 + $0x28] sm:$0xff]
    %v496 = vld [vmem:[#allocation11 + $0x30] sm:$0xff]
    %v497 = vld [vmem:[#allocation11 + $0x38] sm:$0xff]
    %v498 = vld [vmem:[#allocation11 + $0x40] sm:$0xff]
    %v499 = vld [vmem:[#allocation11 + $0x48] sm:$0xff]
    %v500 = vld [vmem:[#allocation11 + $0x50] sm:$0xff]
    %v501 = vld [vmem:[#allocation11 + $0x58] sm:$0xff]
    %v502 = vld [vmem:[#allocation11 + $0x60] sm:$0xff]
    %v503 = vld [vmem:[#allocation11 + $0x68] sm:$0xff]
    %v504 = vld [vmem:[#allocation11 + $0x70] sm:$0xff]
    %v505 = vld [vmem:[#allocation11 + $0x78] sm:$0xff]
    %v506 = vld [vmem:[#allocation13] sm:$0xff]
    %v507 = vld [vmem:[#allocation13 + $0x8] sm:$0xff]
    %v508 = vld [vmem:[#allocation13 + $0x10] sm:$0xff]
    %v509 = vld [vmem:[#allocation13 + $0x18] sm:$0xff]
    %v510 = vld [vmem:[#allocation13 + $0x20] sm:$0xff]
    %v511 = vld [vmem:[#allocation13 + $0x28] sm:$0xff]
    %v512 = vld [vmem:[#allocation13 + $0x30] sm:$0xff]
    %v513 = vld [vmem:[#allocation13 + $0x38] sm:$0xff]
    %v514 = vld [vmem:[#allocation13 + $0x40] sm:$0xff]
    %v515 = vld [vmem:[#allocation13 + $0x48] sm:$0xff]
    %v516 = vld [vmem:[#allocation13 + $0x50] sm:$0xff]
    %v517 = vld [vmem:[#allocation13 + $0x58] sm:$0xff]
    %v518 = vld [vmem:[#allocation13 + $0x60] sm:$0xff]
    %v519 = vld [vmem:[#allocation13 + $0x68] sm:$0xff]
    %v520 = vld [vmem:[#allocation13 + $0x70] sm:$0xff]
    %v521 = vld [vmem:[#allocation13 + $0x78] sm:$0xff]
    %s522 = smul.u32 0, 4
    %s523 = smul.addr %s522, 8
    %s524 = scalar_lea.vmem [#allocation2], %s523
    %v525 = vld [vmem:[%s524] sm:$0xff]
    %v526 = vld [vmem:[%s524 + $0x8] sm:$0xff]
    %s527 = smul.u32 7, 4
    %s528 = smul.addr %s527, 8
    %s529 = scalar_lea.vmem [#allocation2], %s528
    %v530 = vld [vmem:[%s529 + $0x10] sm:$0xff]
    %v531 = vld [vmem:[%s529 + $0x18] sm:$0xff]
    %vm532 = vcmask 523264
    %v534 = vsel %vm532, 0.0, 0
    %536 = vmatprep.subr.mxu0 0.0
    %537 = vmatpush1.msra.mxu0 0.0
    %538 = vmatprep.subr.mxu0 0.0
    %539 = vmatpush1.msra.mxu0 0.0
    %540 = vmatprep.subr.mxu0 0.0
    %541 = vmatpush1.msra.mxu0 0.0
    %542 = vmatprep.subr.mxu0 0.0
    %543 = vmatpush1.msra.mxu0 0.0
    %544 = vmatprep.subr.mxu0 0.0
    %545 = vmatpush1.msra.mxu0 0.0
    %546 = vmatprep.subr.mxu0 0.0
    %547 = vmatpush1.msra.mxu0 0.0
    %548 = vmatprep.subr.mxu0 0.0
    %549 = vmatpush1.msra.mxu0 0.0
    %550 = vmatprep.subr.mxu0 0.0
    %551 = vmatpush1.msra.mxu0 0.0
    %552 = vmatprep.subr.mxu0 %v505
    %553 = vmatpush1.msra.mxu0 %v504
    %554 = vmatprep.subr.mxu0 %v503
    %555 = vmatpush1.msra.mxu0 %v502
    %556 = vmatprep.subr.mxu0 %v501
    %557 = vmatpush1.msra.mxu0 %v500
    %558 = vmatprep.subr.mxu0 %v499
    %559 = vmatpush1.msra.mxu0 %v498
    %560 = vmatprep.subr.mxu0 %v497
    %561 = vmatpush1.msra.mxu0 %v496
    %562 = vmatprep.subr.mxu0 %v495
    %563 = vmatpush1.msra.mxu0 %v494
    %564 = vmatprep.subr.mxu0 %v493
    %565 = vmatpush1.msra.mxu0 %v492
    %566 = vmatprep.subr.mxu0 %v491
    %567 = vmatpush1.msra.mxu0 %v490
    %568 = vmatprep.subr.mxu0 0.0
    %569 = vmatpush2.msra.mxu0 0.0
    %570 = vmatprep.subr.mxu0 0.0
    %571 = vmatpush2.msra.mxu0 0.0
    %572 = vmatprep.subr.mxu0 0.0
    %573 = vmatpush2.msra.mxu0 0.0
    %574 = vmatprep.subr.mxu0 0.0
    %575 = vmatpush2.msra.mxu0 0.0
    %576 = vmatprep.subr.mxu0 0.0
    %577 = vmatpush2.msra.mxu0 0.0
    %578 = vmatprep.subr.mxu0 0.0
    %579 = vmatpush2.msra.mxu0 0.0
    %580 = vmatprep.subr.mxu0 0.0
    %581 = vmatpush2.msra.mxu0 0.0
    %582 = vmatprep.subr.mxu0 0.0
    %583 = vmatpush2.msra.mxu0 0.0
    %584 = vmatprep.subr.mxu0 0.0
    %585 = vmatpush2.msra.mxu0 0.0
    %586 = vmatprep.subr.mxu0 0.0
    %587 = vmatpush2.msra.mxu0 0.0
    %588 = vmatprep.subr.mxu0 0.0
    %589 = vmatpush2.msra.mxu0 0.0
    %590 = vmatprep.subr.mxu0 0.0
    %591 = vmatpush2.msra.mxu0 0.0
    %592 = vmatprep.subr.mxu0 0.0
    %593 = vmatpush2.msra.mxu0 0.0
    %594 = vmatprep.subr.mxu0 0.0
    %595 = vmatpush2.msra.mxu0 0.0
    %596 = vmatprep.subr.mxu0 0.0
    %597 = vmatpush2.msra.mxu0 0.0
    %598 = vmatprep.subr.mxu0 0.0
    %599 = vmatpush2.msra.mxu0 0.0
    %600 = vmatprep.mubr.f32.mxu0 0.0
    %601 = vmatmul.mubr.f32.gmra.mxu0 %v534
    %v602 = vpop.f32.mrf.mxu0
    %v603 = vadd.f32 0.0, %v602
    %v604 = vpop.f32.mrf.mxu0
    %v605 = vadd.f32 0.0, %v604
    %606 = vdwg.mxu0
    %v607 = vadd.f32 %v525, %v603
    %v608 = vadd.f32 %v526, %v605
    %v609 = vxor.u32 %v607, 2147483648
    %v610 = vxor.u32 %v608, 2147483648
    %v611 = vmul.f32 %v609, 1.442695
    %v612 = vpow.pop %v611
    %v613 = vmul.f32 %v610, 1.442695
    %v614 = vpow.pop %v613
    %v615 = vadd.f32 %v612, 1.0
    %v616 = vadd.f32 %v614, 1.0
    %v617 = vrcp.pop %v615
    %v618 = vmul.f32 1.0, %v617
    %v619 = vrcp.pop %v616
    %v620 = vmul.f32 1.0, %v619
    %v621 = vtanh.pop %v608
    %v622 = vmul.f32 %v618, 0.0
    %624 = vrot.lane.b32.xlu0 %v621, 64
    %v625 = vpop.permute.xlu0 %624
    %v627 = vmul.f32 %v618, %v625
    %629 = vrot.lane.b32.xlu0 %v627, 64
    %v630 = vpop.permute.xlu0 %629
    %v632 = vadd.f32 %v622, %v630
    %v633 = vtanh.pop %v632
    %635 = vrot.lane.b32.xlu0 %v633, 64
    %v636 = vpop.permute.xlu0 %635
    %v638 = vmul.f32 %v620, %v636
    %639 = vmatprep.subr.mxu0 0.0
    %640 = vmatpush1.msra.mxu0 0.0
    %641 = vmatprep.subr.mxu0 0.0
    %642 = vmatpush1.msra.mxu0 0.0
    %643 = vmatprep.subr.mxu0 0.0
    %644 = vmatpush1.msra.mxu0 0.0
    %645 = vmatprep.subr.mxu0 0.0
    %646 = vmatpush1.msra.mxu0 0.0
    %647 = vmatprep.subr.mxu0 0.0
    %648 = vmatpush1.msra.mxu0 0.0
    %649 = vmatprep.subr.mxu0 0.0
    %650 = vmatpush1.msra.mxu0 0.0
    %651 = vmatprep.subr.mxu0 0.0
    %652 = vmatpush1.msra.mxu0 0.0
    %653 = vmatprep.subr.mxu0 0.0
    %654 = vmatpush1.msra.mxu0 0.0
    %655 = vmatprep.subr.mxu0 %v521
    %656 = vmatpush1.msra.mxu0 %v520
    %657 = vmatprep.subr.mxu0 %v519
    %658 = vmatpush1.msra.mxu0 %v518
    %659 = vmatprep.subr.mxu0 %v517
    %660 = vmatpush1.msra.mxu0 %v516
    %661 = vmatprep.subr.mxu0 %v515
    %662 = vmatpush1.msra.mxu0 %v514
    %663 = vmatprep.subr.mxu0 %v513
    %664 = vmatpush1.msra.mxu0 %v512
    %665 = vmatprep.subr.mxu0 %v511
    %666 = vmatpush1.msra.mxu0 %v510
    %667 = vmatprep.subr.mxu0 %v509
    %668 = vmatpush1.msra.mxu0 %v508
    %669 = vmatprep.subr.mxu0 %v507
    %670 = vmatpush1.msra.mxu0 %v506
    %671 = vmatprep.subr.mxu0 0.0
    %672 = vmatpush2.msra.mxu0 0.0
    %673 = vmatprep.subr.mxu0 0.0
    %674 = vmatpush2.msra.mxu0 0.0
    %675 = vmatprep.subr.mxu0 0.0
    %676 = vmatpush2.msra.mxu0 0.0
    %677 = vmatprep.subr.mxu0 0.0
    %678 = vmatpush2.msra.mxu0 0.0
    %679 = vmatprep.subr.mxu0 0.0
    %680 = vmatpush2.msra.mxu0 0.0
    %681 = vmatprep.subr.mxu0 0.0
    %682 = vmatpush2.msra.mxu0 0.0
    %683 = vmatprep.subr.mxu0 0.0
    %684 = vmatpush2.msra.mxu0 0.0
    %685 = vmatprep.subr.mxu0 0.0
    %686 = vmatpush2.msra.mxu0 0.0
    %687 = vmatprep.subr.mxu0 0.0
    %688 = vmatpush2.msra.mxu0 0.0
    %689 = vmatprep.subr.mxu0 0.0
    %690 = vmatpush2.msra.mxu0 0.0
    %691 = vmatprep.subr.mxu0 0.0
    %692 = vmatpush2.msra.mxu0 0.0
    %693 = vmatprep.subr.mxu0 0.0
    %694 = vmatpush2.msra.mxu0 0.0
    %695 = vmatprep.subr.mxu0 0.0
    %696 = vmatpush2.msra.mxu0 0.0
    %697 = vmatprep.subr.mxu0 0.0
    %698 = vmatpush2.msra.mxu0 0.0
    %699 = vmatprep.subr.mxu0 0.0
    %700 = vmatpush2.msra.mxu0 0.0
    %701 = vmatprep.subr.mxu0 0.0
    %702 = vmatpush2.msra.mxu0 0.0
    %703 = vmatprep.mubr.f32.mxu0 0.0
    %704 = vmatmul.mubr.f32.gmra.mxu0 %v534
    %v705 = vpop.f32.mrf.mxu0
    %v706 = vadd.f32 0.0, %v705
    %v707 = vpop.f32.mrf.mxu0
    %v708 = vadd.f32 0.0, %v707
    %709 = vdwg.mxu0
    %v710 = vadd.f32 %v530, %v706
    %v711 = vadd.f32 %v531, %v708
    %v712 = vxor.u32 %v710, 2147483648
    %v713 = vxor.u32 %v711, 2147483648
    %v714 = vmul.f32 %v712, 1.442695
    %v715 = vpow.pop %v714
    %v716 = vmul.f32 %v713, 1.442695
    %v717 = vpow.pop %v716
    %v718 = vadd.f32 %v715, 1.0
    %v719 = vadd.f32 %v717, 1.0
    %v720 = vrcp.pop %v718
    %v721 = vmul.f32 1.0, %v720
    %v722 = vrcp.pop %v719
    %v723 = vmul.f32 1.0, %v722
    %v724 = vtanh.pop %v711
    %v725 = vmul.f32 %v721, 0.0
    %727 = vrot.lane.b32.xlu0 %v724, 64
    %v728 = vpop.permute.xlu0 %727
    %v730 = vmul.f32 %v721, %v728
    %732 = vrot.lane.b32.xlu0 %v730, 64
    %v733 = vpop.permute.xlu0 %732
    %v735 = vadd.f32 %v725, %v733
    %v736 = vtanh.pop %v735
    %738 = vrot.lane.b32.xlu0 %v736, 64
    %v739 = vpop.permute.xlu0 %738
    %v741 = vmul.f32 %v723, %v739
    %vm742 = vcmp.gt.s32.totalorder %v143, 0
    %vm743 = vcmp.gt.s32.totalorder %v143, 7
    %v744 = vsel %vm742, 1, 0
    %745 = vset.pattern.permute.xlu0 0
    %746 = vperm.xlu0 %745, %v744
    %v747 = vpop.permute.xlu0 %746
    %vm748 = vcmp.eq.s32.totalorder %v747, 1
    %v749 = vsel %vm748, %v638, 0.0
    %750 = vst.msk [vmem:[#allocation3] sm:$0xff] %vm532, %v749
    %v751 = vsel %vm743, 1, 0
    %752 = vset.pattern.permute.xlu0 0
    %753 = vperm.xlu0 %752, %v751
    %v754 = vpop.permute.xlu0 %753
    %vm755 = vcmp.eq.s32.totalorder %v754, 1
    %v756 = vsel %vm755, %v741, 0.0
    %s757 = scalar_lea.vmem [#allocation4], 56
    %758 = vst.msk [vmem:[%s757] sm:$0xff] %vm532, %v756
    %v759 = vsel %vm748, %v632, 0.0
    %v760 = vsel %vm755, %v735, 0.0
    %s761 = smul.u32 1, 4
    %s762 = smul.addr %s761, 8
    %s763 = scalar_lea.vmem [#allocation2], %s762
    %v764 = vld [vmem:[%s763] sm:$0xff]
    %v765 = vld [vmem:[%s763 + $0x8] sm:$0xff]
    %s766 = smul.u32 6, 4
    %s767 = smul.addr %s766, 8
    %s768 = scalar_lea.vmem [#allocation2], %s767
    %v769 = vld [vmem:[%s768 + $0x10] sm:$0xff]
    %v770 = vld [vmem:[%s768 + $0x18] sm:$0xff]
    %v772 = vsel %vm532, %v749, 0
    %774 = vmatprep.subr.mxu0 0.0
    %775 = vmatpush1.msra.mxu0 0.0
    %776 = vmatprep.subr.mxu0 0.0
    %777 = vmatpush1.msra.mxu0 0.0
    %778 = vmatprep.subr.mxu0 0.0
    %779 = vmatpush1.msra.mxu0 0.0
    %780 = vmatprep.subr.mxu0 0.0
    %781 = vmatpush1.msra.mxu0 0.0
    %782 = vmatprep.subr.mxu0 0.0
    %783 = vmatpush1.msra.mxu0 0.0
    %784 = vmatprep.subr.mxu0 0.0
    %785 = vmatpush1.msra.mxu0 0.0
    %786 = vmatprep.subr.mxu0 0.0
    %787 = vmatpush1.msra.mxu0 0.0
    %788 = vmatprep.subr.mxu0 0.0
    %789 = vmatpush1.msra.mxu0 0.0
    %790 = vmatprep.subr.mxu0 %v505
    %791 = vmatpush1.msra.mxu0 %v504
    %792 = vmatprep.subr.mxu0 %v503
    %793 = vmatpush1.msra.mxu0 %v502
    %794 = vmatprep.subr.mxu0 %v501
    %795 = vmatpush1.msra.mxu0 %v500
    %796 = vmatprep.subr.mxu0 %v499
    %797 = vmatpush1.msra.mxu0 %v498
    %798 = vmatprep.subr.mxu0 %v497
    %799 = vmatpush1.msra.mxu0 %v496
    %800 = vmatprep.subr.mxu0 %v495
    %801 = vmatpush1.msra.mxu0 %v494
    %802 = vmatprep.subr.mxu0 %v493
    %803 = vmatpush1.msra.mxu0 %v492
    %804 = vmatprep.subr.mxu0 %v491
    %805 = vmatpush1.msra.mxu0 %v490
    %806 = vmatprep.subr.mxu0 0.0
    %807 = vmatpush2.msra.mxu0 0.0
    %808 = vmatprep.subr.mxu0 0.0
    %809 = vmatpush2.msra.mxu0 0.0
    %810 = vmatprep.subr.mxu0 0.0
    %811 = vmatpush2.msra.mxu0 0.0
    %812 = vmatprep.subr.mxu0 0.0
    %813 = vmatpush2.msra.mxu0 0.0
    %814 = vmatprep.subr.mxu0 0.0
    %815 = vmatpush2.msra.mxu0 0.0
    %816 = vmatprep.subr.mxu0 0.0
    %817 = vmatpush2.msra.mxu0 0.0
    %818 = vmatprep.subr.mxu0 0.0
    %819 = vmatpush2.msra.mxu0 0.0
    %820 = vmatprep.subr.mxu0 0.0
    %821 = vmatpush2.msra.mxu0 0.0
    %822 = vmatprep.subr.mxu0 0.0
    %823 = vmatpush2.msra.mxu0 0.0
    %824 = vmatprep.subr.mxu0 0.0
    %825 = vmatpush2.msra.mxu0 0.0
    %826 = vmatprep.subr.mxu0 0.0
    %827 = vmatpush2.msra.mxu0 0.0
    %828 = vmatprep.subr.mxu0 0.0
    %829 = vmatpush2.msra.mxu0 0.0
    %830 = vmatprep.subr.mxu0 0.0
    %831 = vmatpush2.msra.mxu0 0.0
    %832 = vmatprep.subr.mxu0 0.0
    %833 = vmatpush2.msra.mxu0 0.0
    %834 = vmatprep.subr.mxu0 0.0
    %835 = vmatpush2.msra.mxu0 0.0
    %836 = vmatprep.subr.mxu0 0.0
    %837 = vmatpush2.msra.mxu0 0.0
    %838 = vmatprep.mubr.f32.mxu0 0.0
    %839 = vmatmul.mubr.f32.gmra.mxu0 %v772
    %v840 = vpop.f32.mrf.mxu0
    %v841 = vadd.f32 0.0, %v840
    %v842 = vpop.f32.mrf.mxu0
    %v843 = vadd.f32 0.0, %v842
    %844 = vdwg.mxu0
    %v845 = vadd.f32 %v764, %v841
    %v846 = vadd.f32 %v765, %v843
    %v847 = vxor.u32 %v845, 2147483648
    %v848 = vxor.u32 %v846, 2147483648
    %v849 = vmul.f32 %v847, 1.442695
    %v850 = vpow.pop %v849
    %v851 = vmul.f32 %v848, 1.442695
    %v852 = vpow.pop %v851
    %v853 = vadd.f32 %v850, 1.0
    %v854 = vadd.f32 %v852, 1.0
    %v855 = vrcp.pop %v853
    %v856 = vmul.f32 1.0, %v855
    %v857 = vrcp.pop %v854
    %v858 = vmul.f32 1.0, %v857
    %v859 = vtanh.pop %v846
    %v860 = vmul.f32 %v856, %v759
    %862 = vrot.lane.b32.xlu0 %v859, 64
    %v863 = vpop.permute.xlu0 %862
    %v865 = vmul.f32 %v856, %v863
    %867 = vrot.lane.b32.xlu0 %v865, 64
    %v868 = vpop.permute.xlu0 %867
    %v870 = vadd.f32 %v860, %v868
    %v871 = vtanh.pop %v870
    %873 = vrot.lane.b32.xlu0 %v871, 64
    %v874 = vpop.permute.xlu0 %873
    %v876 = vmul.f32 %v858, %v874
    %v878 = vsel %vm532, %v756, 0
    %880 = vmatprep.subr.mxu0 0.0
    %881 = vmatpush1.msra.mxu0 0.0
    %882 = vmatprep.subr.mxu0 0.0
    %883 = vmatpush1.msra.mxu0 0.0
    %884 = vmatprep.subr.mxu0 0.0
    %885 = vmatpush1.msra.mxu0 0.0
    %886 = vmatprep.subr.mxu0 0.0
    %887 = vmatpush1.msra.mxu0 0.0
    %888 = vmatprep.subr.mxu0 0.0
    %889 = vmatpush1.msra.mxu0 0.0
    %890 = vmatprep.subr.mxu0 0.0
    %891 = vmatpush1.msra.mxu0 0.0
    %892 = vmatprep.subr.mxu0 0.0
    %893 = vmatpush1.msra.mxu0 0.0
    %894 = vmatprep.subr.mxu0 0.0
    %895 = vmatpush1.msra.mxu0 0.0
    %896 = vmatprep.subr.mxu0 %v521
    %897 = vmatpush1.msra.mxu0 %v520
    %898 = vmatprep.subr.mxu0 %v519
    %899 = vmatpush1.msra.mxu0 %v518
    %900 = vmatprep.subr.mxu0 %v517
    %901 = vmatpush1.msra.mxu0 %v516
    %902 = vmatprep.subr.mxu0 %v515
    %903 = vmatpush1.msra.mxu0 %v514
    %904 = vmatprep.subr.mxu0 %v513
    %905 = vmatpush1.msra.mxu0 %v512
    %906 = vmatprep.subr.mxu0 %v511
    %907 = vmatpush1.msra.mxu0 %v510
    %908 = vmatprep.subr.mxu0 %v509
    %909 = vmatpush1.msra.mxu0 %v508
    %910 = vmatprep.subr.mxu0 %v507
    %911 = vmatpush1.msra.mxu0 %v506
    %912 = vmatprep.subr.mxu0 0.0
    %913 = vmatpush2.msra.mxu0 0.0
    %914 = vmatprep.subr.mxu0 0.0
    %915 = vmatpush2.msra.mxu0 0.0
    %916 = vmatprep.subr.mxu0 0.0
    %917 = vmatpush2.msra.mxu0 0.0
    %918 = vmatprep.subr.mxu0 0.0
    %919 = vmatpush2.msra.mxu0 0.0
    %920 = vmatprep.subr.mxu0 0.0
    %921 = vmatpush2.msra.mxu0 0.0
    %922 = vmatprep.subr.mxu0 0.0
    %923 = vmatpush2.msra.mxu0 0.0
    %924 = vmatprep.subr.mxu0 0.0
    %925 = vmatpush2.msra.mxu0 0.0
    %926 = vmatprep.subr.mxu0 0.0
    %927 = vmatpush2.msra.mxu0 0.0
    %928 = vmatprep.subr.mxu0 0.0
    %929 = vmatpush2.msra.mxu0 0.0
    %930 = vmatprep.subr.mxu0 0.0
    %931 = vmatpush2.msra.mxu0 0.0
    %932 = vmatprep.subr.mxu0 0.0
    %933 = vmatpush2.msra.mxu0 0.0
    %934 = vmatprep.subr.mxu0 0.0
    %935 = vmatpush2.msra.mxu0 0.0
    %936 = vmatprep.subr.mxu0 0.0
    %937 = vmatpush2.msra.mxu0 0.0
    %938 = vmatprep.subr.mxu0 0.0
    %939 = vmatpush2.msra.mxu0 0.0
    %940 = vmatprep.subr.mxu0 0.0
    %941 = vmatpush2.msra.mxu0 0.0
    %942 = vmatprep.subr.mxu0 0.0
    %943 = vmatpush2.msra.mxu0 0.0
    %944 = vmatprep.mubr.f32.mxu0 0.0
    %945 = vmatmul.mubr.f32.gmra.mxu0 %v878
    %v946 = vpop.f32.mrf.mxu0
    %v947 = vadd.f32 0.0, %v946
    %v948 = vpop.f32.mrf.mxu0
    %v949 = vadd.f32 0.0, %v948
    %950 = vdwg.mxu0
    %v951 = vadd.f32 %v769, %v947
    %v952 = vadd.f32 %v770, %v949
    %v953 = vxor.u32 %v951, 2147483648
    %v954 = vxor.u32 %v952, 2147483648
    %v955 = vmul.f32 %v953, 1.442695
    %v956 = vpow.pop %v955
    %v957 = vmul.f32 %v954, 1.442695
    %v958 = vpow.pop %v957
    %v959 = vadd.f32 %v956, 1.0
    %v960 = vadd.f32 %v958, 1.0
    %v961 = vrcp.pop %v959
    %v962 = vmul.f32 1.0, %v961
    %v963 = vrcp.pop %v960
    %v964 = vmul.f32 1.0, %v963
    %v965 = vtanh.pop %v952
    %v966 = vmul.f32 %v962, %v760
    %968 = vrot.lane.b32.xlu0 %v965, 64
    %v969 = vpop.permute.xlu0 %968
    %v971 = vmul.f32 %v962, %v969
    %973 = vrot.lane.b32.xlu0 %v971, 64
    %v974 = vpop.permute.xlu0 %973
    %v976 = vadd.f32 %v966, %v974
    %v977 = vtanh.pop %v976
    %979 = vrot.lane.b32.xlu0 %v977, 64
    %v980 = vpop.permute.xlu0 %979
    %v982 = vmul.f32 %v964, %v980
    %vm983 = vcmp.gt.s32.totalorder %v143, 1
    %vm984 = vcmp.gt.s32.totalorder %v143, 6
    %v985 = vsel %vm983, 1, 0
    %986 = vset.pattern.permute.xlu0 0
    %987 = vperm.xlu0 %986, %v985
    %v988 = vpop.permute.xlu0 %987
    %vm989 = vcmp.eq.s32.totalorder %v988, 1
    %v990 = vsel %vm989, %v876, 0.0
    %s991 = scalar_lea.vmem [#allocation3], 8
    %992 = vst.msk [vmem:[%s991] sm:$0xff] %vm532, %v990
    %v993 = vsel %vm984, 1, 0
    %994 = vset.pattern.permute.xlu0 0
    %995 = vperm.xlu0 %994, %v993
    %v996 = vpop.permute.xlu0 %995
    %vm997 = vcmp.eq.s32.totalorder %v996, 1
    %v998 = vsel %vm997, %v982, 0.0
    %s999 = scalar_lea.vmem [#allocation4], 48
    %1000 = vst.msk [vmem:[%s999] sm:$0xff] %vm532, %v998
    %v1001 = vsel %vm989, %v876, %v749
    %v1002 = vsel %vm989, %v870, %v759
    %v1003 = vsel %vm997, %v982, %v756
    %v1004 = vsel %vm997, %v976, %v760
    %s1005 = smul.u32 2, 4
    %s1006 = smul.addr %s1005, 8
    %s1007 = scalar_lea.vmem [#allocation2], %s1006
    %v1008 = vld [vmem:[%s1007] sm:$0xff]
    %v1009 = vld [vmem:[%s1007 + $0x8] sm:$0xff]
    %s1010 = smul.u32 5, 4
    %s1011 = smul.addr %s1010, 8
    %s1012 = scalar_lea.vmem [#allocation2], %s1011
    %v1013 = vld [vmem:[%s1012 + $0x10] sm:$0xff]
    %v1014 = vld [vmem:[%s1012 + $0x18] sm:$0xff]
    %v1016 = vsel %vm532, %v1001, 0
    %1018 = vmatprep.subr.mxu0 0.0
    %1019 = vmatpush1.msra.mxu0 0.0
    %1020 = vmatprep.subr.mxu0 0.0
    %1021 = vmatpush1.msra.mxu0 0.0
    %1022 = vmatprep.subr.mxu0 0.0
    %1023 = vmatpush1.msra.mxu0 0.0
    %1024 = vmatprep.subr.mxu0 0.0
    %1025 = vmatpush1.msra.mxu0 0.0
    %1026 = vmatprep.subr.mxu0 0.0
    %1027 = vmatpush1.msra.mxu0 0.0
    %1028 = vmatprep.subr.mxu0 0.0
    %1029 = vmatpush1.msra.mxu0 0.0
    %1030 = vmatprep.subr.mxu0 0.0
    %1031 = vmatpush1.msra.mxu0 0.0
    %1032 = vmatprep.subr.mxu0 0.0
    %1033 = vmatpush1.msra.mxu0 0.0
    %1034 = vmatprep.subr.mxu0 %v505
    %1035 = vmatpush1.msra.mxu0 %v504
    %1036 = vmatprep.subr.mxu0 %v503
    %1037 = vmatpush1.msra.mxu0 %v502
    %1038 = vmatprep.subr.mxu0 %v501
    %1039 = vmatpush1.msra.mxu0 %v500
    %1040 = vmatprep.subr.mxu0 %v499
    %1041 = vmatpush1.msra.mxu0 %v498
    %1042 = vmatprep.subr.mxu0 %v497
    %1043 = vmatpush1.msra.mxu0 %v496
    %1044 = vmatprep.subr.mxu0 %v495
    %1045 = vmatpush1.msra.mxu0 %v494
    %1046 = vmatprep.subr.mxu0 %v493
    %1047 = vmatpush1.msra.mxu0 %v492
    %1048 = vmatprep.subr.mxu0 %v491
    %1049 = vmatpush1.msra.mxu0 %v490
    %1050 = vmatprep.subr.mxu0 0.0
    %1051 = vmatpush2.msra.mxu0 0.0
    %1052 = vmatprep.subr.mxu0 0.0
    %1053 = vmatpush2.msra.mxu0 0.0
    %1054 = vmatprep.subr.mxu0 0.0
    %1055 = vmatpush2.msra.mxu0 0.0
    %1056 = vmatprep.subr.mxu0 0.0
    %1057 = vmatpush2.msra.mxu0 0.0
    %1058 = vmatprep.subr.mxu0 0.0
    %1059 = vmatpush2.msra.mxu0 0.0
    %1060 = vmatprep.subr.mxu0 0.0
    %1061 = vmatpush2.msra.mxu0 0.0
    %1062 = vmatprep.subr.mxu0 0.0
    %1063 = vmatpush2.msra.mxu0 0.0
    %1064 = vmatprep.subr.mxu0 0.0
    %1065 = vmatpush2.msra.mxu0 0.0
    %1066 = vmatprep.subr.mxu0 0.0
    %1067 = vmatpush2.msra.mxu0 0.0
    %1068 = vmatprep.subr.mxu0 0.0
    %1069 = vmatpush2.msra.mxu0 0.0
    %1070 = vmatprep.subr.mxu0 0.0
    %1071 = vmatpush2.msra.mxu0 0.0
    %1072 = vmatprep.subr.mxu0 0.0
    %1073 = vmatpush2.msra.mxu0 0.0
    %1074 = vmatprep.subr.mxu0 0.0
    %1075 = vmatpush2.msra.mxu0 0.0
    %1076 = vmatprep.subr.mxu0 0.0
    %1077 = vmatpush2.msra.mxu0 0.0
    %1078 = vmatprep.subr.mxu0 0.0
    %1079 = vmatpush2.msra.mxu0 0.0
    %1080 = vmatprep.subr.mxu0 0.0
    %1081 = vmatpush2.msra.mxu0 0.0
    %1082 = vmatprep.mubr.f32.mxu0 0.0
    %1083 = vmatmul.mubr.f32.gmra.mxu0 %v1016
    %v1084 = vpop.f32.mrf.mxu0
    %v1085 = vadd.f32 0.0, %v1084
    %v1086 = vpop.f32.mrf.mxu0
    %v1087 = vadd.f32 0.0, %v1086
    %1088 = vdwg.mxu0
    %v1089 = vadd.f32 %v1008, %v1085
    %v1090 = vadd.f32 %v1009, %v1087
    %v1091 = vxor.u32 %v1089, 2147483648
    %v1092 = vxor.u32 %v1090, 2147483648
    %v1093 = vmul.f32 %v1091, 1.442695
    %v1094 = vpow.pop %v1093
    %v1095 = vmul.f32 %v1092, 1.442695
    %v1096 = vpow.pop %v1095
    %v1097 = vadd.f32 %v1094, 1.0
    %v1098 = vadd.f32 %v1096, 1.0
    %v1099 = vrcp.pop %v1097
    %v1100 = vmul.f32 1.0, %v1099
    %v1101 = vrcp.pop %v1098
    %v1102 = vmul.f32 1.0, %v1101
    %v1103 = vtanh.pop %v1090
    %v1104 = vmul.f32 %v1100, %v1002
    %1106 = vrot.lane.b32.xlu0 %v1103, 64
    %v1107 = vpop.permute.xlu0 %1106
    %v1109 = vmul.f32 %v1100, %v1107
    %1111 = vrot.lane.b32.xlu0 %v1109, 64
    %v1112 = vpop.permute.xlu0 %1111
    %v1114 = vadd.f32 %v1104, %v1112
    %v1115 = vtanh.pop %v1114
    %1117 = vrot.lane.b32.xlu0 %v1115, 64
    %v1118 = vpop.permute.xlu0 %1117
    %v1120 = vmul.f32 %v1102, %v1118
    %v1122 = vsel %vm532, %v1003, 0
    %1124 = vmatprep.subr.mxu0 0.0
    %1125 = vmatpush1.msra.mxu0 0.0
    %1126 = vmatprep.subr.mxu0 0.0
    %1127 = vmatpush1.msra.mxu0 0.0
    %1128 = vmatprep.subr.mxu0 0.0
    %1129 = vmatpush1.msra.mxu0 0.0
    %1130 = vmatprep.subr.mxu0 0.0
    %1131 = vmatpush1.msra.mxu0 0.0
    %1132 = vmatprep.subr.mxu0 0.0
    %1133 = vmatpush1.msra.mxu0 0.0
    %1134 = vmatprep.subr.mxu0 0.0
    %1135 = vmatpush1.msra.mxu0 0.0
    %1136 = vmatprep.subr.mxu0 0.0
    %1137 = vmatpush1.msra.mxu0 0.0
    %1138 = vmatprep.subr.mxu0 0.0
    %1139 = vmatpush1.msra.mxu0 0.0
    %1140 = vmatprep.subr.mxu0 %v521
    %1141 = vmatpush1.msra.mxu0 %v520
    %1142 = vmatprep.subr.mxu0 %v519
    %1143 = vmatpush1.msra.mxu0 %v518
    %1144 = vmatprep.subr.mxu0 %v517
    %1145 = vmatpush1.msra.mxu0 %v516
    %1146 = vmatprep.subr.mxu0 %v515
    %1147 = vmatpush1.msra.mxu0 %v514
    %1148 = vmatprep.subr.mxu0 %v513
    %1149 = vmatpush1.msra.mxu0 %v512
    %1150 = vmatprep.subr.mxu0 %v511
    %1151 = vmatpush1.msra.mxu0 %v510
    %1152 = vmatprep.subr.mxu0 %v509
    %1153 = vmatpush1.msra.mxu0 %v508
    %1154 = vmatprep.subr.mxu0 %v507
    %1155 = vmatpush1.msra.mxu0 %v506
    %1156 = vmatprep.subr.mxu0 0.0
    %1157 = vmatpush2.msra.mxu0 0.0
    %1158 = vmatprep.subr.mxu0 0.0
    %1159 = vmatpush2.msra.mxu0 0.0
    %1160 = vmatprep.subr.mxu0 0.0
    %1161 = vmatpush2.msra.mxu0 0.0
    %1162 = vmatprep.subr.mxu0 0.0
    %1163 = vmatpush2.msra.mxu0 0.0
    %1164 = vmatprep.subr.mxu0 0.0
    %1165 = vmatpush2.msra.mxu0 0.0
    %1166 = vmatprep.subr.mxu0 0.0
    %1167 = vmatpush2.msra.mxu0 0.0
    %1168 = vmatprep.subr.mxu0 0.0
    %1169 = vmatpush2.msra.mxu0 0.0
    %1170 = vmatprep.subr.mxu0 0.0
    %1171 = vmatpush2.msra.mxu0 0.0
    %1172 = vmatprep.subr.mxu0 0.0
    %1173 = vmatpush2.msra.mxu0 0.0
    %1174 = vmatprep.subr.mxu0 0.0
    %1175 = vmatpush2.msra.mxu0 0.0
    %1176 = vmatprep.subr.mxu0 0.0
    %1177 = vmatpush2.msra.mxu0 0.0
    %1178 = vmatprep.subr.mxu0 0.0
    %1179 = vmatpush2.msra.mxu0 0.0
    %1180 = vmatprep.subr.mxu0 0.0
    %1181 = vmatpush2.msra.mxu0 0.0
    %1182 = vmatprep.subr.mxu0 0.0
    %1183 = vmatpush2.msra.mxu0 0.0
    %1184 = vmatprep.subr.mxu0 0.0
    %1185 = vmatpush2.msra.mxu0 0.0
    %1186 = vmatprep.subr.mxu0 0.0
    %1187 = vmatpush2.msra.mxu0 0.0
    %1188 = vmatprep.mubr.f32.mxu0 0.0
    %1189 = vmatmul.mubr.f32.gmra.mxu0 %v1122
    %v1190 = vpop.f32.mrf.mxu0
    %v1191 = vadd.f32 0.0, %v1190
    %v1192 = vpop.f32.mrf.mxu0
    %v1193 = vadd.f32 0.0, %v1192
    %1194 = vdwg.mxu0
    %v1195 = vadd.f32 %v1013, %v1191
    %v1196 = vadd.f32 %v1014, %v1193
    %v1197 = vxor.u32 %v1195, 2147483648
    %v1198 = vxor.u32 %v1196, 2147483648
    %v1199 = vmul.f32 %v1197, 1.442695
    %v1200 = vpow.pop %v1199
    %v1201 = vmul.f32 %v1198, 1.442695
    %v1202 = vpow.pop %v1201
    %v1203 = vadd.f32 %v1200, 1.0
    %v1204 = vadd.f32 %v1202, 1.0
    %v1205 = vrcp.pop %v1203
    %v1206 = vmul.f32 1.0, %v1205
    %v1207 = vrcp.pop %v1204
    %v1208 = vmul.f32 1.0, %v1207
    %v1209 = vtanh.pop %v1196
    %v1210 = vmul.f32 %v1206, %v1004
    %1212 = vrot.lane.b32.xlu0 %v1209, 64
    %v1213 = vpop.permute.xlu0 %1212
    %v1215 = vmul.f32 %v1206, %v1213
    %1217 = vrot.lane.b32.xlu0 %v1215, 64
    %v1218 = vpop.permute.xlu0 %1217
    %v1220 = vadd.f32 %v1210, %v1218
    %v1221 = vtanh.pop %v1220
    %1223 = vrot.lane.b32.xlu0 %v1221, 64
    %v1224 = vpop.permute.xlu0 %1223
    %v1226 = vmul.f32 %v1208, %v1224
    %vm1227 = vcmp.gt.s32.totalorder %v143, 2
    %vm1228 = vcmp.gt.s32.totalorder %v143, 5
    %v1229 = vsel %vm1227, 1, 0
    %1230 = vset.pattern.permute.xlu0 0
    %1231 = vperm.xlu0 %1230, %v1229
    %v1232 = vpop.permute.xlu0 %1231
    %vm1233 = vcmp.eq.s32.totalorder %v1232, 1
    %v1234 = vsel %vm1233, %v1120, 0.0
    %s1235 = scalar_lea.vmem [#allocation3], 16
    %1236 = vst.msk [vmem:[%s1235] sm:$0xff] %vm532, %v1234
    %v1237 = vsel %vm1228, 1, 0
    %1238 = vset.pattern.permute.xlu0 0
    %1239 = vperm.xlu0 %1238, %v1237
    %v1240 = vpop.permute.xlu0 %1239
    %vm1241 = vcmp.eq.s32.totalorder %v1240, 1
    %v1242 = vsel %vm1241, %v1226, 0.0
    %s1243 = scalar_lea.vmem [#allocation4], 40
    %1244 = vst.msk [vmem:[%s1243] sm:$0xff] %vm532, %v1242
    %v1245 = vsel %vm1233, %v1120, %v1001
    %v1246 = vsel %vm1233, %v1114, %v1002
    %v1247 = vsel %vm1241, %v1226, %v1003
    %v1248 = vsel %vm1241, %v1220, %v1004
    %s1249 = smul.u32 3, 4
    %s1250 = smul.addr %s1249, 8
    %s1251 = scalar_lea.vmem [#allocation2], %s1250
    %v1252 = vld [vmem:[%s1251] sm:$0xff]
    %v1253 = vld [vmem:[%s1251 + $0x8] sm:$0xff]
    %s1254 = smul.u32 4, 4
    %s1255 = smul.addr %s1254, 8
    %s1256 = scalar_lea.vmem [#allocation2], %s1255
    %v1257 = vld [vmem:[%s1256 + $0x10] sm:$0xff]
    %v1258 = vld [vmem:[%s1256 + $0x18] sm:$0xff]
    %v1260 = vsel %vm532, %v1245, 0
    %1262 = vmatprep.subr.mxu0 0.0
    %1263 = vmatpush1.msra.mxu0 0.0
    %1264 = vmatprep.subr.mxu0 0.0
    %1265 = vmatpush1.msra.mxu0 0.0
    %1266 = vmatprep.subr.mxu0 0.0
    %1267 = vmatpush1.msra.mxu0 0.0
    %1268 = vmatprep.subr.mxu0 0.0
    %1269 = vmatpush1.msra.mxu0 0.0
    %1270 = vmatprep.subr.mxu0 0.0
    %1271 = vmatpush1.msra.mxu0 0.0
    %1272 = vmatprep.subr.mxu0 0.0
    %1273 = vmatpush1.msra.mxu0 0.0
    %1274 = vmatprep.subr.mxu0 0.0
    %1275 = vmatpush1.msra.mxu0 0.0
    %1276 = vmatprep.subr.mxu0 0.0
    %1277 = vmatpush1.msra.mxu0 0.0
    %1278 = vmatprep.subr.mxu0 %v505
    %1279 = vmatpush1.msra.mxu0 %v504
    %1280 = vmatprep.subr.mxu0 %v503
    %1281 = vmatpush1.msra.mxu0 %v502
    %1282 = vmatprep.subr.mxu0 %v501
    %1283 = vmatpush1.msra.mxu0 %v500
    %1284 = vmatprep.subr.mxu0 %v499
    %1285 = vmatpush1.msra.mxu0 %v498
    %1286 = vmatprep.subr.mxu0 %v497
    %1287 = vmatpush1.msra.mxu0 %v496
    %1288 = vmatprep.subr.mxu0 %v495
    %1289 = vmatpush1.msra.mxu0 %v494
    %1290 = vmatprep.subr.mxu0 %v493
    %1291 = vmatpush1.msra.mxu0 %v492
    %1292 = vmatprep.subr.mxu0 %v491
    %1293 = vmatpush1.msra.mxu0 %v490
    %1294 = vmatprep.subr.mxu0 0.0
    %1295 = vmatpush2.msra.mxu0 0.0
    %1296 = vmatprep.subr.mxu0 0.0
    %1297 = vmatpush2.msra.mxu0 0.0
    %1298 = vmatprep.subr.mxu0 0.0
    %1299 = vmatpush2.msra.mxu0 0.0
    %1300 = vmatprep.subr.mxu0 0.0
    %1301 = vmatpush2.msra.mxu0 0.0
    %1302 = vmatprep.subr.mxu0 0.0
    %1303 = vmatpush2.msra.mxu0 0.0
    %1304 = vmatprep.subr.mxu0 0.0
    %1305 = vmatpush2.msra.mxu0 0.0
    %1306 = vmatprep.subr.mxu0 0.0
    %1307 = vmatpush2.msra.mxu0 0.0
    %1308 = vmatprep.subr.mxu0 0.0
    %1309 = vmatpush2.msra.mxu0 0.0
    %1310 = vmatprep.subr.mxu0 0.0
    %1311 = vmatpush2.msra.mxu0 0.0
    %1312 = vmatprep.subr.mxu0 0.0
    %1313 = vmatpush2.msra.mxu0 0.0
    %1314 = vmatprep.subr.mxu0 0.0
    %1315 = vmatpush2.msra.mxu0 0.0
    %1316 = vmatprep.subr.mxu0 0.0
    %1317 = vmatpush2.msra.mxu0 0.0
    %1318 = vmatprep.subr.mxu0 0.0
    %1319 = vmatpush2.msra.mxu0 0.0
    %1320 = vmatprep.subr.mxu0 0.0
    %1321 = vmatpush2.msra.mxu0 0.0
    %1322 = vmatprep.subr.mxu0 0.0
    %1323 = vmatpush2.msra.mxu0 0.0
    %1324 = vmatprep.subr.mxu0 0.0
    %1325 = vmatpush2.msra.mxu0 0.0
    %1326 = vmatprep.mubr.f32.mxu0 0.0
    %1327 = vmatmul.mubr.f32.gmra.mxu0 %v1260
    %v1328 = vpop.f32.mrf.mxu0
    %v1329 = vadd.f32 0.0, %v1328
    %v1330 = vpop.f32.mrf.mxu0
    %v1331 = vadd.f32 0.0, %v1330
    %1332 = vdwg.mxu0
    %v1333 = vadd.f32 %v1252, %v1329
    %v1334 = vadd.f32 %v1253, %v1331
    %v1335 = vxor.u32 %v1333, 2147483648
    %v1336 = vxor.u32 %v1334, 2147483648
    %v1337 = vmul.f32 %v1335, 1.442695
    %v1338 = vpow.pop %v1337
    %v1339 = vmul.f32 %v1336, 1.442695
    %v1340 = vpow.pop %v1339
    %v1341 = vadd.f32 %v1338, 1.0
    %v1342 = vadd.f32 %v1340, 1.0
    %v1343 = vrcp.pop %v1341
    %v1344 = vmul.f32 1.0, %v1343
    %v1345 = vrcp.pop %v1342
    %v1346 = vmul.f32 1.0, %v1345
    %v1347 = vtanh.pop %v1334
    %v1348 = vmul.f32 %v1344, %v1246
    %1350 = vrot.lane.b32.xlu0 %v1347, 64
    %v1351 = vpop.permute.xlu0 %1350
    %v1353 = vmul.f32 %v1344, %v1351
    %1355 = vrot.lane.b32.xlu0 %v1353, 64
    %v1356 = vpop.permute.xlu0 %1355
    %v1358 = vadd.f32 %v1348, %v1356
    %v1359 = vtanh.pop %v1358
    %1361 = vrot.lane.b32.xlu0 %v1359, 64
    %v1362 = vpop.permute.xlu0 %1361
    %v1364 = vmul.f32 %v1346, %v1362
    %v1366 = vsel %vm532, %v1247, 0
    %1368 = vmatprep.subr.mxu0 0.0
    %1369 = vmatpush1.msra.mxu0 0.0
    %1370 = vmatprep.subr.mxu0 0.0
    %1371 = vmatpush1.msra.mxu0 0.0
    %1372 = vmatprep.subr.mxu0 0.0
    %1373 = vmatpush1.msra.mxu0 0.0
    %1374 = vmatprep.subr.mxu0 0.0
    %1375 = vmatpush1.msra.mxu0 0.0
    %1376 = vmatprep.subr.mxu0 0.0
    %1377 = vmatpush1.msra.mxu0 0.0
    %1378 = vmatprep.subr.mxu0 0.0
    %1379 = vmatpush1.msra.mxu0 0.0
    %1380 = vmatprep.subr.mxu0 0.0
    %1381 = vmatpush1.msra.mxu0 0.0
    %1382 = vmatprep.subr.mxu0 0.0
    %1383 = vmatpush1.msra.mxu0 0.0
    %1384 = vmatprep.subr.mxu0 %v521
    %1385 = vmatpush1.msra.mxu0 %v520
    %1386 = vmatprep.subr.mxu0 %v519
    %1387 = vmatpush1.msra.mxu0 %v518
    %1388 = vmatprep.subr.mxu0 %v517
    %1389 = vmatpush1.msra.mxu0 %v516
    %1390 = vmatprep.subr.mxu0 %v515
    %1391 = vmatpush1.msra.mxu0 %v514
    %1392 = vmatprep.subr.mxu0 %v513
    %1393 = vmatpush1.msra.mxu0 %v512
    %1394 = vmatprep.subr.mxu0 %v511
    %1395 = vmatpush1.msra.mxu0 %v510
    %1396 = vmatprep.subr.mxu0 %v509
    %1397 = vmatpush1.msra.mxu0 %v508
    %1398 = vmatprep.subr.mxu0 %v507
    %1399 = vmatpush1.msra.mxu0 %v506
    %1400 = vmatprep.subr.mxu0 0.0
    %1401 = vmatpush2.msra.mxu0 0.0
    %1402 = vmatprep.subr.mxu0 0.0
    %1403 = vmatpush2.msra.mxu0 0.0
    %1404 = vmatprep.subr.mxu0 0.0
    %1405 = vmatpush2.msra.mxu0 0.0
    %1406 = vmatprep.subr.mxu0 0.0
    %1407 = vmatpush2.msra.mxu0 0.0
    %1408 = vmatprep.subr.mxu0 0.0
    %1409 = vmatpush2.msra.mxu0 0.0
    %1410 = vmatprep.subr.mxu0 0.0
    %1411 = vmatpush2.msra.mxu0 0.0
    %1412 = vmatprep.subr.mxu0 0.0
    %1413 = vmatpush2.msra.mxu0 0.0
    %1414 = vmatprep.subr.mxu0 0.0
    %1415 = vmatpush2.msra.mxu0 0.0
    %1416 = vmatprep.subr.mxu0 0.0
    %1417 = vmatpush2.msra.mxu0 0.0
    %1418 = vmatprep.subr.mxu0 0.0
    %1419 = vmatpush2.msra.mxu0 0.0
    %1420 = vmatprep.subr.mxu0 0.0
    %1421 = vmatpush2.msra.mxu0 0.0
    %1422 = vmatprep.subr.mxu0 0.0
    %1423 = vmatpush2.msra.mxu0 0.0
    %1424 = vmatprep.subr.mxu0 0.0
    %1425 = vmatpush2.msra.mxu0 0.0
    %1426 = vmatprep.subr.mxu0 0.0
    %1427 = vmatpush2.msra.mxu0 0.0
    %1428 = vmatprep.subr.mxu0 0.0
    %1429 = vmatpush2.msra.mxu0 0.0
    %1430 = vmatprep.subr.mxu0 0.0
    %1431 = vmatpush2.msra.mxu0 0.0
    %1432 = vmatprep.mubr.f32.mxu0 0.0
    %1433 = vmatmul.mubr.f32.gmra.mxu0 %v1366
    %v1434 = vpop.f32.mrf.mxu0
    %v1435 = vadd.f32 0.0, %v1434
    %v1436 = vpop.f32.mrf.mxu0
    %v1437 = vadd.f32 0.0, %v1436
    %1438 = vdwg.mxu0
    %v1439 = vadd.f32 %v1257, %v1435
    %v1440 = vadd.f32 %v1258, %v1437
    %v1441 = vxor.u32 %v1439, 2147483648
    %v1442 = vxor.u32 %v1440, 2147483648
    %v1443 = vmul.f32 %v1441, 1.442695
    %v1444 = vpow.pop %v1443
    %v1445 = vmul.f32 %v1442, 1.442695
    %v1446 = vpow.pop %v1445
    %v1447 = vadd.f32 %v1444, 1.0
    %v1448 = vadd.f32 %v1446, 1.0
    %v1449 = vrcp.pop %v1447
    %v1450 = vmul.f32 1.0, %v1449
    %v1451 = vrcp.pop %v1448
    %v1452 = vmul.f32 1.0, %v1451
    %v1453 = vtanh.pop %v1440
    %v1454 = vmul.f32 %v1450, %v1248
    %1456 = vrot.lane.b32.xlu0 %v1453, 64
    %v1457 = vpop.permute.xlu0 %1456
    %v1459 = vmul.f32 %v1450, %v1457
    %1461 = vrot.lane.b32.xlu0 %v1459, 64
    %v1462 = vpop.permute.xlu0 %1461
    %v1464 = vadd.f32 %v1454, %v1462
    %v1465 = vtanh.pop %v1464
    %1467 = vrot.lane.b32.xlu0 %v1465, 64
    %v1468 = vpop.permute.xlu0 %1467
    %v1470 = vmul.f32 %v1452, %v1468
    %vm1471 = vcmp.gt.s32.totalorder %v143, 3
    %vm1472 = vcmp.gt.s32.totalorder %v143, 4
    %v1473 = vsel %vm1471, 1, 0
    %1474 = vset.pattern.permute.xlu0 0
    %1475 = vperm.xlu0 %1474, %v1473
    %v1476 = vpop.permute.xlu0 %1475
    %vm1477 = vcmp.eq.s32.totalorder %v1476, 1
    %v1478 = vsel %vm1477, %v1364, 0.0
    %s1479 = scalar_lea.vmem [#allocation3], 24
    %1480 = vst.msk [vmem:[%s1479] sm:$0xff] %vm532, %v1478
    %v1481 = vsel %vm1472, 1, 0
    %1482 = vset.pattern.permute.xlu0 0
    %1483 = vperm.xlu0 %1482, %v1481
    %v1484 = vpop.permute.xlu0 %1483
    %vm1485 = vcmp.eq.s32.totalorder %v1484, 1
    %v1486 = vsel %vm1485, %v1470, 0.0
    %s1487 = scalar_lea.vmem [#allocation4], 32
    %1488 = vst.msk [vmem:[%s1487] sm:$0xff] %vm532, %v1486
    %v1489 = vsel %vm1477, %v1364, %v1245
    %v1490 = vsel %vm1477, %v1358, %v1246
    %v1491 = vsel %vm1485, %v1470, %v1247
    %v1492 = vsel %vm1485, %v1464, %v1248
    %v1493 = vld [vmem:[%s1256] sm:$0xff]
    %v1494 = vld [vmem:[%s1256 + $0x8] sm:$0xff]
    %v1495 = vld [vmem:[%s1251 + $0x10] sm:$0xff]
    %v1496 = vld [vmem:[%s1251 + $0x18] sm:$0xff]
    %v1498 = vsel %vm532, %v1489, 0
    %1500 = vmatprep.subr.mxu0 0.0
    %1501 = vmatpush1.msra.mxu0 0.0
    %1502 = vmatprep.subr.mxu0 0.0
    %1503 = vmatpush1.msra.mxu0 0.0
    %1504 = vmatprep.subr.mxu0 0.0
    %1505 = vmatpush1.msra.mxu0 0.0
    %1506 = vmatprep.subr.mxu0 0.0
    %1507 = vmatpush1.msra.mxu0 0.0
    %1508 = vmatprep.subr.mxu0 0.0
    %1509 = vmatpush1.msra.mxu0 0.0
    %1510 = vmatprep.subr.mxu0 0.0
    %1511 = vmatpush1.msra.mxu0 0.0
    %1512 = vmatprep.subr.mxu0 0.0
    %1513 = vmatpush1.msra.mxu0 0.0
    %1514 = vmatprep.subr.mxu0 0.0
    %1515 = vmatpush1.msra.mxu0 0.0
    %1516 = vmatprep.subr.mxu0 %v505
    %1517 = vmatpush1.msra.mxu0 %v504
    %1518 = vmatprep.subr.mxu0 %v503
    %1519 = vmatpush1.msra.mxu0 %v502
    %1520 = vmatprep.subr.mxu0 %v501
    %1521 = vmatpush1.msra.mxu0 %v500
    %1522 = vmatprep.subr.mxu0 %v499
    %1523 = vmatpush1.msra.mxu0 %v498
    %1524 = vmatprep.subr.mxu0 %v497
    %1525 = vmatpush1.msra.mxu0 %v496
    %1526 = vmatprep.subr.mxu0 %v495
    %1527 = vmatpush1.msra.mxu0 %v494
    %1528 = vmatprep.subr.mxu0 %v493
    %1529 = vmatpush1.msra.mxu0 %v492
    %1530 = vmatprep.subr.mxu0 %v491
    %1531 = vmatpush1.msra.mxu0 %v490
    %1532 = vmatprep.subr.mxu0 0.0
    %1533 = vmatpush2.msra.mxu0 0.0
    %1534 = vmatprep.subr.mxu0 0.0
    %1535 = vmatpush2.msra.mxu0 0.0
    %1536 = vmatprep.subr.mxu0 0.0
    %1537 = vmatpush2.msra.mxu0 0.0
    %1538 = vmatprep.subr.mxu0 0.0
    %1539 = vmatpush2.msra.mxu0 0.0
    %1540 = vmatprep.subr.mxu0 0.0
    %1541 = vmatpush2.msra.mxu0 0.0
    %1542 = vmatprep.subr.mxu0 0.0
    %1543 = vmatpush2.msra.mxu0 0.0
    %1544 = vmatprep.subr.mxu0 0.0
    %1545 = vmatpush2.msra.mxu0 0.0
    %1546 = vmatprep.subr.mxu0 0.0
    %1547 = vmatpush2.msra.mxu0 0.0
    %1548 = vmatprep.subr.mxu0 0.0
    %1549 = vmatpush2.msra.mxu0 0.0
    %1550 = vmatprep.subr.mxu0 0.0
    %1551 = vmatpush2.msra.mxu0 0.0
    %1552 = vmatprep.subr.mxu0 0.0
    %1553 = vmatpush2.msra.mxu0 0.0
    %1554 = vmatprep.subr.mxu0 0.0
    %1555 = vmatpush2.msra.mxu0 0.0
    %1556 = vmatprep.subr.mxu0 0.0
    %1557 = vmatpush2.msra.mxu0 0.0
    %1558 = vmatprep.subr.mxu0 0.0
    %1559 = vmatpush2.msra.mxu0 0.0
    %1560 = vmatprep.subr.mxu0 0.0
    %1561 = vmatpush2.msra.mxu0 0.0
    %1562 = vmatprep.subr.mxu0 0.0
    %1563 = vmatpush2.msra.mxu0 0.0
    %1564 = vmatprep.mubr.f32.mxu0 0.0
    %1565 = vmatmul.mubr.f32.gmra.mxu0 %v1498
    %v1566 = vpop.f32.mrf.mxu0
    %v1567 = vadd.f32 0.0, %v1566
    %v1568 = vpop.f32.mrf.mxu0
    %v1569 = vadd.f32 0.0, %v1568
    %1570 = vdwg.mxu0
    %v1571 = vadd.f32 %v1493, %v1567
    %v1572 = vadd.f32 %v1494, %v1569
    %v1573 = vxor.u32 %v1571, 2147483648
    %v1574 = vxor.u32 %v1572, 2147483648
    %v1575 = vmul.f32 %v1573, 1.442695
    %v1576 = vpow.pop %v1575
    %v1577 = vmul.f32 %v1574, 1.442695
    %v1578 = vpow.pop %v1577
    %v1579 = vadd.f32 %v1576, 1.0
    %v1580 = vadd.f32 %v1578, 1.0
    %v1581 = vrcp.pop %v1579
    %v1582 = vmul.f32 1.0, %v1581
    %v1583 = vrcp.pop %v1580
    %v1584 = vmul.f32 1.0, %v1583
    %v1585 = vtanh.pop %v1572
    %v1586 = vmul.f32 %v1582, %v1490
    %1588 = vrot.lane.b32.xlu0 %v1585, 64
    %v1589 = vpop.permute.xlu0 %1588
    %v1591 = vmul.f32 %v1582, %v1589
    %1593 = vrot.lane.b32.xlu0 %v1591, 64
    %v1594 = vpop.permute.xlu0 %1593
    %v1596 = vadd.f32 %v1586, %v1594
    %v1597 = vtanh.pop %v1596
    %1599 = vrot.lane.b32.xlu0 %v1597, 64
    %v1600 = vpop.permute.xlu0 %1599
    %v1602 = vmul.f32 %v1584, %v1600
    %v1604 = vsel %vm532, %v1491, 0
    %1606 = vmatprep.subr.mxu0 0.0
    %1607 = vmatpush1.msra.mxu0 0.0
    %1608 = vmatprep.subr.mxu0 0.0
    %1609 = vmatpush1.msra.mxu0 0.0
    %1610 = vmatprep.subr.mxu0 0.0
    %1611 = vmatpush1.msra.mxu0 0.0
    %1612 = vmatprep.subr.mxu0 0.0
    %1613 = vmatpush1.msra.mxu0 0.0
    %1614 = vmatprep.subr.mxu0 0.0
    %1615 = vmatpush1.msra.mxu0 0.0
    %1616 = vmatprep.subr.mxu0 0.0
    %1617 = vmatpush1.msra.mxu0 0.0
    %1618 = vmatprep.subr.mxu0 0.0
    %1619 = vmatpush1.msra.mxu0 0.0
    %1620 = vmatprep.subr.mxu0 0.0
    %1621 = vmatpush1.msra.mxu0 0.0
    %1622 = vmatprep.subr.mxu0 %v521
    %1623 = vmatpush1.msra.mxu0 %v520
    %1624 = vmatprep.subr.mxu0 %v519
    %1625 = vmatpush1.msra.mxu0 %v518
    %1626 = vmatprep.subr.mxu0 %v517
    %1627 = vmatpush1.msra.mxu0 %v516
    %1628 = vmatprep.subr.mxu0 %v515
    %1629 = vmatpush1.msra.mxu0 %v514
    %1630 = vmatprep.subr.mxu0 %v513
    %1631 = vmatpush1.msra.mxu0 %v512
    %1632 = vmatprep.subr.mxu0 %v511
    %1633 = vmatpush1.msra.mxu0 %v510
    %1634 = vmatprep.subr.mxu0 %v509
    %1635 = vmatpush1.msra.mxu0 %v508
    %1636 = vmatprep.subr.mxu0 %v507
    %1637 = vmatpush1.msra.mxu0 %v506
    %1638 = vmatprep.subr.mxu0 0.0
    %1639 = vmatpush2.msra.mxu0 0.0
    %1640 = vmatprep.subr.mxu0 0.0
    %1641 = vmatpush2.msra.mxu0 0.0
    %1642 = vmatprep.subr.mxu0 0.0
    %1643 = vmatpush2.msra.mxu0 0.0
    %1644 = vmatprep.subr.mxu0 0.0
    %1645 = vmatpush2.msra.mxu0 0.0
    %1646 = vmatprep.subr.mxu0 0.0
    %1647 = vmatpush2.msra.mxu0 0.0
    %1648 = vmatprep.subr.mxu0 0.0
    %1649 = vmatpush2.msra.mxu0 0.0
    %1650 = vmatprep.subr.mxu0 0.0
    %1651 = vmatpush2.msra.mxu0 0.0
    %1652 = vmatprep.subr.mxu0 0.0
    %1653 = vmatpush2.msra.mxu0 0.0
    %1654 = vmatprep.subr.mxu0 0.0
    %1655 = vmatpush2.msra.mxu0 0.0
    %1656 = vmatprep.subr.mxu0 0.0
    %1657 = vmatpush2.msra.mxu0 0.0
    %1658 = vmatprep.subr.mxu0 0.0
    %1659 = vmatpush2.msra.mxu0 0.0
    %1660 = vmatprep.subr.mxu0 0.0
    %1661 = vmatpush2.msra.mxu0 0.0
    %1662 = vmatprep.subr.mxu0 0.0
    %1663 = vmatpush2.msra.mxu0 0.0
    %1664 = vmatprep.subr.mxu0 0.0
    %1665 = vmatpush2.msra.mxu0 0.0
    %1666 = vmatprep.subr.mxu0 0.0
    %1667 = vmatpush2.msra.mxu0 0.0
    %1668 = vmatprep.subr.mxu0 0.0
    %1669 = vmatpush2.msra.mxu0 0.0
    %1670 = vmatprep.mubr.f32.mxu0 0.0
    %1671 = vmatmul.mubr.f32.gmra.mxu0 %v1604
    %v1672 = vpop.f32.mrf.mxu0
    %v1673 = vadd.f32 0.0, %v1672
    %v1674 = vpop.f32.mrf.mxu0
    %v1675 = vadd.f32 0.0, %v1674
    %1676 = vdwg.mxu0
    %v1677 = vadd.f32 %v1495, %v1673
    %v1678 = vadd.f32 %v1496, %v1675
    %v1679 = vxor.u32 %v1677, 2147483648
    %v1680 = vxor.u32 %v1678, 2147483648
    %v1681 = vmul.f32 %v1679, 1.442695
    %v1682 = vpow.pop %v1681
    %v1683 = vmul.f32 %v1680, 1.442695
    %v1684 = vpow.pop %v1683
    %v1685 = vadd.f32 %v1682, 1.0
    %v1686 = vadd.f32 %v1684, 1.0
    %v1687 = vrcp.pop %v1685
    %v1688 = vmul.f32 1.0, %v1687
    %v1689 = vrcp.pop %v1686
    %v1690 = vmul.f32 1.0, %v1689
    %v1691 = vtanh.pop %v1678
    %v1692 = vmul.f32 %v1688, %v1492
    %1694 = vrot.lane.b32.xlu0 %v1691, 64
    %v1695 = vpop.permute.xlu0 %1694
    %v1697 = vmul.f32 %v1688, %v1695
    %1699 = vrot.lane.b32.xlu0 %v1697, 64
    %v1700 = vpop.permute.xlu0 %1699
    %v1702 = vadd.f32 %v1692, %v1700
    %v1703 = vtanh.pop %v1702
    %1705 = vrot.lane.b32.xlu0 %v1703, 64
    %v1706 = vpop.permute.xlu0 %1705
    %v1708 = vmul.f32 %v1690, %v1706
    %v1709 = vsel %vm1485, %v1602, 0.0
    %s1710 = scalar_lea.vmem [#allocation3], 32
    %1711 = vst.msk [vmem:[%s1710] sm:$0xff] %vm532, %v1709
    %v1712 = vsel %vm1477, %v1708, 0.0
    %s1713 = scalar_lea.vmem [#allocation4], 24
    %1714 = vst.msk [vmem:[%s1713] sm:$0xff] %vm532, %v1712
    %v1715 = vsel %vm1485, %v1602, %v1489
    %v1716 = vsel %vm1485, %v1596, %v1490
    %v1717 = vsel %vm1477, %v1708, %v1491
    %v1718 = vsel %vm1477, %v1702, %v1492
    %v1719 = vld [vmem:[%s1012] sm:$0xff]
    %v1720 = vld [vmem:[%s1012 + $0x8] sm:$0xff]
    %v1721 = vld [vmem:[%s1007 + $0x10] sm:$0xff]
    %v1722 = vld [vmem:[%s1007 + $0x18] sm:$0xff]
    %v1724 = vsel %vm532, %v1715, 0
    %1726 = vmatprep.subr.mxu0 0.0
    %1727 = vmatpush1.msra.mxu0 0.0
    %1728 = vmatprep.subr.mxu0 0.0
    %1729 = vmatpush1.msra.mxu0 0.0
    %1730 = vmatprep.subr.mxu0 0.0
    %1731 = vmatpush1.msra.mxu0 0.0
    %1732 = vmatprep.subr.mxu0 0.0
    %1733 = vmatpush1.msra.mxu0 0.0
    %1734 = vmatprep.subr.mxu0 0.0
    %1735 = vmatpush1.msra.mxu0 0.0
    %1736 = vmatprep.subr.mxu0 0.0
    %1737 = vmatpush1.msra.mxu0 0.0
    %1738 = vmatprep.subr.mxu0 0.0
    %1739 = vmatpush1.msra.mxu0 0.0
    %1740 = vmatprep.subr.mxu0 0.0
    %1741 = vmatpush1.msra.mxu0 0.0
    %1742 = vmatprep.subr.mxu0 %v505
    %1743 = vmatpush1.msra.mxu0 %v504
    %1744 = vmatprep.subr.mxu0 %v503
    %1745 = vmatpush1.msra.mxu0 %v502
    %1746 = vmatprep.subr.mxu0 %v501
    %1747 = vmatpush1.msra.mxu0 %v500
    %1748 = vmatprep.subr.mxu0 %v499
    %1749 = vmatpush1.msra.mxu0 %v498
    %1750 = vmatprep.subr.mxu0 %v497
    %1751 = vmatpush1.msra.mxu0 %v496
    %1752 = vmatprep.subr.mxu0 %v495
    %1753 = vmatpush1.msra.mxu0 %v494
    %1754 = vmatprep.subr.mxu0 %v493
    %1755 = vmatpush1.msra.mxu0 %v492
    %1756 = vmatprep.subr.mxu0 %v491
    %1757 = vmatpush1.msra.mxu0 %v490
    %1758 = vmatprep.subr.mxu0 0.0
    %1759 = vmatpush2.msra.mxu0 0.0
    %1760 = vmatprep.subr.mxu0 0.0
    %1761 = vmatpush2.msra.mxu0 0.0
    %1762 = vmatprep.subr.mxu0 0.0
    %1763 = vmatpush2.msra.mxu0 0.0
    %1764 = vmatprep.subr.mxu0 0.0
    %1765 = vmatpush2.msra.mxu0 0.0
    %1766 = vmatprep.subr.mxu0 0.0
    %1767 = vmatpush2.msra.mxu0 0.0
    %1768 = vmatprep.subr.mxu0 0.0
    %1769 = vmatpush2.msra.mxu0 0.0
    %1770 = vmatprep.subr.mxu0 0.0
    %1771 = vmatpush2.msra.mxu0 0.0
    %1772 = vmatprep.subr.mxu0 0.0
    %1773 = vmatpush2.msra.mxu0 0.0
    %1774 = vmatprep.subr.mxu0 0.0
    %1775 = vmatpush2.msra.mxu0 0.0
    %1776 = vmatprep.subr.mxu0 0.0
    %1777 = vmatpush2.msra.mxu0 0.0
    %1778 = vmatprep.subr.mxu0 0.0
    %1779 = vmatpush2.msra.mxu0 0.0
    %1780 = vmatprep.subr.mxu0 0.0
    %1781 = vmatpush2.msra.mxu0 0.0
    %1782 = vmatprep.subr.mxu0 0.0
    %1783 = vmatpush2.msra.mxu0 0.0
    %1784 = vmatprep.subr.mxu0 0.0
    %1785 = vmatpush2.msra.mxu0 0.0
    %1786 = vmatprep.subr.mxu0 0.0
    %1787 = vmatpush2.msra.mxu0 0.0
    %1788 = vmatprep.subr.mxu0 0.0
    %1789 = vmatpush2.msra.mxu0 0.0
    %1790 = vmatprep.mubr.f32.mxu0 0.0
    %1791 = vmatmul.mubr.f32.gmra.mxu0 %v1724
    %v1792 = vpop.f32.mrf.mxu0
    %v1793 = vadd.f32 0.0, %v1792
    %v1794 = vpop.f32.mrf.mxu0
    %v1795 = vadd.f32 0.0, %v1794
    %1796 = vdwg.mxu0
    %v1797 = vadd.f32 %v1719, %v1793
    %v1798 = vadd.f32 %v1720, %v1795
    %v1799 = vxor.u32 %v1797, 2147483648
    %v1800 = vxor.u32 %v1798, 2147483648
    %v1801 = vmul.f32 %v1799, 1.442695
    %v1802 = vpow.pop %v1801
    %v1803 = vmul.f32 %v1800, 1.442695
    %v1804 = vpow.pop %v1803
    %v1805 = vadd.f32 %v1802, 1.0
    %v1806 = vadd.f32 %v1804, 1.0
    %v1807 = vrcp.pop %v1805
    %v1808 = vmul.f32 1.0, %v1807
    %v1809 = vrcp.pop %v1806
    %v1810 = vmul.f32 1.0, %v1809
    %v1811 = vtanh.pop %v1798
    %v1812 = vmul.f32 %v1808, %v1716
    %1814 = vrot.lane.b32.xlu0 %v1811, 64
    %v1815 = vpop.permute.xlu0 %1814
    %v1817 = vmul.f32 %v1808, %v1815
    %1819 = vrot.lane.b32.xlu0 %v1817, 64
    %v1820 = vpop.permute.xlu0 %1819
    %v1822 = vadd.f32 %v1812, %v1820
    %v1823 = vtanh.pop %v1822
    %1825 = vrot.lane.b32.xlu0 %v1823, 64
    %v1826 = vpop.permute.xlu0 %1825
    %v1828 = vmul.f32 %v1810, %v1826
    %v1830 = vsel %vm532, %v1717, 0
    %1832 = vmatprep.subr.mxu0 0.0
    %1833 = vmatpush1.msra.mxu0 0.0
    %1834 = vmatprep.subr.mxu0 0.0
    %1835 = vmatpush1.msra.mxu0 0.0
    %1836 = vmatprep.subr.mxu0 0.0
    %1837 = vmatpush1.msra.mxu0 0.0
    %1838 = vmatprep.subr.mxu0 0.0
    %1839 = vmatpush1.msra.mxu0 0.0
    %1840 = vmatprep.subr.mxu0 0.0
    %1841 = vmatpush1.msra.mxu0 0.0
    %1842 = vmatprep.subr.mxu0 0.0
    %1843 = vmatpush1.msra.mxu0 0.0
    %1844 = vmatprep.subr.mxu0 0.0
    %1845 = vmatpush1.msra.mxu0 0.0
    %1846 = vmatprep.subr.mxu0 0.0
    %1847 = vmatpush1.msra.mxu0 0.0
    %1848 = vmatprep.subr.mxu0 %v521
    %1849 = vmatpush1.msra.mxu0 %v520
    %1850 = vmatprep.subr.mxu0 %v519
    %1851 = vmatpush1.msra.mxu0 %v518
    %1852 = vmatprep.subr.mxu0 %v517
    %1853 = vmatpush1.msra.mxu0 %v516
    %1854 = vmatprep.subr.mxu0 %v515
    %1855 = vmatpush1.msra.mxu0 %v514
    %1856 = vmatprep.subr.mxu0 %v513
    %1857 = vmatpush1.msra.mxu0 %v512
    %1858 = vmatprep.subr.mxu0 %v511
    %1859 = vmatpush1.msra.mxu0 %v510
    %1860 = vmatprep.subr.mxu0 %v509
    %1861 = vmatpush1.msra.mxu0 %v508
    %1862 = vmatprep.subr.mxu0 %v507
    %1863 = vmatpush1.msra.mxu0 %v506
    %1864 = vmatprep.subr.mxu0 0.0
    %1865 = vmatpush2.msra.mxu0 0.0
    %1866 = vmatprep.subr.mxu0 0.0
    %1867 = vmatpush2.msra.mxu0 0.0
    %1868 = vmatprep.subr.mxu0 0.0
    %1869 = vmatpush2.msra.mxu0 0.0
    %1870 = vmatprep.subr.mxu0 0.0
    %1871 = vmatpush2.msra.mxu0 0.0
    %1872 = vmatprep.subr.mxu0 0.0
    %1873 = vmatpush2.msra.mxu0 0.0
    %1874 = vmatprep.subr.mxu0 0.0
    %1875 = vmatpush2.msra.mxu0 0.0
    %1876 = vmatprep.subr.mxu0 0.0
    %1877 = vmatpush2.msra.mxu0 0.0
    %1878 = vmatprep.subr.mxu0 0.0
    %1879 = vmatpush2.msra.mxu0 0.0
    %1880 = vmatprep.subr.mxu0 0.0
    %1881 = vmatpush2.msra.mxu0 0.0
    %1882 = vmatprep.subr.mxu0 0.0
    %1883 = vmatpush2.msra.mxu0 0.0
    %1884 = vmatprep.subr.mxu0 0.0
    %1885 = vmatpush2.msra.mxu0 0.0
    %1886 = vmatprep.subr.mxu0 0.0
    %1887 = vmatpush2.msra.mxu0 0.0
    %1888 = vmatprep.subr.mxu0 0.0
    %1889 = vmatpush2.msra.mxu0 0.0
    %1890 = vmatprep.subr.mxu0 0.0
    %1891 = vmatpush2.msra.mxu0 0.0
    %1892 = vmatprep.subr.mxu0 0.0
    %1893 = vmatpush2.msra.mxu0 0.0
    %1894 = vmatprep.subr.mxu0 0.0
    %1895 = vmatpush2.msra.mxu0 0.0
    %1896 = vmatprep.mubr.f32.mxu0 0.0
    %1897 = vmatmul.mubr.f32.gmra.mxu0 %v1830
    %v1898 = vpop.f32.mrf.mxu0
    %v1899 = vadd.f32 0.0, %v1898
    %v1900 = vpop.f32.mrf.mxu0
    %v1901 = vadd.f32 0.0, %v1900
    %1902 = vdwg.mxu0
    %v1903 = vadd.f32 %v1721, %v1899
    %v1904 = vadd.f32 %v1722, %v1901
    %v1905 = vxor.u32 %v1903, 2147483648
    %v1906 = vxor.u32 %v1904, 2147483648
    %v1907 = vmul.f32 %v1905, 1.442695
    %v1908 = vpow.pop %v1907
    %v1909 = vmul.f32 %v1906, 1.442695
    %v1910 = vpow.pop %v1909
    %v1911 = vadd.f32 %v1908, 1.0
    %v1912 = vadd.f32 %v1910, 1.0
    %v1913 = vrcp.pop %v1911
    %v1914 = vmul.f32 1.0, %v1913
    %v1915 = vrcp.pop %v1912
    %v1916 = vmul.f32 1.0, %v1915
    %v1917 = vtanh.pop %v1904
    %v1918 = vmul.f32 %v1914, %v1718
    %1920 = vrot.lane.b32.xlu0 %v1917, 64
    %v1921 = vpop.permute.xlu0 %1920
    %v1923 = vmul.f32 %v1914, %v1921
    %1925 = vrot.lane.b32.xlu0 %v1923, 64
    %v1926 = vpop.permute.xlu0 %1925
    %v1928 = vadd.f32 %v1918, %v1926
    %v1929 = vtanh.pop %v1928
    %1931 = vrot.lane.b32.xlu0 %v1929, 64
    %v1932 = vpop.permute.xlu0 %1931
    %v1934 = vmul.f32 %v1916, %v1932
    %v1935 = vsel %vm1241, %v1828, 0.0
    %s1936 = scalar_lea.vmem [#allocation3], 40
    %1937 = vst.msk [vmem:[%s1936] sm:$0xff] %vm532, %v1935
    %v1938 = vsel %vm1233, %v1934, 0.0
    %s1939 = scalar_lea.vmem [#allocation4], 16
    %1940 = vst.msk [vmem:[%s1939] sm:$0xff] %vm532, %v1938
    %v1941 = vsel %vm1241, %v1828, %v1715
    %v1942 = vsel %vm1241, %v1822, %v1716
    %v1943 = vsel %vm1233, %v1934, %v1717
    %v1944 = vsel %vm1233, %v1928, %v1718
    %v1945 = vld [vmem:[%s768] sm:$0xff]
    %v1946 = vld [vmem:[%s768 + $0x8] sm:$0xff]
    %v1947 = vld [vmem:[%s763 + $0x10] sm:$0xff]
    %v1948 = vld [vmem:[%s763 + $0x18] sm:$0xff]
    %v1950 = vsel %vm532, %v1941, 0
    %1952 = vmatprep.subr.mxu0 0.0
    %1953 = vmatpush1.msra.mxu0 0.0
    %1954 = vmatprep.subr.mxu0 0.0
    %1955 = vmatpush1.msra.mxu0 0.0
    %1956 = vmatprep.subr.mxu0 0.0
    %1957 = vmatpush1.msra.mxu0 0.0
    %1958 = vmatprep.subr.mxu0 0.0
    %1959 = vmatpush1.msra.mxu0 0.0
    %1960 = vmatprep.subr.mxu0 0.0
    %1961 = vmatpush1.msra.mxu0 0.0
    %1962 = vmatprep.subr.mxu0 0.0
    %1963 = vmatpush1.msra.mxu0 0.0
    %1964 = vmatprep.subr.mxu0 0.0
    %1965 = vmatpush1.msra.mxu0 0.0
    %1966 = vmatprep.subr.mxu0 0.0
    %1967 = vmatpush1.msra.mxu0 0.0
    %1968 = vmatprep.subr.mxu0 %v505
    %1969 = vmatpush1.msra.mxu0 %v504
    %1970 = vmatprep.subr.mxu0 %v503
    %1971 = vmatpush1.msra.mxu0 %v502
    %1972 = vmatprep.subr.mxu0 %v501
    %1973 = vmatpush1.msra.mxu0 %v500
    %1974 = vmatprep.subr.mxu0 %v499
    %1975 = vmatpush1.msra.mxu0 %v498
    %1976 = vmatprep.subr.mxu0 %v497
    %1977 = vmatpush1.msra.mxu0 %v496
    %1978 = vmatprep.subr.mxu0 %v495
    %1979 = vmatpush1.msra.mxu0 %v494
    %1980 = vmatprep.subr.mxu0 %v493
    %1981 = vmatpush1.msra.mxu0 %v492
    %1982 = vmatprep.subr.mxu0 %v491
    %1983 = vmatpush1.msra.mxu0 %v490
    %1984 = vmatprep.subr.mxu0 0.0
    %1985 = vmatpush2.msra.mxu0 0.0
    %1986 = vmatprep.subr.mxu0 0.0
    %1987 = vmatpush2.msra.mxu0 0.0
    %1988 = vmatprep.subr.mxu0 0.0
    %1989 = vmatpush2.msra.mxu0 0.0
    %1990 = vmatprep.subr.mxu0 0.0
    %1991 = vmatpush2.msra.mxu0 0.0
    %1992 = vmatprep.subr.mxu0 0.0
    %1993 = vmatpush2.msra.mxu0 0.0
    %1994 = vmatprep.subr.mxu0 0.0
    %1995 = vmatpush2.msra.mxu0 0.0
    %1996 = vmatprep.subr.mxu0 0.0
    %1997 = vmatpush2.msra.mxu0 0.0
    %1998 = vmatprep.subr.mxu0 0.0
    %1999 = vmatpush2.msra.mxu0 0.0
    %2000 = vmatprep.subr.mxu0 0.0
    %2001 = vmatpush2.msra.mxu0 0.0
    %2002 = vmatprep.subr.mxu0 0.0
    %2003 = vmatpush2.msra.mxu0 0.0
    %2004 = vmatprep.subr.mxu0 0.0
    %2005 = vmatpush2.msra.mxu0 0.0
    %2006 = vmatprep.subr.mxu0 0.0
    %2007 = vmatpush2.msra.mxu0 0.0
    %2008 = vmatprep.subr.mxu0 0.0
    %2009 = vmatpush2.msra.mxu0 0.0
    %2010 = vmatprep.subr.mxu0 0.0
    %2011 = vmatpush2.msra.mxu0 0.0
    %2012 = vmatprep.subr.mxu0 0.0
    %2013 = vmatpush2.msra.mxu0 0.0
    %2014 = vmatprep.subr.mxu0 0.0
    %2015 = vmatpush2.msra.mxu0 0.0
    %2016 = vmatprep.mubr.f32.mxu0 0.0
    %2017 = vmatmul.mubr.f32.gmra.mxu0 %v1950
    %v2018 = vpop.f32.mrf.mxu0
    %v2019 = vadd.f32 0.0, %v2018
    %v2020 = vpop.f32.mrf.mxu0
    %v2021 = vadd.f32 0.0, %v2020
    %2022 = vdwg.mxu0
    %v2023 = vadd.f32 %v1945, %v2019
    %v2024 = vadd.f32 %v1946, %v2021
    %v2025 = vxor.u32 %v2023, 2147483648
    %v2026 = vxor.u32 %v2024, 2147483648
    %v2027 = vmul.f32 %v2025, 1.442695
    %v2028 = vpow.pop %v2027
    %v2029 = vmul.f32 %v2026, 1.442695
    %v2030 = vpow.pop %v2029
    %v2031 = vadd.f32 %v2028, 1.0
    %v2032 = vadd.f32 %v2030, 1.0
    %v2033 = vrcp.pop %v2031
    %v2034 = vmul.f32 1.0, %v2033
    %v2035 = vrcp.pop %v2032
    %v2036 = vmul.f32 1.0, %v2035
    %v2037 = vtanh.pop %v2024
    %v2038 = vmul.f32 %v2034, %v1942
    %2040 = vrot.lane.b32.xlu0 %v2037, 64
    %v2041 = vpop.permute.xlu0 %2040
    %v2043 = vmul.f32 %v2034, %v2041
    %2045 = vrot.lane.b32.xlu0 %v2043, 64
    %v2046 = vpop.permute.xlu0 %2045
    %v2048 = vadd.f32 %v2038, %v2046
    %v2049 = vtanh.pop %v2048
    %2051 = vrot.lane.b32.xlu0 %v2049, 64
    %v2052 = vpop.permute.xlu0 %2051
    %v2054 = vmul.f32 %v2036, %v2052
    %v2056 = vsel %vm532, %v1943, 0
    %2058 = vmatprep.subr.mxu0 0.0
    %2059 = vmatpush1.msra.mxu0 0.0
    %2060 = vmatprep.subr.mxu0 0.0
    %2061 = vmatpush1.msra.mxu0 0.0
    %2062 = vmatprep.subr.mxu0 0.0
    %2063 = vmatpush1.msra.mxu0 0.0
    %2064 = vmatprep.subr.mxu0 0.0
    %2065 = vmatpush1.msra.mxu0 0.0
    %2066 = vmatprep.subr.mxu0 0.0
    %2067 = vmatpush1.msra.mxu0 0.0
    %2068 = vmatprep.subr.mxu0 0.0
    %2069 = vmatpush1.msra.mxu0 0.0
    %2070 = vmatprep.subr.mxu0 0.0
    %2071 = vmatpush1.msra.mxu0 0.0
    %2072 = vmatprep.subr.mxu0 0.0
    %2073 = vmatpush1.msra.mxu0 0.0
    %2074 = vmatprep.subr.mxu0 %v521
    %2075 = vmatpush1.msra.mxu0 %v520
    %2076 = vmatprep.subr.mxu0 %v519
    %2077 = vmatpush1.msra.mxu0 %v518
    %2078 = vmatprep.subr.mxu0 %v517
    %2079 = vmatpush1.msra.mxu0 %v516
    %2080 = vmatprep.subr.mxu0 %v515
    %2081 = vmatpush1.msra.mxu0 %v514
    %2082 = vmatprep.subr.mxu0 %v513
    %2083 = vmatpush1.msra.mxu0 %v512
    %2084 = vmatprep.subr.mxu0 %v511
    %2085 = vmatpush1.msra.mxu0 %v510
    %2086 = vmatprep.subr.mxu0 %v509
    %2087 = vmatpush1.msra.mxu0 %v508
    %2088 = vmatprep.subr.mxu0 %v507
    %2089 = vmatpush1.msra.mxu0 %v506
    %2090 = vmatprep.subr.mxu0 0.0
    %2091 = vmatpush2.msra.mxu0 0.0
    %2092 = vmatprep.subr.mxu0 0.0
    %2093 = vmatpush2.msra.mxu0 0.0
    %2094 = vmatprep.subr.mxu0 0.0
    %2095 = vmatpush2.msra.mxu0 0.0
    %2096 = vmatprep.subr.mxu0 0.0
    %2097 = vmatpush2.msra.mxu0 0.0
    %2098 = vmatprep.subr.mxu0 0.0
    %2099 = vmatpush2.msra.mxu0 0.0
    %2100 = vmatprep.subr.mxu0 0.0
    %2101 = vmatpush2.msra.mxu0 0.0
    %2102 = vmatprep.subr.mxu0 0.0
    %2103 = vmatpush2.msra.mxu0 0.0
    %2104 = vmatprep.subr.mxu0 0.0
    %2105 = vmatpush2.msra.mxu0 0.0
    %2106 = vmatprep.subr.mxu0 0.0
    %2107 = vmatpush2.msra.mxu0 0.0
    %2108 = vmatprep.subr.mxu0 0.0
    %2109 = vmatpush2.msra.mxu0 0.0
    %2110 = vmatprep.subr.mxu0 0.0
    %2111 = vmatpush2.msra.mxu0 0.0
    %2112 = vmatprep.subr.mxu0 0.0
    %2113 = vmatpush2.msra.mxu0 0.0
    %2114 = vmatprep.subr.mxu0 0.0
    %2115 = vmatpush2.msra.mxu0 0.0
    %2116 = vmatprep.subr.mxu0 0.0
    %2117 = vmatpush2.msra.mxu0 0.0
    %2118 = vmatprep.subr.mxu0 0.0
    %2119 = vmatpush2.msra.mxu0 0.0
    %2120 = vmatprep.subr.mxu0 0.0
    %2121 = vmatpush2.msra.mxu0 0.0
    %2122 = vmatprep.mubr.f32.mxu0 0.0
    %2123 = vmatmul.mubr.f32.gmra.mxu0 %v2056
    %v2124 = vpop.f32.mrf.mxu0
    %v2125 = vadd.f32 0.0, %v2124
    %v2126 = vpop.f32.mrf.mxu0
    %v2127 = vadd.f32 0.0, %v2126
    %2128 = vdwg.mxu0
    %v2129 = vadd.f32 %v1947, %v2125
    %v2130 = vadd.f32 %v1948, %v2127
    %v2131 = vxor.u32 %v2129, 2147483648
    %v2132 = vxor.u32 %v2130, 2147483648
    %v2133 = vmul.f32 %v2131, 1.442695
    %v2134 = vpow.pop %v2133
    %v2135 = vmul.f32 %v2132, 1.442695
    %v2136 = vpow.pop %v2135
    %v2137 = vadd.f32 %v2134, 1.0
    %v2138 = vadd.f32 %v2136, 1.0
    %v2139 = vrcp.pop %v2137
    %v2140 = vmul.f32 1.0, %v2139
    %v2141 = vrcp.pop %v2138
    %v2142 = vmul.f32 1.0, %v2141
    %v2143 = vtanh.pop %v2130
    %v2144 = vmul.f32 %v2140, %v1944
    %2146 = vrot.lane.b32.xlu0 %v2143, 64
    %v2147 = vpop.permute.xlu0 %2146
    %v2149 = vmul.f32 %v2140, %v2147
    %2151 = vrot.lane.b32.xlu0 %v2149, 64
    %v2152 = vpop.permute.xlu0 %2151
    %v2154 = vadd.f32 %v2144, %v2152
    %v2155 = vtanh.pop %v2154
    %2157 = vrot.lane.b32.xlu0 %v2155, 64
    %v2158 = vpop.permute.xlu0 %2157
    %v2160 = vmul.f32 %v2142, %v2158
    %v2161 = vsel %vm997, %v2054, 0.0
    %s2162 = scalar_lea.vmem [#allocation3], 48
    %2163 = vst.msk [vmem:[%s2162] sm:$0xff] %vm532, %v2161
    %v2164 = vsel %vm989, %v2160, 0.0
    %s2165 = scalar_lea.vmem [#allocation4], 8
    %2166 = vst.msk [vmem:[%s2165] sm:$0xff] %vm532, %v2164
    %v2167 = vsel %vm997, %v2054, %v1941
    %v2168 = vsel %vm997, %v2048, %v1942
    %v2169 = vsel %vm989, %v2160, %v1943
    %v2170 = vsel %vm989, %v2154, %v1944
    %v2171 = vld [vmem:[%s529] sm:$0xff]
    %v2172 = vld [vmem:[%s529 + $0x8] sm:$0xff]
    %v2173 = vld [vmem:[%s524 + $0x10] sm:$0xff]
    %v2174 = vld [vmem:[%s524 + $0x18] sm:$0xff]
    %v2176 = vsel %vm532, %v2167, 0
    %2178 = vmatprep.subr.mxu0 0.0
    %2179 = vmatpush1.msra.mxu0 0.0
    %2180 = vmatprep.subr.mxu0 0.0
    %2181 = vmatpush1.msra.mxu0 0.0
    %2182 = vmatprep.subr.mxu0 0.0
    %2183 = vmatpush1.msra.mxu0 0.0
    %2184 = vmatprep.subr.mxu0 0.0
    %2185 = vmatpush1.msra.mxu0 0.0
    %2186 = vmatprep.subr.mxu0 0.0
    %2187 = vmatpush1.msra.mxu0 0.0
    %2188 = vmatprep.subr.mxu0 0.0
    %2189 = vmatpush1.msra.mxu0 0.0
    %2190 = vmatprep.subr.mxu0 0.0
    %2191 = vmatpush1.msra.mxu0 0.0
    %2192 = vmatprep.subr.mxu0 0.0
    %2193 = vmatpush1.msra.mxu0 0.0
    %2194 = vmatprep.subr.mxu0 %v505
    %2195 = vmatpush1.msra.mxu0 %v504
    %2196 = vmatprep.subr.mxu0 %v503
    %2197 = vmatpush1.msra.mxu0 %v502
    %2198 = vmatprep.subr.mxu0 %v501
    %2199 = vmatpush1.msra.mxu0 %v500
    %2200 = vmatprep.subr.mxu0 %v499
    %2201 = vmatpush1.msra.mxu0 %v498
    %2202 = vmatprep.subr.mxu0 %v497
    %2203 = vmatpush1.msra.mxu0 %v496
    %2204 = vmatprep.subr.mxu0 %v495
    %2205 = vmatpush1.msra.mxu0 %v494
    %2206 = vmatprep.subr.mxu0 %v493
    %2207 = vmatpush1.msra.mxu0 %v492
    %2208 = vmatprep.subr.mxu0 %v491
    %2209 = vmatpush1.msra.mxu0 %v490
    %2210 = vmatprep.subr.mxu0 0.0
    %2211 = vmatpush2.msra.mxu0 0.0
    %2212 = vmatprep.subr.mxu0 0.0
    %2213 = vmatpush2.msra.mxu0 0.0
    %2214 = vmatprep.subr.mxu0 0.0
    %2215 = vmatpush2.msra.mxu0 0.0
    %2216 = vmatprep.subr.mxu0 0.0
    %2217 = vmatpush2.msra.mxu0 0.0
    %2218 = vmatprep.subr.mxu0 0.0
    %2219 = vmatpush2.msra.mxu0 0.0
    %2220 = vmatprep.subr.mxu0 0.0
    %2221 = vmatpush2.msra.mxu0 0.0
    %2222 = vmatprep.subr.mxu0 0.0
    %2223 = vmatpush2.msra.mxu0 0.0
    %2224 = vmatprep.subr.mxu0 0.0
    %2225 = vmatpush2.msra.mxu0 0.0
    %2226 = vmatprep.subr.mxu0 0.0
    %2227 = vmatpush2.msra.mxu0 0.0
    %2228 = vmatprep.subr.mxu0 0.0
    %2229 = vmatpush2.msra.mxu0 0.0
    %2230 = vmatprep.subr.mxu0 0.0
    %2231 = vmatpush2.msra.mxu0 0.0
    %2232 = vmatprep.subr.mxu0 0.0
    %2233 = vmatpush2.msra.mxu0 0.0
    %2234 = vmatprep.subr.mxu0 0.0
    %2235 = vmatpush2.msra.mxu0 0.0
    %2236 = vmatprep.subr.mxu0 0.0
    %2237 = vmatpush2.msra.mxu0 0.0
    %2238 = vmatprep.subr.mxu0 0.0
    %2239 = vmatpush2.msra.mxu0 0.0
    %2240 = vmatprep.subr.mxu0 0.0
    %2241 = vmatpush2.msra.mxu0 0.0
    %2242 = vmatprep.mubr.f32.mxu0 0.0
    %2243 = vmatmul.mubr.f32.gmra.mxu0 %v2176
    %v2244 = vpop.f32.mrf.mxu0
    %v2245 = vadd.f32 0.0, %v2244
    %v2246 = vpop.f32.mrf.mxu0
    %v2247 = vadd.f32 0.0, %v2246
    %2248 = vdwg.mxu0
    %v2249 = vadd.f32 %v2171, %v2245
    %v2250 = vadd.f32 %v2172, %v2247
    %v2251 = vxor.u32 %v2249, 2147483648
    %v2252 = vxor.u32 %v2250, 2147483648
    %v2253 = vmul.f32 %v2251, 1.442695
    %v2254 = vpow.pop %v2253
    %v2255 = vmul.f32 %v2252, 1.442695
    %v2256 = vpow.pop %v2255
    %v2257 = vadd.f32 %v2254, 1.0
    %v2258 = vadd.f32 %v2256, 1.0
    %v2259 = vrcp.pop %v2257
    %v2260 = vmul.f32 1.0, %v2259
    %v2261 = vrcp.pop %v2258
    %v2262 = vmul.f32 1.0, %v2261
    %v2263 = vtanh.pop %v2250
    %v2264 = vmul.f32 %v2260, %v2168
    %2266 = vrot.lane.b32.xlu0 %v2263, 64
    %v2267 = vpop.permute.xlu0 %2266
    %v2269 = vmul.f32 %v2260, %v2267
    %2271 = vrot.lane.b32.xlu0 %v2269, 64
    %v2272 = vpop.permute.xlu0 %2271
    %v2274 = vadd.f32 %v2264, %v2272
    %v2275 = vtanh.pop %v2274
    %2277 = vrot.lane.b32.xlu0 %v2275, 64
    %v2278 = vpop.permute.xlu0 %2277
    %v2280 = vmul.f32 %v2262, %v2278
    %v2282 = vsel %vm532, %v2169, 0
    %2284 = vmatprep.subr.mxu0 0.0
    %2285 = vmatpush1.msra.mxu0 0.0
    %2286 = vmatprep.subr.mxu0 0.0
    %2287 = vmatpush1.msra.mxu0 0.0
    %2288 = vmatprep.subr.mxu0 0.0
    %2289 = vmatpush1.msra.mxu0 0.0
    %2290 = vmatprep.subr.mxu0 0.0
    %2291 = vmatpush1.msra.mxu0 0.0
    %2292 = vmatprep.subr.mxu0 0.0
    %2293 = vmatpush1.msra.mxu0 0.0
    %2294 = vmatprep.subr.mxu0 0.0
    %2295 = vmatpush1.msra.mxu0 0.0
    %2296 = vmatprep.subr.mxu0 0.0
    %2297 = vmatpush1.msra.mxu0 0.0
    %2298 = vmatprep.subr.mxu0 0.0
    %2299 = vmatpush1.msra.mxu0 0.0
    %2300 = vmatprep.subr.mxu0 %v521
    %2301 = vmatpush1.msra.mxu0 %v520
    %2302 = vmatprep.subr.mxu0 %v519
    %2303 = vmatpush1.msra.mxu0 %v518
    %2304 = vmatprep.subr.mxu0 %v517
    %2305 = vmatpush1.msra.mxu0 %v516
    %2306 = vmatprep.subr.mxu0 %v515
    %2307 = vmatpush1.msra.mxu0 %v514
    %2308 = vmatprep.subr.mxu0 %v513
    %2309 = vmatpush1.msra.mxu0 %v512
    %2310 = vmatprep.subr.mxu0 %v511
    %2311 = vmatpush1.msra.mxu0 %v510
    %2312 = vmatprep.subr.mxu0 %v509
    %2313 = vmatpush1.msra.mxu0 %v508
    %2314 = vmatprep.subr.mxu0 %v507
    %2315 = vmatpush1.msra.mxu0 %v506
    %2316 = vmatprep.subr.mxu0 0.0
    %2317 = vmatpush2.msra.mxu0 0.0
    %2318 = vmatprep.subr.mxu0 0.0
    %2319 = vmatpush2.msra.mxu0 0.0
    %2320 = vmatprep.subr.mxu0 0.0
    %2321 = vmatpush2.msra.mxu0 0.0
    %2322 = vmatprep.subr.mxu0 0.0
    %2323 = vmatpush2.msra.mxu0 0.0
    %2324 = vmatprep.subr.mxu0 0.0
    %2325 = vmatpush2.msra.mxu0 0.0
    %2326 = vmatprep.subr.mxu0 0.0
    %2327 = vmatpush2.msra.mxu0 0.0
    %2328 = vmatprep.subr.mxu0 0.0
    %2329 = vmatpush2.msra.mxu0 0.0
    %2330 = vmatprep.subr.mxu0 0.0
    %2331 = vmatpush2.msra.mxu0 0.0
    %2332 = vmatprep.subr.mxu0 0.0
    %2333 = vmatpush2.msra.mxu0 0.0
    %2334 = vmatprep.subr.mxu0 0.0
    %2335 = vmatpush2.msra.mxu0 0.0
    %2336 = vmatprep.subr.mxu0 0.0
    %2337 = vmatpush2.msra.mxu0 0.0
    %2338 = vmatprep.subr.mxu0 0.0
    %2339 = vmatpush2.msra.mxu0 0.0
    %2340 = vmatprep.subr.mxu0 0.0
    %2341 = vmatpush2.msra.mxu0 0.0
    %2342 = vmatprep.subr.mxu0 0.0
    %2343 = vmatpush2.msra.mxu0 0.0
    %2344 = vmatprep.subr.mxu0 0.0
    %2345 = vmatpush2.msra.mxu0 0.0
    %2346 = vmatprep.subr.mxu0 0.0
    %2347 = vmatpush2.msra.mxu0 0.0
    %2348 = vmatprep.mubr.f32.mxu0 0.0
    %2349 = vmatmul.mubr.f32.gmra.mxu0 %v2282
    %v2350 = vpop.f32.mrf.mxu0
    %v2351 = vadd.f32 0.0, %v2350
    %v2352 = vpop.f32.mrf.mxu0
    %v2353 = vadd.f32 0.0, %v2352
    %2354 = vdwg.mxu0
    %v2355 = vadd.f32 %v2173, %v2351
    %v2356 = vadd.f32 %v2174, %v2353
    %v2357 = vxor.u32 %v2355, 2147483648
    %v2358 = vxor.u32 %v2356, 2147483648
    %v2359 = vmul.f32 %v2357, 1.442695
    %v2360 = vpow.pop %v2359
    %v2361 = vmul.f32 %v2358, 1.442695
    %v2362 = vpow.pop %v2361
    %v2363 = vadd.f32 %v2360, 1.0
    %v2364 = vadd.f32 %v2362, 1.0
    %v2365 = vrcp.pop %v2363
    %v2366 = vmul.f32 1.0, %v2365
    %v2367 = vrcp.pop %v2364
    %v2368 = vmul.f32 1.0, %v2367
    %v2369 = vtanh.pop %v2356
    %v2370 = vmul.f32 %v2366, %v2170
    %2372 = vrot.lane.b32.xlu0 %v2369, 64
    %v2373 = vpop.permute.xlu0 %2372
    %v2375 = vmul.f32 %v2366, %v2373
    %2377 = vrot.lane.b32.xlu0 %v2375, 64
    %v2378 = vpop.permute.xlu0 %2377
    %v2380 = vadd.f32 %v2370, %v2378
    %v2381 = vtanh.pop %v2380
    %2383 = vrot.lane.b32.xlu0 %v2381, 64
    %v2384 = vpop.permute.xlu0 %2383
    %v2386 = vmul.f32 %v2368, %v2384
    %v2387 = vsel %vm755, %v2280, 0.0
    %s2388 = scalar_lea.vmem [#allocation3], 56
    %2389 = vst.msk [vmem:[%s2388] sm:$0xff] %vm532, %v2387
    %v2390 = vsel %vm748, %v2386, 0.0
    %2391 = vst.msk [vmem:[#allocation4] sm:$0xff] %vm532, %v2390
    %v2392 = vld [vmem:[#allocation3] sm:$0xff]
    %v2393 = vld [vmem:[#allocation3 + $0x8] sm:$0xff]
    %v2394 = vld [vmem:[#allocation3 + $0x10] sm:$0xff]
    %v2395 = vld [vmem:[#allocation3 + $0x18] sm:$0xff]
    %v2396 = vld [vmem:[#allocation3 + $0x20] sm:$0xff]
    %v2397 = vld [vmem:[#allocation3 + $0x28] sm:$0xff]
    %v2398 = vld [vmem:[#allocation3 + $0x30] sm:$0xff]
    %v2399 = vld [vmem:[#allocation3 + $0x38] sm:$0xff]
    %v2400 = vld [vmem:[#allocation16] sm:$0xff]
    %v2401 = vld [vmem:[#allocation16 + $0x8] sm:$0xff]
    %v2402 = vld [vmem:[#allocation16 + $0x10] sm:$0xff]
    %v2403 = vld [vmem:[#allocation16 + $0x18] sm:$0xff]
    %v2404 = vld [vmem:[#allocation16 + $0x20] sm:$0xff]
    %v2405 = vld [vmem:[#allocation16 + $0x28] sm:$0xff]
    %v2406 = vld [vmem:[#allocation16 + $0x30] sm:$0xff]
    %v2407 = vld [vmem:[#allocation16 + $0x38] sm:$0xff]
    %v2408 = vld [vmem:[#allocation16 + $0x40] sm:$0xff]
    %v2409 = vld [vmem:[#allocation16 + $0x48] sm:$0xff]
    %v2410 = vld [vmem:[#allocation16 + $0x50] sm:$0xff]
    %v2411 = vld [vmem:[#allocation16 + $0x58] sm:$0xff]
    %v2412 = vld [vmem:[#allocation16 + $0x60] sm:$0xff]
    %v2413 = vld [vmem:[#allocation16 + $0x68] sm:$0xff]
    %v2414 = vld [vmem:[#allocation16 + $0x70] sm:$0xff]
    %v2415 = vld [vmem:[#allocation16 + $0x78] sm:$0xff]
    %v2416 = vld [vmem:[#allocation16 + $0x80] sm:$0xff]
    %v2417 = vld [vmem:[#allocation16 + $0x88] sm:$0xff]
    %v2418 = vld [vmem:[#allocation16 + $0x90] sm:$0xff]
    %v2419 = vld [vmem:[#allocation16 + $0x98] sm:$0xff]
    %v2420 = vld [vmem:[#allocation16 + $0xa0] sm:$0xff]
    %v2421 = vld [vmem:[#allocation16 + $0xa8] sm:$0xff]
    %v2422 = vld [vmem:[#allocation16 + $0xb0] sm:$0xff]
    %v2423 = vld [vmem:[#allocation16 + $0xb8] sm:$0xff]
    %v2424 = vld [vmem:[#allocation16 + $0xc0] sm:$0xff]
    %v2425 = vld [vmem:[#allocation16 + $0xc8] sm:$0xff]
    %v2426 = vld [vmem:[#allocation16 + $0xd0] sm:$0xff]
    %v2427 = vld [vmem:[#allocation16 + $0xd8] sm:$0xff]
    %v2428 = vld [vmem:[#allocation16 + $0xe0] sm:$0xff]
    %v2429 = vld [vmem:[#allocation16 + $0xe8] sm:$0xff]
    %v2430 = vld [vmem:[#allocation16 + $0xf0] sm:$0xff]
    %v2431 = vld [vmem:[#allocation16 + $0xf8] sm:$0xff]
    %v2432 = vld [vmem:[#allocation4] sm:$0xff]
    %v2433 = vld [vmem:[#allocation4 + $0x8] sm:$0xff]
    %v2434 = vld [vmem:[#allocation4 + $0x10] sm:$0xff]
    %v2435 = vld [vmem:[#allocation4 + $0x18] sm:$0xff]
    %v2436 = vld [vmem:[#allocation4 + $0x20] sm:$0xff]
    %v2437 = vld [vmem:[#allocation4 + $0x28] sm:$0xff]
    %v2438 = vld [vmem:[#allocation4 + $0x30] sm:$0xff]
    %v2439 = vld [vmem:[#allocation4 + $0x38] sm:$0xff]
    %v2440 = vld [vmem:[#allocation17] sm:$0xff]
    %v2441 = vld [vmem:[#allocation17 + $0x8] sm:$0xff]
    %v2442 = vld [vmem:[#allocation17 + $0x10] sm:$0xff]
    %v2443 = vld [vmem:[#allocation17 + $0x18] sm:$0xff]
    %v2444 = vld [vmem:[#allocation17 + $0x20] sm:$0xff]
    %v2445 = vld [vmem:[#allocation17 + $0x28] sm:$0xff]
    %v2446 = vld [vmem:[#allocation17 + $0x30] sm:$0xff]
    %v2447 = vld [vmem:[#allocation17 + $0x38] sm:$0xff]
    %v2448 = vld [vmem:[#allocation17 + $0x40] sm:$0xff]
    %v2449 = vld [vmem:[#allocation17 + $0x48] sm:$0xff]
    %v2450 = vld [vmem:[#allocation17 + $0x50] sm:$0xff]
    %v2451 = vld [vmem:[#allocation17 + $0x58] sm:$0xff]
    %v2452 = vld [vmem:[#allocation17 + $0x60] sm:$0xff]
    %v2453 = vld [vmem:[#allocation17 + $0x68] sm:$0xff]
    %v2454 = vld [vmem:[#allocation17 + $0x70] sm:$0xff]
    %v2455 = vld [vmem:[#allocation17 + $0x78] sm:$0xff]
    %v2456 = vld [vmem:[#allocation17 + $0x80] sm:$0xff]
    %v2457 = vld [vmem:[#allocation17 + $0x88] sm:$0xff]
    %v2458 = vld [vmem:[#allocation17 + $0x90] sm:$0xff]
    %v2459 = vld [vmem:[#allocation17 + $0x98] sm:$0xff]
    %v2460 = vld [vmem:[#allocation17 + $0xa0] sm:$0xff]
    %v2461 = vld [vmem:[#allocation17 + $0xa8] sm:$0xff]
    %v2462 = vld [vmem:[#allocation17 + $0xb0] sm:$0xff]
    %v2463 = vld [vmem:[#allocation17 + $0xb8] sm:$0xff]
    %v2464 = vld [vmem:[#allocation17 + $0xc0] sm:$0xff]
    %v2465 = vld [vmem:[#allocation17 + $0xc8] sm:$0xff]
    %v2466 = vld [vmem:[#allocation17 + $0xd0] sm:$0xff]
    %v2467 = vld [vmem:[#allocation17 + $0xd8] sm:$0xff]
    %v2468 = vld [vmem:[#allocation17 + $0xe0] sm:$0xff]
    %v2469 = vld [vmem:[#allocation17 + $0xe8] sm:$0xff]
    %v2470 = vld [vmem:[#allocation17 + $0xf0] sm:$0xff]
    %v2471 = vld [vmem:[#allocation17 + $0xf8] sm:$0xff]
    %v2473 = vsel %vm532, %v2432, 0
    %v2476 = vsel %vm532, %v2433, 0
    %v2479 = vsel %vm532, %v2434, 0
    %v2482 = vsel %vm532, %v2435, 0
    %v2485 = vsel %vm532, %v2436, 0
    %v2488 = vsel %vm532, %v2437, 0
    %v2491 = vsel %vm532, %v2438, 0
    %v2494 = vsel %vm532, %v2439, 0
    %2496 = vmatprep.subr.mxu0 0.0
    %2497 = vmatpush1.msra.mxu0 0.0
    %2498 = vmatprep.subr.mxu0 0.0
    %2499 = vmatpush1.msra.mxu0 0.0
    %2500 = vmatprep.subr.mxu0 0.0
    %2501 = vmatpush1.msra.mxu0 0.0
    %2502 = vmatprep.subr.mxu0 0.0
    %2503 = vmatpush1.msra.mxu0 0.0
    %2504 = vmatprep.subr.mxu0 0.0
    %2505 = vmatpush1.msra.mxu0 0.0
    %2506 = vmatprep.subr.mxu0 0.0
    %2507 = vmatpush1.msra.mxu0 0.0
    %2508 = vmatprep.subr.mxu0 0.0
    %2509 = vmatpush1.msra.mxu0 0.0
    %2510 = vmatprep.subr.mxu0 0.0
    %2511 = vmatpush1.msra.mxu0 0.0
    %2512 = vmatprep.subr.mxu0 %v2469
    %2513 = vmatpush1.msra.mxu0 %v2468
    %2514 = vmatprep.subr.mxu0 %v2465
    %2515 = vmatpush1.msra.mxu0 %v2464
    %2516 = vmatprep.subr.mxu0 %v2461
    %2517 = vmatpush1.msra.mxu0 %v2460
    %2518 = vmatprep.subr.mxu0 %v2457
    %2519 = vmatpush1.msra.mxu0 %v2456
    %2520 = vmatprep.subr.mxu0 %v2453
    %2521 = vmatpush1.msra.mxu0 %v2452
    %2522 = vmatprep.subr.mxu0 %v2449
    %2523 = vmatpush1.msra.mxu0 %v2448
    %2524 = vmatprep.subr.mxu0 %v2445
    %2525 = vmatpush1.msra.mxu0 %v2444
    %2526 = vmatprep.subr.mxu0 %v2441
    %2527 = vmatpush1.msra.mxu0 %v2440
    %2528 = vmatprep.subr.mxu0 0.0
    %2529 = vmatpush2.msra.mxu0 0.0
    %2530 = vmatprep.subr.mxu0 0.0
    %2531 = vmatpush2.msra.mxu0 0.0
    %2532 = vmatprep.subr.mxu0 0.0
    %2533 = vmatpush2.msra.mxu0 0.0
    %2534 = vmatprep.subr.mxu0 0.0
    %2535 = vmatpush2.msra.mxu0 0.0
    %2536 = vmatprep.subr.mxu0 0.0
    %2537 = vmatpush2.msra.mxu0 0.0
    %2538 = vmatprep.subr.mxu0 0.0
    %2539 = vmatpush2.msra.mxu0 0.0
    %2540 = vmatprep.subr.mxu0 0.0
    %2541 = vmatpush2.msra.mxu0 0.0
    %2542 = vmatprep.subr.mxu0 0.0
    %2543 = vmatpush2.msra.mxu0 0.0
    %2544 = vmatprep.subr.mxu0 0.0
    %2545 = vmatpush2.msra.mxu0 0.0
    %2546 = vmatprep.subr.mxu0 0.0
    %2547 = vmatpush2.msra.mxu0 0.0
    %2548 = vmatprep.subr.mxu0 0.0
    %2549 = vmatpush2.msra.mxu0 0.0
    %2550 = vmatprep.subr.mxu0 0.0
    %2551 = vmatpush2.msra.mxu0 0.0
    %2552 = vmatprep.subr.mxu0 0.0
    %2553 = vmatpush2.msra.mxu0 0.0
    %2554 = vmatprep.subr.mxu0 0.0
    %2555 = vmatpush2.msra.mxu0 0.0
    %2556 = vmatprep.subr.mxu0 0.0
    %2557 = vmatpush2.msra.mxu0 0.0
    %2558 = vmatprep.subr.mxu0 0.0
    %2559 = vmatpush2.msra.mxu0 0.0
    %2560 = vmatprep.mubr.f32.mxu0 0.0
    %2561 = vmatmul.mubr.f32.gmra.mxu0 %v2473
    %v2562 = vpop.f32.mrf.mxu0
    %v2563 = vadd.f32 0.0, %v2562
    %v2564 = vpop.f32.mrf.mxu0
    %v2565 = vadd.f32 0.0, %v2564
    %2566 = vmatprep.mubr.f32.mxu0 0.0
    %2567 = vmatmul.mubr.f32.gmra.mxu0 %v2476
    %v2568 = vpop.f32.mrf.mxu0
    %v2569 = vadd.f32 0.0, %v2568
    %v2570 = vpop.f32.mrf.mxu0
    %v2571 = vadd.f32 0.0, %v2570
    %2572 = vmatprep.mubr.f32.mxu0 0.0
    %2573 = vmatmul.mubr.f32.gmra.mxu0 %v2479
    %v2574 = vpop.f32.mrf.mxu0
    %v2575 = vadd.f32 0.0, %v2574
    %v2576 = vpop.f32.mrf.mxu0
    %v2577 = vadd.f32 0.0, %v2576
    %2578 = vmatprep.mubr.f32.mxu0 0.0
    %2579 = vmatmul.mubr.f32.gmra.mxu0 %v2482
    %v2580 = vpop.f32.mrf.mxu0
    %v2581 = vadd.f32 0.0, %v2580
    %v2582 = vpop.f32.mrf.mxu0
    %v2583 = vadd.f32 0.0, %v2582
    %2584 = vmatprep.mubr.f32.mxu0 0.0
    %2585 = vmatmul.mubr.f32.gmra.mxu0 %v2485
    %v2586 = vpop.f32.mrf.mxu0
    %v2587 = vadd.f32 0.0, %v2586
    %v2588 = vpop.f32.mrf.mxu0
    %v2589 = vadd.f32 0.0, %v2588
    %2590 = vmatprep.mubr.f32.mxu0 0.0
    %2591 = vmatmul.mubr.f32.gmra.mxu0 %v2488
    %v2592 = vpop.f32.mrf.mxu0
    %v2593 = vadd.f32 0.0, %v2592
    %v2594 = vpop.f32.mrf.mxu0
    %v2595 = vadd.f32 0.0, %v2594
    %2596 = vmatprep.mubr.f32.mxu0 0.0
    %2597 = vmatmul.mubr.f32.gmra.mxu0 %v2491
    %v2598 = vpop.f32.mrf.mxu0
    %v2599 = vadd.f32 0.0, %v2598
    %v2600 = vpop.f32.mrf.mxu0
    %v2601 = vadd.f32 0.0, %v2600
    %2602 = vmatprep.mubr.f32.mxu0 0.0
    %2603 = vmatmul.mubr.f32.gmra.mxu0 %v2494
    %v2604 = vpop.f32.mrf.mxu0
    %v2605 = vadd.f32 0.0, %v2604
    %v2606 = vpop.f32.mrf.mxu0
    %v2607 = vadd.f32 0.0, %v2606
    %2608 = vdwg.mxu0
    %2609 = vmatprep.subr.mxu0 0.0
    %2610 = vmatpush1.msra.mxu0 0.0
    %2611 = vmatprep.subr.mxu0 0.0
    %2612 = vmatpush1.msra.mxu0 0.0
    %2613 = vmatprep.subr.mxu0 0.0
    %2614 = vmatpush1.msra.mxu0 0.0
    %2615 = vmatprep.subr.mxu0 0.0
    %2616 = vmatpush1.msra.mxu0 0.0
    %2617 = vmatprep.subr.mxu0 0.0
    %2618 = vmatpush1.msra.mxu0 0.0
    %2619 = vmatprep.subr.mxu0 0.0
    %2620 = vmatpush1.msra.mxu0 0.0
    %2621 = vmatprep.subr.mxu0 0.0
    %2622 = vmatpush1.msra.mxu0 0.0
    %2623 = vmatprep.subr.mxu0 0.0
    %2624 = vmatpush1.msra.mxu0 0.0
    %2625 = vmatprep.subr.mxu0 %v2471
    %2626 = vmatpush1.msra.mxu0 %v2470
    %2627 = vmatprep.subr.mxu0 %v2467
    %2628 = vmatpush1.msra.mxu0 %v2466
    %2629 = vmatprep.subr.mxu0 %v2463
    %2630 = vmatpush1.msra.mxu0 %v2462
    %2631 = vmatprep.subr.mxu0 %v2459
    %2632 = vmatpush1.msra.mxu0 %v2458
    %2633 = vmatprep.subr.mxu0 %v2455
    %2634 = vmatpush1.msra.mxu0 %v2454
    %2635 = vmatprep.subr.mxu0 %v2451
    %2636 = vmatpush1.msra.mxu0 %v2450
    %2637 = vmatprep.subr.mxu0 %v2447
    %2638 = vmatpush1.msra.mxu0 %v2446
    %2639 = vmatprep.subr.mxu0 %v2443
    %2640 = vmatpush1.msra.mxu0 %v2442
    %2641 = vmatprep.subr.mxu0 0.0
    %2642 = vmatpush2.msra.mxu0 0.0
    %2643 = vmatprep.subr.mxu0 0.0
    %2644 = vmatpush2.msra.mxu0 0.0
    %2645 = vmatprep.subr.mxu0 0.0
    %2646 = vmatpush2.msra.mxu0 0.0
    %2647 = vmatprep.subr.mxu0 0.0
    %2648 = vmatpush2.msra.mxu0 0.0
    %2649 = vmatprep.subr.mxu0 0.0
    %2650 = vmatpush2.msra.mxu0 0.0
    %2651 = vmatprep.subr.mxu0 0.0
    %2652 = vmatpush2.msra.mxu0 0.0
    %2653 = vmatprep.subr.mxu0 0.0
    %2654 = vmatpush2.msra.mxu0 0.0
    %2655 = vmatprep.subr.mxu0 0.0
    %2656 = vmatpush2.msra.mxu0 0.0
    %2657 = vmatprep.subr.mxu0 0.0
    %2658 = vmatpush2.msra.mxu0 0.0
    %2659 = vmatprep.subr.mxu0 0.0
    %2660 = vmatpush2.msra.mxu0 0.0
    %2661 = vmatprep.subr.mxu0 0.0
    %2662 = vmatpush2.msra.mxu0 0.0
    %2663 = vmatprep.subr.mxu0 0.0
    %2664 = vmatpush2.msra.mxu0 0.0
    %2665 = vmatprep.subr.mxu0 0.0
    %2666 = vmatpush2.msra.mxu0 0.0
    %2667 = vmatprep.subr.mxu0 0.0
    %2668 = vmatpush2.msra.mxu0 0.0
    %2669 = vmatprep.subr.mxu0 0.0
    %2670 = vmatpush2.msra.mxu0 0.0
    %2671 = vmatprep.subr.mxu0 0.0
    %2672 = vmatpush2.msra.mxu0 0.0
    %2673 = vmatprep.mubr.f32.mxu0 0.0
    %2674 = vmatmul.mubr.f32.gmra.mxu0 %v2473
    %v2675 = vpop.f32.mrf.mxu0
    %v2676 = vadd.f32 0.0, %v2675
    %v2677 = vpop.f32.mrf.mxu0
    %v2678 = vadd.f32 0.0, %v2677
    %2679 = vmatprep.mubr.f32.mxu0 0.0
    %2680 = vmatmul.mubr.f32.gmra.mxu0 %v2476
    %v2681 = vpop.f32.mrf.mxu0
    %v2682 = vadd.f32 0.0, %v2681
    %v2683 = vpop.f32.mrf.mxu0
    %v2684 = vadd.f32 0.0, %v2683
    %2685 = vmatprep.mubr.f32.mxu0 0.0
    %2686 = vmatmul.mubr.f32.gmra.mxu0 %v2479
    %v2687 = vpop.f32.mrf.mxu0
    %v2688 = vadd.f32 0.0, %v2687
    %v2689 = vpop.f32.mrf.mxu0
    %v2690 = vadd.f32 0.0, %v2689
    %2691 = vmatprep.mubr.f32.mxu0 0.0
    %2692 = vmatmul.mubr.f32.gmra.mxu0 %v2482
    %v2693 = vpop.f32.mrf.mxu0
    %v2694 = vadd.f32 0.0, %v2693
    %v2695 = vpop.f32.mrf.mxu0
    %v2696 = vadd.f32 0.0, %v2695
    %2697 = vmatprep.mubr.f32.mxu0 0.0
    %2698 = vmatmul.mubr.f32.gmra.mxu0 %v2485
    %v2699 = vpop.f32.mrf.mxu0
    %v2700 = vadd.f32 0.0, %v2699
    %v2701 = vpop.f32.mrf.mxu0
    %v2702 = vadd.f32 0.0, %v2701
    %2703 = vmatprep.mubr.f32.mxu0 0.0
    %2704 = vmatmul.mubr.f32.gmra.mxu0 %v2488
    %v2705 = vpop.f32.mrf.mxu0
    %v2706 = vadd.f32 0.0, %v2705
    %v2707 = vpop.f32.mrf.mxu0
    %v2708 = vadd.f32 0.0, %v2707
    %2709 = vmatprep.mubr.f32.mxu0 0.0
    %2710 = vmatmul.mubr.f32.gmra.mxu0 %v2491
    %v2711 = vpop.f32.mrf.mxu0
    %v2712 = vadd.f32 0.0, %v2711
    %v2713 = vpop.f32.mrf.mxu0
    %v2714 = vadd.f32 0.0, %v2713
    %2715 = vmatprep.mubr.f32.mxu0 0.0
    %2716 = vmatmul.mubr.f32.gmra.mxu0 %v2494
    %v2717 = vpop.f32.mrf.mxu0
    %v2718 = vadd.f32 0.0, %v2717
    %v2719 = vpop.f32.mrf.mxu0
    %v2720 = vadd.f32 0.0, %v2719
    %2721 = vdwg.mxu0
    %v2723 = vsel %vm532, %v2392, 0
    %v2726 = vsel %vm532, %v2393, 0
    %v2729 = vsel %vm532, %v2394, 0
    %v2732 = vsel %vm532, %v2395, 0
    %v2735 = vsel %vm532, %v2396, 0
    %v2738 = vsel %vm532, %v2397, 0
    %v2741 = vsel %vm532, %v2398, 0
    %v2744 = vsel %vm532, %v2399, 0
    %2746 = vmatprep.subr.mxu0 0.0
    %2747 = vmatpush1.msra.mxu0 0.0
    %2748 = vmatprep.subr.mxu0 0.0
    %2749 = vmatpush1.msra.mxu0 0.0
    %2750 = vmatprep.subr.mxu0 0.0
    %2751 = vmatpush1.msra.mxu0 0.0
    %2752 = vmatprep.subr.mxu0 0.0
    %2753 = vmatpush1.msra.mxu0 0.0
    %2754 = vmatprep.subr.mxu0 0.0
    %2755 = vmatpush1.msra.mxu0 0.0
    %2756 = vmatprep.subr.mxu0 0.0
    %2757 = vmatpush1.msra.mxu0 0.0
    %2758 = vmatprep.subr.mxu0 0.0
    %2759 = vmatpush1.msra.mxu0 0.0
    %2760 = vmatprep.subr.mxu0 0.0
    %2761 = vmatpush1.msra.mxu0 0.0
    %2762 = vmatprep.subr.mxu0 %v2429
    %2763 = vmatpush1.msra.mxu0 %v2428
    %2764 = vmatprep.subr.mxu0 %v2425
    %2765 = vmatpush1.msra.mxu0 %v2424
    %2766 = vmatprep.subr.mxu0 %v2421
    %2767 = vmatpush1.msra.mxu0 %v2420
    %2768 = vmatprep.subr.mxu0 %v2417
    %2769 = vmatpush1.msra.mxu0 %v2416
    %2770 = vmatprep.subr.mxu0 %v2413
    %2771 = vmatpush1.msra.mxu0 %v2412
    %2772 = vmatprep.subr.mxu0 %v2409
    %2773 = vmatpush1.msra.mxu0 %v2408
    %2774 = vmatprep.subr.mxu0 %v2405
    %2775 = vmatpush1.msra.mxu0 %v2404
    %2776 = vmatprep.subr.mxu0 %v2401
    %2777 = vmatpush1.msra.mxu0 %v2400
    %2778 = vmatprep.subr.mxu0 0.0
    %2779 = vmatpush2.msra.mxu0 0.0
    %2780 = vmatprep.subr.mxu0 0.0
    %2781 = vmatpush2.msra.mxu0 0.0
    %2782 = vmatprep.subr.mxu0 0.0
    %2783 = vmatpush2.msra.mxu0 0.0
    %2784 = vmatprep.subr.mxu0 0.0
    %2785 = vmatpush2.msra.mxu0 0.0
    %2786 = vmatprep.subr.mxu0 0.0
    %2787 = vmatpush2.msra.mxu0 0.0
    %2788 = vmatprep.subr.mxu0 0.0
    %2789 = vmatpush2.msra.mxu0 0.0
    %2790 = vmatprep.subr.mxu0 0.0
    %2791 = vmatpush2.msra.mxu0 0.0
    %2792 = vmatprep.subr.mxu0 0.0
    %2793 = vmatpush2.msra.mxu0 0.0
    %2794 = vmatprep.subr.mxu0 0.0
    %2795 = vmatpush2.msra.mxu0 0.0
    %2796 = vmatprep.subr.mxu0 0.0
    %2797 = vmatpush2.msra.mxu0 0.0
    %2798 = vmatprep.subr.mxu0 0.0
    %2799 = vmatpush2.msra.mxu0 0.0
    %2800 = vmatprep.subr.mxu0 0.0
    %2801 = vmatpush2.msra.mxu0 0.0
    %2802 = vmatprep.subr.mxu0 0.0
    %2803 = vmatpush2.msra.mxu0 0.0
    %2804 = vmatprep.subr.mxu0 0.0
    %2805 = vmatpush2.msra.mxu0 0.0
    %2806 = vmatprep.subr.mxu0 0.0
    %2807 = vmatpush2.msra.mxu0 0.0
    %2808 = vmatprep.subr.mxu0 0.0
    %2809 = vmatpush2.msra.mxu0 0.0
    %2810 = vmatprep.mubr.f32.mxu0 0.0
    %2811 = vmatmul.mubr.f32.gmra.mxu0 %v2723
    %v2812 = vpop.f32.mrf.mxu0
    %v2813 = vadd.f32 %v2563, %v2812
    %v2814 = vpop.f32.mrf.mxu0
    %v2815 = vadd.f32 %v2565, %v2814
    %2816 = vmatprep.mubr.f32.mxu0 0.0
    %2817 = vmatmul.mubr.f32.gmra.mxu0 %v2726
    %v2818 = vpop.f32.mrf.mxu0
    %v2819 = vadd.f32 %v2569, %v2818
    %v2820 = vpop.f32.mrf.mxu0
    %v2821 = vadd.f32 %v2571, %v2820
    %2822 = vmatprep.mubr.f32.mxu0 0.0
    %2823 = vmatmul.mubr.f32.gmra.mxu0 %v2729
    %v2824 = vpop.f32.mrf.mxu0
    %v2825 = vadd.f32 %v2575, %v2824
    %v2826 = vpop.f32.mrf.mxu0
    %v2827 = vadd.f32 %v2577, %v2826
    %2828 = vmatprep.mubr.f32.mxu0 0.0
    %2829 = vmatmul.mubr.f32.gmra.mxu0 %v2732
    %v2830 = vpop.f32.mrf.mxu0
    %v2831 = vadd.f32 %v2581, %v2830
    %v2832 = vpop.f32.mrf.mxu0
    %v2833 = vadd.f32 %v2583, %v2832
    %2834 = vmatprep.mubr.f32.mxu0 0.0
    %2835 = vmatmul.mubr.f32.gmra.mxu0 %v2735
    %v2836 = vpop.f32.mrf.mxu0
    %v2837 = vadd.f32 %v2587, %v2836
    %v2838 = vpop.f32.mrf.mxu0
    %v2839 = vadd.f32 %v2589, %v2838
    %2840 = vmatprep.mubr.f32.mxu0 0.0
    %2841 = vmatmul.mubr.f32.gmra.mxu0 %v2738
    %v2842 = vpop.f32.mrf.mxu0
    %v2843 = vadd.f32 %v2593, %v2842
    %v2844 = vpop.f32.mrf.mxu0
    %v2845 = vadd.f32 %v2595, %v2844
    %2846 = vmatprep.mubr.f32.mxu0 0.0
    %2847 = vmatmul.mubr.f32.gmra.mxu0 %v2741
    %v2848 = vpop.f32.mrf.mxu0
    %v2849 = vadd.f32 %v2599, %v2848
    %v2850 = vpop.f32.mrf.mxu0
    %v2851 = vadd.f32 %v2601, %v2850
    %2852 = vmatprep.mubr.f32.mxu0 0.0
    %2853 = vmatmul.mubr.f32.gmra.mxu0 %v2744
    %v2854 = vpop.f32.mrf.mxu0
    %v2855 = vadd.f32 %v2605, %v2854
    %v2856 = vpop.f32.mrf.mxu0
    %v2857 = vadd.f32 %v2607, %v2856
    %2858 = vdwg.mxu0
    %2859 = vmatprep.subr.mxu0 0.0
    %2860 = vmatpush1.msra.mxu0 0.0
    %2861 = vmatprep.subr.mxu0 0.0
    %2862 = vmatpush1.msra.mxu0 0.0
    %2863 = vmatprep.subr.mxu0 0.0
    %2864 = vmatpush1.msra.mxu0 0.0
    %2865 = vmatprep.subr.mxu0 0.0
    %2866 = vmatpush1.msra.mxu0 0.0
    %2867 = vmatprep.subr.mxu0 0.0
    %2868 = vmatpush1.msra.mxu0 0.0
    %2869 = vmatprep.subr.mxu0 0.0
    %2870 = vmatpush1.msra.mxu0 0.0
    %2871 = vmatprep.subr.mxu0 0.0
    %2872 = vmatpush1.msra.mxu0 0.0
    %2873 = vmatprep.subr.mxu0 0.0
    %2874 = vmatpush1.msra.mxu0 0.0
    %2875 = vmatprep.subr.mxu0 %v2431
    %2876 = vmatpush1.msra.mxu0 %v2430
    %2877 = vmatprep.subr.mxu0 %v2427
    %2878 = vmatpush1.msra.mxu0 %v2426
    %2879 = vmatprep.subr.mxu0 %v2423
    %2880 = vmatpush1.msra.mxu0 %v2422
    %2881 = vmatprep.subr.mxu0 %v2419
    %2882 = vmatpush1.msra.mxu0 %v2418
    %2883 = vmatprep.subr.mxu0 %v2415
    %2884 = vmatpush1.msra.mxu0 %v2414
    %2885 = vmatprep.subr.mxu0 %v2411
    %2886 = vmatpush1.msra.mxu0 %v2410
    %2887 = vmatprep.subr.mxu0 %v2407
    %2888 = vmatpush1.msra.mxu0 %v2406
    %2889 = vmatprep.subr.mxu0 %v2403
    %2890 = vmatpush1.msra.mxu0 %v2402
    %2891 = vmatprep.subr.mxu0 0.0
    %2892 = vmatpush2.msra.mxu0 0.0
    %2893 = vmatprep.subr.mxu0 0.0
    %2894 = vmatpush2.msra.mxu0 0.0
    %2895 = vmatprep.subr.mxu0 0.0
    %2896 = vmatpush2.msra.mxu0 0.0
    %2897 = vmatprep.subr.mxu0 0.0
    %2898 = vmatpush2.msra.mxu0 0.0
    %2899 = vmatprep.subr.mxu0 0.0
    %2900 = vmatpush2.msra.mxu0 0.0
    %2901 = vmatprep.subr.mxu0 0.0
    %2902 = vmatpush2.msra.mxu0 0.0
    %2903 = vmatprep.subr.mxu0 0.0
    %2904 = vmatpush2.msra.mxu0 0.0
    %2905 = vmatprep.subr.mxu0 0.0
    %2906 = vmatpush2.msra.mxu0 0.0
    %2907 = vmatprep.subr.mxu0 0.0
    %2908 = vmatpush2.msra.mxu0 0.0
    %2909 = vmatprep.subr.mxu0 0.0
    %2910 = vmatpush2.msra.mxu0 0.0
    %2911 = vmatprep.subr.mxu0 0.0
    %2912 = vmatpush2.msra.mxu0 0.0
    %2913 = vmatprep.subr.mxu0 0.0
    %2914 = vmatpush2.msra.mxu0 0.0
    %2915 = vmatprep.subr.mxu0 0.0
    %2916 = vmatpush2.msra.mxu0 0.0
    %2917 = vmatprep.subr.mxu0 0.0
    %2918 = vmatpush2.msra.mxu0 0.0
    %2919 = vmatprep.subr.mxu0 0.0
    %2920 = vmatpush2.msra.mxu0 0.0
    %2921 = vmatprep.subr.mxu0 0.0
    %2922 = vmatpush2.msra.mxu0 0.0
    %2923 = vmatprep.mubr.f32.mxu0 0.0
    %2924 = vmatmul.mubr.f32.gmra.mxu0 %v2723
    %v2925 = vpop.f32.mrf.mxu0
    %v2926 = vadd.f32 %v2676, %v2925
    %v2927 = vpop.f32.mrf.mxu0
    %v2928 = vadd.f32 %v2678, %v2927
    %2929 = vmatprep.mubr.f32.mxu0 0.0
    %2930 = vmatmul.mubr.f32.gmra.mxu0 %v2726
    %v2931 = vpop.f32.mrf.mxu0
    %v2932 = vadd.f32 %v2682, %v2931
    %v2933 = vpop.f32.mrf.mxu0
    %v2934 = vadd.f32 %v2684, %v2933
    %2935 = vmatprep.mubr.f32.mxu0 0.0
    %2936 = vmatmul.mubr.f32.gmra.mxu0 %v2729
    %v2937 = vpop.f32.mrf.mxu0
    %v2938 = vadd.f32 %v2688, %v2937
    %v2939 = vpop.f32.mrf.mxu0
    %v2940 = vadd.f32 %v2690, %v2939
    %2941 = vmatprep.mubr.f32.mxu0 0.0
    %2942 = vmatmul.mubr.f32.gmra.mxu0 %v2732
    %v2943 = vpop.f32.mrf.mxu0
    %v2944 = vadd.f32 %v2694, %v2943
    %v2945 = vpop.f32.mrf.mxu0
    %v2946 = vadd.f32 %v2696, %v2945
    %2947 = vmatprep.mubr.f32.mxu0 0.0
    %2948 = vmatmul.mubr.f32.gmra.mxu0 %v2735
    %v2949 = vpop.f32.mrf.mxu0
    %v2950 = vadd.f32 %v2700, %v2949
    %v2951 = vpop.f32.mrf.mxu0
    %v2952 = vadd.f32 %v2702, %v2951
    %2953 = vmatprep.mubr.f32.mxu0 0.0
    %2954 = vmatmul.mubr.f32.gmra.mxu0 %v2738
    %v2955 = vpop.f32.mrf.mxu0
    %v2956 = vadd.f32 %v2706, %v2955
    %v2957 = vpop.f32.mrf.mxu0
    %v2958 = vadd.f32 %v2708, %v2957
    %2959 = vmatprep.mubr.f32.mxu0 0.0
    %2960 = vmatmul.mubr.f32.gmra.mxu0 %v2741
    %v2961 = vpop.f32.mrf.mxu0
    %v2962 = vadd.f32 %v2712, %v2961
    %v2963 = vpop.f32.mrf.mxu0
    %v2964 = vadd.f32 %v2714, %v2963
    %2965 = vmatprep.mubr.f32.mxu0 0.0
    %2966 = vmatmul.mubr.f32.gmra.mxu0 %v2744
    %v2967 = vpop.f32.mrf.mxu0
    %v2968 = vadd.f32 %v2718, %v2967
    %v2969 = vpop.f32.mrf.mxu0
    %v2970 = vadd.f32 %v2720, %v2969
    %2971 = vdwg.mxu0
    %v2972 = vld [vmem:[%s10] sm:$0xf]
    %v2974 = vlaneseq
    %v2975 = vshrl.u32 %v2974, 7
    %v2976 = vsub.s32 0, %v2975
    %v2977 = vrot.slane %v2972, %v2976
    %v2978 = vlaneseq
    %v2979 = vshrl.u32 %v2978, 7
    %v2980 = vsub.s32 1, %v2979
    %v2981 = vrot.slane %v2972, %v2980
    %v2982 = vlaneseq
    %v2983 = vshrl.u32 %v2982, 7
    %v2984 = vsub.s32 2, %v2983
    %v2985 = vrot.slane %v2972, %v2984
    %v2986 = vlaneseq
    %v2987 = vshrl.u32 %v2986, 7
    %v2988 = vsub.s32 3, %v2987
    %v2989 = vrot.slane %v2972, %v2988
    %v2994 = vadd.f32 %v2813, %v2977
    %v2995 = vadd.f32 %v2815, %v2981
    %v2996 = vadd.f32 %v2926, %v2985
    %v2997 = vadd.f32 %v2928, %v2989
    %v2998 = vadd.f32 %v2819, %v2977
    %v2999 = vadd.f32 %v2821, %v2981
    %v3000 = vadd.f32 %v2932, %v2985
    %v3001 = vadd.f32 %v2934, %v2989
    %v3002 = vadd.f32 %v2825, %v2977
    %v3003 = vadd.f32 %v2827, %v2981
    %v3004 = vadd.f32 %v2938, %v2985
    %v3005 = vadd.f32 %v2940, %v2989
    %v3006 = vadd.f32 %v2831, %v2977
    %v3007 = vadd.f32 %v2833, %v2981
    %v3008 = vadd.f32 %v2944, %v2985
    %v3009 = vadd.f32 %v2946, %v2989
    %v3010 = vadd.f32 %v2837, %v2977
    %v3011 = vadd.f32 %v2839, %v2981
    %v3012 = vadd.f32 %v2950, %v2985
    %v3013 = vadd.f32 %v2952, %v2989
    %v3014 = vadd.f32 %v2843, %v2977
    %v3015 = vadd.f32 %v2845, %v2981
    %v3016 = vadd.f32 %v2956, %v2985
    %v3017 = vadd.f32 %v2958, %v2989
    %v3018 = vadd.f32 %v2849, %v2977
    %v3019 = vadd.f32 %v2851, %v2981
    %v3020 = vadd.f32 %v2962, %v2985
    %v3021 = vadd.f32 %v2964, %v2989
    %v3022 = vadd.f32 %v2855, %v2977
    %v3023 = vadd.f32 %v2857, %v2981
    %v3024 = vadd.f32 %v2968, %v2985
    %v3025 = vadd.f32 %v2970, %v2989
    %3026 = vst [vmem:[#allocation2] sm:$0xff] %v2994
    %3027 = vst [vmem:[#allocation2 + $0x8] sm:$0xff] %v2995
    %3028 = vst [vmem:[#allocation2 + $0x10] sm:$0xff] %v2996
    %3029 = vst [vmem:[#allocation2 + $0x18] sm:$0xff] %v2997
    %3030 = vst [vmem:[#allocation2 + $0x20] sm:$0xff] %v2998
    %3031 = vst [vmem:[#allocation2 + $0x28] sm:$0xff] %v2999
    %3032 = vst [vmem:[#allocation2 + $0x30] sm:$0xff] %v3000
    %3033 = vst [vmem:[#allocation2 + $0x38] sm:$0xff] %v3001
    %3034 = vst [vmem:[#allocation2 + $0x40] sm:$0xff] %v3002
    %3035 = vst [vmem:[#allocation2 + $0x48] sm:$0xff] %v3003
    %3036 = vst [vmem:[#allocation2 + $0x50] sm:$0xff] %v3004
    %3037 = vst [vmem:[#allocation2 + $0x58] sm:$0xff] %v3005
    %3038 = vst [vmem:[#allocation2 + $0x60] sm:$0xff] %v3006
    %3039 = vst [vmem:[#allocation2 + $0x68] sm:$0xff] %v3007
    %3040 = vst [vmem:[#allocation2 + $0x70] sm:$0xff] %v3008
    %3041 = vst [vmem:[#allocation2 + $0x78] sm:$0xff] %v3009
    %3042 = vst [vmem:[#allocation2 + $0x80] sm:$0xff] %v3010
    %3043 = vst [vmem:[#allocation2 + $0x88] sm:$0xff] %v3011
    %3044 = vst [vmem:[#allocation2 + $0x90] sm:$0xff] %v3012
    %3045 = vst [vmem:[#allocation2 + $0x98] sm:$0xff] %v3013
    %3046 = vst [vmem:[#allocation2 + $0xa0] sm:$0xff] %v3014
    %3047 = vst [vmem:[#allocation2 + $0xa8] sm:$0xff] %v3015
    %3048 = vst [vmem:[#allocation2 + $0xb0] sm:$0xff] %v3016
    %3049 = vst [vmem:[#allocation2 + $0xb8] sm:$0xff] %v3017
    %3050 = vst [vmem:[#allocation2 + $0xc0] sm:$0xff] %v3018
    %3051 = vst [vmem:[#allocation2 + $0xc8] sm:$0xff] %v3019
    %3052 = vst [vmem:[#allocation2 + $0xd0] sm:$0xff] %v3020
    %3053 = vst [vmem:[#allocation2 + $0xd8] sm:$0xff] %v3021
    %3054 = vst [vmem:[#allocation2 + $0xe0] sm:$0xff] %v3022
    %3055 = vst [vmem:[#allocation2 + $0xe8] sm:$0xff] %v3023
    %3056 = vst [vmem:[#allocation2 + $0xf0] sm:$0xff] %v3024
    %3057 = vst [vmem:[#allocation2 + $0xf8] sm:$0xff] %v3025
    %v3058 = vld [vmem:[%s8] sm:$0xff]
    %v3059 = vld [vmem:[%s8 + $0x8] sm:$0xff]
    %v3060 = vld [vmem:[%s8 + $0x10] sm:$0xff]
    %v3061 = vld [vmem:[%s8 + $0x18] sm:$0xff]
    %v3062 = vld [vmem:[%s8 + $0x20] sm:$0xff]
    %v3063 = vld [vmem:[%s8 + $0x28] sm:$0xff]
    %v3064 = vld [vmem:[%s8 + $0x30] sm:$0xff]
    %v3065 = vld [vmem:[%s8 + $0x38] sm:$0xff]
    %v3066 = vld [vmem:[%s8 + $0x40] sm:$0xff]
    %v3067 = vld [vmem:[%s8 + $0x48] sm:$0xff]
    %v3068 = vld [vmem:[%s8 + $0x50] sm:$0xff]
    %v3069 = vld [vmem:[%s8 + $0x58] sm:$0xff]
    %v3070 = vld [vmem:[%s8 + $0x60] sm:$0xff]
    %v3071 = vld [vmem:[%s8 + $0x68] sm:$0xff]
    %v3072 = vld [vmem:[%s8 + $0x70] sm:$0xff]
    %v3073 = vld [vmem:[%s8 + $0x78] sm:$0xff]
    %v3074 = vld [vmem:[#allocation19] sm:$0xff]
    %v3075 = vld [vmem:[#allocation19 + $0x8] sm:$0xff]
    %v3076 = vld [vmem:[#allocation19 + $0x10] sm:$0xff]
    %v3077 = vld [vmem:[#allocation19 + $0x18] sm:$0xff]
    %v3078 = vld [vmem:[#allocation19 + $0x20] sm:$0xff]
    %v3079 = vld [vmem:[#allocation19 + $0x28] sm:$0xff]
    %v3080 = vld [vmem:[#allocation19 + $0x30] sm:$0xff]
    %v3081 = vld [vmem:[#allocation19 + $0x38] sm:$0xff]
    %v3082 = vld [vmem:[#allocation19 + $0x40] sm:$0xff]
    %v3083 = vld [vmem:[#allocation19 + $0x48] sm:$0xff]
    %v3084 = vld [vmem:[#allocation19 + $0x50] sm:$0xff]
    %v3085 = vld [vmem:[#allocation19 + $0x58] sm:$0xff]
    %v3086 = vld [vmem:[#allocation19 + $0x60] sm:$0xff]
    %v3087 = vld [vmem:[#allocation19 + $0x68] sm:$0xff]
    %v3088 = vld [vmem:[#allocation19 + $0x70] sm:$0xff]
    %v3089 = vld [vmem:[#allocation19 + $0x78] sm:$0xff]
    %v3090 = vld [vmem:[%s524] sm:$0xff]
    %v3091 = vld [vmem:[%s524 + $0x8] sm:$0xff]
    %v3092 = vld [vmem:[%s529 + $0x10] sm:$0xff]
    %v3093 = vld [vmem:[%s529 + $0x18] sm:$0xff]
    %3094 = vmatprep.subr.mxu0 0.0
    %3095 = vmatpush1.msra.mxu0 0.0
    %3096 = vmatprep.subr.mxu0 0.0
    %3097 = vmatpush1.msra.mxu0 0.0
    %3098 = vmatprep.subr.mxu0 0.0
    %3099 = vmatpush1.msra.mxu0 0.0
    %3100 = vmatprep.subr.mxu0 0.0
    %3101 = vmatpush1.msra.mxu0 0.0
    %3102 = vmatprep.subr.mxu0 0.0
    %3103 = vmatpush1.msra.mxu0 0.0
    %3104 = vmatprep.subr.mxu0 0.0
    %3105 = vmatpush1.msra.mxu0 0.0
    %3106 = vmatprep.subr.mxu0 0.0
    %3107 = vmatpush1.msra.mxu0 0.0
    %3108 = vmatprep.subr.mxu0 0.0
    %3109 = vmatpush1.msra.mxu0 0.0
    %3110 = vmatprep.subr.mxu0 %v3073
    %3111 = vmatpush1.msra.mxu0 %v3072
    %3112 = vmatprep.subr.mxu0 %v3071
    %3113 = vmatpush1.msra.mxu0 %v3070
    %3114 = vmatprep.subr.mxu0 %v3069
    %3115 = vmatpush1.msra.mxu0 %v3068
    %3116 = vmatprep.subr.mxu0 %v3067
    %3117 = vmatpush1.msra.mxu0 %v3066
    %3118 = vmatprep.subr.mxu0 %v3065
    %3119 = vmatpush1.msra.mxu0 %v3064
    %3120 = vmatprep.subr.mxu0 %v3063
    %3121 = vmatpush1.msra.mxu0 %v3062
    %3122 = vmatprep.subr.mxu0 %v3061
    %3123 = vmatpush1.msra.mxu0 %v3060
    %3124 = vmatprep.subr.mxu0 %v3059
    %3125 = vmatpush1.msra.mxu0 %v3058
    %3126 = vmatprep.subr.mxu0 0.0
    %3127 = vmatpush2.msra.mxu0 0.0
    %3128 = vmatprep.subr.mxu0 0.0
    %3129 = vmatpush2.msra.mxu0 0.0
    %3130 = vmatprep.subr.mxu0 0.0
    %3131 = vmatpush2.msra.mxu0 0.0
    %3132 = vmatprep.subr.mxu0 0.0
    %3133 = vmatpush2.msra.mxu0 0.0
    %3134 = vmatprep.subr.mxu0 0.0
    %3135 = vmatpush2.msra.mxu0 0.0
    %3136 = vmatprep.subr.mxu0 0.0
    %3137 = vmatpush2.msra.mxu0 0.0
    %3138 = vmatprep.subr.mxu0 0.0
    %3139 = vmatpush2.msra.mxu0 0.0
    %3140 = vmatprep.subr.mxu0 0.0
    %3141 = vmatpush2.msra.mxu0 0.0
    %3142 = vmatprep.subr.mxu0 0.0
    %3143 = vmatpush2.msra.mxu0 0.0
    %3144 = vmatprep.subr.mxu0 0.0
    %3145 = vmatpush2.msra.mxu0 0.0
    %3146 = vmatprep.subr.mxu0 0.0
    %3147 = vmatpush2.msra.mxu0 0.0
    %3148 = vmatprep.subr.mxu0 0.0
    %3149 = vmatpush2.msra.mxu0 0.0
    %3150 = vmatprep.subr.mxu0 0.0
    %3151 = vmatpush2.msra.mxu0 0.0
    %3152 = vmatprep.subr.mxu0 0.0
    %3153 = vmatpush2.msra.mxu0 0.0
    %3154 = vmatprep.subr.mxu0 0.0
    %3155 = vmatpush2.msra.mxu0 0.0
    %3156 = vmatprep.subr.mxu0 0.0
    %3157 = vmatpush2.msra.mxu0 0.0
    %3158 = vmatprep.mubr.f32.mxu0 0.0
    %3159 = vmatmul.mubr.f32.gmra.mxu0 %v534
    %v3160 = vpop.f32.mrf.mxu0
    %v3161 = vadd.f32 0.0, %v3160
    %v3162 = vpop.f32.mrf.mxu0
    %v3163 = vadd.f32 0.0, %v3162
    %3164 = vdwg.mxu0
    %v3165 = vadd.f32 %v3090, %v3161
    %v3166 = vadd.f32 %v3091, %v3163
    %v3167 = vxor.u32 %v3165, 2147483648
    %v3168 = vxor.u32 %v3166, 2147483648
    %v3169 = vmul.f32 %v3167, 1.442695
    %v3170 = vpow.pop %v3169
    %v3171 = vmul.f32 %v3168, 1.442695
    %v3172 = vpow.pop %v3171
    %v3173 = vadd.f32 %v3170, 1.0
    %v3174 = vadd.f32 %v3172, 1.0
    %v3175 = vrcp.pop %v3173
    %v3176 = vmul.f32 1.0, %v3175
    %v3177 = vrcp.pop %v3174
    %v3178 = vmul.f32 1.0, %v3177
    %v3179 = vtanh.pop %v3166
    %v3180 = vmul.f32 %v3176, 0.0
    %3182 = vrot.lane.b32.xlu0 %v3179, 64
    %v3183 = vpop.permute.xlu0 %3182
    %v3185 = vmul.f32 %v3176, %v3183
    %3187 = vrot.lane.b32.xlu0 %v3185, 64
    %v3188 = vpop.permute.xlu0 %3187
    %v3190 = vadd.f32 %v3180, %v3188
    %v3191 = vtanh.pop %v3190
    %3193 = vrot.lane.b32.xlu0 %v3191, 64
    %v3194 = vpop.permute.xlu0 %3193
    %v3196 = vmul.f32 %v3178, %v3194
    %3197 = vmatprep.subr.mxu0 0.0
    %3198 = vmatpush1.msra.mxu0 0.0
    %3199 = vmatprep.subr.mxu0 0.0
    %3200 = vmatpush1.msra.mxu0 0.0
    %3201 = vmatprep.subr.mxu0 0.0
    %3202 = vmatpush1.msra.mxu0 0.0
    %3203 = vmatprep.subr.mxu0 0.0
    %3204 = vmatpush1.msra.mxu0 0.0
    %3205 = vmatprep.subr.mxu0 0.0
    %3206 = vmatpush1.msra.mxu0 0.0
    %3207 = vmatprep.subr.mxu0 0.0
    %3208 = vmatpush1.msra.mxu0 0.0
    %3209 = vmatprep.subr.mxu0 0.0
    %3210 = vmatpush1.msra.mxu0 0.0
    %3211 = vmatprep.subr.mxu0 0.0
    %3212 = vmatpush1.msra.mxu0 0.0
    %3213 = vmatprep.subr.mxu0 %v3089
    %3214 = vmatpush1.msra.mxu0 %v3088
    %3215 = vmatprep.subr.mxu0 %v3087
    %3216 = vmatpush1.msra.mxu0 %v3086
    %3217 = vmatprep.subr.mxu0 %v3085
    %3218 = vmatpush1.msra.mxu0 %v3084
    %3219 = vmatprep.subr.mxu0 %v3083
    %3220 = vmatpush1.msra.mxu0 %v3082
    %3221 = vmatprep.subr.mxu0 %v3081
    %3222 = vmatpush1.msra.mxu0 %v3080
    %3223 = vmatprep.subr.mxu0 %v3079
    %3224 = vmatpush1.msra.mxu0 %v3078
    %3225 = vmatprep.subr.mxu0 %v3077
    %3226 = vmatpush1.msra.mxu0 %v3076
    %3227 = vmatprep.subr.mxu0 %v3075
    %3228 = vmatpush1.msra.mxu0 %v3074
    %3229 = vmatprep.subr.mxu0 0.0
    %3230 = vmatpush2.msra.mxu0 0.0
    %3231 = vmatprep.subr.mxu0 0.0
    %3232 = vmatpush2.msra.mxu0 0.0
    %3233 = vmatprep.subr.mxu0 0.0
    %3234 = vmatpush2.msra.mxu0 0.0
    %3235 = vmatprep.subr.mxu0 0.0
    %3236 = vmatpush2.msra.mxu0 0.0
    %3237 = vmatprep.subr.mxu0 0.0
    %3238 = vmatpush2.msra.mxu0 0.0
    %3239 = vmatprep.subr.mxu0 0.0
    %3240 = vmatpush2.msra.mxu0 0.0
    %3241 = vmatprep.subr.mxu0 0.0
    %3242 = vmatpush2.msra.mxu0 0.0
    %3243 = vmatprep.subr.mxu0 0.0
    %3244 = vmatpush2.msra.mxu0 0.0
    %3245 = vmatprep.subr.mxu0 0.0
    %3246 = vmatpush2.msra.mxu0 0.0
    %3247 = vmatprep.subr.mxu0 0.0
    %3248 = vmatpush2.msra.mxu0 0.0
    %3249 = vmatprep.subr.mxu0 0.0
    %3250 = vmatpush2.msra.mxu0 0.0
    %3251 = vmatprep.subr.mxu0 0.0
    %3252 = vmatpush2.msra.mxu0 0.0
    %3253 = vmatprep.subr.mxu0 0.0
    %3254 = vmatpush2.msra.mxu0 0.0
    %3255 = vmatprep.subr.mxu0 0.0
    %3256 = vmatpush2.msra.mxu0 0.0
    %3257 = vmatprep.subr.mxu0 0.0
    %3258 = vmatpush2.msra.mxu0 0.0
    %3259 = vmatprep.subr.mxu0 0.0
    %3260 = vmatpush2.msra.mxu0 0.0
    %3261 = vmatprep.mubr.f32.mxu0 0.0
    %3262 = vmatmul.mubr.f32.gmra.mxu0 %v534
    %v3263 = vpop.f32.mrf.mxu0
    %v3264 = vadd.f32 0.0, %v3263
    %v3265 = vpop.f32.mrf.mxu0
    %v3266 = vadd.f32 0.0, %v3265
    %3267 = vdwg.mxu0
    %v3268 = vadd.f32 %v3092, %v3264
    %v3269 = vadd.f32 %v3093, %v3266
    %v3270 = vxor.u32 %v3268, 2147483648
    %v3271 = vxor.u32 %v3269, 2147483648
    %v3272 = vmul.f32 %v3270, 1.442695
    %v3273 = vpow.pop %v3272
    %v3274 = vmul.f32 %v3271, 1.442695
    %v3275 = vpow.pop %v3274
    %v3276 = vadd.f32 %v3273, 1.0
    %v3277 = vadd.f32 %v3275, 1.0
    %v3278 = vrcp.pop %v3276
    %v3279 = vmul.f32 1.0, %v3278
    %v3280 = vrcp.pop %v3277
    %v3281 = vmul.f32 1.0, %v3280
    %v3282 = vtanh.pop %v3269
    %v3283 = vmul.f32 %v3279, 0.0
    %3285 = vrot.lane.b32.xlu0 %v3282, 64
    %v3286 = vpop.permute.xlu0 %3285
    %v3288 = vmul.f32 %v3279, %v3286
    %3290 = vrot.lane.b32.xlu0 %v3288, 64
    %v3291 = vpop.permute.xlu0 %3290
    %v3293 = vadd.f32 %v3283, %v3291
    %v3294 = vtanh.pop %v3293
    %3296 = vrot.lane.b32.xlu0 %v3294, 64
    %v3297 = vpop.permute.xlu0 %3296
    %v3299 = vmul.f32 %v3281, %v3297
    %v3300 = vsel %vm748, %v3196, 0.0
    %3301 = vst.msk [vmem:[#allocation5] sm:$0xff] %vm532, %v3300
    %v3302 = vsel %vm755, %v3299, 0.0
    %s3303 = scalar_lea.vmem [#allocation6], 56
    %3304 = vst.msk [vmem:[%s3303] sm:$0xff] %vm532, %v3302
    %v3305 = vsel %vm748, %v3190, 0.0
    %v3306 = vsel %vm755, %v3293, 0.0
    %v3307 = vld [vmem:[%s763] sm:$0xff]
    %v3308 = vld [vmem:[%s763 + $0x8] sm:$0xff]
    %v3309 = vld [vmem:[%s768 + $0x10] sm:$0xff]
    %v3310 = vld [vmem:[%s768 + $0x18] sm:$0xff]
    %v3312 = vsel %vm532, %v3300, 0
    %3314 = vmatprep.subr.mxu0 0.0
    %3315 = vmatpush1.msra.mxu0 0.0
    %3316 = vmatprep.subr.mxu0 0.0
    %3317 = vmatpush1.msra.mxu0 0.0
    %3318 = vmatprep.subr.mxu0 0.0
    %3319 = vmatpush1.msra.mxu0 0.0
    %3320 = vmatprep.subr.mxu0 0.0
    %3321 = vmatpush1.msra.mxu0 0.0
    %3322 = vmatprep.subr.mxu0 0.0
    %3323 = vmatpush1.msra.mxu0 0.0
    %3324 = vmatprep.subr.mxu0 0.0
    %3325 = vmatpush1.msra.mxu0 0.0
    %3326 = vmatprep.subr.mxu0 0.0
    %3327 = vmatpush1.msra.mxu0 0.0
    %3328 = vmatprep.subr.mxu0 0.0
    %3329 = vmatpush1.msra.mxu0 0.0
    %3330 = vmatprep.subr.mxu0 %v3073
    %3331 = vmatpush1.msra.mxu0 %v3072
    %3332 = vmatprep.subr.mxu0 %v3071
    %3333 = vmatpush1.msra.mxu0 %v3070
    %3334 = vmatprep.subr.mxu0 %v3069
    %3335 = vmatpush1.msra.mxu0 %v3068
    %3336 = vmatprep.subr.mxu0 %v3067
    %3337 = vmatpush1.msra.mxu0 %v3066
    %3338 = vmatprep.subr.mxu0 %v3065
    %3339 = vmatpush1.msra.mxu0 %v3064
    %3340 = vmatprep.subr.mxu0 %v3063
    %3341 = vmatpush1.msra.mxu0 %v3062
    %3342 = vmatprep.subr.mxu0 %v3061
    %3343 = vmatpush1.msra.mxu0 %v3060
    %3344 = vmatprep.subr.mxu0 %v3059
    %3345 = vmatpush1.msra.mxu0 %v3058
    %3346 = vmatprep.subr.mxu0 0.0
    %3347 = vmatpush2.msra.mxu0 0.0
    %3348 = vmatprep.subr.mxu0 0.0
    %3349 = vmatpush2.msra.mxu0 0.0
    %3350 = vmatprep.subr.mxu0 0.0
    %3351 = vmatpush2.msra.mxu0 0.0
    %3352 = vmatprep.subr.mxu0 0.0
    %3353 = vmatpush2.msra.mxu0 0.0
    %3354 = vmatprep.subr.mxu0 0.0
    %3355 = vmatpush2.msra.mxu0 0.0
    %3356 = vmatprep.subr.mxu0 0.0
    %3357 = vmatpush2.msra.mxu0 0.0
    %3358 = vmatprep.subr.mxu0 0.0
    %3359 = vmatpush2.msra.mxu0 0.0
    %3360 = vmatprep.subr.mxu0 0.0
    %3361 = vmatpush2.msra.mxu0 0.0
    %3362 = vmatprep.subr.mxu0 0.0
    %3363 = vmatpush2.msra.mxu0 0.0
    %3364 = vmatprep.subr.mxu0 0.0
    %3365 = vmatpush2.msra.mxu0 0.0
    %3366 = vmatprep.subr.mxu0 0.0
    %3367 = vmatpush2.msra.mxu0 0.0
    %3368 = vmatprep.subr.mxu0 0.0
    %3369 = vmatpush2.msra.mxu0 0.0
    %3370 = vmatprep.subr.mxu0 0.0
    %3371 = vmatpush2.msra.mxu0 0.0
    %3372 = vmatprep.subr.mxu0 0.0
    %3373 = vmatpush2.msra.mxu0 0.0
    %3374 = vmatprep.subr.mxu0 0.0
    %3375 = vmatpush2.msra.mxu0 0.0
    %3376 = vmatprep.subr.mxu0 0.0
    %3377 = vmatpush2.msra.mxu0 0.0
    %3378 = vmatprep.mubr.f32.mxu0 0.0
    %3379 = vmatmul.mubr.f32.gmra.mxu0 %v3312
    %v3380 = vpop.f32.mrf.mxu0
    %v3381 = vadd.f32 0.0, %v3380
    %v3382 = vpop.f32.mrf.mxu0
    %v3383 = vadd.f32 0.0, %v3382
    %3384 = vdwg.mxu0
    %v3385 = vadd.f32 %v3307, %v3381
    %v3386 = vadd.f32 %v3308, %v3383
    %v3387 = vxor.u32 %v3385, 2147483648
    %v3388 = vxor.u32 %v3386, 2147483648
    %v3389 = vmul.f32 %v3387, 1.442695
    %v3390 = vpow.pop %v3389
    %v3391 = vmul.f32 %v3388, 1.442695
    %v3392 = vpow.pop %v3391
    %v3393 = vadd.f32 %v3390, 1.0
    %v3394 = vadd.f32 %v3392, 1.0
    %v3395 = vrcp.pop %v3393
    %v3396 = vmul.f32 1.0, %v3395
    %v3397 = vrcp.pop %v3394
    %v3398 = vmul.f32 1.0, %v3397
    %v3399 = vtanh.pop %v3386
    %v3400 = vmul.f32 %v3396, %v3305
    %3402 = vrot.lane.b32.xlu0 %v3399, 64
    %v3403 = vpop.permute.xlu0 %3402
    %v3405 = vmul.f32 %v3396, %v3403
    %3407 = vrot.lane.b32.xlu0 %v3405, 64
    %v3408 = vpop.permute.xlu0 %3407
    %v3410 = vadd.f32 %v3400, %v3408
    %v3411 = vtanh.pop %v3410
    %3413 = vrot.lane.b32.xlu0 %v3411, 64
    %v3414 = vpop.permute.xlu0 %3413
    %v3416 = vmul.f32 %v3398, %v3414
    %v3418 = vsel %vm532, %v3302, 0
    %3420 = vmatprep.subr.mxu0 0.0
    %3421 = vmatpush1.msra.mxu0 0.0
    %3422 = vmatprep.subr.mxu0 0.0
    %3423 = vmatpush1.msra.mxu0 0.0
    %3424 = vmatprep.subr.mxu0 0.0
    %3425 = vmatpush1.msra.mxu0 0.0
    %3426 = vmatprep.subr.mxu0 0.0
    %3427 = vmatpush1.msra.mxu0 0.0
    %3428 = vmatprep.subr.mxu0 0.0
    %3429 = vmatpush1.msra.mxu0 0.0
    %3430 = vmatprep.subr.mxu0 0.0
    %3431 = vmatpush1.msra.mxu0 0.0
    %3432 = vmatprep.subr.mxu0 0.0
    %3433 = vmatpush1.msra.mxu0 0.0
    %3434 = vmatprep.subr.mxu0 0.0
    %3435 = vmatpush1.msra.mxu0 0.0
    %3436 = vmatprep.subr.mxu0 %v3089
    %3437 = vmatpush1.msra.mxu0 %v3088
    %3438 = vmatprep.subr.mxu0 %v3087
    %3439 = vmatpush1.msra.mxu0 %v3086
    %3440 = vmatprep.subr.mxu0 %v3085
    %3441 = vmatpush1.msra.mxu0 %v3084
    %3442 = vmatprep.subr.mxu0 %v3083
    %3443 = vmatpush1.msra.mxu0 %v3082
    %3444 = vmatprep.subr.mxu0 %v3081
    %3445 = vmatpush1.msra.mxu0 %v3080
    %3446 = vmatprep.subr.mxu0 %v3079
    %3447 = vmatpush1.msra.mxu0 %v3078
    %3448 = vmatprep.subr.mxu0 %v3077
    %3449 = vmatpush1.msra.mxu0 %v3076
    %3450 = vmatprep.subr.mxu0 %v3075
    %3451 = vmatpush1.msra.mxu0 %v3074
    %3452 = vmatprep.subr.mxu0 0.0
    %3453 = vmatpush2.msra.mxu0 0.0
    %3454 = vmatprep.subr.mxu0 0.0
    %3455 = vmatpush2.msra.mxu0 0.0
    %3456 = vmatprep.subr.mxu0 0.0
    %3457 = vmatpush2.msra.mxu0 0.0
    %3458 = vmatprep.subr.mxu0 0.0
    %3459 = vmatpush2.msra.mxu0 0.0
    %3460 = vmatprep.subr.mxu0 0.0
    %3461 = vmatpush2.msra.mxu0 0.0
    %3462 = vmatprep.subr.mxu0 0.0
    %3463 = vmatpush2.msra.mxu0 0.0
    %3464 = vmatprep.subr.mxu0 0.0
    %3465 = vmatpush2.msra.mxu0 0.0
    %3466 = vmatprep.subr.mxu0 0.0
    %3467 = vmatpush2.msra.mxu0 0.0
    %3468 = vmatprep.subr.mxu0 0.0
    %3469 = vmatpush2.msra.mxu0 0.0
    %3470 = vmatprep.subr.mxu0 0.0
    %3471 = vmatpush2.msra.mxu0 0.0
    %3472 = vmatprep.subr.mxu0 0.0
    %3473 = vmatpush2.msra.mxu0 0.0
    %3474 = vmatprep.subr.mxu0 0.0
    %3475 = vmatpush2.msra.mxu0 0.0
    %3476 = vmatprep.subr.mxu0 0.0
    %3477 = vmatpush2.msra.mxu0 0.0
    %3478 = vmatprep.subr.mxu0 0.0
    %3479 = vmatpush2.msra.mxu0 0.0
    %3480 = vmatprep.subr.mxu0 0.0
    %3481 = vmatpush2.msra.mxu0 0.0
    %3482 = vmatprep.subr.mxu0 0.0
    %3483 = vmatpush2.msra.mxu0 0.0
    %3484 = vmatprep.mubr.f32.mxu0 0.0
    %3485 = vmatmul.mubr.f32.gmra.mxu0 %v3418
    %v3486 = vpop.f32.mrf.mxu0
    %v3487 = vadd.f32 0.0, %v3486
    %v3488 = vpop.f32.mrf.mxu0
    %v3489 = vadd.f32 0.0, %v3488
    %3490 = vdwg.mxu0
    %v3491 = vadd.f32 %v3309, %v3487
    %v3492 = vadd.f32 %v3310, %v3489
    %v3493 = vxor.u32 %v3491, 2147483648
    %v3494 = vxor.u32 %v3492, 2147483648
    %v3495 = vmul.f32 %v3493, 1.442695
    %v3496 = vpow.pop %v3495
    %v3497 = vmul.f32 %v3494, 1.442695
    %v3498 = vpow.pop %v3497
    %v3499 = vadd.f32 %v3496, 1.0
    %v3500 = vadd.f32 %v3498, 1.0
    %v3501 = vrcp.pop %v3499
    %v3502 = vmul.f32 1.0, %v3501
    %v3503 = vrcp.pop %v3500
    %v3504 = vmul.f32 1.0, %v3503
    %v3505 = vtanh.pop %v3492
    %v3506 = vmul.f32 %v3502, %v3306
    %3508 = vrot.lane.b32.xlu0 %v3505, 64
    %v3509 = vpop.permute.xlu0 %3508
    %v3511 = vmul.f32 %v3502, %v3509
    %3513 = vrot.lane.b32.xlu0 %v3511, 64
    %v3514 = vpop.permute.xlu0 %3513
    %v3516 = vadd.f32 %v3506, %v3514
    %v3517 = vtanh.pop %v3516
    %3519 = vrot.lane.b32.xlu0 %v3517, 64
    %v3520 = vpop.permute.xlu0 %3519
    %v3522 = vmul.f32 %v3504, %v3520
    %v3523 = vsel %vm989, %v3416, 0.0
    %s3524 = scalar_lea.vmem [#allocation5], 8
    %3525 = vst.msk [vmem:[%s3524] sm:$0xff] %vm532, %v3523
    %v3526 = vsel %vm997, %v3522, 0.0
    %s3527 = scalar_lea.vmem [#allocation6], 48
    %3528 = vst.msk [vmem:[%s3527] sm:$0xff] %vm532, %v3526
    %v3529 = vsel %vm989, %v3416, %v3300
    %v3530 = vsel %vm989, %v3410, %v3305
    %v3531 = vsel %vm997, %v3522, %v3302
    %v3532 = vsel %vm997, %v3516, %v3306
    %v3533 = vld [vmem:[%s1007] sm:$0xff]
    %v3534 = vld [vmem:[%s1007 + $0x8] sm:$0xff]
    %v3535 = vld [vmem:[%s1012 + $0x10] sm:$0xff]
    %v3536 = vld [vmem:[%s1012 + $0x18] sm:$0xff]
    %v3538 = vsel %vm532, %v3529, 0
    %3540 = vmatprep.subr.mxu0 0.0
    %3541 = vmatpush1.msra.mxu0 0.0
    %3542 = vmatprep.subr.mxu0 0.0
    %3543 = vmatpush1.msra.mxu0 0.0
    %3544 = vmatprep.subr.mxu0 0.0
    %3545 = vmatpush1.msra.mxu0 0.0
    %3546 = vmatprep.subr.mxu0 0.0
    %3547 = vmatpush1.msra.mxu0 0.0
    %3548 = vmatprep.subr.mxu0 0.0
    %3549 = vmatpush1.msra.mxu0 0.0
    %3550 = vmatprep.subr.mxu0 0.0
    %3551 = vmatpush1.msra.mxu0 0.0
    %3552 = vmatprep.subr.mxu0 0.0
    %3553 = vmatpush1.msra.mxu0 0.0
    %3554 = vmatprep.subr.mxu0 0.0
    %3555 = vmatpush1.msra.mxu0 0.0
    %3556 = vmatprep.subr.mxu0 %v3073
    %3557 = vmatpush1.msra.mxu0 %v3072
    %3558 = vmatprep.subr.mxu0 %v3071
    %3559 = vmatpush1.msra.mxu0 %v3070
    %3560 = vmatprep.subr.mxu0 %v3069
    %3561 = vmatpush1.msra.mxu0 %v3068
    %3562 = vmatprep.subr.mxu0 %v3067
    %3563 = vmatpush1.msra.mxu0 %v3066
    %3564 = vmatprep.subr.mxu0 %v3065
    %3565 = vmatpush1.msra.mxu0 %v3064
    %3566 = vmatprep.subr.mxu0 %v3063
    %3567 = vmatpush1.msra.mxu0 %v3062
    %3568 = vmatprep.subr.mxu0 %v3061
    %3569 = vmatpush1.msra.mxu0 %v3060
    %3570 = vmatprep.subr.mxu0 %v3059
    %3571 = vmatpush1.msra.mxu0 %v3058
    %3572 = vmatprep.subr.mxu0 0.0
    %3573 = vmatpush2.msra.mxu0 0.0
    %3574 = vmatprep.subr.mxu0 0.0
    %3575 = vmatpush2.msra.mxu0 0.0
    %3576 = vmatprep.subr.mxu0 0.0
    %3577 = vmatpush2.msra.mxu0 0.0
    %3578 = vmatprep.subr.mxu0 0.0
    %3579 = vmatpush2.msra.mxu0 0.0
    %3580 = vmatprep.subr.mxu0 0.0
    %3581 = vmatpush2.msra.mxu0 0.0
    %3582 = vmatprep.subr.mxu0 0.0
    %3583 = vmatpush2.msra.mxu0 0.0
    %3584 = vmatprep.subr.mxu0 0.0
    %3585 = vmatpush2.msra.mxu0 0.0
    %3586 = vmatprep.subr.mxu0 0.0
    %3587 = vmatpush2.msra.mxu0 0.0
    %3588 = vmatprep.subr.mxu0 0.0
    %3589 = vmatpush2.msra.mxu0 0.0
    %3590 = vmatprep.subr.mxu0 0.0
    %3591 = vmatpush2.msra.mxu0 0.0
    %3592 = vmatprep.subr.mxu0 0.0
    %3593 = vmatpush2.msra.mxu0 0.0
    %3594 = vmatprep.subr.mxu0 0.0
    %3595 = vmatpush2.msra.mxu0 0.0
    %3596 = vmatprep.subr.mxu0 0.0
    %3597 = vmatpush2.msra.mxu0 0.0
    %3598 = vmatprep.subr.mxu0 0.0
    %3599 = vmatpush2.msra.mxu0 0.0
    %3600 = vmatprep.subr.mxu0 0.0
    %3601 = vmatpush2.msra.mxu0 0.0
    %3602 = vmatprep.subr.mxu0 0.0
    %3603 = vmatpush2.msra.mxu0 0.0
    %3604 = vmatprep.mubr.f32.mxu0 0.0
    %3605 = vmatmul.mubr.f32.gmra.mxu0 %v3538
    %v3606 = vpop.f32.mrf.mxu0
    %v3607 = vadd.f32 0.0, %v3606
    %v3608 = vpop.f32.mrf.mxu0
    %v3609 = vadd.f32 0.0, %v3608
    %3610 = vdwg.mxu0
    %v3611 = vadd.f32 %v3533, %v3607
    %v3612 = vadd.f32 %v3534, %v3609
    %v3613 = vxor.u32 %v3611, 2147483648
    %v3614 = vxor.u32 %v3612, 2147483648
    %v3615 = vmul.f32 %v3613, 1.442695
    %v3616 = vpow.pop %v3615
    %v3617 = vmul.f32 %v3614, 1.442695
    %v3618 = vpow.pop %v3617
    %v3619 = vadd.f32 %v3616, 1.0
    %v3620 = vadd.f32 %v3618, 1.0
    %v3621 = vrcp.pop %v3619
    %v3622 = vmul.f32 1.0, %v3621
    %v3623 = vrcp.pop %v3620
    %v3624 = vmul.f32 1.0, %v3623
    %v3625 = vtanh.pop %v3612
    %v3626 = vmul.f32 %v3622, %v3530
    %3628 = vrot.lane.b32.xlu0 %v3625, 64
    %v3629 = vpop.permute.xlu0 %3628
    %v3631 = vmul.f32 %v3622, %v3629
    %3633 = vrot.lane.b32.xlu0 %v3631, 64
    %v3634 = vpop.permute.xlu0 %3633
    %v3636 = vadd.f32 %v3626, %v3634
    %v3637 = vtanh.pop %v3636
    %3639 = vrot.lane.b32.xlu0 %v3637, 64
    %v3640 = vpop.permute.xlu0 %3639
    %v3642 = vmul.f32 %v3624, %v3640
    %v3644 = vsel %vm532, %v3531, 0
    %3646 = vmatprep.subr.mxu0 0.0
    %3647 = vmatpush1.msra.mxu0 0.0
    %3648 = vmatprep.subr.mxu0 0.0
    %3649 = vmatpush1.msra.mxu0 0.0
    %3650 = vmatprep.subr.mxu0 0.0
    %3651 = vmatpush1.msra.mxu0 0.0
    %3652 = vmatprep.subr.mxu0 0.0
    %3653 = vmatpush1.msra.mxu0 0.0
    %3654 = vmatprep.subr.mxu0 0.0
    %3655 = vmatpush1.msra.mxu0 0.0
    %3656 = vmatprep.subr.mxu0 0.0
    %3657 = vmatpush1.msra.mxu0 0.0
    %3658 = vmatprep.subr.mxu0 0.0
    %3659 = vmatpush1.msra.mxu0 0.0
    %3660 = vmatprep.subr.mxu0 0.0
    %3661 = vmatpush1.msra.mxu0 0.0
    %3662 = vmatprep.subr.mxu0 %v3089
    %3663 = vmatpush1.msra.mxu0 %v3088
    %3664 = vmatprep.subr.mxu0 %v3087
    %3665 = vmatpush1.msra.mxu0 %v3086
    %3666 = vmatprep.subr.mxu0 %v3085
    %3667 = vmatpush1.msra.mxu0 %v3084
    %3668 = vmatprep.subr.mxu0 %v3083
    %3669 = vmatpush1.msra.mxu0 %v3082
    %3670 = vmatprep.subr.mxu0 %v3081
    %3671 = vmatpush1.msra.mxu0 %v3080
    %3672 = vmatprep.subr.mxu0 %v3079
    %3673 = vmatpush1.msra.mxu0 %v3078
    %3674 = vmatprep.subr.mxu0 %v3077
    %3675 = vmatpush1.msra.mxu0 %v3076
    %3676 = vmatprep.subr.mxu0 %v3075
    %3677 = vmatpush1.msra.mxu0 %v3074
    %3678 = vmatprep.subr.mxu0 0.0
    %3679 = vmatpush2.msra.mxu0 0.0
    %3680 = vmatprep.subr.mxu0 0.0
    %3681 = vmatpush2.msra.mxu0 0.0
    %3682 = vmatprep.subr.mxu0 0.0
    %3683 = vmatpush2.msra.mxu0 0.0
    %3684 = vmatprep.subr.mxu0 0.0
    %3685 = vmatpush2.msra.mxu0 0.0
    %3686 = vmatprep.subr.mxu0 0.0
    %3687 = vmatpush2.msra.mxu0 0.0
    %3688 = vmatprep.subr.mxu0 0.0
    %3689 = vmatpush2.msra.mxu0 0.0
    %3690 = vmatprep.subr.mxu0 0.0
    %3691 = vmatpush2.msra.mxu0 0.0
    %3692 = vmatprep.subr.mxu0 0.0
    %3693 = vmatpush2.msra.mxu0 0.0
    %3694 = vmatprep.subr.mxu0 0.0
    %3695 = vmatpush2.msra.mxu0 0.0
    %3696 = vmatprep.subr.mxu0 0.0
    %3697 = vmatpush2.msra.mxu0 0.0
    %3698 = vmatprep.subr.mxu0 0.0
    %3699 = vmatpush2.msra.mxu0 0.0
    %3700 = vmatprep.subr.mxu0 0.0
    %3701 = vmatpush2.msra.mxu0 0.0
    %3702 = vmatprep.subr.mxu0 0.0
    %3703 = vmatpush2.msra.mxu0 0.0
    %3704 = vmatprep.subr.mxu0 0.0
    %3705 = vmatpush2.msra.mxu0 0.0
    %3706 = vmatprep.subr.mxu0 0.0
    %3707 = vmatpush2.msra.mxu0 0.0
    %3708 = vmatprep.subr.mxu0 0.0
    %3709 = vmatpush2.msra.mxu0 0.0
    %3710 = vmatprep.mubr.f32.mxu0 0.0
    %3711 = vmatmul.mubr.f32.gmra.mxu0 %v3644
    %v3712 = vpop.f32.mrf.mxu0
    %v3713 = vadd.f32 0.0, %v3712
    %v3714 = vpop.f32.mrf.mxu0
    %v3715 = vadd.f32 0.0, %v3714
    %3716 = vdwg.mxu0
    %v3717 = vadd.f32 %v3535, %v3713
    %v3718 = vadd.f32 %v3536, %v3715
    %v3719 = vxor.u32 %v3717, 2147483648
    %v3720 = vxor.u32 %v3718, 2147483648
    %v3721 = vmul.f32 %v3719, 1.442695
    %v3722 = vpow.pop %v3721
    %v3723 = vmul.f32 %v3720, 1.442695
    %v3724 = vpow.pop %v3723
    %v3725 = vadd.f32 %v3722, 1.0
    %v3726 = vadd.f32 %v3724, 1.0
    %v3727 = vrcp.pop %v3725
    %v3728 = vmul.f32 1.0, %v3727
    %v3729 = vrcp.pop %v3726
    %v3730 = vmul.f32 1.0, %v3729
    %v3731 = vtanh.pop %v3718
    %v3732 = vmul.f32 %v3728, %v3532
    %3734 = vrot.lane.b32.xlu0 %v3731, 64
    %v3735 = vpop.permute.xlu0 %3734
    %v3737 = vmul.f32 %v3728, %v3735
    %3739 = vrot.lane.b32.xlu0 %v3737, 64
    %v3740 = vpop.permute.xlu0 %3739
    %v3742 = vadd.f32 %v3732, %v3740
    %v3743 = vtanh.pop %v3742
    %3745 = vrot.lane.b32.xlu0 %v3743, 64
    %v3746 = vpop.permute.xlu0 %3745
    %v3748 = vmul.f32 %v3730, %v3746
    %v3749 = vsel %vm1233, %v3642, 0.0
    %s3750 = scalar_lea.vmem [#allocation5], 16
    %3751 = vst.msk [vmem:[%s3750] sm:$0xff] %vm532, %v3749
    %v3752 = vsel %vm1241, %v3748, 0.0
    %s3753 = scalar_lea.vmem [#allocation6], 40
    %3754 = vst.msk [vmem:[%s3753] sm:$0xff] %vm532, %v3752
    %v3755 = vsel %vm1233, %v3642, %v3529
    %v3756 = vsel %vm1233, %v3636, %v3530
    %v3757 = vsel %vm1241, %v3748, %v3531
    %v3758 = vsel %vm1241, %v3742, %v3532
    %v3759 = vld [vmem:[%s1251] sm:$0xff]
    %v3760 = vld [vmem:[%s1251 + $0x8] sm:$0xff]
    %v3761 = vld [vmem:[%s1256 + $0x10] sm:$0xff]
    %v3762 = vld [vmem:[%s1256 + $0x18] sm:$0xff]
    %v3764 = vsel %vm532, %v3755, 0
    %3766 = vmatprep.subr.mxu0 0.0
    %3767 = vmatpush1.msra.mxu0 0.0
    %3768 = vmatprep.subr.mxu0 0.0
    %3769 = vmatpush1.msra.mxu0 0.0
    %3770 = vmatprep.subr.mxu0 0.0
    %3771 = vmatpush1.msra.mxu0 0.0
    %3772 = vmatprep.subr.mxu0 0.0
    %3773 = vmatpush1.msra.mxu0 0.0
    %3774 = vmatprep.subr.mxu0 0.0
    %3775 = vmatpush1.msra.mxu0 0.0
    %3776 = vmatprep.subr.mxu0 0.0
    %3777 = vmatpush1.msra.mxu0 0.0
    %3778 = vmatprep.subr.mxu0 0.0
    %3779 = vmatpush1.msra.mxu0 0.0
    %3780 = vmatprep.subr.mxu0 0.0
    %3781 = vmatpush1.msra.mxu0 0.0
    %3782 = vmatprep.subr.mxu0 %v3073
    %3783 = vmatpush1.msra.mxu0 %v3072
    %3784 = vmatprep.subr.mxu0 %v3071
    %3785 = vmatpush1.msra.mxu0 %v3070
    %3786 = vmatprep.subr.mxu0 %v3069
    %3787 = vmatpush1.msra.mxu0 %v3068
    %3788 = vmatprep.subr.mxu0 %v3067
    %3789 = vmatpush1.msra.mxu0 %v3066
    %3790 = vmatprep.subr.mxu0 %v3065
    %3791 = vmatpush1.msra.mxu0 %v3064
    %3792 = vmatprep.subr.mxu0 %v3063
    %3793 = vmatpush1.msra.mxu0 %v3062
    %3794 = vmatprep.subr.mxu0 %v3061
    %3795 = vmatpush1.msra.mxu0 %v3060
    %3796 = vmatprep.subr.mxu0 %v3059
    %3797 = vmatpush1.msra.mxu0 %v3058
    %3798 = vmatprep.subr.mxu0 0.0
    %3799 = vmatpush2.msra.mxu0 0.0
    %3800 = vmatprep.subr.mxu0 0.0
    %3801 = vmatpush2.msra.mxu0 0.0
    %3802 = vmatprep.subr.mxu0 0.0
    %3803 = vmatpush2.msra.mxu0 0.0
    %3804 = vmatprep.subr.mxu0 0.0
    %3805 = vmatpush2.msra.mxu0 0.0
    %3806 = vmatprep.subr.mxu0 0.0
    %3807 = vmatpush2.msra.mxu0 0.0
    %3808 = vmatprep.subr.mxu0 0.0
    %3809 = vmatpush2.msra.mxu0 0.0
    %3810 = vmatprep.subr.mxu0 0.0
    %3811 = vmatpush2.msra.mxu0 0.0
    %3812 = vmatprep.subr.mxu0 0.0
    %3813 = vmatpush2.msra.mxu0 0.0
    %3814 = vmatprep.subr.mxu0 0.0
    %3815 = vmatpush2.msra.mxu0 0.0
    %3816 = vmatprep.subr.mxu0 0.0
    %3817 = vmatpush2.msra.mxu0 0.0
    %3818 = vmatprep.subr.mxu0 0.0
    %3819 = vmatpush2.msra.mxu0 0.0
    %3820 = vmatprep.subr.mxu0 0.0
    %3821 = vmatpush2.msra.mxu0 0.0
    %3822 = vmatprep.subr.mxu0 0.0
    %3823 = vmatpush2.msra.mxu0 0.0
    %3824 = vmatprep.subr.mxu0 0.0
    %3825 = vmatpush2.msra.mxu0 0.0
    %3826 = vmatprep.subr.mxu0 0.0
    %3827 = vmatpush2.msra.mxu0 0.0
    %3828 = vmatprep.subr.mxu0 0.0
    %3829 = vmatpush2.msra.mxu0 0.0
    %3830 = vmatprep.mubr.f32.mxu0 0.0
    %3831 = vmatmul.mubr.f32.gmra.mxu0 %v3764
    %v3832 = vpop.f32.mrf.mxu0
    %v3833 = vadd.f32 0.0, %v3832
    %v3834 = vpop.f32.mrf.mxu0
    %v3835 = vadd.f32 0.0, %v3834
    %3836 = vdwg.mxu0
    %v3837 = vadd.f32 %v3759, %v3833
    %v3838 = vadd.f32 %v3760, %v3835
    %v3839 = vxor.u32 %v3837, 2147483648
    %v3840 = vxor.u32 %v3838, 2147483648
    %v3841 = vmul.f32 %v3839, 1.442695
    %v3842 = vpow.pop %v3841
    %v3843 = vmul.f32 %v3840, 1.442695
    %v3844 = vpow.pop %v3843
    %v3845 = vadd.f32 %v3842, 1.0
    %v3846 = vadd.f32 %v3844, 1.0
    %v3847 = vrcp.pop %v3845
    %v3848 = vmul.f32 1.0, %v3847
    %v3849 = vrcp.pop %v3846
    %v3850 = vmul.f32 1.0, %v3849
    %v3851 = vtanh.pop %v3838
    %v3852 = vmul.f32 %v3848, %v3756
    %3854 = vrot.lane.b32.xlu0 %v3851, 64
    %v3855 = vpop.permute.xlu0 %3854
    %v3857 = vmul.f32 %v3848, %v3855
    %3859 = vrot.lane.b32.xlu0 %v3857, 64
    %v3860 = vpop.permute.xlu0 %3859
    %v3862 = vadd.f32 %v3852, %v3860
    %v3863 = vtanh.pop %v3862
    %3865 = vrot.lane.b32.xlu0 %v3863, 64
    %v3866 = vpop.permute.xlu0 %3865
    %v3868 = vmul.f32 %v3850, %v3866
    %v3870 = vsel %vm532, %v3757, 0
    %3872 = vmatprep.subr.mxu0 0.0
    %3873 = vmatpush1.msra.mxu0 0.0
    %3874 = vmatprep.subr.mxu0 0.0
    %3875 = vmatpush1.msra.mxu0 0.0
    %3876 = vmatprep.subr.mxu0 0.0
    %3877 = vmatpush1.msra.mxu0 0.0
    %3878 = vmatprep.subr.mxu0 0.0
    %3879 = vmatpush1.msra.mxu0 0.0
    %3880 = vmatprep.subr.mxu0 0.0
    %3881 = vmatpush1.msra.mxu0 0.0
    %3882 = vmatprep.subr.mxu0 0.0
    %3883 = vmatpush1.msra.mxu0 0.0
    %3884 = vmatprep.subr.mxu0 0.0
    %3885 = vmatpush1.msra.mxu0 0.0
    %3886 = vmatprep.subr.mxu0 0.0
    %3887 = vmatpush1.msra.mxu0 0.0
    %3888 = vmatprep.subr.mxu0 %v3089
    %3889 = vmatpush1.msra.mxu0 %v3088
    %3890 = vmatprep.subr.mxu0 %v3087
    %3891 = vmatpush1.msra.mxu0 %v3086
    %3892 = vmatprep.subr.mxu0 %v3085
    %3893 = vmatpush1.msra.mxu0 %v3084
    %3894 = vmatprep.subr.mxu0 %v3083
    %3895 = vmatpush1.msra.mxu0 %v3082
    %3896 = vmatprep.subr.mxu0 %v3081
    %3897 = vmatpush1.msra.mxu0 %v3080
    %3898 = vmatprep.subr.mxu0 %v3079
    %3899 = vmatpush1.msra.mxu0 %v3078
    %3900 = vmatprep.subr.mxu0 %v3077
    %3901 = vmatpush1.msra.mxu0 %v3076
    %3902 = vmatprep.subr.mxu0 %v3075
    %3903 = vmatpush1.msra.mxu0 %v3074
    %3904 = vmatprep.subr.mxu0 0.0
    %3905 = vmatpush2.msra.mxu0 0.0
    %3906 = vmatprep.subr.mxu0 0.0
    %3907 = vmatpush2.msra.mxu0 0.0
    %3908 = vmatprep.subr.mxu0 0.0
    %3909 = vmatpush2.msra.mxu0 0.0
    %3910 = vmatprep.subr.mxu0 0.0
    %3911 = vmatpush2.msra.mxu0 0.0
    %3912 = vmatprep.subr.mxu0 0.0
    %3913 = vmatpush2.msra.mxu0 0.0
    %3914 = vmatprep.subr.mxu0 0.0
    %3915 = vmatpush2.msra.mxu0 0.0
    %3916 = vmatprep.subr.mxu0 0.0
    %3917 = vmatpush2.msra.mxu0 0.0
    %3918 = vmatprep.subr.mxu0 0.0
    %3919 = vmatpush2.msra.mxu0 0.0
    %3920 = vmatprep.subr.mxu0 0.0
    %3921 = vmatpush2.msra.mxu0 0.0
    %3922 = vmatprep.subr.mxu0 0.0
    %3923 = vmatpush2.msra.mxu0 0.0
    %3924 = vmatprep.subr.mxu0 0.0
    %3925 = vmatpush2.msra.mxu0 0.0
    %3926 = vmatprep.subr.mxu0 0.0
    %3927 = vmatpush2.msra.mxu0 0.0
    %3928 = vmatprep.subr.mxu0 0.0
    %3929 = vmatpush2.msra.mxu0 0.0
    %3930 = vmatprep.subr.mxu0 0.0
    %3931 = vmatpush2.msra.mxu0 0.0
    %3932 = vmatprep.subr.mxu0 0.0
    %3933 = vmatpush2.msra.mxu0 0.0
    %3934 = vmatprep.subr.mxu0 0.0
    %3935 = vmatpush2.msra.mxu0 0.0
    %3936 = vmatprep.mubr.f32.mxu0 0.0
    %3937 = vmatmul.mubr.f32.gmra.mxu0 %v3870
    %v3938 = vpop.f32.mrf.mxu0
    %v3939 = vadd.f32 0.0, %v3938
    %v3940 = vpop.f32.mrf.mxu0
    %v3941 = vadd.f32 0.0, %v3940
    %3942 = vdwg.mxu0
    %v3943 = vadd.f32 %v3761, %v3939
    %v3944 = vadd.f32 %v3762, %v3941
    %v3945 = vxor.u32 %v3943, 2147483648
    %v3946 = vxor.u32 %v3944, 2147483648
    %v3947 = vmul.f32 %v3945, 1.442695
    %v3948 = vpow.pop %v3947
    %v3949 = vmul.f32 %v3946, 1.442695
    %v3950 = vpow.pop %v3949
    %v3951 = vadd.f32 %v3948, 1.0
    %v3952 = vadd.f32 %v3950, 1.0
    %v3953 = vrcp.pop %v3951
    %v3954 = vmul.f32 1.0, %v3953
    %v3955 = vrcp.pop %v3952
    %v3956 = vmul.f32 1.0, %v3955
    %v3957 = vtanh.pop %v3944
    %v3958 = vmul.f32 %v3954, %v3758
    %3960 = vrot.lane.b32.xlu0 %v3957, 64
    %v3961 = vpop.permute.xlu0 %3960
    %v3963 = vmul.f32 %v3954, %v3961
    %3965 = vrot.lane.b32.xlu0 %v3963, 64
    %v3966 = vpop.permute.xlu0 %3965
    %v3968 = vadd.f32 %v3958, %v3966
    %v3969 = vtanh.pop %v3968
    %3971 = vrot.lane.b32.xlu0 %v3969, 64
    %v3972 = vpop.permute.xlu0 %3971
    %v3974 = vmul.f32 %v3956, %v3972
    %v3975 = vsel %vm1477, %v3868, 0.0
    %s3976 = scalar_lea.vmem [#allocation5], 24
    %3977 = vst.msk [vmem:[%s3976] sm:$0xff] %vm532, %v3975
    %v3978 = vsel %vm1485, %v3974, 0.0
    %s3979 = scalar_lea.vmem [#allocation6], 32
    %3980 = vst.msk [vmem:[%s3979] sm:$0xff] %vm532, %v3978
    %v3981 = vsel %vm1477, %v3868, %v3755
    %v3982 = vsel %vm1477, %v3862, %v3756
    %v3983 = vsel %vm1485, %v3974, %v3757
    %v3984 = vsel %vm1485, %v3968, %v3758
    %v3985 = vld [vmem:[%s1256] sm:$0xff]
    %v3986 = vld [vmem:[%s1256 + $0x8] sm:$0xff]
    %v3987 = vld [vmem:[%s1251 + $0x10] sm:$0xff]
    %v3988 = vld [vmem:[%s1251 + $0x18] sm:$0xff]
    %v3990 = vsel %vm532, %v3981, 0
    %3992 = vmatprep.subr.mxu0 0.0
    %3993 = vmatpush1.msra.mxu0 0.0
    %3994 = vmatprep.subr.mxu0 0.0
    %3995 = vmatpush1.msra.mxu0 0.0
    %3996 = vmatprep.subr.mxu0 0.0
    %3997 = vmatpush1.msra.mxu0 0.0
    %3998 = vmatprep.subr.mxu0 0.0
    %3999 = vmatpush1.msra.mxu0 0.0
    %4000 = vmatprep.subr.mxu0 0.0
    %4001 = vmatpush1.msra.mxu0 0.0
    %4002 = vmatprep.subr.mxu0 0.0
    %4003 = vmatpush1.msra.mxu0 0.0
    %4004 = vmatprep.subr.mxu0 0.0
    %4005 = vmatpush1.msra.mxu0 0.0
    %4006 = vmatprep.subr.mxu0 0.0
    %4007 = vmatpush1.msra.mxu0 0.0
    %4008 = vmatprep.subr.mxu0 %v3073
    %4009 = vmatpush1.msra.mxu0 %v3072
    %4010 = vmatprep.subr.mxu0 %v3071
    %4011 = vmatpush1.msra.mxu0 %v3070
    %4012 = vmatprep.subr.mxu0 %v3069
    %4013 = vmatpush1.msra.mxu0 %v3068
    %4014 = vmatprep.subr.mxu0 %v3067
    %4015 = vmatpush1.msra.mxu0 %v3066
    %4016 = vmatprep.subr.mxu0 %v3065
    %4017 = vmatpush1.msra.mxu0 %v3064
    %4018 = vmatprep.subr.mxu0 %v3063
    %4019 = vmatpush1.msra.mxu0 %v3062
    %4020 = vmatprep.subr.mxu0 %v3061
    %4021 = vmatpush1.msra.mxu0 %v3060
    %4022 = vmatprep.subr.mxu0 %v3059
    %4023 = vmatpush1.msra.mxu0 %v3058
    %4024 = vmatprep.subr.mxu0 0.0
    %4025 = vmatpush2.msra.mxu0 0.0
    %4026 = vmatprep.subr.mxu0 0.0
    %4027 = vmatpush2.msra.mxu0 0.0
    %4028 = vmatprep.subr.mxu0 0.0
    %4029 = vmatpush2.msra.mxu0 0.0
    %4030 = vmatprep.subr.mxu0 0.0
    %4031 = vmatpush2.msra.mxu0 0.0
    %4032 = vmatprep.subr.mxu0 0.0
    %4033 = vmatpush2.msra.mxu0 0.0
    %4034 = vmatprep.subr.mxu0 0.0
    %4035 = vmatpush2.msra.mxu0 0.0
    %4036 = vmatprep.subr.mxu0 0.0
    %4037 = vmatpush2.msra.mxu0 0.0
    %4038 = vmatprep.subr.mxu0 0.0
    %4039 = vmatpush2.msra.mxu0 0.0
    %4040 = vmatprep.subr.mxu0 0.0
    %4041 = vmatpush2.msra.mxu0 0.0
    %4042 = vmatprep.subr.mxu0 0.0
    %4043 = vmatpush2.msra.mxu0 0.0
    %4044 = vmatprep.subr.mxu0 0.0
    %4045 = vmatpush2.msra.mxu0 0.0
    %4046 = vmatprep.subr.mxu0 0.0
    %4047 = vmatpush2.msra.mxu0 0.0
    %4048 = vmatprep.subr.mxu0 0.0
    %4049 = vmatpush2.msra.mxu0 0.0
    %4050 = vmatprep.subr.mxu0 0.0
    %4051 = vmatpush2.msra.mxu0 0.0
    %4052 = vmatprep.subr.mxu0 0.0
    %4053 = vmatpush2.msra.mxu0 0.0
    %4054 = vmatprep.subr.mxu0 0.0
    %4055 = vmatpush2.msra.mxu0 0.0
    %4056 = vmatprep.mubr.f32.mxu0 0.0
    %4057 = vmatmul.mubr.f32.gmra.mxu0 %v3990
    %v4058 = vpop.f32.mrf.mxu0
    %v4059 = vadd.f32 0.0, %v4058
    %v4060 = vpop.f32.mrf.mxu0
    %v4061 = vadd.f32 0.0, %v4060
    %4062 = vdwg.mxu0
    %v4063 = vadd.f32 %v3985, %v4059
    %v4064 = vadd.f32 %v3986, %v4061
    %v4065 = vxor.u32 %v4063, 2147483648
    %v4066 = vxor.u32 %v4064, 2147483648
    %v4067 = vmul.f32 %v4065, 1.442695
    %v4068 = vpow.pop %v4067
    %v4069 = vmul.f32 %v4066, 1.442695
    %v4070 = vpow.pop %v4069
    %v4071 = vadd.f32 %v4068, 1.0
    %v4072 = vadd.f32 %v4070, 1.0
    %v4073 = vrcp.pop %v4071
    %v4074 = vmul.f32 1.0, %v4073
    %v4075 = vrcp.pop %v4072
    %v4076 = vmul.f32 1.0, %v4075
    %v4077 = vtanh.pop %v4064
    %v4078 = vmul.f32 %v4074, %v3982
    %4080 = vrot.lane.b32.xlu0 %v4077, 64
    %v4081 = vpop.permute.xlu0 %4080
    %v4083 = vmul.f32 %v4074, %v4081
    %4085 = vrot.lane.b32.xlu0 %v4083, 64
    %v4086 = vpop.permute.xlu0 %4085
    %v4088 = vadd.f32 %v4078, %v4086
    %v4089 = vtanh.pop %v4088
    %4091 = vrot.lane.b32.xlu0 %v4089, 64
    %v4092 = vpop.permute.xlu0 %4091
    %v4094 = vmul.f32 %v4076, %v4092
    %v4096 = vsel %vm532, %v3983, 0
    %4098 = vmatprep.subr.mxu0 0.0
    %4099 = vmatpush1.msra.mxu0 0.0
    %4100 = vmatprep.subr.mxu0 0.0
    %4101 = vmatpush1.msra.mxu0 0.0
    %4102 = vmatprep.subr.mxu0 0.0
    %4103 = vmatpush1.msra.mxu0 0.0
    %4104 = vmatprep.subr.mxu0 0.0
    %4105 = vmatpush1.msra.mxu0 0.0
    %4106 = vmatprep.subr.mxu0 0.0
    %4107 = vmatpush1.msra.mxu0 0.0
    %4108 = vmatprep.subr.mxu0 0.0
    %4109 = vmatpush1.msra.mxu0 0.0
    %4110 = vmatprep.subr.mxu0 0.0
    %4111 = vmatpush1.msra.mxu0 0.0
    %4112 = vmatprep.subr.mxu0 0.0
    %4113 = vmatpush1.msra.mxu0 0.0
    %4114 = vmatprep.subr.mxu0 %v3089
    %4115 = vmatpush1.msra.mxu0 %v3088
    %4116 = vmatprep.subr.mxu0 %v3087
    %4117 = vmatpush1.msra.mxu0 %v3086
    %4118 = vmatprep.subr.mxu0 %v3085
    %4119 = vmatpush1.msra.mxu0 %v3084
    %4120 = vmatprep.subr.mxu0 %v3083
    %4121 = vmatpush1.msra.mxu0 %v3082
    %4122 = vmatprep.subr.mxu0 %v3081
    %4123 = vmatpush1.msra.mxu0 %v3080
    %4124 = vmatprep.subr.mxu0 %v3079
    %4125 = vmatpush1.msra.mxu0 %v3078
    %4126 = vmatprep.subr.mxu0 %v3077
    %4127 = vmatpush1.msra.mxu0 %v3076
    %4128 = vmatprep.subr.mxu0 %v3075
    %4129 = vmatpush1.msra.mxu0 %v3074
    %4130 = vmatprep.subr.mxu0 0.0
    %4131 = vmatpush2.msra.mxu0 0.0
    %4132 = vmatprep.subr.mxu0 0.0
    %4133 = vmatpush2.msra.mxu0 0.0
    %4134 = vmatprep.subr.mxu0 0.0
    %4135 = vmatpush2.msra.mxu0 0.0
    %4136 = vmatprep.subr.mxu0 0.0
    %4137 = vmatpush2.msra.mxu0 0.0
    %4138 = vmatprep.subr.mxu0 0.0
    %4139 = vmatpush2.msra.mxu0 0.0
    %4140 = vmatprep.subr.mxu0 0.0
    %4141 = vmatpush2.msra.mxu0 0.0
    %4142 = vmatprep.subr.mxu0 0.0
    %4143 = vmatpush2.msra.mxu0 0.0
    %4144 = vmatprep.subr.mxu0 0.0
    %4145 = vmatpush2.msra.mxu0 0.0
    %4146 = vmatprep.subr.mxu0 0.0
    %4147 = vmatpush2.msra.mxu0 0.0
    %4148 = vmatprep.subr.mxu0 0.0
    %4149 = vmatpush2.msra.mxu0 0.0
    %4150 = vmatprep.subr.mxu0 0.0
    %4151 = vmatpush2.msra.mxu0 0.0
    %4152 = vmatprep.subr.mxu0 0.0
    %4153 = vmatpush2.msra.mxu0 0.0
    %4154 = vmatprep.subr.mxu0 0.0
    %4155 = vmatpush2.msra.mxu0 0.0
    %4156 = vmatprep.subr.mxu0 0.0
    %4157 = vmatpush2.msra.mxu0 0.0
    %4158 = vmatprep.subr.mxu0 0.0
    %4159 = vmatpush2.msra.mxu0 0.0
    %4160 = vmatprep.subr.mxu0 0.0
    %4161 = vmatpush2.msra.mxu0 0.0
    %4162 = vmatprep.mubr.f32.mxu0 0.0
    %4163 = vmatmul.mubr.f32.gmra.mxu0 %v4096
    %v4164 = vpop.f32.mrf.mxu0
    %v4165 = vadd.f32 0.0, %v4164
    %v4166 = vpop.f32.mrf.mxu0
    %v4167 = vadd.f32 0.0, %v4166
    %4168 = vdwg.mxu0
    %v4169 = vadd.f32 %v3987, %v4165
    %v4170 = vadd.f32 %v3988, %v4167
    %v4171 = vxor.u32 %v4169, 2147483648
    %v4172 = vxor.u32 %v4170, 2147483648
    %v4173 = vmul.f32 %v4171, 1.442695
    %v4174 = vpow.pop %v4173
    %v4175 = vmul.f32 %v4172, 1.442695
    %v4176 = vpow.pop %v4175
    %v4177 = vadd.f32 %v4174, 1.0
    %v4178 = vadd.f32 %v4176, 1.0
    %v4179 = vrcp.pop %v4177
    %v4180 = vmul.f32 1.0, %v4179
    %v4181 = vrcp.pop %v4178
    %v4182 = vmul.f32 1.0, %v4181
    %v4183 = vtanh.pop %v4170
    %v4184 = vmul.f32 %v4180, %v3984
    %4186 = vrot.lane.b32.xlu0 %v4183, 64
    %v4187 = vpop.permute.xlu0 %4186
    %v4189 = vmul.f32 %v4180, %v4187
    %4191 = vrot.lane.b32.xlu0 %v4189, 64
    %v4192 = vpop.permute.xlu0 %4191
    %v4194 = vadd.f32 %v4184, %v4192
    %v4195 = vtanh.pop %v4194
    %4197 = vrot.lane.b32.xlu0 %v4195, 64
    %v4198 = vpop.permute.xlu0 %4197
    %v4200 = vmul.f32 %v4182, %v4198
    %v4201 = vsel %vm1485, %v4094, 0.0
    %s4202 = scalar_lea.vmem [#allocation5], 32
    %4203 = vst.msk [vmem:[%s4202] sm:$0xff] %vm532, %v4201
    %v4204 = vsel %vm1477, %v4200, 0.0
    %s4205 = scalar_lea.vmem [#allocation6], 24
    %4206 = vst.msk [vmem:[%s4205] sm:$0xff] %vm532, %v4204
    %v4207 = vsel %vm1485, %v4094, %v3981
    %v4208 = vsel %vm1485, %v4088, %v3982
    %v4209 = vsel %vm1477, %v4200, %v3983
    %v4210 = vsel %vm1477, %v4194, %v3984
    %v4211 = vld [vmem:[%s1012] sm:$0xff]
    %v4212 = vld [vmem:[%s1012 + $0x8] sm:$0xff]
    %v4213 = vld [vmem:[%s1007 + $0x10] sm:$0xff]
    %v4214 = vld [vmem:[%s1007 + $0x18] sm:$0xff]
    %v4216 = vsel %vm532, %v4207, 0
    %4218 = vmatprep.subr.mxu0 0.0
    %4219 = vmatpush1.msra.mxu0 0.0
    %4220 = vmatprep.subr.mxu0 0.0
    %4221 = vmatpush1.msra.mxu0 0.0
    %4222 = vmatprep.subr.mxu0 0.0
    %4223 = vmatpush1.msra.mxu0 0.0
    %4224 = vmatprep.subr.mxu0 0.0
    %4225 = vmatpush1.msra.mxu0 0.0
    %4226 = vmatprep.subr.mxu0 0.0
    %4227 = vmatpush1.msra.mxu0 0.0
    %4228 = vmatprep.subr.mxu0 0.0
    %4229 = vmatpush1.msra.mxu0 0.0
    %4230 = vmatprep.subr.mxu0 0.0
    %4231 = vmatpush1.msra.mxu0 0.0
    %4232 = vmatprep.subr.mxu0 0.0
    %4233 = vmatpush1.msra.mxu0 0.0
    %4234 = vmatprep.subr.mxu0 %v3073
    %4235 = vmatpush1.msra.mxu0 %v3072
    %4236 = vmatprep.subr.mxu0 %v3071
    %4237 = vmatpush1.msra.mxu0 %v3070
    %4238 = vmatprep.subr.mxu0 %v3069
    %4239 = vmatpush1.msra.mxu0 %v3068
    %4240 = vmatprep.subr.mxu0 %v3067
    %4241 = vmatpush1.msra.mxu0 %v3066
    %4242 = vmatprep.subr.mxu0 %v3065
    %4243 = vmatpush1.msra.mxu0 %v3064
    %4244 = vmatprep.subr.mxu0 %v3063
    %4245 = vmatpush1.msra.mxu0 %v3062
    %4246 = vmatprep.subr.mxu0 %v3061
    %4247 = vmatpush1.msra.mxu0 %v3060
    %4248 = vmatprep.subr.mxu0 %v3059
    %4249 = vmatpush1.msra.mxu0 %v3058
    %4250 = vmatprep.subr.mxu0 0.0
    %4251 = vmatpush2.msra.mxu0 0.0
    %4252 = vmatprep.subr.mxu0 0.0
    %4253 = vmatpush2.msra.mxu0 0.0
    %4254 = vmatprep.subr.mxu0 0.0
    %4255 = vmatpush2.msra.mxu0 0.0
    %4256 = vmatprep.subr.mxu0 0.0
    %4257 = vmatpush2.msra.mxu0 0.0
    %4258 = vmatprep.subr.mxu0 0.0
    %4259 = vmatpush2.msra.mxu0 0.0
    %4260 = vmatprep.subr.mxu0 0.0
    %4261 = vmatpush2.msra.mxu0 0.0
    %4262 = vmatprep.subr.mxu0 0.0
    %4263 = vmatpush2.msra.mxu0 0.0
    %4264 = vmatprep.subr.mxu0 0.0
    %4265 = vmatpush2.msra.mxu0 0.0
    %4266 = vmatprep.subr.mxu0 0.0
    %4267 = vmatpush2.msra.mxu0 0.0
    %4268 = vmatprep.subr.mxu0 0.0
    %4269 = vmatpush2.msra.mxu0 0.0
    %4270 = vmatprep.subr.mxu0 0.0
    %4271 = vmatpush2.msra.mxu0 0.0
    %4272 = vmatprep.subr.mxu0 0.0
    %4273 = vmatpush2.msra.mxu0 0.0
    %4274 = vmatprep.subr.mxu0 0.0
    %4275 = vmatpush2.msra.mxu0 0.0
    %4276 = vmatprep.subr.mxu0 0.0
    %4277 = vmatpush2.msra.mxu0 0.0
    %4278 = vmatprep.subr.mxu0 0.0
    %4279 = vmatpush2.msra.mxu0 0.0
    %4280 = vmatprep.subr.mxu0 0.0
    %4281 = vmatpush2.msra.mxu0 0.0
    %4282 = vmatprep.mubr.f32.mxu0 0.0
    %4283 = vmatmul.mubr.f32.gmra.mxu0 %v4216
    %v4284 = vpop.f32.mrf.mxu0
    %v4285 = vadd.f32 0.0, %v4284
    %v4286 = vpop.f32.mrf.mxu0
    %v4287 = vadd.f32 0.0, %v4286
    %4288 = vdwg.mxu0
    %v4289 = vadd.f32 %v4211, %v4285
    %v4290 = vadd.f32 %v4212, %v4287
    %v4291 = vxor.u32 %v4289, 2147483648
    %v4292 = vxor.u32 %v4290, 2147483648
    %v4293 = vmul.f32 %v4291, 1.442695
    %v4294 = vpow.pop %v4293
    %v4295 = vmul.f32 %v4292, 1.442695
    %v4296 = vpow.pop %v4295
    %v4297 = vadd.f32 %v4294, 1.0
    %v4298 = vadd.f32 %v4296, 1.0
    %v4299 = vrcp.pop %v4297
    %v4300 = vmul.f32 1.0, %v4299
    %v4301 = vrcp.pop %v4298
    %v4302 = vmul.f32 1.0, %v4301
    %v4303 = vtanh.pop %v4290
    %v4304 = vmul.f32 %v4300, %v4208
    %4306 = vrot.lane.b32.xlu0 %v4303, 64
    %v4307 = vpop.permute.xlu0 %4306
    %v4309 = vmul.f32 %v4300, %v4307
    %4311 = vrot.lane.b32.xlu0 %v4309, 64
    %v4312 = vpop.permute.xlu0 %4311
    %v4314 = vadd.f32 %v4304, %v4312
    %v4315 = vtanh.pop %v4314
    %4317 = vrot.lane.b32.xlu0 %v4315, 64
    %v4318 = vpop.permute.xlu0 %4317
    %v4320 = vmul.f32 %v4302, %v4318
    %v4322 = vsel %vm532, %v4209, 0
    %4324 = vmatprep.subr.mxu0 0.0
    %4325 = vmatpush1.msra.mxu0 0.0
    %4326 = vmatprep.subr.mxu0 0.0
    %4327 = vmatpush1.msra.mxu0 0.0
    %4328 = vmatprep.subr.mxu0 0.0
    %4329 = vmatpush1.msra.mxu0 0.0
    %4330 = vmatprep.subr.mxu0 0.0
    %4331 = vmatpush1.msra.mxu0 0.0
    %4332 = vmatprep.subr.mxu0 0.0
    %4333 = vmatpush1.msra.mxu0 0.0
    %4334 = vmatprep.subr.mxu0 0.0
    %4335 = vmatpush1.msra.mxu0 0.0
    %4336 = vmatprep.subr.mxu0 0.0
    %4337 = vmatpush1.msra.mxu0 0.0
    %4338 = vmatprep.subr.mxu0 0.0
    %4339 = vmatpush1.msra.mxu0 0.0
    %4340 = vmatprep.subr.mxu0 %v3089
    %4341 = vmatpush1.msra.mxu0 %v3088
    %4342 = vmatprep.subr.mxu0 %v3087
    %4343 = vmatpush1.msra.mxu0 %v3086
    %4344 = vmatprep.subr.mxu0 %v3085
    %4345 = vmatpush1.msra.mxu0 %v3084
    %4346 = vmatprep.subr.mxu0 %v3083
    %4347 = vmatpush1.msra.mxu0 %v3082
    %4348 = vmatprep.subr.mxu0 %v3081
    %4349 = vmatpush1.msra.mxu0 %v3080
    %4350 = vmatprep.subr.mxu0 %v3079
    %4351 = vmatpush1.msra.mxu0 %v3078
    %4352 = vmatprep.subr.mxu0 %v3077
    %4353 = vmatpush1.msra.mxu0 %v3076
    %4354 = vmatprep.subr.mxu0 %v3075
    %4355 = vmatpush1.msra.mxu0 %v3074
    %4356 = vmatprep.subr.mxu0 0.0
    %4357 = vmatpush2.msra.mxu0 0.0
    %4358 = vmatprep.subr.mxu0 0.0
    %4359 = vmatpush2.msra.mxu0 0.0
    %4360 = vmatprep.subr.mxu0 0.0
    %4361 = vmatpush2.msra.mxu0 0.0
    %4362 = vmatprep.subr.mxu0 0.0
    %4363 = vmatpush2.msra.mxu0 0.0
    %4364 = vmatprep.subr.mxu0 0.0
    %4365 = vmatpush2.msra.mxu0 0.0
    %4366 = vmatprep.subr.mxu0 0.0
    %4367 = vmatpush2.msra.mxu0 0.0
    %4368 = vmatprep.subr.mxu0 0.0
    %4369 = vmatpush2.msra.mxu0 0.0
    %4370 = vmatprep.subr.mxu0 0.0
    %4371 = vmatpush2.msra.mxu0 0.0
    %4372 = vmatprep.subr.mxu0 0.0
    %4373 = vmatpush2.msra.mxu0 0.0
    %4374 = vmatprep.subr.mxu0 0.0
    %4375 = vmatpush2.msra.mxu0 0.0
    %4376 = vmatprep.subr.mxu0 0.0
    %4377 = vmatpush2.msra.mxu0 0.0
    %4378 = vmatprep.subr.mxu0 0.0
    %4379 = vmatpush2.msra.mxu0 0.0
    %4380 = vmatprep.subr.mxu0 0.0
    %4381 = vmatpush2.msra.mxu0 0.0
    %4382 = vmatprep.subr.mxu0 0.0
    %4383 = vmatpush2.msra.mxu0 0.0
    %4384 = vmatprep.subr.mxu0 0.0
    %4385 = vmatpush2.msra.mxu0 0.0
    %4386 = vmatprep.subr.mxu0 0.0
    %4387 = vmatpush2.msra.mxu0 0.0
    %4388 = vmatprep.mubr.f32.mxu0 0.0
    %4389 = vmatmul.mubr.f32.gmra.mxu0 %v4322
    %v4390 = vpop.f32.mrf.mxu0
    %v4391 = vadd.f32 0.0, %v4390
    %v4392 = vpop.f32.mrf.mxu0
    %v4393 = vadd.f32 0.0, %v4392
    %4394 = vdwg.mxu0
    %v4395 = vadd.f32 %v4213, %v4391
    %v4396 = vadd.f32 %v4214, %v4393
    %v4397 = vxor.u32 %v4395, 2147483648
    %v4398 = vxor.u32 %v4396, 2147483648
    %v4399 = vmul.f32 %v4397, 1.442695
    %v4400 = vpow.pop %v4399
    %v4401 = vmul.f32 %v4398, 1.442695
    %v4402 = vpow.pop %v4401
    %v4403 = vadd.f32 %v4400, 1.0
    %v4404 = vadd.f32 %v4402, 1.0
    %v4405 = vrcp.pop %v4403
    %v4406 = vmul.f32 1.0, %v4405
    %v4407 = vrcp.pop %v4404
    %v4408 = vmul.f32 1.0, %v4407
    %v4409 = vtanh.pop %v4396
    %v4410 = vmul.f32 %v4406, %v4210
    %4412 = vrot.lane.b32.xlu0 %v4409, 64
    %v4413 = vpop.permute.xlu0 %4412
    %v4415 = vmul.f32 %v4406, %v4413
    %4417 = vrot.lane.b32.xlu0 %v4415, 64
    %v4418 = vpop.permute.xlu0 %4417
    %v4420 = vadd.f32 %v4410, %v4418
    %v4421 = vtanh.pop %v4420
    %4423 = vrot.lane.b32.xlu0 %v4421, 64
    %v4424 = vpop.permute.xlu0 %4423
    %v4426 = vmul.f32 %v4408, %v4424
    %v4427 = vsel %vm1241, %v4320, 0.0
    %s4428 = scalar_lea.vmem [#allocation5], 40
    %4429 = vst.msk [vmem:[%s4428] sm:$0xff] %vm532, %v4427
    %v4430 = vsel %vm1233, %v4426, 0.0
    %s4431 = scalar_lea.vmem [#allocation6], 16
    %4432 = vst.msk [vmem:[%s4431] sm:$0xff] %vm532, %v4430
    %v4433 = vsel %vm1241, %v4320, %v4207
    %v4434 = vsel %vm1241, %v4314, %v4208
    %v4435 = vsel %vm1233, %v4426, %v4209
    %v4436 = vsel %vm1233, %v4420, %v4210
    %v4437 = vld [vmem:[%s768] sm:$0xff]
    %v4438 = vld [vmem:[%s768 + $0x8] sm:$0xff]
    %v4439 = vld [vmem:[%s763 + $0x10] sm:$0xff]
    %v4440 = vld [vmem:[%s763 + $0x18] sm:$0xff]
    %v4442 = vsel %vm532, %v4433, 0
    %4444 = vmatprep.subr.mxu0 0.0
    %4445 = vmatpush1.msra.mxu0 0.0
    %4446 = vmatprep.subr.mxu0 0.0
    %4447 = vmatpush1.msra.mxu0 0.0
    %4448 = vmatprep.subr.mxu0 0.0
    %4449 = vmatpush1.msra.mxu0 0.0
    %4450 = vmatprep.subr.mxu0 0.0
    %4451 = vmatpush1.msra.mxu0 0.0
    %4452 = vmatprep.subr.mxu0 0.0
    %4453 = vmatpush1.msra.mxu0 0.0
    %4454 = vmatprep.subr.mxu0 0.0
    %4455 = vmatpush1.msra.mxu0 0.0
    %4456 = vmatprep.subr.mxu0 0.0
    %4457 = vmatpush1.msra.mxu0 0.0
    %4458 = vmatprep.subr.mxu0 0.0
    %4459 = vmatpush1.msra.mxu0 0.0
    %4460 = vmatprep.subr.mxu0 %v3073
    %4461 = vmatpush1.msra.mxu0 %v3072
    %4462 = vmatprep.subr.mxu0 %v3071
    %4463 = vmatpush1.msra.mxu0 %v3070
    %4464 = vmatprep.subr.mxu0 %v3069
    %4465 = vmatpush1.msra.mxu0 %v3068
    %4466 = vmatprep.subr.mxu0 %v3067
    %4467 = vmatpush1.msra.mxu0 %v3066
    %4468 = vmatprep.subr.mxu0 %v3065
    %4469 = vmatpush1.msra.mxu0 %v3064
    %4470 = vmatprep.subr.mxu0 %v3063
    %4471 = vmatpush1.msra.mxu0 %v3062
    %4472 = vmatprep.subr.mxu0 %v3061
    %4473 = vmatpush1.msra.mxu0 %v3060
    %4474 = vmatprep.subr.mxu0 %v3059
    %4475 = vmatpush1.msra.mxu0 %v3058
    %4476 = vmatprep.subr.mxu0 0.0
    %4477 = vmatpush2.msra.mxu0 0.0
    %4478 = vmatprep.subr.mxu0 0.0
    %4479 = vmatpush2.msra.mxu0 0.0
    %4480 = vmatprep.subr.mxu0 0.0
    %4481 = vmatpush2.msra.mxu0 0.0
    %4482 = vmatprep.subr.mxu0 0.0
    %4483 = vmatpush2.msra.mxu0 0.0
    %4484 = vmatprep.subr.mxu0 0.0
    %4485 = vmatpush2.msra.mxu0 0.0
    %4486 = vmatprep.subr.mxu0 0.0
    %4487 = vmatpush2.msra.mxu0 0.0
    %4488 = vmatprep.subr.mxu0 0.0
    %4489 = vmatpush2.msra.mxu0 0.0
    %4490 = vmatprep.subr.mxu0 0.0
    %4491 = vmatpush2.msra.mxu0 0.0
    %4492 = vmatprep.subr.mxu0 0.0
    %4493 = vmatpush2.msra.mxu0 0.0
    %4494 = vmatprep.subr.mxu0 0.0
    %4495 = vmatpush2.msra.mxu0 0.0
    %4496 = vmatprep.subr.mxu0 0.0
    %4497 = vmatpush2.msra.mxu0 0.0
    %4498 = vmatprep.subr.mxu0 0.0
    %4499 = vmatpush2.msra.mxu0 0.0
    %4500 = vmatprep.subr.mxu0 0.0
    %4501 = vmatpush2.msra.mxu0 0.0
    %4502 = vmatprep.subr.mxu0 0.0
    %4503 = vmatpush2.msra.mxu0 0.0
    %4504 = vmatprep.subr.mxu0 0.0
    %4505 = vmatpush2.msra.mxu0 0.0
    %4506 = vmatprep.subr.mxu0 0.0
    %4507 = vmatpush2.msra.mxu0 0.0
    %4508 = vmatprep.mubr.f32.mxu0 0.0
    %4509 = vmatmul.mubr.f32.gmra.mxu0 %v4442
    %v4510 = vpop.f32.mrf.mxu0
    %v4511 = vadd.f32 0.0, %v4510
    %v4512 = vpop.f32.mrf.mxu0
    %v4513 = vadd.f32 0.0, %v4512
    %4514 = vdwg.mxu0
    %v4515 = vadd.f32 %v4437, %v4511
    %v4516 = vadd.f32 %v4438, %v4513
    %v4517 = vxor.u32 %v4515, 2147483648
    %v4518 = vxor.u32 %v4516, 2147483648
    %v4519 = vmul.f32 %v4517, 1.442695
    %v4520 = vpow.pop %v4519
    %v4521 = vmul.f32 %v4518, 1.442695
    %v4522 = vpow.pop %v4521
    %v4523 = vadd.f32 %v4520, 1.0
    %v4524 = vadd.f32 %v4522, 1.0
    %v4525 = vrcp.pop %v4523
    %v4526 = vmul.f32 1.0, %v4525
    %v4527 = vrcp.pop %v4524
    %v4528 = vmul.f32 1.0, %v4527
    %v4529 = vtanh.pop %v4516
    %v4530 = vmul.f32 %v4526, %v4434
    %4532 = vrot.lane.b32.xlu0 %v4529, 64
    %v4533 = vpop.permute.xlu0 %4532
    %v4535 = vmul.f32 %v4526, %v4533
    %4537 = vrot.lane.b32.xlu0 %v4535, 64
    %v4538 = vpop.permute.xlu0 %4537
    %v4540 = vadd.f32 %v4530, %v4538
    %v4541 = vtanh.pop %v4540
    %4543 = vrot.lane.b32.xlu0 %v4541, 64
    %v4544 = vpop.permute.xlu0 %4543
    %v4546 = vmul.f32 %v4528, %v4544
    %v4548 = vsel %vm532, %v4435, 0
    %4550 = vmatprep.subr.mxu0 0.0
    %4551 = vmatpush1.msra.mxu0 0.0
    %4552 = vmatprep.subr.mxu0 0.0
    %4553 = vmatpush1.msra.mxu0 0.0
    %4554 = vmatprep.subr.mxu0 0.0
    %4555 = vmatpush1.msra.mxu0 0.0
    %4556 = vmatprep.subr.mxu0 0.0
    %4557 = vmatpush1.msra.mxu0 0.0
    %4558 = vmatprep.subr.mxu0 0.0
    %4559 = vmatpush1.msra.mxu0 0.0
    %4560 = vmatprep.subr.mxu0 0.0
    %4561 = vmatpush1.msra.mxu0 0.0
    %4562 = vmatprep.subr.mxu0 0.0
    %4563 = vmatpush1.msra.mxu0 0.0
    %4564 = vmatprep.subr.mxu0 0.0
    %4565 = vmatpush1.msra.mxu0 0.0
    %4566 = vmatprep.subr.mxu0 %v3089
    %4567 = vmatpush1.msra.mxu0 %v3088
    %4568 = vmatprep.subr.mxu0 %v3087
    %4569 = vmatpush1.msra.mxu0 %v3086
    %4570 = vmatprep.subr.mxu0 %v3085
    %4571 = vmatpush1.msra.mxu0 %v3084
    %4572 = vmatprep.subr.mxu0 %v3083
    %4573 = vmatpush1.msra.mxu0 %v3082
    %4574 = vmatprep.subr.mxu0 %v3081
    %4575 = vmatpush1.msra.mxu0 %v3080
    %4576 = vmatprep.subr.mxu0 %v3079
    %4577 = vmatpush1.msra.mxu0 %v3078
    %4578 = vmatprep.subr.mxu0 %v3077
    %4579 = vmatpush1.msra.mxu0 %v3076
    %4580 = vmatprep.subr.mxu0 %v3075
    %4581 = vmatpush1.msra.mxu0 %v3074
    %4582 = vmatprep.subr.mxu0 0.0
    %4583 = vmatpush2.msra.mxu0 0.0
    %4584 = vmatprep.subr.mxu0 0.0
    %4585 = vmatpush2.msra.mxu0 0.0
    %4586 = vmatprep.subr.mxu0 0.0
    %4587 = vmatpush2.msra.mxu0 0.0
    %4588 = vmatprep.subr.mxu0 0.0
    %4589 = vmatpush2.msra.mxu0 0.0
    %4590 = vmatprep.subr.mxu0 0.0
    %4591 = vmatpush2.msra.mxu0 0.0
    %4592 = vmatprep.subr.mxu0 0.0
    %4593 = vmatpush2.msra.mxu0 0.0
    %4594 = vmatprep.subr.mxu0 0.0
    %4595 = vmatpush2.msra.mxu0 0.0
    %4596 = vmatprep.subr.mxu0 0.0
    %4597 = vmatpush2.msra.mxu0 0.0
    %4598 = vmatprep.subr.mxu0 0.0
    %4599 = vmatpush2.msra.mxu0 0.0
    %4600 = vmatprep.subr.mxu0 0.0
    %4601 = vmatpush2.msra.mxu0 0.0
    %4602 = vmatprep.subr.mxu0 0.0
    %4603 = vmatpush2.msra.mxu0 0.0
    %4604 = vmatprep.subr.mxu0 0.0
    %4605 = vmatpush2.msra.mxu0 0.0
    %4606 = vmatprep.subr.mxu0 0.0
    %4607 = vmatpush2.msra.mxu0 0.0
    %4608 = vmatprep.subr.mxu0 0.0
    %4609 = vmatpush2.msra.mxu0 0.0
    %4610 = vmatprep.subr.mxu0 0.0
    %4611 = vmatpush2.msra.mxu0 0.0
    %4612 = vmatprep.subr.mxu0 0.0
    %4613 = vmatpush2.msra.mxu0 0.0
    %4614 = vmatprep.mubr.f32.mxu0 0.0
    %4615 = vmatmul.mubr.f32.gmra.mxu0 %v4548
    %v4616 = vpop.f32.mrf.mxu0
    %v4617 = vadd.f32 0.0, %v4616
    %v4618 = vpop.f32.mrf.mxu0
    %v4619 = vadd.f32 0.0, %v4618
    %4620 = vdwg.mxu0
    %v4621 = vadd.f32 %v4439, %v4617
    %v4622 = vadd.f32 %v4440, %v4619
    %v4623 = vxor.u32 %v4621, 2147483648
    %v4624 = vxor.u32 %v4622, 2147483648
    %v4625 = vmul.f32 %v4623, 1.442695
    %v4626 = vpow.pop %v4625
    %v4627 = vmul.f32 %v4624, 1.442695
    %v4628 = vpow.pop %v4627
    %v4629 = vadd.f32 %v4626, 1.0
    %v4630 = vadd.f32 %v4628, 1.0
    %v4631 = vrcp.pop %v4629
    %v4632 = vmul.f32 1.0, %v4631
    %v4633 = vrcp.pop %v4630
    %v4634 = vmul.f32 1.0, %v4633
    %v4635 = vtanh.pop %v4622
    %v4636 = vmul.f32 %v4632, %v4436
    %4638 = vrot.lane.b32.xlu0 %v4635, 64
    %v4639 = vpop.permute.xlu0 %4638
    %v4641 = vmul.f32 %v4632, %v4639
    %4643 = vrot.lane.b32.xlu0 %v4641, 64
    %v4644 = vpop.permute.xlu0 %4643
    %v4646 = vadd.f32 %v4636, %v4644
    %v4647 = vtanh.pop %v4646
    %4649 = vrot.lane.b32.xlu0 %v4647, 64
    %v4650 = vpop.permute.xlu0 %4649
    %v4652 = vmul.f32 %v4634, %v4650
    %v4653 = vsel %vm997, %v4546, 0.0
    %s4654 = scalar_lea.vmem [#allocation5], 48
    %4655 = vst.msk [vmem:[%s4654] sm:$0xff] %vm532, %v4653
    %v4656 = vsel %vm989, %v4652, 0.0
    %s4657 = scalar_lea.vmem [#allocation6], 8
    %4658 = vst.msk [vmem:[%s4657] sm:$0xff] %vm532, %v4656
    %v4659 = vsel %vm997, %v4546, %v4433
    %v4660 = vsel %vm997, %v4540, %v4434
    %v4661 = vsel %vm989, %v4652, %v4435
    %v4662 = vsel %vm989, %v4646, %v4436
    %v4663 = vld [vmem:[%s529] sm:$0xff]
    %v4664 = vld [vmem:[%s529 + $0x8] sm:$0xff]
    %v4665 = vld [vmem:[%s524 + $0x10] sm:$0xff]
    %v4666 = vld [vmem:[%s524 + $0x18] sm:$0xff]
    %v4668 = vsel %vm532, %v4659, 0
    %4670 = vmatprep.subr.mxu0 0.0
    %4671 = vmatpush1.msra.mxu0 0.0
    %4672 = vmatprep.subr.mxu0 0.0
    %4673 = vmatpush1.msra.mxu0 0.0
    %4674 = vmatprep.subr.mxu0 0.0
    %4675 = vmatpush1.msra.mxu0 0.0
    %4676 = vmatprep.subr.mxu0 0.0
    %4677 = vmatpush1.msra.mxu0 0.0
    %4678 = vmatprep.subr.mxu0 0.0
    %4679 = vmatpush1.msra.mxu0 0.0
    %4680 = vmatprep.subr.mxu0 0.0
    %4681 = vmatpush1.msra.mxu0 0.0
    %4682 = vmatprep.subr.mxu0 0.0
    %4683 = vmatpush1.msra.mxu0 0.0
    %4684 = vmatprep.subr.mxu0 0.0
    %4685 = vmatpush1.msra.mxu0 0.0
    %4686 = vmatprep.subr.mxu0 %v3073
    %4687 = vmatpush1.msra.mxu0 %v3072
    %4688 = vmatprep.subr.mxu0 %v3071
    %4689 = vmatpush1.msra.mxu0 %v3070
    %4690 = vmatprep.subr.mxu0 %v3069
    %4691 = vmatpush1.msra.mxu0 %v3068
    %4692 = vmatprep.subr.mxu0 %v3067
    %4693 = vmatpush1.msra.mxu0 %v3066
    %4694 = vmatprep.subr.mxu0 %v3065
    %4695 = vmatpush1.msra.mxu0 %v3064
    %4696 = vmatprep.subr.mxu0 %v3063
    %4697 = vmatpush1.msra.mxu0 %v3062
    %4698 = vmatprep.subr.mxu0 %v3061
    %4699 = vmatpush1.msra.mxu0 %v3060
    %4700 = vmatprep.subr.mxu0 %v3059
    %4701 = vmatpush1.msra.mxu0 %v3058
    %4702 = vmatprep.subr.mxu0 0.0
    %4703 = vmatpush2.msra.mxu0 0.0
    %4704 = vmatprep.subr.mxu0 0.0
    %4705 = vmatpush2.msra.mxu0 0.0
    %4706 = vmatprep.subr.mxu0 0.0
    %4707 = vmatpush2.msra.mxu0 0.0
    %4708 = vmatprep.subr.mxu0 0.0
    %4709 = vmatpush2.msra.mxu0 0.0
    %4710 = vmatprep.subr.mxu0 0.0
    %4711 = vmatpush2.msra.mxu0 0.0
    %4712 = vmatprep.subr.mxu0 0.0
    %4713 = vmatpush2.msra.mxu0 0.0
    %4714 = vmatprep.subr.mxu0 0.0
    %4715 = vmatpush2.msra.mxu0 0.0
    %4716 = vmatprep.subr.mxu0 0.0
    %4717 = vmatpush2.msra.mxu0 0.0
    %4718 = vmatprep.subr.mxu0 0.0
    %4719 = vmatpush2.msra.mxu0 0.0
    %4720 = vmatprep.subr.mxu0 0.0
    %4721 = vmatpush2.msra.mxu0 0.0
    %4722 = vmatprep.subr.mxu0 0.0
    %4723 = vmatpush2.msra.mxu0 0.0
    %4724 = vmatprep.subr.mxu0 0.0
    %4725 = vmatpush2.msra.mxu0 0.0
    %4726 = vmatprep.subr.mxu0 0.0
    %4727 = vmatpush2.msra.mxu0 0.0
    %4728 = vmatprep.subr.mxu0 0.0
    %4729 = vmatpush2.msra.mxu0 0.0
    %4730 = vmatprep.subr.mxu0 0.0
    %4731 = vmatpush2.msra.mxu0 0.0
    %4732 = vmatprep.subr.mxu0 0.0
    %4733 = vmatpush2.msra.mxu0 0.0
    %4734 = vmatprep.mubr.f32.mxu0 0.0
    %4735 = vmatmul.mubr.f32.gmra.mxu0 %v4668
    %v4736 = vpop.f32.mrf.mxu0
    %v4737 = vadd.f32 0.0, %v4736
    %v4738 = vpop.f32.mrf.mxu0
    %v4739 = vadd.f32 0.0, %v4738
    %4740 = vdwg.mxu0
    %v4741 = vadd.f32 %v4663, %v4737
    %v4742 = vadd.f32 %v4664, %v4739
    %v4743 = vxor.u32 %v4741, 2147483648
    %v4744 = vxor.u32 %v4742, 2147483648
    %v4745 = vmul.f32 %v4743, 1.442695
    %v4746 = vpow.pop %v4745
    %v4747 = vmul.f32 %v4744, 1.442695
    %v4748 = vpow.pop %v4747
    %v4749 = vadd.f32 %v4746, 1.0
    %v4750 = vadd.f32 %v4748, 1.0
    %v4751 = vrcp.pop %v4749
    %v4752 = vmul.f32 1.0, %v4751
    %v4753 = vrcp.pop %v4750
    %v4754 = vmul.f32 1.0, %v4753
    %v4755 = vtanh.pop %v4742
    %v4756 = vmul.f32 %v4752, %v4660
    %4758 = vrot.lane.b32.xlu0 %v4755, 64
    %v4759 = vpop.permute.xlu0 %4758
    %v4761 = vmul.f32 %v4752, %v4759
    %4763 = vrot.lane.b32.xlu0 %v4761, 64
    %v4764 = vpop.permute.xlu0 %4763
    %v4766 = vadd.f32 %v4756, %v4764
    %v4767 = vtanh.pop %v4766
    %4769 = vrot.lane.b32.xlu0 %v4767, 64
    %v4770 = vpop.permute.xlu0 %4769
    %v4772 = vmul.f32 %v4754, %v4770
    %v4774 = vsel %vm532, %v4661, 0
    %4776 = vmatprep.subr.mxu0 0.0
    %4777 = vmatpush1.msra.mxu0 0.0
    %4778 = vmatprep.subr.mxu0 0.0
    %4779 = vmatpush1.msra.mxu0 0.0
    %4780 = vmatprep.subr.mxu0 0.0
    %4781 = vmatpush1.msra.mxu0 0.0
    %4782 = vmatprep.subr.mxu0 0.0
    %4783 = vmatpush1.msra.mxu0 0.0
    %4784 = vmatprep.subr.mxu0 0.0
    %4785 = vmatpush1.msra.mxu0 0.0
    %4786 = vmatprep.subr.mxu0 0.0
    %4787 = vmatpush1.msra.mxu0 0.0
    %4788 = vmatprep.subr.mxu0 0.0
    %4789 = vmatpush1.msra.mxu0 0.0
    %4790 = vmatprep.subr.mxu0 0.0
    %4791 = vmatpush1.msra.mxu0 0.0
    %4792 = vmatprep.subr.mxu0 %v3089
    %4793 = vmatpush1.msra.mxu0 %v3088
    %4794 = vmatprep.subr.mxu0 %v3087
    %4795 = vmatpush1.msra.mxu0 %v3086
    %4796 = vmatprep.subr.mxu0 %v3085
    %4797 = vmatpush1.msra.mxu0 %v3084
    %4798 = vmatprep.subr.mxu0 %v3083
    %4799 = vmatpush1.msra.mxu0 %v3082
    %4800 = vmatprep.subr.mxu0 %v3081
    %4801 = vmatpush1.msra.mxu0 %v3080
    %4802 = vmatprep.subr.mxu0 %v3079
    %4803 = vmatpush1.msra.mxu0 %v3078
    %4804 = vmatprep.subr.mxu0 %v3077
    %4805 = vmatpush1.msra.mxu0 %v3076
    %4806 = vmatprep.subr.mxu0 %v3075
    %4807 = vmatpush1.msra.mxu0 %v3074
    %4808 = vmatprep.subr.mxu0 0.0
    %4809 = vmatpush2.msra.mxu0 0.0
    %4810 = vmatprep.subr.mxu0 0.0
    %4811 = vmatpush2.msra.mxu0 0.0
    %4812 = vmatprep.subr.mxu0 0.0
    %4813 = vmatpush2.msra.mxu0 0.0
    %4814 = vmatprep.subr.mxu0 0.0
    %4815 = vmatpush2.msra.mxu0 0.0
    %4816 = vmatprep.subr.mxu0 0.0
    %4817 = vmatpush2.msra.mxu0 0.0
    %4818 = vmatprep.subr.mxu0 0.0
    %4819 = vmatpush2.msra.mxu0 0.0
    %4820 = vmatprep.subr.mxu0 0.0
    %4821 = vmatpush2.msra.mxu0 0.0
    %4822 = vmatprep.subr.mxu0 0.0
    %4823 = vmatpush2.msra.mxu0 0.0
    %4824 = vmatprep.subr.mxu0 0.0
    %4825 = vmatpush2.msra.mxu0 0.0
    %4826 = vmatprep.subr.mxu0 0.0
    %4827 = vmatpush2.msra.mxu0 0.0
    %4828 = vmatprep.subr.mxu0 0.0
    %4829 = vmatpush2.msra.mxu0 0.0
    %4830 = vmatprep.subr.mxu0 0.0
    %4831 = vmatpush2.msra.mxu0 0.0
    %4832 = vmatprep.subr.mxu0 0.0
    %4833 = vmatpush2.msra.mxu0 0.0
    %4834 = vmatprep.subr.mxu0 0.0
    %4835 = vmatpush2.msra.mxu0 0.0
    %4836 = vmatprep.subr.mxu0 0.0
    %4837 = vmatpush2.msra.mxu0 0.0
    %4838 = vmatprep.subr.mxu0 0.0
    %4839 = vmatpush2.msra.mxu0 0.0
    %4840 = vmatprep.mubr.f32.mxu0 0.0
    %4841 = vmatmul.mubr.f32.gmra.mxu0 %v4774
    %v4842 = vpop.f32.mrf.mxu0
    %v4843 = vadd.f32 0.0, %v4842
    %v4844 = vpop.f32.mrf.mxu0
    %v4845 = vadd.f32 0.0, %v4844
    %4846 = vdwg.mxu0
    %v4847 = vadd.f32 %v4665, %v4843
    %v4848 = vadd.f32 %v4666, %v4845
    %v4849 = vxor.u32 %v4847, 2147483648
    %v4850 = vxor.u32 %v4848, 2147483648
    %v4851 = vmul.f32 %v4849, 1.442695
    %v4852 = vpow.pop %v4851
    %v4853 = vmul.f32 %v4850, 1.442695
    %v4854 = vpow.pop %v4853
    %v4855 = vadd.f32 %v4852, 1.0
    %v4856 = vadd.f32 %v4854, 1.0
    %v4857 = vrcp.pop %v4855
    %v4858 = vmul.f32 1.0, %v4857
    %v4859 = vrcp.pop %v4856
    %v4860 = vmul.f32 1.0, %v4859
    %v4861 = vtanh.pop %v4848
    %v4862 = vmul.f32 %v4858, %v4662
    %4864 = vrot.lane.b32.xlu0 %v4861, 64
    %v4865 = vpop.permute.xlu0 %4864
    %v4867 = vmul.f32 %v4858, %v4865
    %4869 = vrot.lane.b32.xlu0 %v4867, 64
    %v4870 = vpop.permute.xlu0 %4869
    %v4872 = vadd.f32 %v4862, %v4870
    %v4873 = vtanh.pop %v4872
    %4875 = vrot.lane.b32.xlu0 %v4873, 64
    %v4876 = vpop.permute.xlu0 %4875
    %v4878 = vmul.f32 %v4860, %v4876
    %v4879 = vsel %vm755, %v4772, 0.0
    %s4880 = scalar_lea.vmem [#allocation5], 56
    %4881 = vst.msk [vmem:[%s4880] sm:$0xff] %vm532, %v4879
    %v4882 = vsel %vm748, %v4878, 0.0
    %4883 = vst.msk [vmem:[#allocation6] sm:$0xff] %vm532, %v4882
    %v4884 = vld [vmem:[#allocation5] sm:$0xff]
    %v4885 = vld [vmem:[#allocation5 + $0x8] sm:$0xff]
    %v4886 = vld [vmem:[#allocation5 + $0x10] sm:$0xff]
    %v4887 = vld [vmem:[#allocation5 + $0x18] sm:$0xff]
    %v4888 = vld [vmem:[#allocation5 + $0x20] sm:$0xff]
    %v4889 = vld [vmem:[#allocation5 + $0x28] sm:$0xff]
    %v4890 = vld [vmem:[#allocation5 + $0x30] sm:$0xff]
    %v4891 = vld [vmem:[#allocation5 + $0x38] sm:$0xff]
    %v4892 = vld [vmem:[%s11] sm:$0x1]
    %v4894 = vlaneseq
    %v4895 = vshrl.u32 %v4894, 7
    %v4896 = vsub.s32 0, %v4895
    %v4897 = vrot.slane %v4892, %v4896
    %v4899 = vmul.f32 %v4884, %v4897
    %v4900 = vmul.f32 %v4885, %v4897
    %v4901 = vmul.f32 %v4886, %v4897
    %v4902 = vmul.f32 %v4887, %v4897
    %v4903 = vmul.f32 %v4888, %v4897
    %v4904 = vmul.f32 %v4889, %v4897
    %v4905 = vmul.f32 %v4890, %v4897
    %v4906 = vmul.f32 %v4891, %v4897
    %v4907 = vsel %vm532, %v4899, 0.0
    %4908 = vadd.xlane.f32.xlu0 %v4907
    %v4909 = vpop.xlane.xlu0 %4908
    %v4910 = vsel %vm532, %v4900, 0.0
    %4911 = vadd.xlane.f32.xlu0 %v4910
    %v4912 = vpop.xlane.xlu0 %4911
    %v4913 = vsel %vm532, %v4901, 0.0
    %4914 = vadd.xlane.f32.xlu0 %v4913
    %v4915 = vpop.xlane.xlu0 %4914
    %v4916 = vsel %vm532, %v4902, 0.0
    %4917 = vadd.xlane.f32.xlu0 %v4916
    %v4918 = vpop.xlane.xlu0 %4917
    %v4919 = vsel %vm532, %v4903, 0.0
    %4920 = vadd.xlane.f32.xlu0 %v4919
    %v4921 = vpop.xlane.xlu0 %4920
    %v4922 = vsel %vm532, %v4904, 0.0
    %4923 = vadd.xlane.f32.xlu0 %v4922
    %v4924 = vpop.xlane.xlu0 %4923
    %v4925 = vsel %vm532, %v4905, 0.0
    %4926 = vadd.xlane.f32.xlu0 %v4925
    %v4927 = vpop.xlane.xlu0 %4926
    %v4928 = vsel %vm532, %v4906, 0.0
    %4929 = vadd.xlane.f32.xlu0 %v4928
    %v4930 = vpop.xlane.xlu0 %4929
    %v4931 = vld [vmem:[#allocation6] sm:$0xff]
    %v4932 = vld [vmem:[#allocation6 + $0x8] sm:$0xff]
    %v4933 = vld [vmem:[#allocation6 + $0x10] sm:$0xff]
    %v4934 = vld [vmem:[#allocation6 + $0x18] sm:$0xff]
    %v4935 = vld [vmem:[#allocation6 + $0x20] sm:$0xff]
    %v4936 = vld [vmem:[#allocation6 + $0x28] sm:$0xff]
    %v4937 = vld [vmem:[#allocation6 + $0x30] sm:$0xff]
    %v4938 = vld [vmem:[#allocation6 + $0x38] sm:$0xff]
    %v4939 = vld [vmem:[%s12] sm:$0x1]
    %v4941 = vlaneseq
    %v4942 = vshrl.u32 %v4941, 7
    %v4943 = vsub.s32 0, %v4942
    %v4944 = vrot.slane %v4939, %v4943
    %v4946 = vmul.f32 %v4931, %v4944
    %v4947 = vmul.f32 %v4932, %v4944
    %v4948 = vmul.f32 %v4933, %v4944
    %v4949 = vmul.f32 %v4934, %v4944
    %v4950 = vmul.f32 %v4935, %v4944
    %v4951 = vmul.f32 %v4936, %v4944
    %v4952 = vmul.f32 %v4937, %v4944
    %v4953 = vmul.f32 %v4938, %v4944
    %v4954 = vsel %vm532, %v4946, 0.0
    %4955 = vadd.xlane.f32.xlu0 %v4954
    %v4956 = vpop.xlane.xlu0 %4955
    %v4957 = vsel %vm532, %v4947, 0.0
    %4958 = vadd.xlane.f32.xlu0 %v4957
    %v4959 = vpop.xlane.xlu0 %4958
    %v4960 = vsel %vm532, %v4948, 0.0
    %4961 = vadd.xlane.f32.xlu0 %v4960
    %v4962 = vpop.xlane.xlu0 %4961
    %v4963 = vsel %vm532, %v4949, 0.0
    %4964 = vadd.xlane.f32.xlu0 %v4963
    %v4965 = vpop.xlane.xlu0 %4964
    %v4966 = vsel %vm532, %v4950, 0.0
    %4967 = vadd.xlane.f32.xlu0 %v4966
    %v4968 = vpop.xlane.xlu0 %4967
    %v4969 = vsel %vm532, %v4951, 0.0
    %4970 = vadd.xlane.f32.xlu0 %v4969
    %v4971 = vpop.xlane.xlu0 %4970
    %v4972 = vsel %vm532, %v4952, 0.0
    %4973 = vadd.xlane.f32.xlu0 %v4972
    %v4974 = vpop.xlane.xlu0 %4973
    %v4975 = vsel %vm532, %v4953, 0.0
    %4976 = vadd.xlane.f32.xlu0 %v4975
    %v4977 = vpop.xlane.xlu0 %4976
    %v4978 = vadd.f32 %v4909, %v4956
    %v4979 = vadd.f32 %v4912, %v4959
    %v4980 = vadd.f32 %v4915, %v4962
    %v4981 = vadd.f32 %v4918, %v4965
    %v4982 = vadd.f32 %v4921, %v4968
    %v4983 = vadd.f32 %v4924, %v4971
    %v4984 = vadd.f32 %v4927, %v4974
    %v4985 = vadd.f32 %v4930, %v4977
    %v4986 = vld [vmem:[#allocation7] sm:$0x1]
    %v4988 = vlaneseq
    %v4989 = vshrl.u32 %v4988, 7
    %v4990 = vsub.s32 0, %v4989
    %v4991 = vrot.slane %v4986, %v4990
    %4992 = vset.pattern.permute.xlu0 0
    %4993 = vperm.xlu0 %4992, %v4991
    %v4994 = vpop.permute.xlu0 %4993
    %v4996 = vadd.f32 %v4978, %v4994
    %v4997 = vadd.f32 %v4979, %v4994
    %v4998 = vadd.f32 %v4980, %v4994
    %v4999 = vadd.f32 %v4981, %v4994
    %v5000 = vadd.f32 %v4982, %v4994
    %v5001 = vadd.f32 %v4983, %v4994
    %v5002 = vadd.f32 %v4984, %v4994
    %v5003 = vadd.f32 %v4985, %v4994
    %v5012 = vlaneseq
    %v5013 = vand.u32 %v5012, 127
    %v5014 = vlaneseq
    %v5015 = vshrl.u32 %v5014, 7
    %v5016 = vsub.s32 %v5013, %v5015
    %v5017 = vrot.slane %v4996, %v5016
    %v5018 = vlaneseq
    %v5019 = vshrl.u32 %v5018, 7
    %v5020 = vsub.s32 %v5013, %v5019
    %v5021 = vrot.slane %v4997, %v5020
    %v5022 = vlaneseq
    %v5023 = vshrl.u32 %v5022, 7
    %v5024 = vsub.s32 %v5013, %v5023
    %v5025 = vrot.slane %v4998, %v5024
    %v5026 = vlaneseq
    %v5027 = vshrl.u32 %v5026, 7
    %v5028 = vsub.s32 %v5013, %v5027
    %v5029 = vrot.slane %v4999, %v5028
    %v5030 = vlaneseq
    %v5031 = vshrl.u32 %v5030, 7
    %v5032 = vsub.s32 %v5013, %v5031
    %v5033 = vrot.slane %v5000, %v5032
    %v5034 = vlaneseq
    %v5035 = vshrl.u32 %v5034, 7
    %v5036 = vsub.s32 %v5013, %v5035
    %v5037 = vrot.slane %v5001, %v5036
    %v5038 = vlaneseq
    %v5039 = vshrl.u32 %v5038, 7
    %v5040 = vsub.s32 %v5013, %v5039
    %v5041 = vrot.slane %v5002, %v5040
    %v5042 = vlaneseq
    %v5043 = vshrl.u32 %v5042, 7
    %v5044 = vsub.s32 %v5013, %v5043
    %v5045 = vrot.slane %v5003, %v5044
    %vm5046 = vcmask 1041409
    %v5047 = vsel %vm5046, %v5021, %v5017
    %vm5048 = vcmask 1042434
    %v5049 = vsel %vm5048, %v5025, %v5047
    %vm5050 = vcmask 1043459
    %v5051 = vsel %vm5050, %v5029, %v5049
    %vm5052 = vcmask 1044484
    %v5053 = vsel %vm5052, %v5033, %v5051
    %vm5054 = vcmask 1045509
    %v5055 = vsel %vm5054, %v5037, %v5053
    %vm5056 = vcmask 1046534
    %v5057 = vsel %vm5056, %v5041, %v5055
    %vm5058 = vcmask 1047559
    %v5059 = vsel %vm5058, %v5045, %v5057
    %vm5061 = vcmask 64512
    %5062 = vst.msk [vmem:[#allocation20] sm:$0xff] %vm5061, %v5059
    // Predicated region
    $region86: #{tpu_custom_call.1} parent=1 // pred_check
      _
    $region87: #{tpu_custom_call.1} parent=1 // pred_check_branch
      %5064 = sbr.rel (0) target = $region89
    $region88: #{tpu_custom_call.1} parent=1 // pred_region
      %s5066 = ssub.s32 128, 128
      %5067 = vsyncadd [#allocation10], %s5066
      %s5069 = sshll.u32 [#allocation20], 4
      %s5070 = int_to_ptr.vmem [resolvable:$true] %s5069
      %5072 = dma.vmem_to_hbm [thread:$0]  %s5070, 128, %s14, [#allocation10]
    $region89: #{tpu_custom_call.1} parent=1 // pred_fallthru
      _
    // Predicated region
    $region90: #{tpu_custom_call.1} parent=1 // pred_check
      _
    $region91: #{tpu_custom_call.1} parent=1 // pred_check_branch
      %5074 = sbr.rel (0) target = $region93
    $region92: #{tpu_custom_call.1} parent=1 // pred_region
      %5075 = dma.done [#allocation10], 128
    $region93: #{tpu_custom_call.1} parent=1 // pred_fallthru
      _
    %5076 = vsyncpa [#allocation9], 1
    %5077 = vsyncpa [#allocation12], 1
    %5078 = vsyncpa [#allocation15], 1
    %5079 = vsyncpa [#allocation18], 1
    %5080 = vsyncpa [#allocation10], 1

</llo_original>
